<compile_context>
chip_gen: v7x
topology: tpu7x:2x2x1
jax: 0.10.0
libtpu: 0.0.40
codegen_flags: <defaults>
</compile_context>

<pallas_src>
import jax
import jax.numpy as jnp
import numpy as np
from jax import lax
from jax.experimental import pallas as pl
from jax.experimental.pallas import tpu as pltpu

# ---------------------------------------------------------------------------
# logical sizes (small, consistent with the module's forward)
# ---------------------------------------------------------------------------
B, L, F, E, A, H, V, Hr = 2, 4, 16, 16, 16, 32, 20, 32
MAX_CAP_LEN = 6
T = MAX_CAP_LEN + 2          # max_caption_len + 2
PAD, SOS, EOS = 0, 1, 2

# in-kernel lane widths -----------------------------------------------------
HG = 128                     # per-gate lane block (valid cols [:H], rest zero)
G3 = 3 * HG                  # fused [r|z|n] gate width = 384
AP = 128                     # attention lane block (valid cols [:A], rest zero)
VP = 128                     # logits lane width (valid cols [:V], pad bias -1e30)
VTOK = 32                    # onehot / token-side weight rows (V=20 padded to 32)
HCOLS = AP + G3              # fused h-side matmul width = 512

_F32 = jnp.float32
NEG_BIG = -1e30

# packed-slab row offsets (all 8-aligned) -----------------------------------
# decoder x-side slab (cols = G3)
DX_WTOK = 0                  # (VTOK, G3) embedding-folded token weights
DX_WCTX = DX_WTOK + VTOK     # (F, G3)    context-side gate weights
DX_BX = DX_WCTX + F          # (8, G3)    x-side gate bias in row 0
DX_ROWS = DX_BX + 8
# decoder h-side slab (cols = HCOLS): [aWh | Whr | Whz | Whn]
DH_W = 0                     # (H, HCOLS)
DH_B = DH_W + H              # (8, HCOLS) h-side bias (only the n block is non-zero)
DH_ROWS = DH_B + 8
# decoder misc slab (cols = 128): attention feature proj + output projection
DM_AWF = 0                   # (F, AP)
DM_AV = DM_AWF + F           # (8, AP)  attention v in row 0
DM_WOUT = DM_AV + 8          # (H, VP)
DM_BOUT = DM_WOUT + H        # (8, VP)  output bias in row 0 (pad cols -1e30)
DM_ROWS = DM_BOUT + 8
# reconstructor slab (cols = G3)
RG_RX = 0                    # (H, G3)   decoder-hidden side
RG_RM = RG_RX + H            # (H, G3)   mean-pool side
RG_RH = RG_RM + H            # (Hr, G3)  recurrent side
RG_BX = RG_RH + Hr           # (8, G3)   x-side bias in row 0
RG_BH = RG_BX + 8            # (8, G3)   h-side bias in row 0
RG_ROWS = RG_BH + 8


def _sigmoid(x):
    return 1.0 / (1.0 + jnp.exp(-x))


# ---------------------------------------------------------------------------
# fused kernel: decoder loop + global reconstructor
# ---------------------------------------------------------------------------
def fused_caption_kernel(feats_ref, cap_ref, dx_ref, dh_ref, dmisc_ref, rg_hbm_ref,
                         logits_ref, rec_ref,
                         hid_ref, rgx_ref, rg_ref, dma_sem):
    # kick off the reconstructor-weight DMA; it overlaps the whole decoder loop
    rg_copy = pltpu.make_async_copy(rg_hbm_ref, rg_ref, dma_sem)
    rg_copy.start()

    # only row 0 needs zeroing; rows 1..T-1 are fully overwritten by the loop
    logits_ref[0] = jnp.zeros((B, VP), _F32)
    hid_ref[0] = jnp.zeros((B, H), _F32)

    feats = feats_ref[...]                             # (B, L, F)

    def mm(x, w):
        return jnp.dot(x, w, preferred_element_type=jnp.float32)

    # loop-invariant: attention projection of all B*L feature slots (one matmul), iotas
    aWf = dmisc_ref[DM_AWF:DM_AV, :]                   # (F, AP)
    av = dmisc_ref[DM_AV:DM_AV + 1, :]                 # (1, AP) pads are 0
    fproj = mm(feats.reshape(B * L, F), aWf).reshape(B, L, AP)
    av_b = av[None, :, :]                              # (1, 1, AP), hoisted broadcast
    iota_v = lax.broadcasted_iota(jnp.int32, (B, VP), 1)     # argmax lanes
    iota_t = lax.broadcasted_iota(jnp.int32, (B, VTOK), 1)   # onehot lanes

    def dec_step(t, carry):
        tok, h = carry                                 # tok (B,1) i32, h (B,H) f32

        # fused h-side matmul: [attention proj | r | z | n]  (single dot on the chain)
        hg = mm(h, dh_ref[DH_W:DH_B, :]) + dh_ref[DH_B:DH_B + 1, :]      # (B, HCOLS)
        hproj = hg[:, 0:AP]                                              # (B, AP)

        # additive attention over the L feature slots (av pads are 0 -> pads contribute 0)
        e = jnp.tanh(hproj[:, None, :] + fproj)                          # (B, L, AP)
        scores = jnp.sum(e * av_b, axis=-1)                              # (B, L)
        scores = scores - jnp.max(scores, axis=-1, keepdims=True)
        p = jnp.exp(scores)
        alpha = p / jnp.sum(p, axis=-1, keepdims=True)                   # (B, L)
        context = jnp.sum(alpha[:, :, None] * feats, axis=1)             # (B, F)

        # fused GRU x-side gates [r|z|n]; embedding folded into the token weights
        onehot = (iota_t == tok).astype(_F32)                            # (B, VTOK)
        gx = (mm(onehot, dx_ref[DX_WTOK:DX_WCTX, :])
              + mm(context, dx_ref[DX_WCTX:DX_BX, :])
              + dx_ref[DX_BX:DX_BX + 1, :])                              # (B, G3)

        # 128-aligned slices, 32 valid lanes each
        r = _sigmoid(gx[:, 0:H] + hg[:, AP:AP + H])
        z = _sigmoid(gx[:, HG:HG + H] + hg[:, AP + HG:AP + HG + H])
        n = jnp.tanh(gx[:, 2 * HG:2 * HG + H]
                     + r * hg[:, AP + 2 * HG:AP + 2 * HG + H])
        h_new = (1.0 - z) * n + z * h                                    # (B, H)

        logits = (mm(h_new, dmisc_ref[DM_WOUT:DM_BOUT, :])
                  + dmisc_ref[DM_BOUT:DM_BOUT + 1, :])                   # (B, VP)
        logits_ref[t] = logits
        hid_ref[t] = h_new

        # greedy argmax (first max index); pad columns are at -1e30 so they never win
        m = jnp.max(logits, axis=-1, keepdims=True)
        cand = jnp.where(logits == m, iota_v, VP)
        tok_new = jnp.min(cand, axis=-1, keepdims=True)                  # (B, 1) i32
        return tok_new, h_new

    tok0 = jnp.full((B, 1), SOS, dtype=jnp.int32)
    h0 = jnp.zeros((B, H), _F32)
    lax.fori_loop(1, T, dec_step, (tok0, h0), unroll=True)

    # ---- global reconstructor (decoder hiddens read straight from VMEM scratch) ----
    msk = (cap_ref[...] != PAD).astype(_F32)           # (T, B, 1) caption mask
    masked = hid_ref[...] * msk                        # (T, B, H)
    pooled = jnp.sum(masked, axis=0)                   # (B, H)
    # guard against all-PAD columns (torch would divide by zero); no-op for lens >= 1
    lens = jnp.maximum(jnp.sum(msk, axis=0), 1.0)      # (B, 1)
    mean_pooled = pooled / lens                        # (B, H)

    rg_copy.wait()                                     # reconstructor weights now in VMEM

    rbias_x = rg_ref[RG_BX:RG_BX + 1, :]               # (1, G3)
    rbias_h = rg_ref[RG_BH:RG_BH + 1, :]               # (1, G3)

    # non-recurrent x-side gate preactivations hoisted out of the loop (one big matmul)
    mp_g = mm(mean_pooled, rg_ref[RG_RM:RG_RH, :]) + rbias_x             # (B, G3)
    gx_all = mm(masked.reshape(T * B, H), rg_ref[RG_RX:RG_RM, :])        # (T*B, G3)
    rgx_ref[...] = gx_all.reshape(T, B, G3) + mp_g[None, :, :]

    def rec_step(t, hr):
        gx = rgx_ref[t]                                                  # (B, G3)
        gh = mm(hr, rg_ref[RG_RH:RG_BX, :]) + rbias_h                    # (B, G3)
        r = _sigmoid(gx[:, 0:Hr] + gh[:, 0:Hr])
        z = _sigmoid(gx[:, HG:HG + Hr] + gh[:, HG:HG + Hr])
        n = jnp.tanh(gx[:, 2 * HG:2 * HG + Hr] + r * gh[:, 2 * HG:2 * HG + Hr])
        hr_new = (1.0 - z) * n + z * hr                                  # (B, Hr)
        rec_ref[t] = hr_new
        return hr_new

    lax.fori_loop(0, T, rec_step, jnp.zeros((B, Hr), _F32), unroll=True)


# ---------------------------------------------------------------------------
# host-side parameter packing (done ONCE, outside the jitted forward)
# ---------------------------------------------------------------------------
def _pad_cols(x, width):
    return jnp.pad(x, ((0, 0), (0, width - x.shape[1])))


def _pad_rows(x, rows):
    return jnp.pad(x, ((0, rows - x.shape[0]), (0, 0)))


def _gate3(wr, wz, wn):
    return jnp.concatenate(
        [_pad_cols(wr, HG), _pad_cols(wz, HG), _pad_cols(wn, HG)], axis=1)


def pack_decoder_params(dec_params):
    (emb, aWh, aWf, av, Wxr_e, Wxr_c, Wxz_e, Wxz_c, Wxn_e, Wxn_c,
     Whr, Whz, Whn, br, bz, bnx, bnh, Wout, bout) = dec_params

    # x-side slab: embedding folded into token gate weights (onehot @ (emb @ Wx))
    W_tok = _pad_rows(jnp.dot(emb, _gate3(Wxr_e, Wxz_e, Wxn_e)), VTOK)   # (VTOK, G3)
    Wx_ctx = _gate3(Wxr_c, Wxz_c, Wxn_c)                                 # (F,    G3)
    bias_x = _pad_rows(_gate3(br, bz, bnx), 8)                           # (8,    G3)
    dec_x = jnp.concatenate([W_tok, Wx_ctx, bias_x], axis=0)             # (DX_ROWS, G3)

    # h-side slab: attention projection fused with the three recurrent gate weights
    W_h_all = jnp.concatenate(
        [_pad_cols(aWh, AP), _pad_cols(Whr, HG),
         _pad_cols(Whz, HG), _pad_cols(Whn, HG)], axis=1)                # (H, HCOLS)
    zb = jnp.zeros((1, HG), _F32)
    bias_h = _pad_rows(jnp.concatenate(
        [jnp.zeros((1, AP), _F32), zb, zb, _pad_cols(bnh, HG)], axis=1), 8)
    dec_h = jnp.concatenate([W_h_all, bias_h], axis=0)                   # (DH_ROWS, HCOLS)

    # misc slab: attention feature proj + v, output projection
    aWf_p = _pad_cols(aWf, AP)                                           # (F, AP)
    av_p = _pad_rows(_pad_cols(av, AP), 8)                               # (8, AP)
    Wout_p = _pad_cols(Wout, VP)                                         # (H, VP), pads 0
    bout_p = _pad_rows(jnp.concatenate(
        [bout, jnp.full((1, VP - V), NEG_BIG, _F32)], axis=1), 8)        # (8, VP)
    dec_misc = jnp.concatenate([aWf_p, av_p, Wout_p, bout_p], axis=0)    # (DM_ROWS, 128)
    return dec_x, dec_h, dec_misc


def pack_recon_params(rec_params):
    (Rxr_h, Rxr_m, Rxz_h, Rxz_m, Rxn_h, Rxn_m,
     Rhr, Rhz, Rhn, rbr, rbz, rbnx, rbnh) = rec_params
    Rx = _gate3(Rxr_h, Rxz_h, Rxn_h)                                     # (H,  G3)
    Rm = _gate3(Rxr_m, Rxz_m, Rxn_m)                                     # (H,  G3)
    Rh = _gate3(Rhr, Rhz, Rhn)                                           # (Hr, G3)
    zb = jnp.zeros_like(rbnh)
    rbias_x = _pad_rows(_gate3(rbr, rbz, rbnx), 8)                       # (8,  G3)
    rbias_h = _pad_rows(_gate3(zb, zb, rbnh), 8)                         # (8,  G3)
    return jnp.concatenate([Rx, Rm, Rh, rbias_x, rbias_h], axis=0)       # (RG_ROWS, G3)


# ---------------------------------------------------------------------------
# wrapper
# ---------------------------------------------------------------------------
_VMEM = pl.BlockSpec(memory_space=pltpu.MemorySpace.VMEM)
_ANY = pl.BlockSpec(memory_space=pl.ANY)


@jax.jit
def _forward_impl(feats, captions, dec_x, dec_h, dec_misc, rec_gates):
    captions3 = captions.reshape(T, B, 1).astype(jnp.int32)

    logits_p, rec_p = pl.pallas_call(
        fused_caption_kernel,
        out_shape=(jax.ShapeDtypeStruct((T, B, VP), _F32),
                   jax.ShapeDtypeStruct((T, B, Hr), _F32)),
        in_specs=[_VMEM, _VMEM, _VMEM, _VMEM, _VMEM, _ANY],
        out_specs=(_VMEM, _VMEM),
        scratch_shapes=[pltpu.VMEM((T, B, H), _F32),       # decoder hiddens
                        pltpu.VMEM((T, B, G3), _F32),      # hoisted recon x-side gates
                        pltpu.VMEM((RG_ROWS, G3), _F32),   # recon weights (manual DMA)
                        pltpu.SemaphoreType.DMA(())],
    )(feats, captions3, dec_x, dec_h, dec_misc, rec_gates)

    outputs = logits_p[:, :, :V]                           # (T, B, V)
    feats_recon = jnp.transpose(rec_p, (1, 0, 2))          # (B, T, Hr)
    return outputs, feats_recon


def caption_generator_forward(feats, captions, dec_x, dec_h, dec_misc, rec_gates,
                              teacher_forcing_ratio=0.0):
    # TODO(synk): teacher forcing uses python random.random(); with ratio=0.0 the decoder
    # always feeds back its own greedy argmax, which is what the kernel implements.
    del teacher_forcing_ratio
    return _forward_impl(feats, captions, dec_x, dec_h, dec_misc, rec_gates)


# ---------------------------------------------------------------------------
# pure-JAX reference (same math, logical shapes, no Pallas) for correctness check
# ---------------------------------------------------------------------------
def reference_forward(feats, captions, dec_params, rec_params):
    (emb, aWh, aWf, av, Wxr_e, Wxr_c, Wxz_e, Wxz_c, Wxn_e, Wxn_c,
     Whr, Whz, Whn, br, bz, bnx, bnh, Wout, bout) = dec_params

    outs = [jnp.zeros((B, V), _F32)]
    hids = [jnp.zeros((B, H), _F32)]
    tok = jnp.full((B,), SOS, jnp.int32)
    h = jnp.zeros((B, H), _F32)
    vocab_iota = jnp.arange(V, dtype=jnp.int32)[None, :]
    for _t in range(1, T):
        onehot = (vocab_iota == tok[:, None]).astype(_F32)
        x_emb = onehot @ emb
        hproj = h @ aWh
        fproj = jnp.einsum('blf,fa->bla', feats, aWf)
        scores = jnp.sum(jnp.tanh(hproj[:, None, :] + fproj) * av[None, :, :], axis=-1)
        scores = scores - jnp.max(scores, axis=-1, keepdims=True)
        w = jnp.exp(scores)
        alpha = w / jnp.sum(w, axis=-1, keepdims=True)
        context = jnp.einsum('bl,blf->bf', alpha, feats)
        r = _sigmoid(x_emb @ Wxr_e + context @ Wxr_c + h @ Whr + br)
        z = _sigmoid(x_emb @ Wxz_e + context @ Wxz_c + h @ Whz + bz)
        n = jnp.tanh(x_emb @ Wxn_e + context @ Wxn_c + bnx + r * (h @ Whn + bnh))
        h = (1.0 - z) * n + z * h
        logits = h @ Wout + bout
        outs.append(logits)
        hids.append(h)
        tok = jnp.argmax(logits, axis=-1).astype(jnp.int32)
    outputs = jnp.stack(outs)          # (T, B, V)
    hiddens = jnp.stack(hids)          # (T, B, H)

    (Rxr_h, Rxr_m, Rxz_h, Rxz_m, Rxn_h, Rxn_m,
     Rhr, Rhz, Rhn, rbr, rbz, rbnx, rbnh) = rec_params
    masks = (captions != PAD).astype(_F32)            # (T, B)
    masked = hiddens * masks[:, :, None]
    lens = jnp.sum(masks, axis=0)
    mean_pooled = jnp.sum(masked, axis=0) / lens[:, None]
    hr = jnp.zeros((B, Hr), _F32)
    recs = []
    for t in range(T):
        d = masked[t]
        r = _sigmoid(d @ Rxr_h + mean_pooled @ Rxr_m + hr @ Rhr + rbr)
        z = _sigmoid(d @ Rxz_h + mean_pooled @ Rxz_m + hr @ Rhz + rbz)
        n = jnp.tanh(d @ Rxn_h + mean_pooled @ Rxn_m + rbnx + r * (hr @ Rhn + rbnh))
        hr = (1.0 - z) * n + z * hr
        recs.append(hr)
    recons = jnp.stack(recs)           # (T, B, Hr)
    return outputs, jnp.transpose(recons, (1, 0, 2))


# ---------------------------------------------------------------------------
# deterministic parameter init (logical shapes; packing happens once, host side)
# ---------------------------------------------------------------------------
def init_params(key):
    keys = iter(jax.random.split(key, 40))
    scale = 0.1

    def nrm(shape):
        return jax.random.normal(next(keys), shape, _F32) * scale

    dec_params = (
        nrm((V, E)),                                   # embedding
        nrm((H, A)), nrm((F, A)), nrm((1, A)),         # attention Wh, Wf, v
        nrm((E, H)), nrm((F, H)),                      # Wxr (emb part, context part)
        nrm((E, H)), nrm((F, H)),                      # Wxz
        nrm((E, H)), nrm((F, H)),                      # Wxn
        nrm((H, H)), nrm((H, H)), nrm((H, H)),         # Whr, Whz, Whn
        nrm((1, H)), nrm((1, H)), nrm((1, H)), nrm((1, H)),  # br, bz, bnx, bnh
        nrm((H, V)), nrm((1, V)),                      # Wout, bout
    )
    rec_params = (
        nrm((H, Hr)), nrm((H, Hr)),                    # Rxr (hidden_t part, mean-pool part)
        nrm((H, Hr)), nrm((H, Hr)),                    # Rxz
        nrm((H, Hr)), nrm((H, Hr)),                    # Rxn
        nrm((Hr, Hr)), nrm((Hr, Hr)), nrm((Hr, Hr)),   # Rhr, Rhz, Rhn
        nrm((1, Hr)), nrm((1, Hr)), nrm((1, Hr)), nrm((1, Hr)),  # rbr, rbz, rbnx, rbnh
    )
    return dec_params, rec_params


if __name__ == "__main__":
    key = jax.random.PRNGKey(0)
    k_feat, k_param = jax.random.split(key)

    feats = jax.random.normal(k_feat, (B, L, F), _F32)
    captions = jnp.array([[SOS, SOS],
                          [5, 7],
                          [6, 8],
                          [9, EOS],
                          [EOS, PAD],
                          [PAD, PAD],
                          [PAD, PAD],
                          [PAD, PAD]], dtype=jnp.int32)          # (T, B)

    dec_params, rec_params = init_params(k_param)

    # pre-pack the parameter slabs ONCE (outside the jitted forward path)
    dec_x, dec_h, dec_misc = pack_decoder_params(dec_params)
    rec_gates = pack_recon_params(rec_params)
    jax.block_until_ready((dec_x, dec_h, dec_misc, rec_gates))

    outputs, feats_recon = caption_generator_forward(
        feats, captions, dec_x, dec_h, dec_misc, rec_gates, teacher_forcing_ratio=0.0)
    jax.block_until_ready((outputs, feats_recon))

    ref_out, ref_rec = reference_forward(feats, captions, dec_params, rec_params)
    assert outputs.shape == (T, B, V) and feats_recon.shape == (B, T, Hr)
    assert np.allclose(np.asarray(outputs), np.asarray(ref_out), rtol=1e-3, atol=1e-3)
    assert np.allclose(np.asarray(feats_recon), np.asarray(ref_rec), rtol=1e-3, atol=1e-3)
    print("KERNEL_OK")
</pallas_src>

<mosaic_0001>
module attributes {stable_mosaic.version = 11 : i64} {
  func.func @fused_caption_kernel(%arg0: memref<2x4x16xf32, #tpu.memory_space<vmem>>, %arg1: memref<8x2x1xi32, #tpu.memory_space<vmem>>, %arg2: memref<56x384xf32, #tpu.memory_space<vmem>>, %arg3: memref<40x512xf32, #tpu.memory_space<vmem>>, %arg4: memref<64x128xf32, #tpu.memory_space<vmem>>, %arg5: memref<112x384xf32, #tpu.memory_space<any>>, %arg6: memref<8x2x128xf32, #tpu.memory_space<vmem>>, %arg7: memref<8x2x32xf32, #tpu.memory_space<vmem>>, %arg8: memref<8x2x32xf32, #tpu.memory_space<vmem>>, %arg9: memref<8x2x384xf32, #tpu.memory_space<vmem>>, %arg10: memref<112x384xf32, #tpu.memory_space<vmem>>, %arg11: memref<!tpu.dma_semaphore, #tpu.memory_space<semaphore_mem>>) attributes {dimension_semantics = [], scalar_prefetch = 0 : i64, scratch_operands = 4 : i64, tpu.core_type = #tpu.core_type<tc>} {
    tpu.enqueue_dma source(%arg5 : memref<112x384xf32, #tpu.memory_space<any>>) target(%arg10 : memref<112x384xf32, #tpu.memory_space<vmem>>) target_semaphore(%arg11 : memref<!tpu.dma_semaphore, #tpu.memory_space<semaphore_mem>>)
    %cst = arith.constant 0.000000e+00 : f32
    %0 = vector.broadcast %cst : f32 to vector<2x128xf32>
    %c0 = arith.constant 0 : index
    %c0_0 = arith.constant 0 : index
    %c0_1 = arith.constant 0 : index
    %1 = vector.load %arg6[%c0, %c0_0, %c0_1] : memref<8x2x128xf32, #tpu.memory_space<vmem>>, vector<1x2x128xf32>
    %2 = vector.shape_cast %1 : vector<1x2x128xf32> to vector<2x128xf32>
    %3 = vector.shape_cast %0 : vector<2x128xf32> to vector<1x2x128xf32>
    tpu.vector_store %arg6[%c0, %c0_0, %c0_1], %3 {strides = array<i32>} : memref<8x2x128xf32, #tpu.memory_space<vmem>>, vector<1x2x128xf32>,
    %cst_2 = arith.constant 0.000000e+00 : f32
    %4 = vector.broadcast %cst_2 : f32 to vector<2x32xf32>
    %c0_3 = arith.constant 0 : index
    %c0_4 = arith.constant 0 : index
    %c0_5 = arith.constant 0 : index
    %5 = vector.load %arg8[%c0_3, %c0_4, %c0_5] : memref<8x2x32xf32, #tpu.memory_space<vmem>>, vector<1x2x32xf32>
    %6 = vector.shape_cast %5 : vector<1x2x32xf32> to vector<2x32xf32>
    %7 = vector.shape_cast %4 : vector<2x32xf32> to vector<1x2x32xf32>
    tpu.vector_store %arg8[%c0_3, %c0_4, %c0_5], %7 {strides = array<i32>} : memref<8x2x32xf32, #tpu.memory_space<vmem>>, vector<1x2x32xf32>,
    %c0_6 = arith.constant 0 : index
    %c0_7 = arith.constant 0 : index
    %c0_8 = arith.constant 0 : index
    %8 = vector.load %arg0[%c0_6, %c0_7, %c0_8] : memref<2x4x16xf32, #tpu.memory_space<vmem>>, vector<2x4x16xf32>
    %c0_9 = arith.constant 0 : index
    %c0_10 = arith.constant 0 : index
    %9 = vector.load %arg4[%c0_9, %c0_10] : memref<64x128xf32, #tpu.memory_space<vmem>>, vector<16x128xf32>
    %c16 = arith.constant 16 : index
    %c0_11 = arith.constant 0 : index
    %10 = vector.load %arg4[%c16, %c0_11] : memref<64x128xf32, #tpu.memory_space<vmem>>, vector<1x128xf32>
    %11 = vector.shape_cast %8 : vector<2x4x16xf32> to vector<8x16xf32>
    %cst_12 = arith.constant dense<0.000000e+00> : vector<8x128xf32>
    %12 = tpu.matmul %11, %9, %cst_12 {dimension_numbers = #tpu.dot_dimension_numbers<[1], [0], [0], [1], [0, 0, 1, 1], [], []>} : vector<8x16xf32>, vector<16x128xf32>, vector<8x128xf32> -> vector<8x128xf32>
    %13 = vector.shape_cast %12 : vector<8x128xf32> to vector<2x4x128xf32>
    %14 = vector.shape_cast %10 : vector<1x128xf32> to vector<1x1x128xf32>
    %15 = tpu.iota {dimensions = array<i32: 1>} : vector<2x128xi32>
    %16 = tpu.iota {dimensions = array<i32: 1>} : vector<2x32xi32>
    %c1_i32 = arith.constant 1 : i32
    %17 = vector.broadcast %c1_i32 : i32 to vector<2x1xi32>
    %cst_13 = arith.constant 0.000000e+00 : f32
    %18 = vector.broadcast %cst_13 : f32 to vector<2x32xf32>
    %c1_i32_14 = arith.constant 1 : i32
    %c0_15 = arith.constant 0 : index
    %c0_16 = arith.constant 0 : index
    %19 = vector.load %arg3[%c0_15, %c0_16] : memref<40x512xf32, #tpu.memory_space<vmem>>, vector<32x512xf32>
    %cst_17 = arith.constant dense<0.000000e+00> : vector<2x512xf32>
    %20 = tpu.matmul %18, %19, %cst_17 {dimension_numbers = #tpu.dot_dimension_numbers<[1], [0], [0], [1], [0, 0, 1, 1], [], []>} : vector<2x32xf32>, vector<32x512xf32>, vector<2x512xf32> -> vector<2x512xf32>
    %c32 = arith.constant 32 : index
    %c0_18 = arith.constant 0 : index
    %21 = vector.load %arg3[%c32, %c0_18] : memref<40x512xf32, #tpu.memory_space<vmem>>, vector<1x512xf32>
    %22 = vector.broadcast %21 : vector<1x512xf32> to vector<2x512xf32>
    %23 = arith.addf %20, %22 : vector<2x512xf32>
    %24 = vector.extract_strided_slice %23 {offsets = [0, 0], sizes = [2, 128], strides = [1, 1]} : vector<2x512xf32> to vector<2x128xf32>
    %25 = vector.shape_cast %24 : vector<2x128xf32> to vector<2x1x128xf32>
    %26 = vector.broadcast %25 : vector<2x1x128xf32> to vector<2x4x128xf32>
    %27 = arith.addf %26, %13 : vector<2x4x128xf32>
    %28 = math.tanh %27 : vector<2x4x128xf32>
    %29 = vector.broadcast %14 : vector<1x1x128xf32> to vector<2x4x128xf32>
    %30 = arith.mulf %28, %29 : vector<2x4x128xf32>
    %cst_19 = arith.constant dense<0.000000e+00> : vector<2x4xf32>
    %31 = vector.multi_reduction <add>, %30, %cst_19 [2] : vector<2x4x128xf32> to vector<2x4xf32>
    %cst_20 = arith.constant dense<0xFF800000> : vector<2xf32>
    %32 = vector.multi_reduction <maximumf>, %31, %cst_20 [1] : vector<2x4xf32> to vector<2xf32>
    %33 = vector.shape_cast %32 : vector<2xf32> to vector<2x1xf32>
    %34 = vector.broadcast %33 : vector<2x1xf32> to vector<2x4xf32>
    %35 = arith.subf %31, %34 : vector<2x4xf32>
    %36 = math.exp %35 : vector<2x4xf32>
    %cst_21 = arith.constant dense<0.000000e+00> : vector<2xf32>
    %37 = vector.multi_reduction <add>, %36, %cst_21 [1] : vector<2x4xf32> to vector<2xf32>
    %38 = vector.shape_cast %37 : vector<2xf32> to vector<2x1xf32>
    %39 = vector.broadcast %38 : vector<2x1xf32> to vector<2x4xf32>
    %40 = arith.divf %36, %39 : vector<2x4xf32>
    %41 = vector.shape_cast %40 : vector<2x4xf32> to vector<2x4x1xf32>
    %42 = vector.broadcast %41 : vector<2x4x1xf32> to vector<2x4x16xf32>
    %43 = arith.mulf %42, %8 : vector<2x4x16xf32>
    %cst_22 = arith.constant dense<0.000000e+00> : vector<2x16xf32>
    %44 = vector.multi_reduction <add>, %43, %cst_22 [1] : vector<2x4x16xf32> to vector<2x16xf32>
    %45 = vector.broadcast %17 : vector<2x1xi32> to vector<2x32xi32>
    %46 = arith.cmpi eq, %16, %45 : vector<2x32xi32>
    %47 = arith.extui %46 : vector<2x32xi1> to vector<2x32xi32>
    %48 = arith.sitofp %47 : vector<2x32xi32> to vector<2x32xf32>
    %c0_23 = arith.constant 0 : index
    %c0_24 = arith.constant 0 : index
    %49 = vector.load %arg2[%c0_23, %c0_24] : memref<56x384xf32, #tpu.memory_space<vmem>>, vector<32x384xf32>
    %cst_25 = arith.constant dense<0.000000e+00> : vector<2x384xf32>
    %50 = tpu.matmul %48, %49, %cst_25 {dimension_numbers = #tpu.dot_dimension_numbers<[1], [0], [0], [1], [0, 0, 1, 1], [], []>} : vector<2x32xf32>, vector<32x384xf32>, vector<2x384xf32> -> vector<2x384xf32>
    %c32_26 = arith.constant 32 : index
    %c0_27 = arith.constant 0 : index
    %51 = vector.load %arg2[%c32_26, %c0_27] : memref<56x384xf32, #tpu.memory_space<vmem>>, vector<16x384xf32>
    %cst_28 = arith.constant dense<0.000000e+00> : vector<2x384xf32>
    %52 = tpu.matmul %44, %51, %cst_28 {dimension_numbers = #tpu.dot_dimension_numbers<[1], [0], [0], [1], [0, 0, 1, 1], [], []>} : vector<2x16xf32>, vector<16x384xf32>, vector<2x384xf32> -> vector<2x384xf32>
    %53 = arith.addf %50, %52 : vector<2x384xf32>
    %c48 = arith.constant 48 : index
    %c0_29 = arith.constant 0 : index
    %54 = vector.load %arg2[%c48, %c0_29] : memref<56x384xf32, #tpu.memory_space<vmem>>, vector<1x384xf32>
    %55 = vector.broadcast %54 : vector<1x384xf32> to vector<2x384xf32>
    %56 = arith.addf %53, %55 : vector<2x384xf32>
    %57 = vector.extract_strided_slice %56 {offsets = [0, 0], sizes = [2, 32], strides = [1, 1]} : vector<2x384xf32> to vector<2x32xf32>
    %58 = vector.extract_strided_slice %23 {offsets = [0, 128], sizes = [2, 32], strides = [1, 1]} : vector<2x512xf32> to vector<2x32xf32>
    %59 = arith.addf %57, %58 : vector<2x32xf32>
    %cst_30 = arith.constant 0.000000e+00 : f32
    %60 = vector.broadcast %cst_30 : f32 to vector<2x32xf32>
    %61 = arith.subf %60, %59 : vector<2x32xf32>
    %62 = math.exp %61 : vector<2x32xf32>
    %cst_31 = arith.constant 1.000000e+00 : f32
    %63 = vector.broadcast %cst_31 : f32 to vector<2x32xf32>
    %64 = arith.addf %63, %62 : vector<2x32xf32>
    %cst_32 = arith.constant 1.000000e+00 : f32
    %65 = vector.broadcast %cst_32 : f32 to vector<2x32xf32>
    %66 = arith.divf %65, %64 : vector<2x32xf32>
    %67 = vector.extract_strided_slice %56 {offsets = [0, 128], sizes = [2, 32], strides = [1, 1]} : vector<2x384xf32> to vector<2x32xf32>
    %68 = vector.extract_strided_slice %23 {offsets = [0, 256], sizes = [2, 32], strides = [1, 1]} : vector<2x512xf32> to vector<2x32xf32>
    %69 = arith.addf %67, %68 : vector<2x32xf32>
    %cst_33 = arith.constant 0.000000e+00 : f32
    %70 = vector.broadcast %cst_33 : f32 to vector<2x32xf32>
    %71 = arith.subf %70, %69 : vector<2x32xf32>
    %72 = math.exp %71 : vector<2x32xf32>
    %cst_34 = arith.constant 1.000000e+00 : f32
    %73 = vector.broadcast %cst_34 : f32 to vector<2x32xf32>
    %74 = arith.addf %73, %72 : vector<2x32xf32>
    %cst_35 = arith.constant 1.000000e+00 : f32
    %75 = vector.broadcast %cst_35 : f32 to vector<2x32xf32>
    %76 = arith.divf %75, %74 : vector<2x32xf32>
    %77 = vector.extract_strided_slice %56 {offsets = [0, 256], sizes = [2, 32], strides = [1, 1]} : vector<2x384xf32> to vector<2x32xf32>
    %78 = vector.extract_strided_slice %23 {offsets = [0, 384], sizes = [2, 32], strides = [1, 1]} : vector<2x512xf32> to vector<2x32xf32>
    %79 = arith.mulf %66, %78 : vector<2x32xf32>
    %80 = arith.addf %77, %79 : vector<2x32xf32>
    %81 = math.tanh %80 : vector<2x32xf32>
    %cst_36 = arith.constant 1.000000e+00 : f32
    %82 = vector.broadcast %cst_36 : f32 to vector<2x32xf32>
    %83 = arith.subf %82, %76 : vector<2x32xf32>
    %84 = arith.mulf %83, %81 : vector<2x32xf32>
    %85 = arith.mulf %76, %18 : vector<2x32xf32>
    %86 = arith.addf %84, %85 : vector<2x32xf32>
    %c24 = arith.constant 24 : index
    %c0_37 = arith.constant 0 : index
    %87 = vector.load %arg4[%c24, %c0_37] : memref<64x128xf32, #tpu.memory_space<vmem>>, vector<32x128xf32>
    %cst_38 = arith.constant dense<0.000000e+00> : vector<2x128xf32>
    %88 = tpu.matmul %86, %87, %cst_38 {dimension_numbers = #tpu.dot_dimension_numbers<[1], [0], [0], [1], [0, 0, 1, 1], [], []>} : vector<2x32xf32>, vector<32x128xf32>, vector<2x128xf32> -> vector<2x128xf32>
    %c56 = arith.constant 56 : index
    %c0_39 = arith.constant 0 : index
    %89 = vector.load %arg4[%c56, %c0_39] : memref<64x128xf32, #tpu.memory_space<vmem>>, vector<1x128xf32>
    %90 = vector.broadcast %89 : vector<1x128xf32> to vector<2x128xf32>
    %91 = arith.addf %88, %90 : vector<2x128xf32>
    %92 = arith.index_cast %c1_i32_14 : i32 to index
    %c0_40 = arith.constant 0 : index
    %c0_41 = arith.constant 0 : index
    %93 = vector.load %arg6[%92, %c0_40, %c0_41] : memref<8x2x128xf32, #tpu.memory_space<vmem>>, vector<1x2x128xf32>
    %94 = vector.shape_cast %93 : vector<1x2x128xf32> to vector<2x128xf32>
    %95 = vector.shape_cast %91 : vector<2x128xf32> to vector<1x2x128xf32>
    tpu.vector_store %arg6[%92, %c0_40, %c0_41], %95 {strides = array<i32>} : memref<8x2x128xf32, #tpu.memory_space<vmem>>, vector<1x2x128xf32>,
    %96 = arith.index_cast %c1_i32_14 : i32 to index
    %c0_42 = arith.constant 0 : index
    %c0_43 = arith.constant 0 : index
    %97 = vector.load %arg8[%96, %c0_42, %c0_43] : memref<8x2x32xf32, #tpu.memory_space<vmem>>, vector<1x2x32xf32>
    %98 = vector.shape_cast %97 : vector<1x2x32xf32> to vector<2x32xf32>
    %99 = vector.shape_cast %86 : vector<2x32xf32> to vector<1x2x32xf32>
    tpu.vector_store %arg8[%96, %c0_42, %c0_43], %99 {strides = array<i32>} : memref<8x2x32xf32, #tpu.memory_space<vmem>>, vector<1x2x32xf32>,
    %cst_44 = arith.constant dense<0xFF800000> : vector<2xf32>
    %100 = vector.multi_reduction <maximumf>, %91, %cst_44 [1] : vector<2x128xf32> to vector<2xf32>
    %101 = vector.shape_cast %100 : vector<2xf32> to vector<2x1xf32>
    %102 = vector.broadcast %101 : vector<2x1xf32> to vector<2x128xf32>
    %103 = arith.cmpf oeq, %91, %102 : vector<2x128xf32>
    %c128_i32 = arith.constant 128 : i32
    %104 = vector.broadcast %c128_i32 : i32 to vector<2x128xi32>
    %105 = arith.select %103, %15, %104 : vector<2x128xi1>, vector<2x128xi32>
    %cst_45 = arith.constant dense<2147483647> : vector<2xi32>
    %106 = vector.multi_reduction <minsi>, %105, %cst_45 [1] : vector<2x128xi32> to vector<2xi32>
    %107 = vector.shape_cast %106 : vector<2xi32> to vector<2x1xi32>
    %c2_i32 = arith.constant 2 : i32
    %c0_46 = arith.constant 0 : index
    %c0_47 = arith.constant 0 : index
    %108 = vector.load %arg3[%c0_46, %c0_47] : memref<40x512xf32, #tpu.memory_space<vmem>>, vector<32x512xf32>
    %cst_48 = arith.constant dense<0.000000e+00> : vector<2x512xf32>
    %109 = tpu.matmul %86, %108, %cst_48 {dimension_numbers = #tpu.dot_dimension_numbers<[1], [0], [0], [1], [0, 0, 1, 1], [], []>} : vector<2x32xf32>, vector<32x512xf32>, vector<2x512xf32> -> vector<2x512xf32>
    %c32_49 = arith.constant 32 : index
    %c0_50 = arith.constant 0 : index
    %110 = vector.load %arg3[%c32_49, %c0_50] : memref<40x512xf32, #tpu.memory_space<vmem>>, vector<1x512xf32>
    %111 = vector.broadcast %110 : vector<1x512xf32> to vector<2x512xf32>
    %112 = arith.addf %109, %111 : vector<2x512xf32>
    %113 = vector.extract_strided_slice %112 {offsets = [0, 0], sizes = [2, 128], strides = [1, 1]} : vector<2x512xf32> to vector<2x128xf32>
    %114 = vector.shape_cast %113 : vector<2x128xf32> to vector<2x1x128xf32>
    %115 = vector.broadcast %114 : vector<2x1x128xf32> to vector<2x4x128xf32>
    %116 = arith.addf %115, %13 : vector<2x4x128xf32>
    %117 = math.tanh %116 : vector<2x4x128xf32>
    %118 = vector.broadcast %14 : vector<1x1x128xf32> to vector<2x4x128xf32>
    %119 = arith.mulf %117, %118 : vector<2x4x128xf32>
    %cst_51 = arith.constant dense<0.000000e+00> : vector<2x4xf32>
    %120 = vector.multi_reduction <add>, %119, %cst_51 [2] : vector<2x4x128xf32> to vector<2x4xf32>
    %cst_52 = arith.constant dense<0xFF800000> : vector<2xf32>
    %121 = vector.multi_reduction <maximumf>, %120, %cst_52 [1] : vector<2x4xf32> to vector<2xf32>
    %122 = vector.shape_cast %121 : vector<2xf32> to vector<2x1xf32>
    %123 = vector.broadcast %122 : vector<2x1xf32> to vector<2x4xf32>
    %124 = arith.subf %120, %123 : vector<2x4xf32>
    %125 = math.exp %124 : vector<2x4xf32>
    %cst_53 = arith.constant dense<0.000000e+00> : vector<2xf32>
    %126 = vector.multi_reduction <add>, %125, %cst_53 [1] : vector<2x4xf32> to vector<2xf32>
    %127 = vector.shape_cast %126 : vector<2xf32> to vector<2x1xf32>
    %128 = vector.broadcast %127 : vector<2x1xf32> to vector<2x4xf32>
    %129 = arith.divf %125, %128 : vector<2x4xf32>
    %130 = vector.shape_cast %129 : vector<2x4xf32> to vector<2x4x1xf32>
    %131 = vector.broadcast %130 : vector<2x4x1xf32> to vector<2x4x16xf32>
    %132 = arith.mulf %131, %8 : vector<2x4x16xf32>
    %cst_54 = arith.constant dense<0.000000e+00> : vector<2x16xf32>
    %133 = vector.multi_reduction <add>, %132, %cst_54 [1] : vector<2x4x16xf32> to vector<2x16xf32>
    %134 = vector.broadcast %107 : vector<2x1xi32> to vector<2x32xi32>
    %135 = arith.cmpi eq, %16, %134 : vector<2x32xi32>
    %136 = arith.extui %135 : vector<2x32xi1> to vector<2x32xi32>
    %137 = arith.sitofp %136 : vector<2x32xi32> to vector<2x32xf32>
    %c0_55 = arith.constant 0 : index
    %c0_56 = arith.constant 0 : index
    %138 = vector.load %arg2[%c0_55, %c0_56] : memref<56x384xf32, #tpu.memory_space<vmem>>, vector<32x384xf32>
    %cst_57 = arith.constant dense<0.000000e+00> : vector<2x384xf32>
    %139 = tpu.matmul %137, %138, %cst_57 {dimension_numbers = #tpu.dot_dimension_numbers<[1], [0], [0], [1], [0, 0, 1, 1], [], []>} : vector<2x32xf32>, vector<32x384xf32>, vector<2x384xf32> -> vector<2x384xf32>
    %c32_58 = arith.constant 32 : index
    %c0_59 = arith.constant 0 : index
    %140 = vector.load %arg2[%c32_58, %c0_59] : memref<56x384xf32, #tpu.memory_space<vmem>>, vector<16x384xf32>
    %cst_60 = arith.constant dense<0.000000e+00> : vector<2x384xf32>
    %141 = tpu.matmul %133, %140, %cst_60 {dimension_numbers = #tpu.dot_dimension_numbers<[1], [0], [0], [1], [0, 0, 1, 1], [], []>} : vector<2x16xf32>, vector<16x384xf32>, vector<2x384xf32> -> vector<2x384xf32>
    %142 = arith.addf %139, %141 : vector<2x384xf32>
    %c48_61 = arith.constant 48 : index
    %c0_62 = arith.constant 0 : index
    %143 = vector.load %arg2[%c48_61, %c0_62] : memref<56x384xf32, #tpu.memory_space<vmem>>, vector<1x384xf32>
    %144 = vector.broadcast %143 : vector<1x384xf32> to vector<2x384xf32>
    %145 = arith.addf %142, %144 : vector<2x384xf32>
    %146 = vector.extract_strided_slice %145 {offsets = [0, 0], sizes = [2, 32], strides = [1, 1]} : vector<2x384xf32> to vector<2x32xf32>
    %147 = vector.extract_strided_slice %112 {offsets = [0, 128], sizes = [2, 32], strides = [1, 1]} : vector<2x512xf32> to vector<2x32xf32>
    %148 = arith.addf %146, %147 : vector<2x32xf32>
    %cst_63 = arith.constant 0.000000e+00 : f32
    %149 = vector.broadcast %cst_63 : f32 to vector<2x32xf32>
    %150 = arith.subf %149, %148 : vector<2x32xf32>
    %151 = math.exp %150 : vector<2x32xf32>
    %cst_64 = arith.constant 1.000000e+00 : f32
    %152 = vector.broadcast %cst_64 : f32 to vector<2x32xf32>
    %153 = arith.addf %152, %151 : vector<2x32xf32>
    %cst_65 = arith.constant 1.000000e+00 : f32
    %154 = vector.broadcast %cst_65 : f32 to vector<2x32xf32>
    %155 = arith.divf %154, %153 : vector<2x32xf32>
    %156 = vector.extract_strided_slice %145 {offsets = [0, 128], sizes = [2, 32], strides = [1, 1]} : vector<2x384xf32> to vector<2x32xf32>
    %157 = vector.extract_strided_slice %112 {offsets = [0, 256], sizes = [2, 32], strides = [1, 1]} : vector<2x512xf32> to vector<2x32xf32>
    %158 = arith.addf %156, %157 : vector<2x32xf32>
    %cst_66 = arith.constant 0.000000e+00 : f32
    %159 = vector.broadcast %cst_66 : f32 to vector<2x32xf32>
    %160 = arith.subf %159, %158 : vector<2x32xf32>
    %161 = math.exp %160 : vector<2x32xf32>
    %cst_67 = arith.constant 1.000000e+00 : f32
    %162 = vector.broadcast %cst_67 : f32 to vector<2x32xf32>
    %163 = arith.addf %162, %161 : vector<2x32xf32>
    %cst_68 = arith.constant 1.000000e+00 : f32
    %164 = vector.broadcast %cst_68 : f32 to vector<2x32xf32>
    %165 = arith.divf %164, %163 : vector<2x32xf32>
    %166 = vector.extract_strided_slice %145 {offsets = [0, 256], sizes = [2, 32], strides = [1, 1]} : vector<2x384xf32> to vector<2x32xf32>
    %167 = vector.extract_strided_slice %112 {offsets = [0, 384], sizes = [2, 32], strides = [1, 1]} : vector<2x512xf32> to vector<2x32xf32>
    %168 = arith.mulf %155, %167 : vector<2x32xf32>
    %169 = arith.addf %166, %168 : vector<2x32xf32>
    %170 = math.tanh %169 : vector<2x32xf32>
    %cst_69 = arith.constant 1.000000e+00 : f32
    %171 = vector.broadcast %cst_69 : f32 to vector<2x32xf32>
    %172 = arith.subf %171, %165 : vector<2x32xf32>
    %173 = arith.mulf %172, %170 : vector<2x32xf32>
    %174 = arith.mulf %165, %86 : vector<2x32xf32>
    %175 = arith.addf %173, %174 : vector<2x32xf32>
    %c24_70 = arith.constant 24 : index
    %c0_71 = arith.constant 0 : index
    %176 = vector.load %arg4[%c24_70, %c0_71] : memref<64x128xf32, #tpu.memory_space<vmem>>, vector<32x128xf32>
    %cst_72 = arith.constant dense<0.000000e+00> : vector<2x128xf32>
    %177 = tpu.matmul %175, %176, %cst_72 {dimension_numbers = #tpu.dot_dimension_numbers<[1], [0], [0], [1], [0, 0, 1, 1], [], []>} : vector<2x32xf32>, vector<32x128xf32>, vector<2x128xf32> -> vector<2x128xf32>
    %c56_73 = arith.constant 56 : index
    %c0_74 = arith.constant 0 : index
    %178 = vector.load %arg4[%c56_73, %c0_74] : memref<64x128xf32, #tpu.memory_space<vmem>>, vector<1x128xf32>
    %179 = vector.broadcast %178 : vector<1x128xf32> to vector<2x128xf32>
    %180 = arith.addf %177, %179 : vector<2x128xf32>
    %181 = arith.index_cast %c2_i32 : i32 to index
    %c0_75 = arith.constant 0 : index
    %c0_76 = arith.constant 0 : index
    %182 = vector.load %arg6[%181, %c0_75, %c0_76] : memref<8x2x128xf32, #tpu.memory_space<vmem>>, vector<1x2x128xf32>
    %183 = vector.shape_cast %182 : vector<1x2x128xf32> to vector<2x128xf32>
    %184 = vector.shape_cast %180 : vector<2x128xf32> to vector<1x2x128xf32>
    tpu.vector_store %arg6[%181, %c0_75, %c0_76], %184 {strides = array<i32>} : memref<8x2x128xf32, #tpu.memory_space<vmem>>, vector<1x2x128xf32>,
    %185 = arith.index_cast %c2_i32 : i32 to index
    %c0_77 = arith.constant 0 : index
    %c0_78 = arith.constant 0 : index
    %186 = vector.load %arg8[%185, %c0_77, %c0_78] : memref<8x2x32xf32, #tpu.memory_space<vmem>>, vector<1x2x32xf32>
    %187 = vector.shape_cast %186 : vector<1x2x32xf32> to vector<2x32xf32>
    %188 = vector.shape_cast %175 : vector<2x32xf32> to vector<1x2x32xf32>
    tpu.vector_store %arg8[%185, %c0_77, %c0_78], %188 {strides = array<i32>} : memref<8x2x32xf32, #tpu.memory_space<vmem>>, vector<1x2x32xf32>,
    %cst_79 = arith.constant dense<0xFF800000> : vector<2xf32>
    %189 = vector.multi_reduction <maximumf>, %180, %cst_79 [1] : vector<2x128xf32> to vector<2xf32>
    %190 = vector.shape_cast %189 : vector<2xf32> to vector<2x1xf32>
    %191 = vector.broadcast %190 : vector<2x1xf32> to vector<2x128xf32>
    %192 = arith.cmpf oeq, %180, %191 : vector<2x128xf32>
    %c128_i32_80 = arith.constant 128 : i32
    %193 = vector.broadcast %c128_i32_80 : i32 to vector<2x128xi32>
    %194 = arith.select %192, %15, %193 : vector<2x128xi1>, vector<2x128xi32>
    %cst_81 = arith.constant dense<2147483647> : vector<2xi32>
    %195 = vector.multi_reduction <minsi>, %194, %cst_81 [1] : vector<2x128xi32> to vector<2xi32>
    %196 = vector.shape_cast %195 : vector<2xi32> to vector<2x1xi32>
    %c3_i32 = arith.constant 3 : i32
    %c0_82 = arith.constant 0 : index
    %c0_83 = arith.constant 0 : index
    %197 = vector.load %arg3[%c0_82, %c0_83] : memref<40x512xf32, #tpu.memory_space<vmem>>, vector<32x512xf32>
    %cst_84 = arith.constant dense<0.000000e+00> : vector<2x512xf32>
    %198 = tpu.matmul %175, %197, %cst_84 {dimension_numbers = #tpu.dot_dimension_numbers<[1], [0], [0], [1], [0, 0, 1, 1], [], []>} : vector<2x32xf32>, vector<32x512xf32>, vector<2x512xf32> -> vector<2x512xf32>
    %c32_85 = arith.constant 32 : index
    %c0_86 = arith.constant 0 : index
    %199 = vector.load %arg3[%c32_85, %c0_86] : memref<40x512xf32, #tpu.memory_space<vmem>>, vector<1x512xf32>
    %200 = vector.broadcast %199 : vector<1x512xf32> to vector<2x512xf32>
    %201 = arith.addf %198, %200 : vector<2x512xf32>
    %202 = vector.extract_strided_slice %201 {offsets = [0, 0], sizes = [2, 128], strides = [1, 1]} : vector<2x512xf32> to vector<2x128xf32>
    %203 = vector.shape_cast %202 : vector<2x128xf32> to vector<2x1x128xf32>
    %204 = vector.broadcast %203 : vector<2x1x128xf32> to vector<2x4x128xf32>
    %205 = arith.addf %204, %13 : vector<2x4x128xf32>
    %206 = math.tanh %205 : vector<2x4x128xf32>
    %207 = vector.broadcast %14 : vector<1x1x128xf32> to vector<2x4x128xf32>
    %208 = arith.mulf %206, %207 : vector<2x4x128xf32>
    %cst_87 = arith.constant dense<0.000000e+00> : vector<2x4xf32>
    %209 = vector.multi_reduction <add>, %208, %cst_87 [2] : vector<2x4x128xf32> to vector<2x4xf32>
    %cst_88 = arith.constant dense<0xFF800000> : vector<2xf32>
    %210 = vector.multi_reduction <maximumf>, %209, %cst_88 [1] : vector<2x4xf32> to vector<2xf32>
    %211 = vector.shape_cast %210 : vector<2xf32> to vector<2x1xf32>
    %212 = vector.broadcast %211 : vector<2x1xf32> to vector<2x4xf32>
    %213 = arith.subf %209, %212 : vector<2x4xf32>
    %214 = math.exp %213 : vector<2x4xf32>
    %cst_89 = arith.constant dense<0.000000e+00> : vector<2xf32>
    %215 = vector.multi_reduction <add>, %214, %cst_89 [1] : vector<2x4xf32> to vector<2xf32>
    %216 = vector.shape_cast %215 : vector<2xf32> to vector<2x1xf32>
    %217 = vector.broadcast %216 : vector<2x1xf32> to vector<2x4xf32>
    %218 = arith.divf %214, %217 : vector<2x4xf32>
    %219 = vector.shape_cast %218 : vector<2x4xf32> to vector<2x4x1xf32>
    %220 = vector.broadcast %219 : vector<2x4x1xf32> to vector<2x4x16xf32>
    %221 = arith.mulf %220, %8 : vector<2x4x16xf32>
    %cst_90 = arith.constant dense<0.000000e+00> : vector<2x16xf32>
    %222 = vector.multi_reduction <add>, %221, %cst_90 [1] : vector<2x4x16xf32> to vector<2x16xf32>
    %223 = vector.broadcast %196 : vector<2x1xi32> to vector<2x32xi32>
    %224 = arith.cmpi eq, %16, %223 : vector<2x32xi32>
    %225 = arith.extui %224 : vector<2x32xi1> to vector<2x32xi32>
    %226 = arith.sitofp %225 : vector<2x32xi32> to vector<2x32xf32>
    %c0_91 = arith.constant 0 : index
    %c0_92 = arith.constant 0 : index
    %227 = vector.load %arg2[%c0_91, %c0_92] : memref<56x384xf32, #tpu.memory_space<vmem>>, vector<32x384xf32>
    %cst_93 = arith.constant dense<0.000000e+00> : vector<2x384xf32>
    %228 = tpu.matmul %226, %227, %cst_93 {dimension_numbers = #tpu.dot_dimension_numbers<[1], [0], [0], [1], [0, 0, 1, 1], [], []>} : vector<2x32xf32>, vector<32x384xf32>, vector<2x384xf32> -> vector<2x384xf32>
    %c32_94 = arith.constant 32 : index
    %c0_95 = arith.constant 0 : index
    %229 = vector.load %arg2[%c32_94, %c0_95] : memref<56x384xf32, #tpu.memory_space<vmem>>, vector<16x384xf32>
    %cst_96 = arith.constant dense<0.000000e+00> : vector<2x384xf32>
    %230 = tpu.matmul %222, %229, %cst_96 {dimension_numbers = #tpu.dot_dimension_numbers<[1], [0], [0], [1], [0, 0, 1, 1], [], []>} : vector<2x16xf32>, vector<16x384xf32>, vector<2x384xf32> -> vector<2x384xf32>
    %231 = arith.addf %228, %230 : vector<2x384xf32>
    %c48_97 = arith.constant 48 : index
    %c0_98 = arith.constant 0 : index
    %232 = vector.load %arg2[%c48_97, %c0_98] : memref<56x384xf32, #tpu.memory_space<vmem>>, vector<1x384xf32>
    %233 = vector.broadcast %232 : vector<1x384xf32> to vector<2x384xf32>
    %234 = arith.addf %231, %233 : vector<2x384xf32>
    %235 = vector.extract_strided_slice %234 {offsets = [0, 0], sizes = [2, 32], strides = [1, 1]} : vector<2x384xf32> to vector<2x32xf32>
    %236 = vector.extract_strided_slice %201 {offsets = [0, 128], sizes = [2, 32], strides = [1, 1]} : vector<2x512xf32> to vector<2x32xf32>
    %237 = arith.addf %235, %236 : vector<2x32xf32>
    %cst_99 = arith.constant 0.000000e+00 : f32
    %238 = vector.broadcast %cst_99 : f32 to vector<2x32xf32>
    %239 = arith.subf %238, %237 : vector<2x32xf32>
    %240 = math.exp %239 : vector<2x32xf32>
    %cst_100 = arith.constant 1.000000e+00 : f32
    %241 = vector.broadcast %cst_100 : f32 to vector<2x32xf32>
    %242 = arith.addf %241, %240 : vector<2x32xf32>
    %cst_101 = arith.constant 1.000000e+00 : f32
    %243 = vector.broadcast %cst_101 : f32 to vector<2x32xf32>
    %244 = arith.divf %243, %242 : vector<2x32xf32>
    %245 = vector.extract_strided_slice %234 {offsets = [0, 128], sizes = [2, 32], strides = [1, 1]} : vector<2x384xf32> to vector<2x32xf32>
    %246 = vector.extract_strided_slice %201 {offsets = [0, 256], sizes = [2, 32], strides = [1, 1]} : vector<2x512xf32> to vector<2x32xf32>
    %247 = arith.addf %245, %246 : vector<2x32xf32>
    %cst_102 = arith.constant 0.000000e+00 : f32
    %248 = vector.broadcast %cst_102 : f32 to vector<2x32xf32>
    %249 = arith.subf %248, %247 : vector<2x32xf32>
    %250 = math.exp %249 : vector<2x32xf32>
    %cst_103 = arith.constant 1.000000e+00 : f32
    %251 = vector.broadcast %cst_103 : f32 to vector<2x32xf32>
    %252 = arith.addf %251, %250 : vector<2x32xf32>
    %cst_104 = arith.constant 1.000000e+00 : f32
    %253 = vector.broadcast %cst_104 : f32 to vector<2x32xf32>
    %254 = arith.divf %253, %252 : vector<2x32xf32>
    %255 = vector.extract_strided_slice %234 {offsets = [0, 256], sizes = [2, 32], strides = [1, 1]} : vector<2x384xf32> to vector<2x32xf32>
    %256 = vector.extract_strided_slice %201 {offsets = [0, 384], sizes = [2, 32], strides = [1, 1]} : vector<2x512xf32> to vector<2x32xf32>
    %257 = arith.mulf %244, %256 : vector<2x32xf32>
    %258 = arith.addf %255, %257 : vector<2x32xf32>
    %259 = math.tanh %258 : vector<2x32xf32>
    %cst_105 = arith.constant 1.000000e+00 : f32
    %260 = vector.broadcast %cst_105 : f32 to vector<2x32xf32>
    %261 = arith.subf %260, %254 : vector<2x32xf32>
    %262 = arith.mulf %261, %259 : vector<2x32xf32>
    %263 = arith.mulf %254, %175 : vector<2x32xf32>
    %264 = arith.addf %262, %263 : vector<2x32xf32>
    %c24_106 = arith.constant 24 : index
    %c0_107 = arith.constant 0 : index
    %265 = vector.load %arg4[%c24_106, %c0_107] : memref<64x128xf32, #tpu.memory_space<vmem>>, vector<32x128xf32>
    %cst_108 = arith.constant dense<0.000000e+00> : vector<2x128xf32>
    %266 = tpu.matmul %264, %265, %cst_108 {dimension_numbers = #tpu.dot_dimension_numbers<[1], [0], [0], [1], [0, 0, 1, 1], [], []>} : vector<2x32xf32>, vector<32x128xf32>, vector<2x128xf32> -> vector<2x128xf32>
    %c56_109 = arith.constant 56 : index
    %c0_110 = arith.constant 0 : index
    %267 = vector.load %arg4[%c56_109, %c0_110] : memref<64x128xf32, #tpu.memory_space<vmem>>, vector<1x128xf32>
    %268 = vector.broadcast %267 : vector<1x128xf32> to vector<2x128xf32>
    %269 = arith.addf %266, %268 : vector<2x128xf32>
    %270 = arith.index_cast %c3_i32 : i32 to index
    %c0_111 = arith.constant 0 : index
    %c0_112 = arith.constant 0 : index
    %271 = vector.load %arg6[%270, %c0_111, %c0_112] : memref<8x2x128xf32, #tpu.memory_space<vmem>>, vector<1x2x128xf32>
    %272 = vector.shape_cast %271 : vector<1x2x128xf32> to vector<2x128xf32>
    %273 = vector.shape_cast %269 : vector<2x128xf32> to vector<1x2x128xf32>
    tpu.vector_store %arg6[%270, %c0_111, %c0_112], %273 {strides = array<i32>} : memref<8x2x128xf32, #tpu.memory_space<vmem>>, vector<1x2x128xf32>,
    %274 = arith.index_cast %c3_i32 : i32 to index
    %c0_113 = arith.constant 0 : index
    %c0_114 = arith.constant 0 : index
    %275 = vector.load %arg8[%274, %c0_113, %c0_114] : memref<8x2x32xf32, #tpu.memory_space<vmem>>, vector<1x2x32xf32>
    %276 = vector.shape_cast %275 : vector<1x2x32xf32> to vector<2x32xf32>
    %277 = vector.shape_cast %264 : vector<2x32xf32> to vector<1x2x32xf32>
    tpu.vector_store %arg8[%274, %c0_113, %c0_114], %277 {strides = array<i32>} : memref<8x2x32xf32, #tpu.memory_space<vmem>>, vector<1x2x32xf32>,
    %cst_115 = arith.constant dense<0xFF800000> : vector<2xf32>
    %278 = vector.multi_reduction <maximumf>, %269, %cst_115 [1] : vector<2x128xf32> to vector<2xf32>
    %279 = vector.shape_cast %278 : vector<2xf32> to vector<2x1xf32>
    %280 = vector.broadcast %279 : vector<2x1xf32> to vector<2x128xf32>
    %281 = arith.cmpf oeq, %269, %280 : vector<2x128xf32>
    %c128_i32_116 = arith.constant 128 : i32
    %282 = vector.broadcast %c128_i32_116 : i32 to vector<2x128xi32>
    %283 = arith.select %281, %15, %282 : vector<2x128xi1>, vector<2x128xi32>
    %cst_117 = arith.constant dense<2147483647> : vector<2xi32>
    %284 = vector.multi_reduction <minsi>, %283, %cst_117 [1] : vector<2x128xi32> to vector<2xi32>
    %285 = vector.shape_cast %284 : vector<2xi32> to vector<2x1xi32>
    %c4_i32 = arith.constant 4 : i32
    %c0_118 = arith.constant 0 : index
    %c0_119 = arith.constant 0 : index
    %286 = vector.load %arg3[%c0_118, %c0_119] : memref<40x512xf32, #tpu.memory_space<vmem>>, vector<32x512xf32>
    %cst_120 = arith.constant dense<0.000000e+00> : vector<2x512xf32>
    %287 = tpu.matmul %264, %286, %cst_120 {dimension_numbers = #tpu.dot_dimension_numbers<[1], [0], [0], [1], [0, 0, 1, 1], [], []>} : vector<2x32xf32>, vector<32x512xf32>, vector<2x512xf32> -> vector<2x512xf32>
    %c32_121 = arith.constant 32 : index
    %c0_122 = arith.constant 0 : index
    %288 = vector.load %arg3[%c32_121, %c0_122] : memref<40x512xf32, #tpu.memory_space<vmem>>, vector<1x512xf32>
    %289 = vector.broadcast %288 : vector<1x512xf32> to vector<2x512xf32>
    %290 = arith.addf %287, %289 : vector<2x512xf32>
    %291 = vector.extract_strided_slice %290 {offsets = [0, 0], sizes = [2, 128], strides = [1, 1]} : vector<2x512xf32> to vector<2x128xf32>
    %292 = vector.shape_cast %291 : vector<2x128xf32> to vector<2x1x128xf32>
    %293 = vector.broadcast %292 : vector<2x1x128xf32> to vector<2x4x128xf32>
    %294 = arith.addf %293, %13 : vector<2x4x128xf32>
    %295 = math.tanh %294 : vector<2x4x128xf32>
    %296 = vector.broadcast %14 : vector<1x1x128xf32> to vector<2x4x128xf32>
    %297 = arith.mulf %295, %296 : vector<2x4x128xf32>
    %cst_123 = arith.constant dense<0.000000e+00> : vector<2x4xf32>
    %298 = vector.multi_reduction <add>, %297, %cst_123 [2] : vector<2x4x128xf32> to vector<2x4xf32>
    %cst_124 = arith.constant dense<0xFF800000> : vector<2xf32>
    %299 = vector.multi_reduction <maximumf>, %298, %cst_124 [1] : vector<2x4xf32> to vector<2xf32>
    %300 = vector.shape_cast %299 : vector<2xf32> to vector<2x1xf32>
    %301 = vector.broadcast %300 : vector<2x1xf32> to vector<2x4xf32>
    %302 = arith.subf %298, %301 : vector<2x4xf32>
    %303 = math.exp %302 : vector<2x4xf32>
    %cst_125 = arith.constant dense<0.000000e+00> : vector<2xf32>
    %304 = vector.multi_reduction <add>, %303, %cst_125 [1] : vector<2x4xf32> to vector<2xf32>
    %305 = vector.shape_cast %304 : vector<2xf32> to vector<2x1xf32>
    %306 = vector.broadcast %305 : vector<2x1xf32> to vector<2x4xf32>
    %307 = arith.divf %303, %306 : vector<2x4xf32>
    %308 = vector.shape_cast %307 : vector<2x4xf32> to vector<2x4x1xf32>
    %309 = vector.broadcast %308 : vector<2x4x1xf32> to vector<2x4x16xf32>
    %310 = arith.mulf %309, %8 : vector<2x4x16xf32>
    %cst_126 = arith.constant dense<0.000000e+00> : vector<2x16xf32>
    %311 = vector.multi_reduction <add>, %310, %cst_126 [1] : vector<2x4x16xf32> to vector<2x16xf32>
    %312 = vector.broadcast %285 : vector<2x1xi32> to vector<2x32xi32>
    %313 = arith.cmpi eq, %16, %312 : vector<2x32xi32>
    %314 = arith.extui %313 : vector<2x32xi1> to vector<2x32xi32>
    %315 = arith.sitofp %314 : vector<2x32xi32> to vector<2x32xf32>
    %c0_127 = arith.constant 0 : index
    %c0_128 = arith.constant 0 : index
    %316 = vector.load %arg2[%c0_127, %c0_128] : memref<56x384xf32, #tpu.memory_space<vmem>>, vector<32x384xf32>
    %cst_129 = arith.constant dense<0.000000e+00> : vector<2x384xf32>
    %317 = tpu.matmul %315, %316, %cst_129 {dimension_numbers = #tpu.dot_dimension_numbers<[1], [0], [0], [1], [0, 0, 1, 1], [], []>} : vector<2x32xf32>, vector<32x384xf32>, vector<2x384xf32> -> vector<2x384xf32>
    %c32_130 = arith.constant 32 : index
    %c0_131 = arith.constant 0 : index
    %318 = vector.load %arg2[%c32_130, %c0_131] : memref<56x384xf32, #tpu.memory_space<vmem>>, vector<16x384xf32>
    %cst_132 = arith.constant dense<0.000000e+00> : vector<2x384xf32>
    %319 = tpu.matmul %311, %318, %cst_132 {dimension_numbers = #tpu.dot_dimension_numbers<[1], [0], [0], [1], [0, 0, 1, 1], [], []>} : vector<2x16xf32>, vector<16x384xf32>, vector<2x384xf32> -> vector<2x384xf32>
    %320 = arith.addf %317, %319 : vector<2x384xf32>
    %c48_133 = arith.constant 48 : index
    %c0_134 = arith.constant 0 : index
    %321 = vector.load %arg2[%c48_133, %c0_134] : memref<56x384xf32, #tpu.memory_space<vmem>>, vector<1x384xf32>
    %322 = vector.broadcast %321 : vector<1x384xf32> to vector<2x384xf32>
    %323 = arith.addf %320, %322 : vector<2x384xf32>
    %324 = vector.extract_strided_slice %323 {offsets = [0, 0], sizes = [2, 32], strides = [1, 1]} : vector<2x384xf32> to vector<2x32xf32>
    %325 = vector.extract_strided_slice %290 {offsets = [0, 128], sizes = [2, 32], strides = [1, 1]} : vector<2x512xf32> to vector<2x32xf32>
    %326 = arith.addf %324, %325 : vector<2x32xf32>
    %cst_135 = arith.constant 0.000000e+00 : f32
    %327 = vector.broadcast %cst_135 : f32 to vector<2x32xf32>
    %328 = arith.subf %327, %326 : vector<2x32xf32>
    %329 = math.exp %328 : vector<2x32xf32>
    %cst_136 = arith.constant 1.000000e+00 : f32
    %330 = vector.broadcast %cst_136 : f32 to vector<2x32xf32>
    %331 = arith.addf %330, %329 : vector<2x32xf32>
    %cst_137 = arith.constant 1.000000e+00 : f32
    %332 = vector.broadcast %cst_137 : f32 to vector<2x32xf32>
    %333 = arith.divf %332, %331 : vector<2x32xf32>
    %334 = vector.extract_strided_slice %323 {offsets = [0, 128], sizes = [2, 32], strides = [1, 1]} : vector<2x384xf32> to vector<2x32xf32>
    %335 = vector.extract_strided_slice %290 {offsets = [0, 256], sizes = [2, 32], strides = [1, 1]} : vector<2x512xf32> to vector<2x32xf32>
    %336 = arith.addf %334, %335 : vector<2x32xf32>
    %cst_138 = arith.constant 0.000000e+00 : f32
    %337 = vector.broadcast %cst_138 : f32 to vector<2x32xf32>
    %338 = arith.subf %337, %336 : vector<2x32xf32>
    %339 = math.exp %338 : vector<2x32xf32>
    %cst_139 = arith.constant 1.000000e+00 : f32
    %340 = vector.broadcast %cst_139 : f32 to vector<2x32xf32>
    %341 = arith.addf %340, %339 : vector<2x32xf32>
    %cst_140 = arith.constant 1.000000e+00 : f32
    %342 = vector.broadcast %cst_140 : f32 to vector<2x32xf32>
    %343 = arith.divf %342, %341 : vector<2x32xf32>
    %344 = vector.extract_strided_slice %323 {offsets = [0, 256], sizes = [2, 32], strides = [1, 1]} : vector<2x384xf32> to vector<2x32xf32>
    %345 = vector.extract_strided_slice %290 {offsets = [0, 384], sizes = [2, 32], strides = [1, 1]} : vector<2x512xf32> to vector<2x32xf32>
    %346 = arith.mulf %333, %345 : vector<2x32xf32>
    %347 = arith.addf %344, %346 : vector<2x32xf32>
    %348 = math.tanh %347 : vector<2x32xf32>
    %cst_141 = arith.constant 1.000000e+00 : f32
    %349 = vector.broadcast %cst_141 : f32 to vector<2x32xf32>
    %350 = arith.subf %349, %343 : vector<2x32xf32>
    %351 = arith.mulf %350, %348 : vector<2x32xf32>
    %352 = arith.mulf %343, %264 : vector<2x32xf32>
    %353 = arith.addf %351, %352 : vector<2x32xf32>
    %c24_142 = arith.constant 24 : index
    %c0_143 = arith.constant 0 : index
    %354 = vector.load %arg4[%c24_142, %c0_143] : memref<64x128xf32, #tpu.memory_space<vmem>>, vector<32x128xf32>
    %cst_144 = arith.constant dense<0.000000e+00> : vector<2x128xf32>
    %355 = tpu.matmul %353, %354, %cst_144 {dimension_numbers = #tpu.dot_dimension_numbers<[1], [0], [0], [1], [0, 0, 1, 1], [], []>} : vector<2x32xf32>, vector<32x128xf32>, vector<2x128xf32> -> vector<2x128xf32>
    %c56_145 = arith.constant 56 : index
    %c0_146 = arith.constant 0 : index
    %356 = vector.load %arg4[%c56_145, %c0_146] : memref<64x128xf32, #tpu.memory_space<vmem>>, vector<1x128xf32>
    %357 = vector.broadcast %356 : vector<1x128xf32> to vector<2x128xf32>
    %358 = arith.addf %355, %357 : vector<2x128xf32>
    %359 = arith.index_cast %c4_i32 : i32 to index
    %c0_147 = arith.constant 0 : index
    %c0_148 = arith.constant 0 : index
    %360 = vector.load %arg6[%359, %c0_147, %c0_148] : memref<8x2x128xf32, #tpu.memory_space<vmem>>, vector<1x2x128xf32>
    %361 = vector.shape_cast %360 : vector<1x2x128xf32> to vector<2x128xf32>
    %362 = vector.shape_cast %358 : vector<2x128xf32> to vector<1x2x128xf32>
    tpu.vector_store %arg6[%359, %c0_147, %c0_148], %362 {strides = array<i32>} : memref<8x2x128xf32, #tpu.memory_space<vmem>>, vector<1x2x128xf32>,
    %363 = arith.index_cast %c4_i32 : i32 to index
    %c0_149 = arith.constant 0 : index
    %c0_150 = arith.constant 0 : index
    %364 = vector.load %arg8[%363, %c0_149, %c0_150] : memref<8x2x32xf32, #tpu.memory_space<vmem>>, vector<1x2x32xf32>
    %365 = vector.shape_cast %364 : vector<1x2x32xf32> to vector<2x32xf32>
    %366 = vector.shape_cast %353 : vector<2x32xf32> to vector<1x2x32xf32>
    tpu.vector_store %arg8[%363, %c0_149, %c0_150], %366 {strides = array<i32>} : memref<8x2x32xf32, #tpu.memory_space<vmem>>, vector<1x2x32xf32>,
    %cst_151 = arith.constant dense<0xFF800000> : vector<2xf32>
    %367 = vector.multi_reduction <maximumf>, %358, %cst_151 [1] : vector<2x128xf32> to vector<2xf32>
    %368 = vector.shape_cast %367 : vector<2xf32> to vector<2x1xf32>
    %369 = vector.broadcast %368 : vector<2x1xf32> to vector<2x128xf32>
    %370 = arith.cmpf oeq, %358, %369 : vector<2x128xf32>
    %c128_i32_152 = arith.constant 128 : i32
    %371 = vector.broadcast %c128_i32_152 : i32 to vector<2x128xi32>
    %372 = arith.select %370, %15, %371 : vector<2x128xi1>, vector<2x128xi32>
    %cst_153 = arith.constant dense<2147483647> : vector<2xi32>
    %373 = vector.multi_reduction <minsi>, %372, %cst_153 [1] : vector<2x128xi32> to vector<2xi32>
    %374 = vector.shape_cast %373 : vector<2xi32> to vector<2x1xi32>
    %c5_i32 = arith.constant 5 : i32
    %c0_154 = arith.constant 0 : index
    %c0_155 = arith.constant 0 : index
    %375 = vector.load %arg3[%c0_154, %c0_155] : memref<40x512xf32, #tpu.memory_space<vmem>>, vector<32x512xf32>
    %cst_156 = arith.constant dense<0.000000e+00> : vector<2x512xf32>
    %376 = tpu.matmul %353, %375, %cst_156 {dimension_numbers = #tpu.dot_dimension_numbers<[1], [0], [0], [1], [0, 0, 1, 1], [], []>} : vector<2x32xf32>, vector<32x512xf32>, vector<2x512xf32> -> vector<2x512xf32>
    %c32_157 = arith.constant 32 : index
    %c0_158 = arith.constant 0 : index
    %377 = vector.load %arg3[%c32_157, %c0_158] : memref<40x512xf32, #tpu.memory_space<vmem>>, vector<1x512xf32>
    %378 = vector.broadcast %377 : vector<1x512xf32> to vector<2x512xf32>
    %379 = arith.addf %376, %378 : vector<2x512xf32>
    %380 = vector.extract_strided_slice %379 {offsets = [0, 0], sizes = [2, 128], strides = [1, 1]} : vector<2x512xf32> to vector<2x128xf32>
    %381 = vector.shape_cast %380 : vector<2x128xf32> to vector<2x1x128xf32>
    %382 = vector.broadcast %381 : vector<2x1x128xf32> to vector<2x4x128xf32>
    %383 = arith.addf %382, %13 : vector<2x4x128xf32>
    %384 = math.tanh %383 : vector<2x4x128xf32>
    %385 = vector.broadcast %14 : vector<1x1x128xf32> to vector<2x4x128xf32>
    %386 = arith.mulf %384, %385 : vector<2x4x128xf32>
    %cst_159 = arith.constant dense<0.000000e+00> : vector<2x4xf32>
    %387 = vector.multi_reduction <add>, %386, %cst_159 [2] : vector<2x4x128xf32> to vector<2x4xf32>
    %cst_160 = arith.constant dense<0xFF800000> : vector<2xf32>
    %388 = vector.multi_reduction <maximumf>, %387, %cst_160 [1] : vector<2x4xf32> to vector<2xf32>
    %389 = vector.shape_cast %388 : vector<2xf32> to vector<2x1xf32>
    %390 = vector.broadcast %389 : vector<2x1xf32> to vector<2x4xf32>
    %391 = arith.subf %387, %390 : vector<2x4xf32>
    %392 = math.exp %391 : vector<2x4xf32>
    %cst_161 = arith.constant dense<0.000000e+00> : vector<2xf32>
    %393 = vector.multi_reduction <add>, %392, %cst_161 [1] : vector<2x4xf32> to vector<2xf32>
    %394 = vector.shape_cast %393 : vector<2xf32> to vector<2x1xf32>
    %395 = vector.broadcast %394 : vector<2x1xf32> to vector<2x4xf32>
    %396 = arith.divf %392, %395 : vector<2x4xf32>
    %397 = vector.shape_cast %396 : vector<2x4xf32> to vector<2x4x1xf32>
    %398 = vector.broadcast %397 : vector<2x4x1xf32> to vector<2x4x16xf32>
    %399 = arith.mulf %398, %8 : vector<2x4x16xf32>
    %cst_162 = arith.constant dense<0.000000e+00> : vector<2x16xf32>
    %400 = vector.multi_reduction <add>, %399, %cst_162 [1] : vector<2x4x16xf32> to vector<2x16xf32>
    %401 = vector.broadcast %374 : vector<2x1xi32> to vector<2x32xi32>
    %402 = arith.cmpi eq, %16, %401 : vector<2x32xi32>
    %403 = arith.extui %402 : vector<2x32xi1> to vector<2x32xi32>
    %404 = arith.sitofp %403 : vector<2x32xi32> to vector<2x32xf32>
    %c0_163 = arith.constant 0 : index
    %c0_164 = arith.constant 0 : index
    %405 = vector.load %arg2[%c0_163, %c0_164] : memref<56x384xf32, #tpu.memory_space<vmem>>, vector<32x384xf32>
    %cst_165 = arith.constant dense<0.000000e+00> : vector<2x384xf32>
    %406 = tpu.matmul %404, %405, %cst_165 {dimension_numbers = #tpu.dot_dimension_numbers<[1], [0], [0], [1], [0, 0, 1, 1], [], []>} : vector<2x32xf32>, vector<32x384xf32>, vector<2x384xf32> -> vector<2x384xf32>
    %c32_166 = arith.constant 32 : index
    %c0_167 = arith.constant 0 : index
    %407 = vector.load %arg2[%c32_166, %c0_167] : memref<56x384xf32, #tpu.memory_space<vmem>>, vector<16x384xf32>
    %cst_168 = arith.constant dense<0.000000e+00> : vector<2x384xf32>
    %408 = tpu.matmul %400, %407, %cst_168 {dimension_numbers = #tpu.dot_dimension_numbers<[1], [0], [0], [1], [0, 0, 1, 1], [], []>} : vector<2x16xf32>, vector<16x384xf32>, vector<2x384xf32> -> vector<2x384xf32>
    %409 = arith.addf %406, %408 : vector<2x384xf32>
    %c48_169 = arith.constant 48 : index
    %c0_170 = arith.constant 0 : index
    %410 = vector.load %arg2[%c48_169, %c0_170] : memref<56x384xf32, #tpu.memory_space<vmem>>, vector<1x384xf32>
    %411 = vector.broadcast %410 : vector<1x384xf32> to vector<2x384xf32>
    %412 = arith.addf %409, %411 : vector<2x384xf32>
    %413 = vector.extract_strided_slice %412 {offsets = [0, 0], sizes = [2, 32], strides = [1, 1]} : vector<2x384xf32> to vector<2x32xf32>
    %414 = vector.extract_strided_slice %379 {offsets = [0, 128], sizes = [2, 32], strides = [1, 1]} : vector<2x512xf32> to vector<2x32xf32>
    %415 = arith.addf %413, %414 : vector<2x32xf32>
    %cst_171 = arith.constant 0.000000e+00 : f32
    %416 = vector.broadcast %cst_171 : f32 to vector<2x32xf32>
    %417 = arith.subf %416, %415 : vector<2x32xf32>
    %418 = math.exp %417 : vector<2x32xf32>
    %cst_172 = arith.constant 1.000000e+00 : f32
    %419 = vector.broadcast %cst_172 : f32 to vector<2x32xf32>
    %420 = arith.addf %419, %418 : vector<2x32xf32>
    %cst_173 = arith.constant 1.000000e+00 : f32
    %421 = vector.broadcast %cst_173 : f32 to vector<2x32xf32>
    %422 = arith.divf %421, %420 : vector<2x32xf32>
    %423 = vector.extract_strided_slice %412 {offsets = [0, 128], sizes = [2, 32], strides = [1, 1]} : vector<2x384xf32> to vector<2x32xf32>
    %424 = vector.extract_strided_slice %379 {offsets = [0, 256], sizes = [2, 32], strides = [1, 1]} : vector<2x512xf32> to vector<2x32xf32>
    %425 = arith.addf %423, %424 : vector<2x32xf32>
    %cst_174 = arith.constant 0.000000e+00 : f32
    %426 = vector.broadcast %cst_174 : f32 to vector<2x32xf32>
    %427 = arith.subf %426, %425 : vector<2x32xf32>
    %428 = math.exp %427 : vector<2x32xf32>
    %cst_175 = arith.constant 1.000000e+00 : f32
    %429 = vector.broadcast %cst_175 : f32 to vector<2x32xf32>
    %430 = arith.addf %429, %428 : vector<2x32xf32>
    %cst_176 = arith.constant 1.000000e+00 : f32
    %431 = vector.broadcast %cst_176 : f32 to vector<2x32xf32>
    %432 = arith.divf %431, %430 : vector<2x32xf32>
    %433 = vector.extract_strided_slice %412 {offsets = [0, 256], sizes = [2, 32], strides = [1, 1]} : vector<2x384xf32> to vector<2x32xf32>
    %434 = vector.extract_strided_slice %379 {offsets = [0, 384], sizes = [2, 32], strides = [1, 1]} : vector<2x512xf32> to vector<2x32xf32>
    %435 = arith.mulf %422, %434 : vector<2x32xf32>
    %436 = arith.addf %433, %435 : vector<2x32xf32>
    %437 = math.tanh %436 : vector<2x32xf32>
    %cst_177 = arith.constant 1.000000e+00 : f32
    %438 = vector.broadcast %cst_177 : f32 to vector<2x32xf32>
    %439 = arith.subf %438, %432 : vector<2x32xf32>
    %440 = arith.mulf %439, %437 : vector<2x32xf32>
    %441 = arith.mulf %432, %353 : vector<2x32xf32>
    %442 = arith.addf %440, %441 : vector<2x32xf32>
    %c24_178 = arith.constant 24 : index
    %c0_179 = arith.constant 0 : index
    %443 = vector.load %arg4[%c24_178, %c0_179] : memref<64x128xf32, #tpu.memory_space<vmem>>, vector<32x128xf32>
    %cst_180 = arith.constant dense<0.000000e+00> : vector<2x128xf32>
    %444 = tpu.matmul %442, %443, %cst_180 {dimension_numbers = #tpu.dot_dimension_numbers<[1], [0], [0], [1], [0, 0, 1, 1], [], []>} : vector<2x32xf32>, vector<32x128xf32>, vector<2x128xf32> -> vector<2x128xf32>
    %c56_181 = arith.constant 56 : index
    %c0_182 = arith.constant 0 : index
    %445 = vector.load %arg4[%c56_181, %c0_182] : memref<64x128xf32, #tpu.memory_space<vmem>>, vector<1x128xf32>
    %446 = vector.broadcast %445 : vector<1x128xf32> to vector<2x128xf32>
    %447 = arith.addf %444, %446 : vector<2x128xf32>
    %448 = arith.index_cast %c5_i32 : i32 to index
    %c0_183 = arith.constant 0 : index
    %c0_184 = arith.constant 0 : index
    %449 = vector.load %arg6[%448, %c0_183, %c0_184] : memref<8x2x128xf32, #tpu.memory_space<vmem>>, vector<1x2x128xf32>
    %450 = vector.shape_cast %449 : vector<1x2x128xf32> to vector<2x128xf32>
    %451 = vector.shape_cast %447 : vector<2x128xf32> to vector<1x2x128xf32>
    tpu.vector_store %arg6[%448, %c0_183, %c0_184], %451 {strides = array<i32>} : memref<8x2x128xf32, #tpu.memory_space<vmem>>, vector<1x2x128xf32>,
    %452 = arith.index_cast %c5_i32 : i32 to index
    %c0_185 = arith.constant 0 : index
    %c0_186 = arith.constant 0 : index
    %453 = vector.load %arg8[%452, %c0_185, %c0_186] : memref<8x2x32xf32, #tpu.memory_space<vmem>>, vector<1x2x32xf32>
    %454 = vector.shape_cast %453 : vector<1x2x32xf32> to vector<2x32xf32>
    %455 = vector.shape_cast %442 : vector<2x32xf32> to vector<1x2x32xf32>
    tpu.vector_store %arg8[%452, %c0_185, %c0_186], %455 {strides = array<i32>} : memref<8x2x32xf32, #tpu.memory_space<vmem>>, vector<1x2x32xf32>,
    %cst_187 = arith.constant dense<0xFF800000> : vector<2xf32>
    %456 = vector.multi_reduction <maximumf>, %447, %cst_187 [1] : vector<2x128xf32> to vector<2xf32>
    %457 = vector.shape_cast %456 : vector<2xf32> to vector<2x1xf32>
    %458 = vector.broadcast %457 : vector<2x1xf32> to vector<2x128xf32>
    %459 = arith.cmpf oeq, %447, %458 : vector<2x128xf32>
    %c128_i32_188 = arith.constant 128 : i32
    %460 = vector.broadcast %c128_i32_188 : i32 to vector<2x128xi32>
    %461 = arith.select %459, %15, %460 : vector<2x128xi1>, vector<2x128xi32>
    %cst_189 = arith.constant dense<2147483647> : vector<2xi32>
    %462 = vector.multi_reduction <minsi>, %461, %cst_189 [1] : vector<2x128xi32> to vector<2xi32>
    %463 = vector.shape_cast %462 : vector<2xi32> to vector<2x1xi32>
    %c6_i32 = arith.constant 6 : i32
    %c0_190 = arith.constant 0 : index
    %c0_191 = arith.constant 0 : index
    %464 = vector.load %arg3[%c0_190, %c0_191] : memref<40x512xf32, #tpu.memory_space<vmem>>, vector<32x512xf32>
    %cst_192 = arith.constant dense<0.000000e+00> : vector<2x512xf32>
    %465 = tpu.matmul %442, %464, %cst_192 {dimension_numbers = #tpu.dot_dimension_numbers<[1], [0], [0], [1], [0, 0, 1, 1], [], []>} : vector<2x32xf32>, vector<32x512xf32>, vector<2x512xf32> -> vector<2x512xf32>
    %c32_193 = arith.constant 32 : index
    %c0_194 = arith.constant 0 : index
    %466 = vector.load %arg3[%c32_193, %c0_194] : memref<40x512xf32, #tpu.memory_space<vmem>>, vector<1x512xf32>
    %467 = vector.broadcast %466 : vector<1x512xf32> to vector<2x512xf32>
    %468 = arith.addf %465, %467 : vector<2x512xf32>
    %469 = vector.extract_strided_slice %468 {offsets = [0, 0], sizes = [2, 128], strides = [1, 1]} : vector<2x512xf32> to vector<2x128xf32>
    %470 = vector.shape_cast %469 : vector<2x128xf32> to vector<2x1x128xf32>
    %471 = vector.broadcast %470 : vector<2x1x128xf32> to vector<2x4x128xf32>
    %472 = arith.addf %471, %13 : vector<2x4x128xf32>
    %473 = math.tanh %472 : vector<2x4x128xf32>
    %474 = vector.broadcast %14 : vector<1x1x128xf32> to vector<2x4x128xf32>
    %475 = arith.mulf %473, %474 : vector<2x4x128xf32>
    %cst_195 = arith.constant dense<0.000000e+00> : vector<2x4xf32>
    %476 = vector.multi_reduction <add>, %475, %cst_195 [2] : vector<2x4x128xf32> to vector<2x4xf32>
    %cst_196 = arith.constant dense<0xFF800000> : vector<2xf32>
    %477 = vector.multi_reduction <maximumf>, %476, %cst_196 [1] : vector<2x4xf32> to vector<2xf32>
    %478 = vector.shape_cast %477 : vector<2xf32> to vector<2x1xf32>
    %479 = vector.broadcast %478 : vector<2x1xf32> to vector<2x4xf32>
    %480 = arith.subf %476, %479 : vector<2x4xf32>
    %481 = math.exp %480 : vector<2x4xf32>
    %cst_197 = arith.constant dense<0.000000e+00> : vector<2xf32>
    %482 = vector.multi_reduction <add>, %481, %cst_197 [1] : vector<2x4xf32> to vector<2xf32>
    %483 = vector.shape_cast %482 : vector<2xf32> to vector<2x1xf32>
    %484 = vector.broadcast %483 : vector<2x1xf32> to vector<2x4xf32>
    %485 = arith.divf %481, %484 : vector<2x4xf32>
    %486 = vector.shape_cast %485 : vector<2x4xf32> to vector<2x4x1xf32>
    %487 = vector.broadcast %486 : vector<2x4x1xf32> to vector<2x4x16xf32>
    %488 = arith.mulf %487, %8 : vector<2x4x16xf32>
    %cst_198 = arith.constant dense<0.000000e+00> : vector<2x16xf32>
    %489 = vector.multi_reduction <add>, %488, %cst_198 [1] : vector<2x4x16xf32> to vector<2x16xf32>
    %490 = vector.broadcast %463 : vector<2x1xi32> to vector<2x32xi32>
    %491 = arith.cmpi eq, %16, %490 : vector<2x32xi32>
    %492 = arith.extui %491 : vector<2x32xi1> to vector<2x32xi32>
    %493 = arith.sitofp %492 : vector<2x32xi32> to vector<2x32xf32>
    %c0_199 = arith.constant 0 : index
    %c0_200 = arith.constant 0 : index
    %494 = vector.load %arg2[%c0_199, %c0_200] : memref<56x384xf32, #tpu.memory_space<vmem>>, vector<32x384xf32>
    %cst_201 = arith.constant dense<0.000000e+00> : vector<2x384xf32>
    %495 = tpu.matmul %493, %494, %cst_201 {dimension_numbers = #tpu.dot_dimension_numbers<[1], [0], [0], [1], [0, 0, 1, 1], [], []>} : vector<2x32xf32>, vector<32x384xf32>, vector<2x384xf32> -> vector<2x384xf32>
    %c32_202 = arith.constant 32 : index
    %c0_203 = arith.constant 0 : index
    %496 = vector.load %arg2[%c32_202, %c0_203] : memref<56x384xf32, #tpu.memory_space<vmem>>, vector<16x384xf32>
    %cst_204 = arith.constant dense<0.000000e+00> : vector<2x384xf32>
    %497 = tpu.matmul %489, %496, %cst_204 {dimension_numbers = #tpu.dot_dimension_numbers<[1], [0], [0], [1], [0, 0, 1, 1], [], []>} : vector<2x16xf32>, vector<16x384xf32>, vector<2x384xf32> -> vector<2x384xf32>
    %498 = arith.addf %495, %497 : vector<2x384xf32>
    %c48_205 = arith.constant 48 : index
    %c0_206 = arith.constant 0 : index
    %499 = vector.load %arg2[%c48_205, %c0_206] : memref<56x384xf32, #tpu.memory_space<vmem>>, vector<1x384xf32>
    %500 = vector.broadcast %499 : vector<1x384xf32> to vector<2x384xf32>
    %501 = arith.addf %498, %500 : vector<2x384xf32>
    %502 = vector.extract_strided_slice %501 {offsets = [0, 0], sizes = [2, 32], strides = [1, 1]} : vector<2x384xf32> to vector<2x32xf32>
    %503 = vector.extract_strided_slice %468 {offsets = [0, 128], sizes = [2, 32], strides = [1, 1]} : vector<2x512xf32> to vector<2x32xf32>
    %504 = arith.addf %502, %503 : vector<2x32xf32>
    %cst_207 = arith.constant 0.000000e+00 : f32
    %505 = vector.broadcast %cst_207 : f32 to vector<2x32xf32>
    %506 = arith.subf %505, %504 : vector<2x32xf32>
    %507 = math.exp %506 : vector<2x32xf32>
    %cst_208 = arith.constant 1.000000e+00 : f32
    %508 = vector.broadcast %cst_208 : f32 to vector<2x32xf32>
    %509 = arith.addf %508, %507 : vector<2x32xf32>
    %cst_209 = arith.constant 1.000000e+00 : f32
    %510 = vector.broadcast %cst_209 : f32 to vector<2x32xf32>
    %511 = arith.divf %510, %509 : vector<2x32xf32>
    %512 = vector.extract_strided_slice %501 {offsets = [0, 128], sizes = [2, 32], strides = [1, 1]} : vector<2x384xf32> to vector<2x32xf32>
    %513 = vector.extract_strided_slice %468 {offsets = [0, 256], sizes = [2, 32], strides = [1, 1]} : vector<2x512xf32> to vector<2x32xf32>
    %514 = arith.addf %512, %513 : vector<2x32xf32>
    %cst_210 = arith.constant 0.000000e+00 : f32
    %515 = vector.broadcast %cst_210 : f32 to vector<2x32xf32>
    %516 = arith.subf %515, %514 : vector<2x32xf32>
    %517 = math.exp %516 : vector<2x32xf32>
    %cst_211 = arith.constant 1.000000e+00 : f32
    %518 = vector.broadcast %cst_211 : f32 to vector<2x32xf32>
    %519 = arith.addf %518, %517 : vector<2x32xf32>
    %cst_212 = arith.constant 1.000000e+00 : f32
    %520 = vector.broadcast %cst_212 : f32 to vector<2x32xf32>
    %521 = arith.divf %520, %519 : vector<2x32xf32>
    %522 = vector.extract_strided_slice %501 {offsets = [0, 256], sizes = [2, 32], strides = [1, 1]} : vector<2x384xf32> to vector<2x32xf32>
    %523 = vector.extract_strided_slice %468 {offsets = [0, 384], sizes = [2, 32], strides = [1, 1]} : vector<2x512xf32> to vector<2x32xf32>
    %524 = arith.mulf %511, %523 : vector<2x32xf32>
    %525 = arith.addf %522, %524 : vector<2x32xf32>
    %526 = math.tanh %525 : vector<2x32xf32>
    %cst_213 = arith.constant 1.000000e+00 : f32
    %527 = vector.broadcast %cst_213 : f32 to vector<2x32xf32>
    %528 = arith.subf %527, %521 : vector<2x32xf32>
    %529 = arith.mulf %528, %526 : vector<2x32xf32>
    %530 = arith.mulf %521, %442 : vector<2x32xf32>
    %531 = arith.addf %529, %530 : vector<2x32xf32>
    %c24_214 = arith.constant 24 : index
    %c0_215 = arith.constant 0 : index
    %532 = vector.load %arg4[%c24_214, %c0_215] : memref<64x128xf32, #tpu.memory_space<vmem>>, vector<32x128xf32>
    %cst_216 = arith.constant dense<0.000000e+00> : vector<2x128xf32>
    %533 = tpu.matmul %531, %532, %cst_216 {dimension_numbers = #tpu.dot_dimension_numbers<[1], [0], [0], [1], [0, 0, 1, 1], [], []>} : vector<2x32xf32>, vector<32x128xf32>, vector<2x128xf32> -> vector<2x128xf32>
    %c56_217 = arith.constant 56 : index
    %c0_218 = arith.constant 0 : index
    %534 = vector.load %arg4[%c56_217, %c0_218] : memref<64x128xf32, #tpu.memory_space<vmem>>, vector<1x128xf32>
    %535 = vector.broadcast %534 : vector<1x128xf32> to vector<2x128xf32>
    %536 = arith.addf %533, %535 : vector<2x128xf32>
    %537 = arith.index_cast %c6_i32 : i32 to index
    %c0_219 = arith.constant 0 : index
    %c0_220 = arith.constant 0 : index
    %538 = vector.load %arg6[%537, %c0_219, %c0_220] : memref<8x2x128xf32, #tpu.memory_space<vmem>>, vector<1x2x128xf32>
    %539 = vector.shape_cast %538 : vector<1x2x128xf32> to vector<2x128xf32>
    %540 = vector.shape_cast %536 : vector<2x128xf32> to vector<1x2x128xf32>
    tpu.vector_store %arg6[%537, %c0_219, %c0_220], %540 {strides = array<i32>} : memref<8x2x128xf32, #tpu.memory_space<vmem>>, vector<1x2x128xf32>,
    %541 = arith.index_cast %c6_i32 : i32 to index
    %c0_221 = arith.constant 0 : index
    %c0_222 = arith.constant 0 : index
    %542 = vector.load %arg8[%541, %c0_221, %c0_222] : memref<8x2x32xf32, #tpu.memory_space<vmem>>, vector<1x2x32xf32>
    %543 = vector.shape_cast %542 : vector<1x2x32xf32> to vector<2x32xf32>
    %544 = vector.shape_cast %531 : vector<2x32xf32> to vector<1x2x32xf32>
    tpu.vector_store %arg8[%541, %c0_221, %c0_222], %544 {strides = array<i32>} : memref<8x2x32xf32, #tpu.memory_space<vmem>>, vector<1x2x32xf32>,
    %cst_223 = arith.constant dense<0xFF800000> : vector<2xf32>
    %545 = vector.multi_reduction <maximumf>, %536, %cst_223 [1] : vector<2x128xf32> to vector<2xf32>
    %546 = vector.shape_cast %545 : vector<2xf32> to vector<2x1xf32>
    %547 = vector.broadcast %546 : vector<2x1xf32> to vector<2x128xf32>
    %548 = arith.cmpf oeq, %536, %547 : vector<2x128xf32>
    %c128_i32_224 = arith.constant 128 : i32
    %549 = vector.broadcast %c128_i32_224 : i32 to vector<2x128xi32>
    %550 = arith.select %548, %15, %549 : vector<2x128xi1>, vector<2x128xi32>
    %cst_225 = arith.constant dense<2147483647> : vector<2xi32>
    %551 = vector.multi_reduction <minsi>, %550, %cst_225 [1] : vector<2x128xi32> to vector<2xi32>
    %552 = vector.shape_cast %551 : vector<2xi32> to vector<2x1xi32>
    %c7_i32 = arith.constant 7 : i32
    %c0_226 = arith.constant 0 : index
    %c0_227 = arith.constant 0 : index
    %553 = vector.load %arg3[%c0_226, %c0_227] : memref<40x512xf32, #tpu.memory_space<vmem>>, vector<32x512xf32>
    %cst_228 = arith.constant dense<0.000000e+00> : vector<2x512xf32>
    %554 = tpu.matmul %531, %553, %cst_228 {dimension_numbers = #tpu.dot_dimension_numbers<[1], [0], [0], [1], [0, 0, 1, 1], [], []>} : vector<2x32xf32>, vector<32x512xf32>, vector<2x512xf32> -> vector<2x512xf32>
    %c32_229 = arith.constant 32 : index
    %c0_230 = arith.constant 0 : index
    %555 = vector.load %arg3[%c32_229, %c0_230] : memref<40x512xf32, #tpu.memory_space<vmem>>, vector<1x512xf32>
    %556 = vector.broadcast %555 : vector<1x512xf32> to vector<2x512xf32>
    %557 = arith.addf %554, %556 : vector<2x512xf32>
    %558 = vector.extract_strided_slice %557 {offsets = [0, 0], sizes = [2, 128], strides = [1, 1]} : vector<2x512xf32> to vector<2x128xf32>
    %559 = vector.shape_cast %558 : vector<2x128xf32> to vector<2x1x128xf32>
    %560 = vector.broadcast %559 : vector<2x1x128xf32> to vector<2x4x128xf32>
    %561 = arith.addf %560, %13 : vector<2x4x128xf32>
    %562 = math.tanh %561 : vector<2x4x128xf32>
    %563 = vector.broadcast %14 : vector<1x1x128xf32> to vector<2x4x128xf32>
    %564 = arith.mulf %562, %563 : vector<2x4x128xf32>
    %cst_231 = arith.constant dense<0.000000e+00> : vector<2x4xf32>
    %565 = vector.multi_reduction <add>, %564, %cst_231 [2] : vector<2x4x128xf32> to vector<2x4xf32>
    %cst_232 = arith.constant dense<0xFF800000> : vector<2xf32>
    %566 = vector.multi_reduction <maximumf>, %565, %cst_232 [1] : vector<2x4xf32> to vector<2xf32>
    %567 = vector.shape_cast %566 : vector<2xf32> to vector<2x1xf32>
    %568 = vector.broadcast %567 : vector<2x1xf32> to vector<2x4xf32>
    %569 = arith.subf %565, %568 : vector<2x4xf32>
    %570 = math.exp %569 : vector<2x4xf32>
    %cst_233 = arith.constant dense<0.000000e+00> : vector<2xf32>
    %571 = vector.multi_reduction <add>, %570, %cst_233 [1] : vector<2x4xf32> to vector<2xf32>
    %572 = vector.shape_cast %571 : vector<2xf32> to vector<2x1xf32>
    %573 = vector.broadcast %572 : vector<2x1xf32> to vector<2x4xf32>
    %574 = arith.divf %570, %573 : vector<2x4xf32>
    %575 = vector.shape_cast %574 : vector<2x4xf32> to vector<2x4x1xf32>
    %576 = vector.broadcast %575 : vector<2x4x1xf32> to vector<2x4x16xf32>
    %577 = arith.mulf %576, %8 : vector<2x4x16xf32>
    %cst_234 = arith.constant dense<0.000000e+00> : vector<2x16xf32>
    %578 = vector.multi_reduction <add>, %577, %cst_234 [1] : vector<2x4x16xf32> to vector<2x16xf32>
    %579 = vector.broadcast %552 : vector<2x1xi32> to vector<2x32xi32>
    %580 = arith.cmpi eq, %16, %579 : vector<2x32xi32>
    %581 = arith.extui %580 : vector<2x32xi1> to vector<2x32xi32>
    %582 = arith.sitofp %581 : vector<2x32xi32> to vector<2x32xf32>
    %c0_235 = arith.constant 0 : index
    %c0_236 = arith.constant 0 : index
    %583 = vector.load %arg2[%c0_235, %c0_236] : memref<56x384xf32, #tpu.memory_space<vmem>>, vector<32x384xf32>
    %cst_237 = arith.constant dense<0.000000e+00> : vector<2x384xf32>
    %584 = tpu.matmul %582, %583, %cst_237 {dimension_numbers = #tpu.dot_dimension_numbers<[1], [0], [0], [1], [0, 0, 1, 1], [], []>} : vector<2x32xf32>, vector<32x384xf32>, vector<2x384xf32> -> vector<2x384xf32>
    %c32_238 = arith.constant 32 : index
    %c0_239 = arith.constant 0 : index
    %585 = vector.load %arg2[%c32_238, %c0_239] : memref<56x384xf32, #tpu.memory_space<vmem>>, vector<16x384xf32>
    %cst_240 = arith.constant dense<0.000000e+00> : vector<2x384xf32>
    %586 = tpu.matmul %578, %585, %cst_240 {dimension_numbers = #tpu.dot_dimension_numbers<[1], [0], [0], [1], [0, 0, 1, 1], [], []>} : vector<2x16xf32>, vector<16x384xf32>, vector<2x384xf32> -> vector<2x384xf32>
    %587 = arith.addf %584, %586 : vector<2x384xf32>
    %c48_241 = arith.constant 48 : index
    %c0_242 = arith.constant 0 : index
    %588 = vector.load %arg2[%c48_241, %c0_242] : memref<56x384xf32, #tpu.memory_space<vmem>>, vector<1x384xf32>
    %589 = vector.broadcast %588 : vector<1x384xf32> to vector<2x384xf32>
    %590 = arith.addf %587, %589 : vector<2x384xf32>
    %591 = vector.extract_strided_slice %590 {offsets = [0, 0], sizes = [2, 32], strides = [1, 1]} : vector<2x384xf32> to vector<2x32xf32>
    %592 = vector.extract_strided_slice %557 {offsets = [0, 128], sizes = [2, 32], strides = [1, 1]} : vector<2x512xf32> to vector<2x32xf32>
    %593 = arith.addf %591, %592 : vector<2x32xf32>
    %cst_243 = arith.constant 0.000000e+00 : f32
    %594 = vector.broadcast %cst_243 : f32 to vector<2x32xf32>
    %595 = arith.subf %594, %593 : vector<2x32xf32>
    %596 = math.exp %595 : vector<2x32xf32>
    %cst_244 = arith.constant 1.000000e+00 : f32
    %597 = vector.broadcast %cst_244 : f32 to vector<2x32xf32>
    %598 = arith.addf %597, %596 : vector<2x32xf32>
    %cst_245 = arith.constant 1.000000e+00 : f32
    %599 = vector.broadcast %cst_245 : f32 to vector<2x32xf32>
    %600 = arith.divf %599, %598 : vector<2x32xf32>
    %601 = vector.extract_strided_slice %590 {offsets = [0, 128], sizes = [2, 32], strides = [1, 1]} : vector<2x384xf32> to vector<2x32xf32>
    %602 = vector.extract_strided_slice %557 {offsets = [0, 256], sizes = [2, 32], strides = [1, 1]} : vector<2x512xf32> to vector<2x32xf32>
    %603 = arith.addf %601, %602 : vector<2x32xf32>
    %cst_246 = arith.constant 0.000000e+00 : f32
    %604 = vector.broadcast %cst_246 : f32 to vector<2x32xf32>
    %605 = arith.subf %604, %603 : vector<2x32xf32>
    %606 = math.exp %605 : vector<2x32xf32>
    %cst_247 = arith.constant 1.000000e+00 : f32
    %607 = vector.broadcast %cst_247 : f32 to vector<2x32xf32>
    %608 = arith.addf %607, %606 : vector<2x32xf32>
    %cst_248 = arith.constant 1.000000e+00 : f32
    %609 = vector.broadcast %cst_248 : f32 to vector<2x32xf32>
    %610 = arith.divf %609, %608 : vector<2x32xf32>
    %611 = vector.extract_strided_slice %590 {offsets = [0, 256], sizes = [2, 32], strides = [1, 1]} : vector<2x384xf32> to vector<2x32xf32>
    %612 = vector.extract_strided_slice %557 {offsets = [0, 384], sizes = [2, 32], strides = [1, 1]} : vector<2x512xf32> to vector<2x32xf32>
    %613 = arith.mulf %600, %612 : vector<2x32xf32>
    %614 = arith.addf %611, %613 : vector<2x32xf32>
    %615 = math.tanh %614 : vector<2x32xf32>
    %cst_249 = arith.constant 1.000000e+00 : f32
    %616 = vector.broadcast %cst_249 : f32 to vector<2x32xf32>
    %617 = arith.subf %616, %610 : vector<2x32xf32>
    %618 = arith.mulf %617, %615 : vector<2x32xf32>
    %619 = arith.mulf %610, %531 : vector<2x32xf32>
    %620 = arith.addf %618, %619 : vector<2x32xf32>
    %c24_250 = arith.constant 24 : index
    %c0_251 = arith.constant 0 : index
    %621 = vector.load %arg4[%c24_250, %c0_251] : memref<64x128xf32, #tpu.memory_space<vmem>>, vector<32x128xf32>
    %cst_252 = arith.constant dense<0.000000e+00> : vector<2x128xf32>
    %622 = tpu.matmul %620, %621, %cst_252 {dimension_numbers = #tpu.dot_dimension_numbers<[1], [0], [0], [1], [0, 0, 1, 1], [], []>} : vector<2x32xf32>, vector<32x128xf32>, vector<2x128xf32> -> vector<2x128xf32>
    %c56_253 = arith.constant 56 : index
    %c0_254 = arith.constant 0 : index
    %623 = vector.load %arg4[%c56_253, %c0_254] : memref<64x128xf32, #tpu.memory_space<vmem>>, vector<1x128xf32>
    %624 = vector.broadcast %623 : vector<1x128xf32> to vector<2x128xf32>
    %625 = arith.addf %622, %624 : vector<2x128xf32>
    %626 = arith.index_cast %c7_i32 : i32 to index
    %c0_255 = arith.constant 0 : index
    %c0_256 = arith.constant 0 : index
    %627 = vector.load %arg6[%626, %c0_255, %c0_256] : memref<8x2x128xf32, #tpu.memory_space<vmem>>, vector<1x2x128xf32>
    %628 = vector.shape_cast %627 : vector<1x2x128xf32> to vector<2x128xf32>
    %629 = vector.shape_cast %625 : vector<2x128xf32> to vector<1x2x128xf32>
    tpu.vector_store %arg6[%626, %c0_255, %c0_256], %629 {strides = array<i32>} : memref<8x2x128xf32, #tpu.memory_space<vmem>>, vector<1x2x128xf32>,
    %630 = arith.index_cast %c7_i32 : i32 to index
    %c0_257 = arith.constant 0 : index
    %c0_258 = arith.constant 0 : index
    %631 = vector.load %arg8[%630, %c0_257, %c0_258] : memref<8x2x32xf32, #tpu.memory_space<vmem>>, vector<1x2x32xf32>
    %632 = vector.shape_cast %631 : vector<1x2x32xf32> to vector<2x32xf32>
    %633 = vector.shape_cast %620 : vector<2x32xf32> to vector<1x2x32xf32>
    tpu.vector_store %arg8[%630, %c0_257, %c0_258], %633 {strides = array<i32>} : memref<8x2x32xf32, #tpu.memory_space<vmem>>, vector<1x2x32xf32>,
    %cst_259 = arith.constant dense<0xFF800000> : vector<2xf32>
    %634 = vector.multi_reduction <maximumf>, %625, %cst_259 [1] : vector<2x128xf32> to vector<2xf32>
    %635 = vector.shape_cast %634 : vector<2xf32> to vector<2x1xf32>
    %636 = vector.broadcast %635 : vector<2x1xf32> to vector<2x128xf32>
    %637 = arith.cmpf oeq, %625, %636 : vector<2x128xf32>
    %c128_i32_260 = arith.constant 128 : i32
    %638 = vector.broadcast %c128_i32_260 : i32 to vector<2x128xi32>
    %639 = arith.select %637, %15, %638 : vector<2x128xi1>, vector<2x128xi32>
    %cst_261 = arith.constant dense<2147483647> : vector<2xi32>
    %640 = vector.multi_reduction <minsi>, %639, %cst_261 [1] : vector<2x128xi32> to vector<2xi32>
    %641 = vector.shape_cast %640 : vector<2xi32> to vector<2x1xi32>
    %c7_i32_262 = arith.constant 7 : i32
    %c0_263 = arith.constant 0 : index
    %c0_264 = arith.constant 0 : index
    %c0_265 = arith.constant 0 : index
    %642 = vector.load %arg1[%c0_263, %c0_264, %c0_265] : memref<8x2x1xi32, #tpu.memory_space<vmem>>, vector<8x2x1xi32>
    %c0_i32 = arith.constant 0 : i32
    %643 = vector.broadcast %c0_i32 : i32 to vector<8x2x1xi32>
    %644 = arith.cmpi ne, %642, %643 : vector<8x2x1xi32>
    %645 = arith.extui %644 : vector<8x2x1xi1> to vector<8x2x1xi32>
    %646 = arith.sitofp %645 : vector<8x2x1xi32> to vector<8x2x1xf32>
    %c0_266 = arith.constant 0 : index
    %c0_267 = arith.constant 0 : index
    %c0_268 = arith.constant 0 : index
    %647 = vector.load %arg8[%c0_266, %c0_267, %c0_268] : memref<8x2x32xf32, #tpu.memory_space<vmem>>, vector<8x2x32xf32>
    %648 = vector.broadcast %646 : vector<8x2x1xf32> to vector<8x2x32xf32>
    %649 = arith.mulf %647, %648 : vector<8x2x32xf32>
    %cst_269 = arith.constant dense<0.000000e+00> : vector<2x32xf32>
    %650 = vector.multi_reduction <add>, %649, %cst_269 [0] : vector<8x2x32xf32> to vector<2x32xf32>
    %cst_270 = arith.constant dense<0.000000e+00> : vector<2x1xf32>
    %651 = vector.multi_reduction <add>, %646, %cst_270 [0] : vector<8x2x1xf32> to vector<2x1xf32>
    %cst_271 = arith.constant 1.000000e+00 : f32
    %652 = vector.broadcast %cst_271 : f32 to vector<2x1xf32>
    %653 = arith.maximumf %651, %652 : vector<2x1xf32>
    %654 = vector.broadcast %653 : vector<2x1xf32> to vector<2x32xf32>
    %655 = arith.divf %650, %654 : vector<2x32xf32>
    tpu.wait_dma2 semaphore(%arg11 : memref<!tpu.dma_semaphore, #tpu.memory_space<semaphore_mem>>) src(%arg5 : memref<112x384xf32, #tpu.memory_space<any>>) dst(%arg10 : memref<112x384xf32, #tpu.memory_space<vmem>>)
    %c96 = arith.constant 96 : index
    %c0_272 = arith.constant 0 : index
    %656 = vector.load %arg10[%c96, %c0_272] : memref<112x384xf32, #tpu.memory_space<vmem>>, vector<1x384xf32>
    %c104 = arith.constant 104 : index
    %c0_273 = arith.constant 0 : index
    %657 = vector.load %arg10[%c104, %c0_273] : memref<112x384xf32, #tpu.memory_space<vmem>>, vector<1x384xf32>
    %c32_274 = arith.constant 32 : index
    %c0_275 = arith.constant 0 : index
    %658 = vector.load %arg10[%c32_274, %c0_275] : memref<112x384xf32, #tpu.memory_space<vmem>>, vector<32x384xf32>
    %cst_276 = arith.constant dense<0.000000e+00> : vector<2x384xf32>
    %659 = tpu.matmul %655, %658, %cst_276 {dimension_numbers = #tpu.dot_dimension_numbers<[1], [0], [0], [1], [0, 0, 1, 1], [], []>} : vector<2x32xf32>, vector<32x384xf32>, vector<2x384xf32> -> vector<2x384xf32>
    %660 = vector.broadcast %656 : vector<1x384xf32> to vector<2x384xf32>
    %661 = arith.addf %659, %660 : vector<2x384xf32>
    %662 = vector.shape_cast %649 : vector<8x2x32xf32> to vector<16x32xf32>
    %c0_277 = arith.constant 0 : index
    %c0_278 = arith.constant 0 : index
    %663 = vector.load %arg10[%c0_277, %c0_278] : memref<112x384xf32, #tpu.memory_space<vmem>>, vector<32x384xf32>
    %cst_279 = arith.constant dense<0.000000e+00> : vector<16x384xf32>
    %664 = tpu.matmul %662, %663, %cst_279 {dimension_numbers = #tpu.dot_dimension_numbers<[1], [0], [0], [1], [0, 0, 1, 1], [], []>} : vector<16x32xf32>, vector<32x384xf32>, vector<16x384xf32> -> vector<16x384xf32>
    %665 = vector.shape_cast %664 : vector<16x384xf32> to vector<8x2x384xf32>
    %666 = vector.shape_cast %661 : vector<2x384xf32> to vector<1x2x384xf32>
    %667 = vector.broadcast %666 : vector<1x2x384xf32> to vector<8x2x384xf32>
    %668 = arith.addf %665, %667 : vector<8x2x384xf32>
    %c0_280 = arith.constant 0 : index
    %c0_281 = arith.constant 0 : index
    %c0_282 = arith.constant 0 : index
    %669 = vector.load %arg9[%c0_280, %c0_281, %c0_282] : memref<8x2x384xf32, #tpu.memory_space<vmem>>, vector<8x2x384xf32>
    tpu.vector_store %arg9[%c0_280, %c0_281, %c0_282], %668 {strides = array<i32>} : memref<8x2x384xf32, #tpu.memory_space<vmem>>, vector<8x2x384xf32>,
    %cst_283 = arith.constant 0.000000e+00 : f32
    %670 = vector.broadcast %cst_283 : f32 to vector<2x32xf32>
    %c0_i32_284 = arith.constant 0 : i32
    %671 = arith.index_cast %c0_i32_284 : i32 to index
    %c0_285 = arith.constant 0 : index
    %c0_286 = arith.constant 0 : index
    %672 = vector.load %arg9[%671, %c0_285, %c0_286] : memref<8x2x384xf32, #tpu.memory_space<vmem>>, vector<1x2x384xf32>
    %673 = vector.shape_cast %672 : vector<1x2x384xf32> to vector<2x384xf32>
    %c64 = arith.constant 64 : index
    %c0_287 = arith.constant 0 : index
    %674 = vector.load %arg10[%c64, %c0_287] : memref<112x384xf32, #tpu.memory_space<vmem>>, vector<32x384xf32>
    %cst_288 = arith.constant dense<0.000000e+00> : vector<2x384xf32>
    %675 = tpu.matmul %670, %674, %cst_288 {dimension_numbers = #tpu.dot_dimension_numbers<[1], [0], [0], [1], [0, 0, 1, 1], [], []>} : vector<2x32xf32>, vector<32x384xf32>, vector<2x384xf32> -> vector<2x384xf32>
    %676 = vector.broadcast %657 : vector<1x384xf32> to vector<2x384xf32>
    %677 = arith.addf %675, %676 : vector<2x384xf32>
    %678 = vector.extract_strided_slice %673 {offsets = [0, 0], sizes = [2, 32], strides = [1, 1]} : vector<2x384xf32> to vector<2x32xf32>
    %679 = vector.extract_strided_slice %677 {offsets = [0, 0], sizes = [2, 32], strides = [1, 1]} : vector<2x384xf32> to vector<2x32xf32>
    %680 = arith.addf %678, %679 : vector<2x32xf32>
    %cst_289 = arith.constant 0.000000e+00 : f32
    %681 = vector.broadcast %cst_289 : f32 to vector<2x32xf32>
    %682 = arith.subf %681, %680 : vector<2x32xf32>
    %683 = math.exp %682 : vector<2x32xf32>
    %cst_290 = arith.constant 1.000000e+00 : f32
    %684 = vector.broadcast %cst_290 : f32 to vector<2x32xf32>
    %685 = arith.addf %684, %683 : vector<2x32xf32>
    %cst_291 = arith.constant 1.000000e+00 : f32
    %686 = vector.broadcast %cst_291 : f32 to vector<2x32xf32>
    %687 = arith.divf %686, %685 : vector<2x32xf32>
    %688 = vector.extract_strided_slice %673 {offsets = [0, 128], sizes = [2, 32], strides = [1, 1]} : vector<2x384xf32> to vector<2x32xf32>
    %689 = vector.extract_strided_slice %677 {offsets = [0, 128], sizes = [2, 32], strides = [1, 1]} : vector<2x384xf32> to vector<2x32xf32>
    %690 = arith.addf %688, %689 : vector<2x32xf32>
    %cst_292 = arith.constant 0.000000e+00 : f32
    %691 = vector.broadcast %cst_292 : f32 to vector<2x32xf32>
    %692 = arith.subf %691, %690 : vector<2x32xf32>
    %693 = math.exp %692 : vector<2x32xf32>
    %cst_293 = arith.constant 1.000000e+00 : f32
    %694 = vector.broadcast %cst_293 : f32 to vector<2x32xf32>
    %695 = arith.addf %694, %693 : vector<2x32xf32>
    %cst_294 = arith.constant 1.000000e+00 : f32
    %696 = vector.broadcast %cst_294 : f32 to vector<2x32xf32>
    %697 = arith.divf %696, %695 : vector<2x32xf32>
    %698 = vector.extract_strided_slice %673 {offsets = [0, 256], sizes = [2, 32], strides = [1, 1]} : vector<2x384xf32> to vector<2x32xf32>
    %699 = vector.extract_strided_slice %677 {offsets = [0, 256], sizes = [2, 32], strides = [1, 1]} : vector<2x384xf32> to vector<2x32xf32>
    %700 = arith.mulf %687, %699 : vector<2x32xf32>
    %701 = arith.addf %698, %700 : vector<2x32xf32>
    %702 = math.tanh %701 : vector<2x32xf32>
    %cst_295 = arith.constant 1.000000e+00 : f32
    %703 = vector.broadcast %cst_295 : f32 to vector<2x32xf32>
    %704 = arith.subf %703, %697 : vector<2x32xf32>
    %705 = arith.mulf %704, %702 : vector<2x32xf32>
    %706 = arith.mulf %697, %670 : vector<2x32xf32>
    %707 = arith.addf %705, %706 : vector<2x32xf32>
    %708 = arith.index_cast %c0_i32_284 : i32 to index
    %c0_296 = arith.constant 0 : index
    %c0_297 = arith.constant 0 : index
    %709 = vector.load %arg7[%708, %c0_296, %c0_297] : memref<8x2x32xf32, #tpu.memory_space<vmem>>, vector<1x2x32xf32>
    %710 = vector.shape_cast %709 : vector<1x2x32xf32> to vector<2x32xf32>
    %711 = vector.shape_cast %707 : vector<2x32xf32> to vector<1x2x32xf32>
    tpu.vector_store %arg7[%708, %c0_296, %c0_297], %711 {strides = array<i32>} : memref<8x2x32xf32, #tpu.memory_space<vmem>>, vector<1x2x32xf32>,
    %c1_i32_298 = arith.constant 1 : i32
    %712 = arith.index_cast %c1_i32_298 : i32 to index
    %c0_299 = arith.constant 0 : index
    %c0_300 = arith.constant 0 : index
    %713 = vector.load %arg9[%712, %c0_299, %c0_300] : memref<8x2x384xf32, #tpu.memory_space<vmem>>, vector<1x2x384xf32>
    %714 = vector.shape_cast %713 : vector<1x2x384xf32> to vector<2x384xf32>
    %c64_301 = arith.constant 64 : index
    %c0_302 = arith.constant 0 : index
    %715 = vector.load %arg10[%c64_301, %c0_302] : memref<112x384xf32, #tpu.memory_space<vmem>>, vector<32x384xf32>
    %cst_303 = arith.constant dense<0.000000e+00> : vector<2x384xf32>
    %716 = tpu.matmul %707, %715, %cst_303 {dimension_numbers = #tpu.dot_dimension_numbers<[1], [0], [0], [1], [0, 0, 1, 1], [], []>} : vector<2x32xf32>, vector<32x384xf32>, vector<2x384xf32> -> vector<2x384xf32>
    %717 = vector.broadcast %657 : vector<1x384xf32> to vector<2x384xf32>
    %718 = arith.addf %716, %717 : vector<2x384xf32>
    %719 = vector.extract_strided_slice %714 {offsets = [0, 0], sizes = [2, 32], strides = [1, 1]} : vector<2x384xf32> to vector<2x32xf32>
    %720 = vector.extract_strided_slice %718 {offsets = [0, 0], sizes = [2, 32], strides = [1, 1]} : vector<2x384xf32> to vector<2x32xf32>
    %721 = arith.addf %719, %720 : vector<2x32xf32>
    %cst_304 = arith.constant 0.000000e+00 : f32
    %722 = vector.broadcast %cst_304 : f32 to vector<2x32xf32>
    %723 = arith.subf %722, %721 : vector<2x32xf32>
    %724 = math.exp %723 : vector<2x32xf32>
    %cst_305 = arith.constant 1.000000e+00 : f32
    %725 = vector.broadcast %cst_305 : f32 to vector<2x32xf32>
    %726 = arith.addf %725, %724 : vector<2x32xf32>
    %cst_306 = arith.constant 1.000000e+00 : f32
    %727 = vector.broadcast %cst_306 : f32 to vector<2x32xf32>
    %728 = arith.divf %727, %726 : vector<2x32xf32>
    %729 = vector.extract_strided_slice %714 {offsets = [0, 128], sizes = [2, 32], strides = [1, 1]} : vector<2x384xf32> to vector<2x32xf32>
    %730 = vector.extract_strided_slice %718 {offsets = [0, 128], sizes = [2, 32], strides = [1, 1]} : vector<2x384xf32> to vector<2x32xf32>
    %731 = arith.addf %729, %730 : vector<2x32xf32>
    %cst_307 = arith.constant 0.000000e+00 : f32
    %732 = vector.broadcast %cst_307 : f32 to vector<2x32xf32>
    %733 = arith.subf %732, %731 : vector<2x32xf32>
    %734 = math.exp %733 : vector<2x32xf32>
    %cst_308 = arith.constant 1.000000e+00 : f32
    %735 = vector.broadcast %cst_308 : f32 to vector<2x32xf32>
    %736 = arith.addf %735, %734 : vector<2x32xf32>
    %cst_309 = arith.constant 1.000000e+00 : f32
    %737 = vector.broadcast %cst_309 : f32 to vector<2x32xf32>
    %738 = arith.divf %737, %736 : vector<2x32xf32>
    %739 = vector.extract_strided_slice %714 {offsets = [0, 256], sizes = [2, 32], strides = [1, 1]} : vector<2x384xf32> to vector<2x32xf32>
    %740 = vector.extract_strided_slice %718 {offsets = [0, 256], sizes = [2, 32], strides = [1, 1]} : vector<2x384xf32> to vector<2x32xf32>
    %741 = arith.mulf %728, %740 : vector<2x32xf32>
    %742 = arith.addf %739, %741 : vector<2x32xf32>
    %743 = math.tanh %742 : vector<2x32xf32>
    %cst_310 = arith.constant 1.000000e+00 : f32
    %744 = vector.broadcast %cst_310 : f32 to vector<2x32xf32>
    %745 = arith.subf %744, %738 : vector<2x32xf32>
    %746 = arith.mulf %745, %743 : vector<2x32xf32>
    %747 = arith.mulf %738, %707 : vector<2x32xf32>
    %748 = arith.addf %746, %747 : vector<2x32xf32>
    %749 = arith.index_cast %c1_i32_298 : i32 to index
    %c0_311 = arith.constant 0 : index
    %c0_312 = arith.constant 0 : index
    %750 = vector.load %arg7[%749, %c0_311, %c0_312] : memref<8x2x32xf32, #tpu.memory_space<vmem>>, vector<1x2x32xf32>
    %751 = vector.shape_cast %750 : vector<1x2x32xf32> to vector<2x32xf32>
    %752 = vector.shape_cast %748 : vector<2x32xf32> to vector<1x2x32xf32>
    tpu.vector_store %arg7[%749, %c0_311, %c0_312], %752 {strides = array<i32>} : memref<8x2x32xf32, #tpu.memory_space<vmem>>, vector<1x2x32xf32>,
    %c2_i32_313 = arith.constant 2 : i32
    %753 = arith.index_cast %c2_i32_313 : i32 to index
    %c0_314 = arith.constant 0 : index
    %c0_315 = arith.constant 0 : index
    %754 = vector.load %arg9[%753, %c0_314, %c0_315] : memref<8x2x384xf32, #tpu.memory_space<vmem>>, vector<1x2x384xf32>
    %755 = vector.shape_cast %754 : vector<1x2x384xf32> to vector<2x384xf32>
    %c64_316 = arith.constant 64 : index
    %c0_317 = arith.constant 0 : index
    %756 = vector.load %arg10[%c64_316, %c0_317] : memref<112x384xf32, #tpu.memory_space<vmem>>, vector<32x384xf32>
    %cst_318 = arith.constant dense<0.000000e+00> : vector<2x384xf32>
    %757 = tpu.matmul %748, %756, %cst_318 {dimension_numbers = #tpu.dot_dimension_numbers<[1], [0], [0], [1], [0, 0, 1, 1], [], []>} : vector<2x32xf32>, vector<32x384xf32>, vector<2x384xf32> -> vector<2x384xf32>
    %758 = vector.broadcast %657 : vector<1x384xf32> to vector<2x384xf32>
    %759 = arith.addf %757, %758 : vector<2x384xf32>
    %760 = vector.extract_strided_slice %755 {offsets = [0, 0], sizes = [2, 32], strides = [1, 1]} : vector<2x384xf32> to vector<2x32xf32>
    %761 = vector.extract_strided_slice %759 {offsets = [0, 0], sizes = [2, 32], strides = [1, 1]} : vector<2x384xf32> to vector<2x32xf32>
    %762 = arith.addf %760, %761 : vector<2x32xf32>
    %cst_319 = arith.constant 0.000000e+00 : f32
    %763 = vector.broadcast %cst_319 : f32 to vector<2x32xf32>
    %764 = arith.subf %763, %762 : vector<2x32xf32>
    %765 = math.exp %764 : vector<2x32xf32>
    %cst_320 = arith.constant 1.000000e+00 : f32
    %766 = vector.broadcast %cst_320 : f32 to vector<2x32xf32>
    %767 = arith.addf %766, %765 : vector<2x32xf32>
    %cst_321 = arith.constant 1.000000e+00 : f32
    %768 = vector.broadcast %cst_321 : f32 to vector<2x32xf32>
    %769 = arith.divf %768, %767 : vector<2x32xf32>
    %770 = vector.extract_strided_slice %755 {offsets = [0, 128], sizes = [2, 32], strides = [1, 1]} : vector<2x384xf32> to vector<2x32xf32>
    %771 = vector.extract_strided_slice %759 {offsets = [0, 128], sizes = [2, 32], strides = [1, 1]} : vector<2x384xf32> to vector<2x32xf32>
    %772 = arith.addf %770, %771 : vector<2x32xf32>
    %cst_322 = arith.constant 0.000000e+00 : f32
    %773 = vector.broadcast %cst_322 : f32 to vector<2x32xf32>
    %774 = arith.subf %773, %772 : vector<2x32xf32>
    %775 = math.exp %774 : vector<2x32xf32>
    %cst_323 = arith.constant 1.000000e+00 : f32
    %776 = vector.broadcast %cst_323 : f32 to vector<2x32xf32>
    %777 = arith.addf %776, %775 : vector<2x32xf32>
    %cst_324 = arith.constant 1.000000e+00 : f32
    %778 = vector.broadcast %cst_324 : f32 to vector<2x32xf32>
    %779 = arith.divf %778, %777 : vector<2x32xf32>
    %780 = vector.extract_strided_slice %755 {offsets = [0, 256], sizes = [2, 32], strides = [1, 1]} : vector<2x384xf32> to vector<2x32xf32>
    %781 = vector.extract_strided_slice %759 {offsets = [0, 256], sizes = [2, 32], strides = [1, 1]} : vector<2x384xf32> to vector<2x32xf32>
    %782 = arith.mulf %769, %781 : vector<2x32xf32>
    %783 = arith.addf %780, %782 : vector<2x32xf32>
    %784 = math.tanh %783 : vector<2x32xf32>
    %cst_325 = arith.constant 1.000000e+00 : f32
    %785 = vector.broadcast %cst_325 : f32 to vector<2x32xf32>
    %786 = arith.subf %785, %779 : vector<2x32xf32>
    %787 = arith.mulf %786, %784 : vector<2x32xf32>
    %788 = arith.mulf %779, %748 : vector<2x32xf32>
    %789 = arith.addf %787, %788 : vector<2x32xf32>
    %790 = arith.index_cast %c2_i32_313 : i32 to index
    %c0_326 = arith.constant 0 : index
    %c0_327 = arith.constant 0 : index
    %791 = vector.load %arg7[%790, %c0_326, %c0_327] : memref<8x2x32xf32, #tpu.memory_space<vmem>>, vector<1x2x32xf32>
    %792 = vector.shape_cast %791 : vector<1x2x32xf32> to vector<2x32xf32>
    %793 = vector.shape_cast %789 : vector<2x32xf32> to vector<1x2x32xf32>
    tpu.vector_store %arg7[%790, %c0_326, %c0_327], %793 {strides = array<i32>} : memref<8x2x32xf32, #tpu.memory_space<vmem>>, vector<1x2x32xf32>,
    %c3_i32_328 = arith.constant 3 : i32
    %794 = arith.index_cast %c3_i32_328 : i32 to index
    %c0_329 = arith.constant 0 : index
    %c0_330 = arith.constant 0 : index
    %795 = vector.load %arg9[%794, %c0_329, %c0_330] : memref<8x2x384xf32, #tpu.memory_space<vmem>>, vector<1x2x384xf32>
    %796 = vector.shape_cast %795 : vector<1x2x384xf32> to vector<2x384xf32>
    %c64_331 = arith.constant 64 : index
    %c0_332 = arith.constant 0 : index
    %797 = vector.load %arg10[%c64_331, %c0_332] : memref<112x384xf32, #tpu.memory_space<vmem>>, vector<32x384xf32>
    %cst_333 = arith.constant dense<0.000000e+00> : vector<2x384xf32>
    %798 = tpu.matmul %789, %797, %cst_333 {dimension_numbers = #tpu.dot_dimension_numbers<[1], [0], [0], [1], [0, 0, 1, 1], [], []>} : vector<2x32xf32>, vector<32x384xf32>, vector<2x384xf32> -> vector<2x384xf32>
    %799 = vector.broadcast %657 : vector<1x384xf32> to vector<2x384xf32>
    %800 = arith.addf %798, %799 : vector<2x384xf32>
    %801 = vector.extract_strided_slice %796 {offsets = [0, 0], sizes = [2, 32], strides = [1, 1]} : vector<2x384xf32> to vector<2x32xf32>
    %802 = vector.extract_strided_slice %800 {offsets = [0, 0], sizes = [2, 32], strides = [1, 1]} : vector<2x384xf32> to vector<2x32xf32>
    %803 = arith.addf %801, %802 : vector<2x32xf32>
    %cst_334 = arith.constant 0.000000e+00 : f32
    %804 = vector.broadcast %cst_334 : f32 to vector<2x32xf32>
    %805 = arith.subf %804, %803 : vector<2x32xf32>
    %806 = math.exp %805 : vector<2x32xf32>
    %cst_335 = arith.constant 1.000000e+00 : f32
    %807 = vector.broadcast %cst_335 : f32 to vector<2x32xf32>
    %808 = arith.addf %807, %806 : vector<2x32xf32>
    %cst_336 = arith.constant 1.000000e+00 : f32
    %809 = vector.broadcast %cst_336 : f32 to vector<2x32xf32>
    %810 = arith.divf %809, %808 : vector<2x32xf32>
    %811 = vector.extract_strided_slice %796 {offsets = [0, 128], sizes = [2, 32], strides = [1, 1]} : vector<2x384xf32> to vector<2x32xf32>
    %812 = vector.extract_strided_slice %800 {offsets = [0, 128], sizes = [2, 32], strides = [1, 1]} : vector<2x384xf32> to vector<2x32xf32>
    %813 = arith.addf %811, %812 : vector<2x32xf32>
    %cst_337 = arith.constant 0.000000e+00 : f32
    %814 = vector.broadcast %cst_337 : f32 to vector<2x32xf32>
    %815 = arith.subf %814, %813 : vector<2x32xf32>
    %816 = math.exp %815 : vector<2x32xf32>
    %cst_338 = arith.constant 1.000000e+00 : f32
    %817 = vector.broadcast %cst_338 : f32 to vector<2x32xf32>
    %818 = arith.addf %817, %816 : vector<2x32xf32>
    %cst_339 = arith.constant 1.000000e+00 : f32
    %819 = vector.broadcast %cst_339 : f32 to vector<2x32xf32>
    %820 = arith.divf %819, %818 : vector<2x32xf32>
    %821 = vector.extract_strided_slice %796 {offsets = [0, 256], sizes = [2, 32], strides = [1, 1]} : vector<2x384xf32> to vector<2x32xf32>
    %822 = vector.extract_strided_slice %800 {offsets = [0, 256], sizes = [2, 32], strides = [1, 1]} : vector<2x384xf32> to vector<2x32xf32>
    %823 = arith.mulf %810, %822 : vector<2x32xf32>
    %824 = arith.addf %821, %823 : vector<2x32xf32>
    %825 = math.tanh %824 : vector<2x32xf32>
    %cst_340 = arith.constant 1.000000e+00 : f32
    %826 = vector.broadcast %cst_340 : f32 to vector<2x32xf32>
    %827 = arith.subf %826, %820 : vector<2x32xf32>
    %828 = arith.mulf %827, %825 : vector<2x32xf32>
    %829 = arith.mulf %820, %789 : vector<2x32xf32>
    %830 = arith.addf %828, %829 : vector<2x32xf32>
    %831 = arith.index_cast %c3_i32_328 : i32 to index
    %c0_341 = arith.constant 0 : index
    %c0_342 = arith.constant 0 : index
    %832 = vector.load %arg7[%831, %c0_341, %c0_342] : memref<8x2x32xf32, #tpu.memory_space<vmem>>, vector<1x2x32xf32>
    %833 = vector.shape_cast %832 : vector<1x2x32xf32> to vector<2x32xf32>
    %834 = vector.shape_cast %830 : vector<2x32xf32> to vector<1x2x32xf32>
    tpu.vector_store %arg7[%831, %c0_341, %c0_342], %834 {strides = array<i32>} : memref<8x2x32xf32, #tpu.memory_space<vmem>>, vector<1x2x32xf32>,
    %c4_i32_343 = arith.constant 4 : i32
    %835 = arith.index_cast %c4_i32_343 : i32 to index
    %c0_344 = arith.constant 0 : index
    %c0_345 = arith.constant 0 : index
    %836 = vector.load %arg9[%835, %c0_344, %c0_345] : memref<8x2x384xf32, #tpu.memory_space<vmem>>, vector<1x2x384xf32>
    %837 = vector.shape_cast %836 : vector<1x2x384xf32> to vector<2x384xf32>
    %c64_346 = arith.constant 64 : index
    %c0_347 = arith.constant 0 : index
    %838 = vector.load %arg10[%c64_346, %c0_347] : memref<112x384xf32, #tpu.memory_space<vmem>>, vector<32x384xf32>
    %cst_348 = arith.constant dense<0.000000e+00> : vector<2x384xf32>
    %839 = tpu.matmul %830, %838, %cst_348 {dimension_numbers = #tpu.dot_dimension_numbers<[1], [0], [0], [1], [0, 0, 1, 1], [], []>} : vector<2x32xf32>, vector<32x384xf32>, vector<2x384xf32> -> vector<2x384xf32>
    %840 = vector.broadcast %657 : vector<1x384xf32> to vector<2x384xf32>
    %841 = arith.addf %839, %840 : vector<2x384xf32>
    %842 = vector.extract_strided_slice %837 {offsets = [0, 0], sizes = [2, 32], strides = [1, 1]} : vector<2x384xf32> to vector<2x32xf32>
    %843 = vector.extract_strided_slice %841 {offsets = [0, 0], sizes = [2, 32], strides = [1, 1]} : vector<2x384xf32> to vector<2x32xf32>
    %844 = arith.addf %842, %843 : vector<2x32xf32>
    %cst_349 = arith.constant 0.000000e+00 : f32
    %845 = vector.broadcast %cst_349 : f32 to vector<2x32xf32>
    %846 = arith.subf %845, %844 : vector<2x32xf32>
    %847 = math.exp %846 : vector<2x32xf32>
    %cst_350 = arith.constant 1.000000e+00 : f32
    %848 = vector.broadcast %cst_350 : f32 to vector<2x32xf32>
    %849 = arith.addf %848, %847 : vector<2x32xf32>
    %cst_351 = arith.constant 1.000000e+00 : f32
    %850 = vector.broadcast %cst_351 : f32 to vector<2x32xf32>
    %851 = arith.divf %850, %849 : vector<2x32xf32>
    %852 = vector.extract_strided_slice %837 {offsets = [0, 128], sizes = [2, 32], strides = [1, 1]} : vector<2x384xf32> to vector<2x32xf32>
    %853 = vector.extract_strided_slice %841 {offsets = [0, 128], sizes = [2, 32], strides = [1, 1]} : vector<2x384xf32> to vector<2x32xf32>
    %854 = arith.addf %852, %853 : vector<2x32xf32>
    %cst_352 = arith.constant 0.000000e+00 : f32
    %855 = vector.broadcast %cst_352 : f32 to vector<2x32xf32>
    %856 = arith.subf %855, %854 : vector<2x32xf32>
    %857 = math.exp %856 : vector<2x32xf32>
    %cst_353 = arith.constant 1.000000e+00 : f32
    %858 = vector.broadcast %cst_353 : f32 to vector<2x32xf32>
    %859 = arith.addf %858, %857 : vector<2x32xf32>
    %cst_354 = arith.constant 1.000000e+00 : f32
    %860 = vector.broadcast %cst_354 : f32 to vector<2x32xf32>
    %861 = arith.divf %860, %859 : vector<2x32xf32>
    %862 = vector.extract_strided_slice %837 {offsets = [0, 256], sizes = [2, 32], strides = [1, 1]} : vector<2x384xf32> to vector<2x32xf32>
    %863 = vector.extract_strided_slice %841 {offsets = [0, 256], sizes = [2, 32], strides = [1, 1]} : vector<2x384xf32> to vector<2x32xf32>
    %864 = arith.mulf %851, %863 : vector<2x32xf32>
    %865 = arith.addf %862, %864 : vector<2x32xf32>
    %866 = math.tanh %865 : vector<2x32xf32>
    %cst_355 = arith.constant 1.000000e+00 : f32
    %867 = vector.broadcast %cst_355 : f32 to vector<2x32xf32>
    %868 = arith.subf %867, %861 : vector<2x32xf32>
    %869 = arith.mulf %868, %866 : vector<2x32xf32>
    %870 = arith.mulf %861, %830 : vector<2x32xf32>
    %871 = arith.addf %869, %870 : vector<2x32xf32>
    %872 = arith.index_cast %c4_i32_343 : i32 to index
    %c0_356 = arith.constant 0 : index
    %c0_357 = arith.constant 0 : index
    %873 = vector.load %arg7[%872, %c0_356, %c0_357] : memref<8x2x32xf32, #tpu.memory_space<vmem>>, vector<1x2x32xf32>
    %874 = vector.shape_cast %873 : vector<1x2x32xf32> to vector<2x32xf32>
    %875 = vector.shape_cast %871 : vector<2x32xf32> to vector<1x2x32xf32>
    tpu.vector_store %arg7[%872, %c0_356, %c0_357], %875 {strides = array<i32>} : memref<8x2x32xf32, #tpu.memory_space<vmem>>, vector<1x2x32xf32>,
    %c5_i32_358 = arith.constant 5 : i32
    %876 = arith.index_cast %c5_i32_358 : i32 to index
    %c0_359 = arith.constant 0 : index
    %c0_360 = arith.constant 0 : index
    %877 = vector.load %arg9[%876, %c0_359, %c0_360] : memref<8x2x384xf32, #tpu.memory_space<vmem>>, vector<1x2x384xf32>
    %878 = vector.shape_cast %877 : vector<1x2x384xf32> to vector<2x384xf32>
    %c64_361 = arith.constant 64 : index
    %c0_362 = arith.constant 0 : index
    %879 = vector.load %arg10[%c64_361, %c0_362] : memref<112x384xf32, #tpu.memory_space<vmem>>, vector<32x384xf32>
    %cst_363 = arith.constant dense<0.000000e+00> : vector<2x384xf32>
    %880 = tpu.matmul %871, %879, %cst_363 {dimension_numbers = #tpu.dot_dimension_numbers<[1], [0], [0], [1], [0, 0, 1, 1], [], []>} : vector<2x32xf32>, vector<32x384xf32>, vector<2x384xf32> -> vector<2x384xf32>
    %881 = vector.broadcast %657 : vector<1x384xf32> to vector<2x384xf32>
    %882 = arith.addf %880, %881 : vector<2x384xf32>
    %883 = vector.extract_strided_slice %878 {offsets = [0, 0], sizes = [2, 32], strides = [1, 1]} : vector<2x384xf32> to vector<2x32xf32>
    %884 = vector.extract_strided_slice %882 {offsets = [0, 0], sizes = [2, 32], strides = [1, 1]} : vector<2x384xf32> to vector<2x32xf32>
    %885 = arith.addf %883, %884 : vector<2x32xf32>
    %cst_364 = arith.constant 0.000000e+00 : f32
    %886 = vector.broadcast %cst_364 : f32 to vector<2x32xf32>
    %887 = arith.subf %886, %885 : vector<2x32xf32>
    %888 = math.exp %887 : vector<2x32xf32>
    %cst_365 = arith.constant 1.000000e+00 : f32
    %889 = vector.broadcast %cst_365 : f32 to vector<2x32xf32>
    %890 = arith.addf %889, %888 : vector<2x32xf32>
    %cst_366 = arith.constant 1.000000e+00 : f32
    %891 = vector.broadcast %cst_366 : f32 to vector<2x32xf32>
    %892 = arith.divf %891, %890 : vector<2x32xf32>
    %893 = vector.extract_strided_slice %878 {offsets = [0, 128], sizes = [2, 32], strides = [1, 1]} : vector<2x384xf32> to vector<2x32xf32>
    %894 = vector.extract_strided_slice %882 {offsets = [0, 128], sizes = [2, 32], strides = [1, 1]} : vector<2x384xf32> to vector<2x32xf32>
    %895 = arith.addf %893, %894 : vector<2x32xf32>
    %cst_367 = arith.constant 0.000000e+00 : f32
    %896 = vector.broadcast %cst_367 : f32 to vector<2x32xf32>
    %897 = arith.subf %896, %895 : vector<2x32xf32>
    %898 = math.exp %897 : vector<2x32xf32>
    %cst_368 = arith.constant 1.000000e+00 : f32
    %899 = vector.broadcast %cst_368 : f32 to vector<2x32xf32>
    %900 = arith.addf %899, %898 : vector<2x32xf32>
    %cst_369 = arith.constant 1.000000e+00 : f32
    %901 = vector.broadcast %cst_369 : f32 to vector<2x32xf32>
    %902 = arith.divf %901, %900 : vector<2x32xf32>
    %903 = vector.extract_strided_slice %878 {offsets = [0, 256], sizes = [2, 32], strides = [1, 1]} : vector<2x384xf32> to vector<2x32xf32>
    %904 = vector.extract_strided_slice %882 {offsets = [0, 256], sizes = [2, 32], strides = [1, 1]} : vector<2x384xf32> to vector<2x32xf32>
    %905 = arith.mulf %892, %904 : vector<2x32xf32>
    %906 = arith.addf %903, %905 : vector<2x32xf32>
    %907 = math.tanh %906 : vector<2x32xf32>
    %cst_370 = arith.constant 1.000000e+00 : f32
    %908 = vector.broadcast %cst_370 : f32 to vector<2x32xf32>
    %909 = arith.subf %908, %902 : vector<2x32xf32>
    %910 = arith.mulf %909, %907 : vector<2x32xf32>
    %911 = arith.mulf %902, %871 : vector<2x32xf32>
    %912 = arith.addf %910, %911 : vector<2x32xf32>
    %913 = arith.index_cast %c5_i32_358 : i32 to index
    %c0_371 = arith.constant 0 : index
    %c0_372 = arith.constant 0 : index
    %914 = vector.load %arg7[%913, %c0_371, %c0_372] : memref<8x2x32xf32, #tpu.memory_space<vmem>>, vector<1x2x32xf32>
    %915 = vector.shape_cast %914 : vector<1x2x32xf32> to vector<2x32xf32>
    %916 = vector.shape_cast %912 : vector<2x32xf32> to vector<1x2x32xf32>
    tpu.vector_store %arg7[%913, %c0_371, %c0_372], %916 {strides = array<i32>} : memref<8x2x32xf32, #tpu.memory_space<vmem>>, vector<1x2x32xf32>,
    %c6_i32_373 = arith.constant 6 : i32
    %917 = arith.index_cast %c6_i32_373 : i32 to index
    %c0_374 = arith.constant 0 : index
    %c0_375 = arith.constant 0 : index
    %918 = vector.load %arg9[%917, %c0_374, %c0_375] : memref<8x2x384xf32, #tpu.memory_space<vmem>>, vector<1x2x384xf32>
    %919 = vector.shape_cast %918 : vector<1x2x384xf32> to vector<2x384xf32>
    %c64_376 = arith.constant 64 : index
    %c0_377 = arith.constant 0 : index
    %920 = vector.load %arg10[%c64_376, %c0_377] : memref<112x384xf32, #tpu.memory_space<vmem>>, vector<32x384xf32>
    %cst_378 = arith.constant dense<0.000000e+00> : vector<2x384xf32>
    %921 = tpu.matmul %912, %920, %cst_378 {dimension_numbers = #tpu.dot_dimension_numbers<[1], [0], [0], [1], [0, 0, 1, 1], [], []>} : vector<2x32xf32>, vector<32x384xf32>, vector<2x384xf32> -> vector<2x384xf32>
    %922 = vector.broadcast %657 : vector<1x384xf32> to vector<2x384xf32>
    %923 = arith.addf %921, %922 : vector<2x384xf32>
    %924 = vector.extract_strided_slice %919 {offsets = [0, 0], sizes = [2, 32], strides = [1, 1]} : vector<2x384xf32> to vector<2x32xf32>
    %925 = vector.extract_strided_slice %923 {offsets = [0, 0], sizes = [2, 32], strides = [1, 1]} : vector<2x384xf32> to vector<2x32xf32>
    %926 = arith.addf %924, %925 : vector<2x32xf32>
    %cst_379 = arith.constant 0.000000e+00 : f32
    %927 = vector.broadcast %cst_379 : f32 to vector<2x32xf32>
    %928 = arith.subf %927, %926 : vector<2x32xf32>
    %929 = math.exp %928 : vector<2x32xf32>
    %cst_380 = arith.constant 1.000000e+00 : f32
    %930 = vector.broadcast %cst_380 : f32 to vector<2x32xf32>
    %931 = arith.addf %930, %929 : vector<2x32xf32>
    %cst_381 = arith.constant 1.000000e+00 : f32
    %932 = vector.broadcast %cst_381 : f32 to vector<2x32xf32>
    %933 = arith.divf %932, %931 : vector<2x32xf32>
    %934 = vector.extract_strided_slice %919 {offsets = [0, 128], sizes = [2, 32], strides = [1, 1]} : vector<2x384xf32> to vector<2x32xf32>
    %935 = vector.extract_strided_slice %923 {offsets = [0, 128], sizes = [2, 32], strides = [1, 1]} : vector<2x384xf32> to vector<2x32xf32>
    %936 = arith.addf %934, %935 : vector<2x32xf32>
    %cst_382 = arith.constant 0.000000e+00 : f32
    %937 = vector.broadcast %cst_382 : f32 to vector<2x32xf32>
    %938 = arith.subf %937, %936 : vector<2x32xf32>
    %939 = math.exp %938 : vector<2x32xf32>
    %cst_383 = arith.constant 1.000000e+00 : f32
    %940 = vector.broadcast %cst_383 : f32 to vector<2x32xf32>
    %941 = arith.addf %940, %939 : vector<2x32xf32>
    %cst_384 = arith.constant 1.000000e+00 : f32
    %942 = vector.broadcast %cst_384 : f32 to vector<2x32xf32>
    %943 = arith.divf %942, %941 : vector<2x32xf32>
    %944 = vector.extract_strided_slice %919 {offsets = [0, 256], sizes = [2, 32], strides = [1, 1]} : vector<2x384xf32> to vector<2x32xf32>
    %945 = vector.extract_strided_slice %923 {offsets = [0, 256], sizes = [2, 32], strides = [1, 1]} : vector<2x384xf32> to vector<2x32xf32>
    %946 = arith.mulf %933, %945 : vector<2x32xf32>
    %947 = arith.addf %944, %946 : vector<2x32xf32>
    %948 = math.tanh %947 : vector<2x32xf32>
    %cst_385 = arith.constant 1.000000e+00 : f32
    %949 = vector.broadcast %cst_385 : f32 to vector<2x32xf32>
    %950 = arith.subf %949, %943 : vector<2x32xf32>
    %951 = arith.mulf %950, %948 : vector<2x32xf32>
    %952 = arith.mulf %943, %912 : vector<2x32xf32>
    %953 = arith.addf %951, %952 : vector<2x32xf32>
    %954 = arith.index_cast %c6_i32_373 : i32 to index
    %c0_386 = arith.constant 0 : index
    %c0_387 = arith.constant 0 : index
    %955 = vector.load %arg7[%954, %c0_386, %c0_387] : memref<8x2x32xf32, #tpu.memory_space<vmem>>, vector<1x2x32xf32>
    %956 = vector.shape_cast %955 : vector<1x2x32xf32> to vector<2x32xf32>
    %957 = vector.shape_cast %953 : vector<2x32xf32> to vector<1x2x32xf32>
    tpu.vector_store %arg7[%954, %c0_386, %c0_387], %957 {strides = array<i32>} : memref<8x2x32xf32, #tpu.memory_space<vmem>>, vector<1x2x32xf32>,
    %c7_i32_388 = arith.constant 7 : i32
    %958 = arith.index_cast %c7_i32_388 : i32 to index
    %c0_389 = arith.constant 0 : index
    %c0_390 = arith.constant 0 : index
    %959 = vector.load %arg9[%958, %c0_389, %c0_390] : memref<8x2x384xf32, #tpu.memory_space<vmem>>, vector<1x2x384xf32>
    %960 = vector.shape_cast %959 : vector<1x2x384xf32> to vector<2x384xf32>
    %c64_391 = arith.constant 64 : index
    %c0_392 = arith.constant 0 : index
    %961 = vector.load %arg10[%c64_391, %c0_392] : memref<112x384xf32, #tpu.memory_space<vmem>>, vector<32x384xf32>
    %cst_393 = arith.constant dense<0.000000e+00> : vector<2x384xf32>
    %962 = tpu.matmul %953, %961, %cst_393 {dimension_numbers = #tpu.dot_dimension_numbers<[1], [0], [0], [1], [0, 0, 1, 1], [], []>} : vector<2x32xf32>, vector<32x384xf32>, vector<2x384xf32> -> vector<2x384xf32>
    %963 = vector.broadcast %657 : vector<1x384xf32> to vector<2x384xf32>
    %964 = arith.addf %962, %963 : vector<2x384xf32>
    %965 = vector.extract_strided_slice %960 {offsets = [0, 0], sizes = [2, 32], strides = [1, 1]} : vector<2x384xf32> to vector<2x32xf32>
    %966 = vector.extract_strided_slice %964 {offsets = [0, 0], sizes = [2, 32], strides = [1, 1]} : vector<2x384xf32> to vector<2x32xf32>
    %967 = arith.addf %965, %966 : vector<2x32xf32>
    %cst_394 = arith.constant 0.000000e+00 : f32
    %968 = vector.broadcast %cst_394 : f32 to vector<2x32xf32>
    %969 = arith.subf %968, %967 : vector<2x32xf32>
    %970 = math.exp %969 : vector<2x32xf32>
    %cst_395 = arith.constant 1.000000e+00 : f32
    %971 = vector.broadcast %cst_395 : f32 to vector<2x32xf32>
    %972 = arith.addf %971, %970 : vector<2x32xf32>
    %cst_396 = arith.constant 1.000000e+00 : f32
    %973 = vector.broadcast %cst_396 : f32 to vector<2x32xf32>
    %974 = arith.divf %973, %972 : vector<2x32xf32>
    %975 = vector.extract_strided_slice %960 {offsets = [0, 128], sizes = [2, 32], strides = [1, 1]} : vector<2x384xf32> to vector<2x32xf32>
    %976 = vector.extract_strided_slice %964 {offsets = [0, 128], sizes = [2, 32], strides = [1, 1]} : vector<2x384xf32> to vector<2x32xf32>
    %977 = arith.addf %975, %976 : vector<2x32xf32>
    %cst_397 = arith.constant 0.000000e+00 : f32
    %978 = vector.broadcast %cst_397 : f32 to vector<2x32xf32>
    %979 = arith.subf %978, %977 : vector<2x32xf32>
    %980 = math.exp %979 : vector<2x32xf32>
    %cst_398 = arith.constant 1.000000e+00 : f32
    %981 = vector.broadcast %cst_398 : f32 to vector<2x32xf32>
    %982 = arith.addf %981, %980 : vector<2x32xf32>
    %cst_399 = arith.constant 1.000000e+00 : f32
    %983 = vector.broadcast %cst_399 : f32 to vector<2x32xf32>
    %984 = arith.divf %983, %982 : vector<2x32xf32>
    %985 = vector.extract_strided_slice %960 {offsets = [0, 256], sizes = [2, 32], strides = [1, 1]} : vector<2x384xf32> to vector<2x32xf32>
    %986 = vector.extract_strided_slice %964 {offsets = [0, 256], sizes = [2, 32], strides = [1, 1]} : vector<2x384xf32> to vector<2x32xf32>
    %987 = arith.mulf %974, %986 : vector<2x32xf32>
    %988 = arith.addf %985, %987 : vector<2x32xf32>
    %989 = math.tanh %988 : vector<2x32xf32>
    %cst_400 = arith.constant 1.000000e+00 : f32
    %990 = vector.broadcast %cst_400 : f32 to vector<2x32xf32>
    %991 = arith.subf %990, %984 : vector<2x32xf32>
    %992 = arith.mulf %991, %989 : vector<2x32xf32>
    %993 = arith.mulf %984, %953 : vector<2x32xf32>
    %994 = arith.addf %992, %993 : vector<2x32xf32>
    %995 = arith.index_cast %c7_i32_388 : i32 to index
    %c0_401 = arith.constant 0 : index
    %c0_402 = arith.constant 0 : index
    %996 = vector.load %arg7[%995, %c0_401, %c0_402] : memref<8x2x32xf32, #tpu.memory_space<vmem>>, vector<1x2x32xf32>
    %997 = vector.shape_cast %996 : vector<1x2x32xf32> to vector<2x32xf32>
    %998 = vector.shape_cast %994 : vector<2x32xf32> to vector<1x2x32xf32>
    tpu.vector_store %arg7[%995, %c0_401, %c0_402], %998 {strides = array<i32>} : memref<8x2x32xf32, #tpu.memory_space<vmem>>, vector<1x2x32xf32>,
    %c8_i32 = arith.constant 8 : i32
    return
  }
}

</mosaic_0001>

<llo_original>
// kernel: _forward_impl.1
$region0: #{_forward_impl.1}
  #allocation0 [shape = 'u32[]', space=smem, size = 0x4, offset = 0x4, fixed_abs, tag = 'smem constant byte address 0x4 - core index']
  #allocation1 [shape = 'u32[144,128]{1,0:T(1,128)}', space=vmem, size = 0x12000, scoped, tag = 'internal scratch']
  #allocation2 [shape = 'f32[8,2,32]{2,1,0:T(2,128)}', space=vmem, size = 0x2000, scoped, tag = 'scratch operand']
  #allocation3 [shape = 'f32[8,2,384]{2,1,0:T(2,128)}', space=vmem, size = 0x6000, scoped, tag = 'scratch operand']
  #allocation4 [shape = 'f32[112,384]{1,0:T(8,128)}', space=vmem, size = 0x2a000, scoped, tag = 'scratch operand']
  #allocation5 [shape = 's32[1]{0}', space=sflag, size = 0x4, scoped, tag = 'scratch operand']
  #allocation13 [shape = 's32[]', space=sflag, size = 0x4, offset = 0, fixed_abs, tag = 'sflag constant byte address 0x0 - dummy sync flag']
  #allocation14 [shape = 's32[]', space=sflag, size = 0x4, offset = 0, fixed_abs, tag = 'sflag constant byte address 0x0 - dummy sync flag']
  #allocation15 [shape = 'u32[]', space=smem, size = 0x4, offset = 0x44, fixed_abs, tag = 'smem constant byte address 0x44 - assertion arg 0']
  #allocation16 [shape = 'u32[]', space=smem, size = 0x4, offset = 0x48, fixed_abs, tag = 'smem constant byte address 0x48 - assertion arg 1']
  %s0 = inlined_call_operand.vmem [shape: f32[2,4,16], index: 0, kind: input, shape index: {}]
  %s1 = inlined_call_operand.vmem [shape: s32[8,2,1], index: 1, kind: input, shape index: {}]
  %s2 = inlined_call_operand.hbm [shape: f32[56,384], index: 2, kind: input, shape index: {}]
  %s3 = inlined_call_operand.hbm [shape: f32[40,512], index: 3, kind: input, shape index: {}]
  %s4 = inlined_call_operand.hbm [shape: f32[64,128], index: 4, kind: input, shape index: {}]
  %s5 = inlined_call_operand.hbm [shape: f32[112,384], index: 5, kind: input, shape index: {}]
  %s6 = inlined_call_operand.hbm [shape: f32[8,2,128], index: 6, kind: output, shape index: {0}]
  %s7 = inlined_call_operand.vmem [shape: f32[8,2,32], index: 7, kind: output, shape index: {1}]
  %8 = xla_tuple %s6, %s7
  %s9 = sld [smem:[#allocation0]]
  $region54: #{_forward_impl.1} parent=0
    _
  %s11 = ssub.s32 1, %s9
  %s12 = scalar_select 0, %s11, %s9
  $region1: #{_forward_impl.1} parent=0
    #allocation6 [shape = 'u8[86016]{0}', space=vmem, size = 0x15000, scoped, tag = 'input window, operand 2, single buffered']
    #allocation7 [shape = 's32[1]{0}', space=sflag, size = 0x4, scoped, tag = 'scoped memory for _forward_impl.1']
    #allocation8 [shape = 's32[1]{0}', space=sflag, size = 0x4, scoped, tag = 'scoped memory for _forward_impl.1']
    #allocation9 [shape = 'u8[81920]{0}', space=vmem, size = 0x14000, scoped, tag = 'input window, operand 3, single buffered']
    #allocation10 [shape = 's32[1]{0}', space=sflag, size = 0x4, scoped, tag = 'scoped memory for _forward_impl.1']
    #allocation11 [shape = 'u8[32768]{0}', space=vmem, size = 0x8000, scoped, tag = 'input window, operand 4, single buffered']
    #allocation12 [shape = 'u8[8192]{0}', space=vmem, size = 0x2000, scoped, tag = 'output window, operand 0, single buffered']
    %13 = vsyncpa [#allocation7], 0
    %14 = vsyncpa [#allocation10], 0
    %15 = vsyncpa [#allocation8], 0
    // Predicated region
    $region2: #{_forward_impl.1} parent=1 // pred_check
      _
    $region3: #{_forward_impl.1} parent=1 // pred_check_branch
      %17 = sbr.rel (0) target = $region5
    $region4: #{_forward_impl.1} parent=1 // pred_region
      _
    $region5: #{_forward_impl.1} parent=1 // pred_fallthru
      _
    // Predicated region
    $region6: #{_forward_impl.1} parent=1 // pred_check
      _
    $region7: #{_forward_impl.1} parent=1 // pred_check_branch
      %19 = sbr.rel (0) target = $region9
    $region8: #{_forward_impl.1} parent=1 // pred_region
      _
    $region9: #{_forward_impl.1} parent=1 // pred_fallthru
      _
    // Predicated region
    $region10: #{_forward_impl.1} parent=1 // pred_check
      _
    $region11: #{_forward_impl.1} parent=1 // pred_check_branch
      %21 = sbr.rel (0) target = $region13
    $region12: #{_forward_impl.1} parent=1 // pred_region
      %s23 = ssub.s32 2688, 2688
      %24 = vsyncadd [#allocation7], %s23
      %s25 = sshll.u32 [#allocation6], 4
      %s26 = int_to_ptr.vmem [resolvable:$true] %s25
      %31 = dma.hbm_to_vmem [thread:$0]  %s2, 2688, %s26, [#allocation7], 384, 384, 24
    $region13: #{_forward_impl.1} parent=1 // pred_fallthru
      _
    // Predicated region
    $region14: #{_forward_impl.1} parent=1 // pred_check
      _
    $region15: #{_forward_impl.1} parent=1 // pred_check_branch
      %33 = sbr.rel (0) target = $region17
    $region16: #{_forward_impl.1} parent=1 // pred_region
      %s35 = ssub.s32 2560, 2560
      %36 = vsyncadd [#allocation10], %s35
      %s37 = sshll.u32 [#allocation9], 4
      %s38 = int_to_ptr.vmem [resolvable:$true] %s37
      %43 = dma.hbm_to_vmem [thread:$0]  %s3, 2560, %s38, [#allocation10], 512, 512, 32
    $region17: #{_forward_impl.1} parent=1 // pred_fallthru
      _
    // Predicated region
    $region18: #{_forward_impl.1} parent=1 // pred_check
      _
    $region19: #{_forward_impl.1} parent=1 // pred_check_branch
      %45 = sbr.rel (0) target = $region21
    $region20: #{_forward_impl.1} parent=1 // pred_region
      %s47 = ssub.s32 1024, 1024
      %48 = vsyncadd [#allocation10], %s47
      %s49 = sshll.u32 [#allocation11], 4
      %s50 = int_to_ptr.vmem [resolvable:$true] %s49
      %55 = dma.hbm_to_vmem [thread:$0]  %s4, 1024, %s50, [#allocation10], 128, 128, 8
    $region21: #{_forward_impl.1} parent=1 // pred_fallthru
      _
    // Predicated region
    $region22: #{_forward_impl.1} parent=1 // pred_check
      _
    $region23: #{_forward_impl.1} parent=1 // pred_check_branch
      %57 = sbr.rel (0) target = $region25
    $region24: #{_forward_impl.1} parent=1 // pred_region
      %58 = dma.done [#allocation7], 2688
    $region25: #{_forward_impl.1} parent=1 // pred_fallthru
      _
    // Predicated region
    $region26: #{_forward_impl.1} parent=1 // pred_check
      _
    $region27: #{_forward_impl.1} parent=1 // pred_check_branch
      %60 = sbr.rel (0) target = $region29
    $region28: #{_forward_impl.1} parent=1 // pred_region
      %61 = dma.done [#allocation10], 2560
    $region29: #{_forward_impl.1} parent=1 // pred_fallthru
      _
    // Predicated region
    $region30: #{_forward_impl.1} parent=1 // pred_check
      _
    $region31: #{_forward_impl.1} parent=1 // pred_check_branch
      %63 = sbr.rel (0) target = $region33
    $region32: #{_forward_impl.1} parent=1 // pred_region
      %64 = dma.done [#allocation10], 1024
    $region33: #{_forward_impl.1} parent=1 // pred_fallthru
      _
    // Predicated region
    $region34: #{_forward_impl.1} parent=1 // pred_check
      _
    $region35: #{_forward_impl.1} parent=1 // pred_check_branch
      %66 = sbr.rel target = $region37
    $region36: #{_forward_impl.1} parent=1 // pred_region
      %67 = sst [smem:[#allocation15]] [#allocation14]
      %68 = sst [smem:[#allocation16]] [#allocation13]
    $region37: #{_forward_impl.1} parent=1 // pred_fallthru
      _
    %70 = shalt.err (0)
    %s72 = sshll.u32 [#allocation4], 4
    %s73 = int_to_ptr.vmem [resolvable:$true] %s72
    %75 = dma.hbm_to_vmem [thread:$0]  %s5, 5376, %s73, [#allocation5]
    %76 = vst [vmem:[#allocation12] sm:$0x3] 0.0
    %vm77 = vcmask 254976
    %78 = vst.msk [vmem:[#allocation2] sm:$0x3] %vm77, 0.0
    %v79 = vld [vmem:[%s0] sm:$0xf]
    %v80 = vld [vmem:[%s0 + $0x4] sm:$0xf]
    %v81 = vld [vmem:[#allocation11] sm:$0xff]
    %v82 = vld [vmem:[#allocation11 + $0x8] sm:$0xff]
    %v83 = vld [vmem:[#allocation11 + $0x10] sm:$0x1]
    %v86 = vcombine.low %v79, %v80
    %vm87 = vcmask 130048
    %v88 = vsel %vm87, %v86, 0
    %90 = vmatprep.subr.mxu0 0.0
    %91 = vmatpush1.msra.mxu0 %v81
    %92 = vmatprep.subr.mxu0 0.0
    %93 = vmatpush1.msra.mxu0 %v82
    %94 = vmatprep.subr.mxu0 0.0
    %95 = vmatpush1.msra.mxu0 0.0
    %96 = vmatprep.subr.mxu0 0.0
    %97 = vmatpush1.msra.mxu0 0.0
    %98 = vmatprep.subr.mxu0 0.0
    %99 = vmatpush1.msra.mxu0 0.0
    %100 = vmatprep.subr.mxu0 0.0
    %101 = vmatpush1.msra.mxu0 0.0
    %102 = vmatprep.subr.mxu0 0.0
    %103 = vmatpush1.msra.mxu0 0.0
    %104 = vmatprep.subr.mxu0 0.0
    %105 = vmatpush1.msra.mxu0 0.0
    %106 = vmatprep.subr.mxu0 0.0
    %107 = vmatpush1.msra.mxu0 0.0
    %108 = vmatprep.subr.mxu0 0.0
    %109 = vmatpush1.msra.mxu0 0.0
    %110 = vmatprep.subr.mxu0 0.0
    %111 = vmatpush1.msra.mxu0 0.0
    %112 = vmatprep.subr.mxu0 0.0
    %113 = vmatpush1.msra.mxu0 0.0
    %114 = vmatprep.subr.mxu0 0.0
    %115 = vmatpush1.msra.mxu0 0.0
    %116 = vmatprep.subr.mxu0 0.0
    %117 = vmatpush1.msra.mxu0 0.0
    %118 = vmatprep.subr.mxu0 0.0
    %119 = vmatpush1.msra.mxu0 0.0
    %120 = vmatprep.subr.mxu0 0.0
    %121 = vmatpush1.msra.mxu0 0.0
    %122 = vmatprep.subr.mxu0 0.0
    %123 = vmatpush1.msra.mxu0 0.0
    %124 = vmatprep.subr.mxu0 0.0
    %125 = vmatpush1.msra.mxu0 0.0
    %126 = vmatprep.subr.mxu0 0.0
    %127 = vmatpush1.msra.mxu0 0.0
    %128 = vmatprep.subr.mxu0 0.0
    %129 = vmatpush1.msra.mxu0 0.0
    %130 = vmatprep.subr.mxu0 0.0
    %131 = vmatpush1.msra.mxu0 0.0
    %132 = vmatprep.subr.mxu0 0.0
    %133 = vmatpush1.msra.mxu0 0.0
    %134 = vmatprep.subr.mxu0 0.0
    %135 = vmatpush1.msra.mxu0 0.0
    %136 = vmatprep.subr.mxu0 0.0
    %137 = vmatpush1.msra.mxu0 0.0
    %138 = vmatprep.subr.mxu0 0.0
    %139 = vmatpush1.msra.mxu0 0.0
    %140 = vmatprep.subr.mxu0 0.0
    %141 = vmatpush1.msra.mxu0 0.0
    %142 = vmatprep.subr.mxu0 0.0
    %143 = vmatpush1.msra.mxu0 0.0
    %144 = vmatprep.subr.mxu0 0.0
    %145 = vmatpush1.msra.mxu0 0.0
    %146 = vmatprep.subr.mxu0 0.0
    %147 = vmatpush1.msra.mxu0 0.0
    %148 = vmatprep.subr.mxu0 0.0
    %149 = vmatpush1.msra.mxu0 0.0
    %150 = vmatprep.subr.mxu0 0.0
    %151 = vmatpush1.msra.mxu0 0.0
    %152 = vmatprep.subr.mxu0 0.0
    %153 = vmatpush1.msra.mxu0 0.0
    %154 = vmatprep.mubr.f32.mxu0 0.0
    %155 = vmatmul.mubr.f32.gmra.mrb[0].mxu0 %v88
    %v156 = vpop.f32.mrb[0].mxu0
    %v157 = vadd.f32 0.0, %v156
    %v158 = vpop.f32.mrb[0].mxu0
    %159 = vdwg.mxu0
    %v161 = vcombine.high %v157, %v157
    %v163 = vlaneseq
    %v164 = vand.u32 %v163, 127
    %v165 = vld [vmem:[#allocation9] sm:$0xff]
    %v166 = vld [vmem:[#allocation9 + $0x8] sm:$0xff]
    %v167 = vld [vmem:[#allocation9 + $0x10] sm:$0xff]
    %v168 = vld [vmem:[#allocation9 + $0x18] sm:$0xff]
    %v169 = vld [vmem:[#allocation9 + $0x20] sm:$0xff]
    %v170 = vld [vmem:[#allocation9 + $0x28] sm:$0xff]
    %v171 = vld [vmem:[#allocation9 + $0x30] sm:$0xff]
    %v172 = vld [vmem:[#allocation9 + $0x38] sm:$0xff]
    %v173 = vld [vmem:[#allocation9 + $0x40] sm:$0xff]
    %v174 = vld [vmem:[#allocation9 + $0x48] sm:$0xff]
    %v175 = vld [vmem:[#allocation9 + $0x50] sm:$0xff]
    %v176 = vld [vmem:[#allocation9 + $0x58] sm:$0xff]
    %v177 = vld [vmem:[#allocation9 + $0x60] sm:$0xff]
    %v178 = vld [vmem:[#allocation9 + $0x68] sm:$0xff]
    %v179 = vld [vmem:[#allocation9 + $0x70] sm:$0xff]
    %v180 = vld [vmem:[#allocation9 + $0x78] sm:$0xff]
    %s181 = scalar_lea.vmem [#allocation9], 128
    %v182 = vld [vmem:[%s181] ss:$8 sm:$0xf]
    %v184 = vlaneseq
    %v185 = vshrl.u32 %v184, 7
    %v186 = vsub.s32 0, %v185
    %v187 = vrot.slane %v182, %v186
    %v188 = vlaneseq
    %v189 = vshrl.u32 %v188, 7
    %v190 = vsub.s32 1, %v189
    %v191 = vrot.slane %v182, %v190
    %v192 = vlaneseq
    %v193 = vshrl.u32 %v192, 7
    %v194 = vsub.s32 2, %v193
    %v195 = vrot.slane %v182, %v194
    %v196 = vlaneseq
    %v197 = vshrl.u32 %v196, 7
    %v198 = vsub.s32 3, %v197
    %v199 = vrot.slane %v182, %v198
    %vm204 = vcmask 261120
    %v206 = vsel %vm204, 0.0, 0
    %208 = vmatprep.subr.mxu0 %v166
    %209 = vmatpush1.msra.mxu0 %v165
    %210 = vmatprep.subr.mxu0 %v170
    %211 = vmatpush1.msra.mxu0 %v169
    %212 = vmatprep.subr.mxu0 %v174
    %213 = vmatpush1.msra.mxu0 %v173
    %214 = vmatprep.subr.mxu0 %v178
    %215 = vmatpush1.msra.mxu0 %v177
    %216 = vmatprep.subr.mxu0 0.0
    %217 = vmatpush1.msra.mxu0 0.0
    %218 = vmatprep.subr.mxu0 0.0
    %219 = vmatpush1.msra.mxu0 0.0
    %220 = vmatprep.subr.mxu0 0.0
    %221 = vmatpush1.msra.mxu0 0.0
    %222 = vmatprep.subr.mxu0 0.0
    %223 = vmatpush1.msra.mxu0 0.0
    %224 = vmatprep.subr.mxu0 0.0
    %225 = vmatpush1.msra.mxu0 0.0
    %226 = vmatprep.subr.mxu0 0.0
    %227 = vmatpush1.msra.mxu0 0.0
    %228 = vmatprep.subr.mxu0 0.0
    %229 = vmatpush1.msra.mxu0 0.0
    %230 = vmatprep.subr.mxu0 0.0
    %231 = vmatpush1.msra.mxu0 0.0
    %232 = vmatprep.subr.mxu0 0.0
    %233 = vmatpush1.msra.mxu0 0.0
    %234 = vmatprep.subr.mxu0 0.0
    %235 = vmatpush1.msra.mxu0 0.0
    %236 = vmatprep.subr.mxu0 0.0
    %237 = vmatpush1.msra.mxu0 0.0
    %238 = vmatprep.subr.mxu0 0.0
    %239 = vmatpush1.msra.mxu0 0.0
    %240 = vmatprep.subr.mxu0 0.0
    %241 = vmatpush1.msra.mxu0 0.0
    %242 = vmatprep.subr.mxu0 0.0
    %243 = vmatpush1.msra.mxu0 0.0
    %244 = vmatprep.subr.mxu0 0.0
    %245 = vmatpush1.msra.mxu0 0.0
    %246 = vmatprep.subr.mxu0 0.0
    %247 = vmatpush1.msra.mxu0 0.0
    %248 = vmatprep.subr.mxu0 0.0
    %249 = vmatpush1.msra.mxu0 0.0
    %250 = vmatprep.subr.mxu0 0.0
    %251 = vmatpush1.msra.mxu0 0.0
    %252 = vmatprep.subr.mxu0 0.0
    %253 = vmatpush1.msra.mxu0 0.0
    %254 = vmatprep.subr.mxu0 0.0
    %255 = vmatpush1.msra.mxu0 0.0
    %256 = vmatprep.subr.mxu0 0.0
    %257 = vmatpush1.msra.mxu0 0.0
    %258 = vmatprep.subr.mxu0 0.0
    %259 = vmatpush1.msra.mxu0 0.0
    %260 = vmatprep.subr.mxu0 0.0
    %261 = vmatpush1.msra.mxu0 0.0
    %262 = vmatprep.subr.mxu0 0.0
    %263 = vmatpush1.msra.mxu0 0.0
    %264 = vmatprep.subr.mxu0 0.0
    %265 = vmatpush1.msra.mxu0 0.0
    %266 = vmatprep.subr.mxu0 0.0
    %267 = vmatpush1.msra.mxu0 0.0
    %268 = vmatprep.subr.mxu0 0.0
    %269 = vmatpush1.msra.mxu0 0.0
    %270 = vmatprep.subr.mxu0 0.0
    %271 = vmatpush1.msra.mxu0 0.0
    %272 = vmatprep.mubr.f32.mxu0 0.0
    %273 = vmatmul.mubr.f32.gmra.mrb[0].mxu0 %v206
    %v274 = vpop.f32.mrb[0].mxu0
    %v275 = vadd.f32 %v187, %v274
    %v276 = vpop.f32.mrb[0].mxu0
    %v277 = vadd.f32 %v191, %v276
    %278 = vdwg.mxu0
    %279 = vmatprep.subr.mxu0 %v168
    %280 = vmatpush1.msra.mxu0 %v167
    %281 = vmatprep.subr.mxu0 %v172
    %282 = vmatpush1.msra.mxu0 %v171
    %283 = vmatprep.subr.mxu0 %v176
    %284 = vmatpush1.msra.mxu0 %v175
    %285 = vmatprep.subr.mxu0 %v180
    %286 = vmatpush1.msra.mxu0 %v179
    %287 = vmatprep.subr.mxu0 0.0
    %288 = vmatpush1.msra.mxu0 0.0
    %289 = vmatprep.subr.mxu0 0.0
    %290 = vmatpush1.msra.mxu0 0.0
    %291 = vmatprep.subr.mxu0 0.0
    %292 = vmatpush1.msra.mxu0 0.0
    %293 = vmatprep.subr.mxu0 0.0
    %294 = vmatpush1.msra.mxu0 0.0
    %295 = vmatprep.subr.mxu0 0.0
    %296 = vmatpush1.msra.mxu0 0.0
    %297 = vmatprep.subr.mxu0 0.0
    %298 = vmatpush1.msra.mxu0 0.0
    %299 = vmatprep.subr.mxu0 0.0
    %300 = vmatpush1.msra.mxu0 0.0
    %301 = vmatprep.subr.mxu0 0.0
    %302 = vmatpush1.msra.mxu0 0.0
    %303 = vmatprep.subr.mxu0 0.0
    %304 = vmatpush1.msra.mxu0 0.0
    %305 = vmatprep.subr.mxu0 0.0
    %306 = vmatpush1.msra.mxu0 0.0
    %307 = vmatprep.subr.mxu0 0.0
    %308 = vmatpush1.msra.mxu0 0.0
    %309 = vmatprep.subr.mxu0 0.0
    %310 = vmatpush1.msra.mxu0 0.0
    %311 = vmatprep.subr.mxu0 0.0
    %312 = vmatpush1.msra.mxu0 0.0
    %313 = vmatprep.subr.mxu0 0.0
    %314 = vmatpush1.msra.mxu0 0.0
    %315 = vmatprep.subr.mxu0 0.0
    %316 = vmatpush1.msra.mxu0 0.0
    %317 = vmatprep.subr.mxu0 0.0
    %318 = vmatpush1.msra.mxu0 0.0
    %319 = vmatprep.subr.mxu0 0.0
    %320 = vmatpush1.msra.mxu0 0.0
    %321 = vmatprep.subr.mxu0 0.0
    %322 = vmatpush1.msra.mxu0 0.0
    %323 = vmatprep.subr.mxu0 0.0
    %324 = vmatpush1.msra.mxu0 0.0
    %325 = vmatprep.subr.mxu0 0.0
    %326 = vmatpush1.msra.mxu0 0.0
    %327 = vmatprep.subr.mxu0 0.0
    %328 = vmatpush1.msra.mxu0 0.0
    %329 = vmatprep.subr.mxu0 0.0
    %330 = vmatpush1.msra.mxu0 0.0
    %331 = vmatprep.subr.mxu0 0.0
    %332 = vmatpush1.msra.mxu0 0.0
    %333 = vmatprep.subr.mxu0 0.0
    %334 = vmatpush1.msra.mxu0 0.0
    %335 = vmatprep.subr.mxu0 0.0
    %336 = vmatpush1.msra.mxu0 0.0
    %337 = vmatprep.subr.mxu0 0.0
    %338 = vmatpush1.msra.mxu0 0.0
    %339 = vmatprep.subr.mxu0 0.0
    %340 = vmatpush1.msra.mxu0 0.0
    %341 = vmatprep.subr.mxu0 0.0
    %342 = vmatpush1.msra.mxu0 0.0
    %343 = vmatprep.mubr.f32.mxu0 0.0
    %344 = vmatmul.mubr.f32.gmra.mrb[0].mxu0 %v206
    %v345 = vpop.f32.mrb[0].mxu0
    %v346 = vadd.f32 %v195, %v345
    %v347 = vpop.f32.mrb[0].mxu0
    %v348 = vadd.f32 %v199, %v347
    %349 = vdwg.mxu0
    %v352 = vunpack.c.l.s4 1966171168
    %v353 = vunpack.c.0.s8 %v352
    %v354 = vlaneseq
    %v355 = vshrl.u32 %v354, 7
    %v356 = vsub.s32 %v353, %v355
    %v357 = vrot.slane %v275, %v356
    %v358 = vcombine.high %v357, %v357
    %v360 = vunpack.c.l.s4 1966171168
    %v361 = vunpack.c.0.s8 %v360
    %v362 = vlaneseq
    %v363 = vshrl.u32 %v362, 7
    %v364 = vsub.s32 %v361, %v363
    %v365 = vrot.slane %v357, %v364
    %v367 = vunpack.c.l.s4 1966171168
    %v368 = vunpack.c.0.s8 %v367
    %v369 = vlaneseq
    %v370 = vshrl.u32 %v369, 7
    %v371 = vsub.s32 %v368, %v370
    %v372 = vrot.slane %v358, %v371
    %v373 = vlaneseq
    %v374 = vshrl.u32 %v373, 7
    %v375 = vsub.s32 0, %v374
    %v376 = vrot.slane %v365, %v375
    %v377 = vlaneseq
    %v378 = vshrl.u32 %v377, 7
    %v379 = vsub.s32 0, %v378
    %v380 = vrot.slane %v372, %v379
    %v383 = vadd.f32 %v376, %v157
    %v384 = vadd.f32 %v380, %v161
    %v385 = vtanh.pop %v383
    %v386 = vtanh.pop %v384
    %v387 = vlaneseq
    %v388 = vshrl.u32 %v387, 7
    %v389 = vsub.s32 0, %v388
    %v390 = vrot.slane %v83, %v389
    %v391 = vmul.f32 %v385, %v390
    %v392 = vmul.f32 %v386, %v390
    %vm393 = vcmask 1043456
    %v394 = vsel %vm393, %v391, 0.0
    %395 = vadd.xlane.f32.xlu0 %v394
    %v396 = vpop.xlane.xlu0 %395
    %v397 = vsel %vm393, %v392, 0.0
    %398 = vadd.xlane.f32.xlu0 %v397
    %v399 = vpop.xlane.xlu0 %398
    %v402 = vlaneseq
    %v403 = vshrl.u32 %v402, 7
    %v404 = vsub.s32 %v164, %v403
    %v405 = vrot.slane %v396, %v404
    %v406 = vlaneseq
    %v407 = vshrl.u32 %v406, 7
    %v408 = vsub.s32 %v164, %v407
    %v409 = vrot.slane %v399, %v408
    %vm410 = vcmask 1041409
    %v411 = vsel %vm410, %v409, %v405
    %vm413 = vcmask 25600
    %v414 = vsel %vm413, %v411, -inf
    %415 = vmax.xlane.f32.xlu0 %v414
    %v416 = vpop.xlane.xlu0 %415
    %v418 = vlaneseq
    %v419 = vshrl.u32 %v418, 7
    %v420 = vsub.s32 0, %v419
    %v421 = vrot.slane %v416, %v420
    %v422 = vlaneseq
    %v423 = vshrl.u32 %v422, 7
    %v424 = vsub.s32 1, %v423
    %v425 = vrot.slane %v416, %v424
    %v428 = vsub.f32 %v396, %v421
    %v429 = vsub.f32 %v399, %v425
    %v430 = vmul.f32 %v428, 1.442695
    %v431 = vpow.pop %v430
    %v432 = vmul.f32 %v429, 1.442695
    %v433 = vpow.pop %v432
    %436 = vset.pattern.permute.xlu0 0
    %437 = vperm.xlu0 %436, %v431
    %v438 = vpop.permute.xlu0 %437
    %439 = vset.pattern.permute.xlu0 0
    %440 = vperm.xlu0 %439, %v433
    %v441 = vpop.permute.xlu0 %440
    %v442 = vlaneseq
    %v443 = vshrl.u32 %v442, 7
    %v444 = vsub.s32 %v164, %v443
    %v445 = vrot.slane %v438, %v444
    %v446 = vlaneseq
    %v447 = vshrl.u32 %v446, 7
    %v448 = vsub.s32 %v164, %v447
    %v449 = vrot.slane %v441, %v448
    %v450 = vsel %vm410, %v449, %v445
    %v452 = vsel %vm413, %v450, 0.0
    %453 = vadd.xlane.f32.xlu0 %v452
    %v454 = vpop.xlane.xlu0 %453
    %v456 = vlaneseq
    %v457 = vshrl.u32 %v456, 7
    %v458 = vsub.s32 0, %v457
    %v459 = vrot.slane %v454, %v458
    %v460 = vlaneseq
    %v461 = vshrl.u32 %v460, 7
    %v462 = vsub.s32 1, %v461
    %v463 = vrot.slane %v454, %v462
    %v466 = vrcp.pop %v459
    %v467 = vmul.f32 %v431, %v466
    %v468 = vrcp.pop %v463
    %v469 = vmul.f32 %v433, %v468
    %471 = vset.pattern.permute.xlu0 0
    %472 = vperm.xlu0 %471, %v467
    %v473 = vpop.permute.xlu0 %472
    %476 = vset.pattern.permute.xlu0 0
    %477 = vperm.xlu0 %476, %v469
    %v478 = vpop.permute.xlu0 %477
    %v480 = vmul.f32 %v473, %v79
    %v481 = vmul.f32 %v478, %v80
    %vm482 = vcmask 125952
    %v483 = vsel %vm482, %v480, 0.0
    %v484 = vrot.slane %v483, 4
    %v485 = vadd.f32 %v483, %v484
    %v486 = vrot.slane %v485, 2
    %v487 = vadd.f32 %v485, %v486
    %v488 = vrot.slane %v487, 1
    %v489 = vadd.f32 %v487, %v488
    %v490 = vsel %vm482, %v481, 0.0
    %v491 = vrot.slane %v490, 4
    %v492 = vadd.f32 %v490, %v491
    %v493 = vrot.slane %v492, 2
    %v494 = vadd.f32 %v492, %v493
    %v495 = vrot.slane %v494, 1
    %v496 = vadd.f32 %v494, %v495
    %vm497 = vcmp.eq.s32.totalorder %v164, 1
    %v498 = vsel %vm497, 1, 0
    %v499 = vcvt.s32.f32 %v498
    %v500 = vld [vmem:[#allocation6] sm:$0xff]
    %v501 = vld [vmem:[#allocation6 + $0x8] sm:$0xff]
    %v502 = vld [vmem:[#allocation6 + $0x10] sm:$0xff]
    %v503 = vld [vmem:[#allocation6 + $0x18] sm:$0xff]
    %v504 = vld [vmem:[#allocation6 + $0x20] sm:$0xff]
    %v505 = vld [vmem:[#allocation6 + $0x28] sm:$0xff]
    %v506 = vld [vmem:[#allocation6 + $0x30] sm:$0xff]
    %v507 = vld [vmem:[#allocation6 + $0x38] sm:$0xff]
    %v508 = vld [vmem:[#allocation6 + $0x40] sm:$0xff]
    %v509 = vld [vmem:[#allocation6 + $0x48] sm:$0xff]
    %v510 = vld [vmem:[#allocation6 + $0x50] sm:$0xff]
    %v511 = vld [vmem:[#allocation6 + $0x58] sm:$0xff]
    %v512 = vld [vmem:[#allocation6 + $0x60] sm:$0xff]
    %v513 = vld [vmem:[#allocation6 + $0x68] sm:$0xff]
    %v514 = vld [vmem:[#allocation6 + $0x70] sm:$0xff]
    %v515 = vld [vmem:[#allocation6 + $0x78] sm:$0xff]
    %v516 = vld [vmem:[#allocation6 + $0x80] sm:$0xff]
    %v517 = vld [vmem:[#allocation6 + $0x88] sm:$0xff]
    %v520 = vsel %vm410, %v496, %v489
    %v521 = vsel %vm87, %v520, 0
    %523 = vmatprep.subr.mxu0 %v513
    %524 = vmatpush1.msra.mxu0 %v512
    %525 = vmatprep.subr.mxu0 %v516
    %526 = vmatpush1.msra.mxu0 %v515
    %527 = vmatprep.subr.mxu0 0.0
    %528 = vmatpush1.msra.mxu0 0.0
    %529 = vmatprep.subr.mxu0 0.0
    %530 = vmatpush1.msra.mxu0 0.0
    %531 = vmatprep.subr.mxu0 0.0
    %532 = vmatpush1.msra.mxu0 0.0
    %533 = vmatprep.subr.mxu0 0.0
    %534 = vmatpush1.msra.mxu0 0.0
    %535 = vmatprep.subr.mxu0 0.0
    %536 = vmatpush1.msra.mxu0 0.0
    %537 = vmatprep.subr.mxu0 0.0
    %538 = vmatpush1.msra.mxu0 0.0
    %539 = vmatprep.subr.mxu0 0.0
    %540 = vmatpush1.msra.mxu0 0.0
    %541 = vmatprep.subr.mxu0 0.0
    %542 = vmatpush1.msra.mxu0 0.0
    %543 = vmatprep.subr.mxu0 0.0
    %544 = vmatpush1.msra.mxu0 0.0
    %545 = vmatprep.subr.mxu0 0.0
    %546 = vmatpush1.msra.mxu0 0.0
    %547 = vmatprep.subr.mxu0 0.0
    %548 = vmatpush1.msra.mxu0 0.0
    %549 = vmatprep.subr.mxu0 0.0
    %550 = vmatpush1.msra.mxu0 0.0
    %551 = vmatprep.subr.mxu0 0.0
    %552 = vmatpush1.msra.mxu0 0.0
    %553 = vmatprep.subr.mxu0 0.0
    %554 = vmatpush1.msra.mxu0 0.0
    %555 = vmatprep.subr.mxu0 0.0
    %556 = vmatpush1.msra.mxu0 0.0
    %557 = vmatprep.subr.mxu0 0.0
    %558 = vmatpush1.msra.mxu0 0.0
    %559 = vmatprep.subr.mxu0 0.0
    %560 = vmatpush1.msra.mxu0 0.0
    %561 = vmatprep.subr.mxu0 0.0
    %562 = vmatpush1.msra.mxu0 0.0
    %563 = vmatprep.subr.mxu0 0.0
    %564 = vmatpush1.msra.mxu0 0.0
    %565 = vmatprep.subr.mxu0 0.0
    %566 = vmatpush1.msra.mxu0 0.0
    %567 = vmatprep.subr.mxu0 0.0
    %568 = vmatpush1.msra.mxu0 0.0
    %569 = vmatprep.subr.mxu0 0.0
    %570 = vmatpush1.msra.mxu0 0.0
    %571 = vmatprep.subr.mxu0 0.0
    %572 = vmatpush1.msra.mxu0 0.0
    %573 = vmatprep.subr.mxu0 0.0
    %574 = vmatpush1.msra.mxu0 0.0
    %575 = vmatprep.subr.mxu0 0.0
    %576 = vmatpush1.msra.mxu0 0.0
    %577 = vmatprep.subr.mxu0 0.0
    %578 = vmatpush1.msra.mxu0 0.0
    %579 = vmatprep.subr.mxu0 0.0
    %580 = vmatpush1.msra.mxu0 0.0
    %581 = vmatprep.subr.mxu0 0.0
    %582 = vmatpush1.msra.mxu0 0.0
    %583 = vmatprep.subr.mxu0 0.0
    %584 = vmatpush1.msra.mxu0 0.0
    %585 = vmatprep.subr.mxu0 0.0
    %586 = vmatpush1.msra.mxu0 0.0
    %587 = vmatprep.mubr.f32.mxu0 0.0
    %588 = vmatmul.mubr.f32.gmra.mrb[0].mxu0 %v521
    %v589 = vpop.f32.mrb[0].mxu0
    %v590 = vadd.f32 0.0, %v589
    %v591 = vpop.f32.mrb[0].mxu0
    %v592 = vadd.f32 0.0, %v591
    %593 = vdwg.mxu0
    %594 = vmatprep.subr.mxu0 0.0
    %595 = vmatpush1.msra.mxu0 %v514
    %596 = vmatprep.subr.mxu0 0.0
    %597 = vmatpush1.msra.mxu0 %v517
    %598 = vmatprep.subr.mxu0 0.0
    %599 = vmatpush1.msra.mxu0 0.0
    %600 = vmatprep.subr.mxu0 0.0
    %601 = vmatpush1.msra.mxu0 0.0
    %602 = vmatprep.subr.mxu0 0.0
    %603 = vmatpush1.msra.mxu0 0.0
    %604 = vmatprep.subr.mxu0 0.0
    %605 = vmatpush1.msra.mxu0 0.0
    %606 = vmatprep.subr.mxu0 0.0
    %607 = vmatpush1.msra.mxu0 0.0
    %608 = vmatprep.subr.mxu0 0.0
    %609 = vmatpush1.msra.mxu0 0.0
    %610 = vmatprep.subr.mxu0 0.0
    %611 = vmatpush1.msra.mxu0 0.0
    %612 = vmatprep.subr.mxu0 0.0
    %613 = vmatpush1.msra.mxu0 0.0
    %614 = vmatprep.subr.mxu0 0.0
    %615 = vmatpush1.msra.mxu0 0.0
    %616 = vmatprep.subr.mxu0 0.0
    %617 = vmatpush1.msra.mxu0 0.0
    %618 = vmatprep.subr.mxu0 0.0
    %619 = vmatpush1.msra.mxu0 0.0
    %620 = vmatprep.subr.mxu0 0.0
    %621 = vmatpush1.msra.mxu0 0.0
    %622 = vmatprep.subr.mxu0 0.0
    %623 = vmatpush1.msra.mxu0 0.0
    %624 = vmatprep.subr.mxu0 0.0
    %625 = vmatpush1.msra.mxu0 0.0
    %626 = vmatprep.subr.mxu0 0.0
    %627 = vmatpush1.msra.mxu0 0.0
    %628 = vmatprep.subr.mxu0 0.0
    %629 = vmatpush1.msra.mxu0 0.0
    %630 = vmatprep.subr.mxu0 0.0
    %631 = vmatpush1.msra.mxu0 0.0
    %632 = vmatprep.subr.mxu0 0.0
    %633 = vmatpush1.msra.mxu0 0.0
    %634 = vmatprep.subr.mxu0 0.0
    %635 = vmatpush1.msra.mxu0 0.0
    %636 = vmatprep.subr.mxu0 0.0
    %637 = vmatpush1.msra.mxu0 0.0
    %638 = vmatprep.subr.mxu0 0.0
    %639 = vmatpush1.msra.mxu0 0.0
    %640 = vmatprep.subr.mxu0 0.0
    %641 = vmatpush1.msra.mxu0 0.0
    %642 = vmatprep.subr.mxu0 0.0
    %643 = vmatpush1.msra.mxu0 0.0
    %644 = vmatprep.subr.mxu0 0.0
    %645 = vmatpush1.msra.mxu0 0.0
    %646 = vmatprep.subr.mxu0 0.0
    %647 = vmatpush1.msra.mxu0 0.0
    %648 = vmatprep.subr.mxu0 0.0
    %649 = vmatpush1.msra.mxu0 0.0
    %650 = vmatprep.subr.mxu0 0.0
    %651 = vmatpush1.msra.mxu0 0.0
    %652 = vmatprep.subr.mxu0 0.0
    %653 = vmatpush1.msra.mxu0 0.0
    %654 = vmatprep.subr.mxu0 0.0
    %655 = vmatpush1.msra.mxu0 0.0
    %656 = vmatprep.subr.mxu0 0.0
    %657 = vmatpush1.msra.mxu0 0.0
    %658 = vmatprep.mubr.f32.mxu0 0.0
    %659 = vmatmul.mubr.f32.gmra.mrb[0].mxu0 %v521
    %v660 = vpop.f32.mrb[0].mxu0
    %v661 = vadd.f32 0.0, %v660
    %v662 = vpop.f32.mrb[0].mxu0
    %663 = vdwg.mxu0
    %v665 = vsel %vm204, %v499, 0
    %667 = vmatprep.subr.mxu0 %v501
    %668 = vmatpush1.msra.mxu0 %v500
    %669 = vmatprep.subr.mxu0 %v504
    %670 = vmatpush1.msra.mxu0 %v503
    %671 = vmatprep.subr.mxu0 %v507
    %672 = vmatpush1.msra.mxu0 %v506
    %673 = vmatprep.subr.mxu0 %v510
    %674 = vmatpush1.msra.mxu0 %v509
    %675 = vmatprep.subr.mxu0 0.0
    %676 = vmatpush1.msra.mxu0 0.0
    %677 = vmatprep.subr.mxu0 0.0
    %678 = vmatpush1.msra.mxu0 0.0
    %679 = vmatprep.subr.mxu0 0.0
    %680 = vmatpush1.msra.mxu0 0.0
    %681 = vmatprep.subr.mxu0 0.0
    %682 = vmatpush1.msra.mxu0 0.0
    %683 = vmatprep.subr.mxu0 0.0
    %684 = vmatpush1.msra.mxu0 0.0
    %685 = vmatprep.subr.mxu0 0.0
    %686 = vmatpush1.msra.mxu0 0.0
    %687 = vmatprep.subr.mxu0 0.0
    %688 = vmatpush1.msra.mxu0 0.0
    %689 = vmatprep.subr.mxu0 0.0
    %690 = vmatpush1.msra.mxu0 0.0
    %691 = vmatprep.subr.mxu0 0.0
    %692 = vmatpush1.msra.mxu0 0.0
    %693 = vmatprep.subr.mxu0 0.0
    %694 = vmatpush1.msra.mxu0 0.0
    %695 = vmatprep.subr.mxu0 0.0
    %696 = vmatpush1.msra.mxu0 0.0
    %697 = vmatprep.subr.mxu0 0.0
    %698 = vmatpush1.msra.mxu0 0.0
    %699 = vmatprep.subr.mxu0 0.0
    %700 = vmatpush1.msra.mxu0 0.0
    %701 = vmatprep.subr.mxu0 0.0
    %702 = vmatpush1.msra.mxu0 0.0
    %703 = vmatprep.subr.mxu0 0.0
    %704 = vmatpush1.msra.mxu0 0.0
    %705 = vmatprep.subr.mxu0 0.0
    %706 = vmatpush1.msra.mxu0 0.0
    %707 = vmatprep.subr.mxu0 0.0
    %708 = vmatpush1.msra.mxu0 0.0
    %709 = vmatprep.subr.mxu0 0.0
    %710 = vmatpush1.msra.mxu0 0.0
    %711 = vmatprep.subr.mxu0 0.0
    %712 = vmatpush1.msra.mxu0 0.0
    %713 = vmatprep.subr.mxu0 0.0
    %714 = vmatpush1.msra.mxu0 0.0
    %715 = vmatprep.subr.mxu0 0.0
    %716 = vmatpush1.msra.mxu0 0.0
    %717 = vmatprep.subr.mxu0 0.0
    %718 = vmatpush1.msra.mxu0 0.0
    %719 = vmatprep.subr.mxu0 0.0
    %720 = vmatpush1.msra.mxu0 0.0
    %721 = vmatprep.subr.mxu0 0.0
    %722 = vmatpush1.msra.mxu0 0.0
    %723 = vmatprep.subr.mxu0 0.0
    %724 = vmatpush1.msra.mxu0 0.0
    %725 = vmatprep.subr.mxu0 0.0
    %726 = vmatpush1.msra.mxu0 0.0
    %727 = vmatprep.subr.mxu0 0.0
    %728 = vmatpush1.msra.mxu0 0.0
    %729 = vmatprep.subr.mxu0 0.0
    %730 = vmatpush1.msra.mxu0 0.0
    %731 = vmatprep.mubr.f32.mxu0 0.0
    %732 = vmatmul.mubr.f32.gmra.mrb[0].mxu0 %v665
    %v733 = vpop.f32.mrb[0].mxu0
    %v734 = vadd.f32 %v590, %v733
    %v735 = vpop.f32.mrb[0].mxu0
    %v736 = vadd.f32 %v592, %v735
    %737 = vdwg.mxu0
    %738 = vmatprep.subr.mxu0 0.0
    %739 = vmatpush1.msra.mxu0 %v502
    %740 = vmatprep.subr.mxu0 0.0
    %741 = vmatpush1.msra.mxu0 %v505
    %742 = vmatprep.subr.mxu0 0.0
    %743 = vmatpush1.msra.mxu0 %v508
    %744 = vmatprep.subr.mxu0 0.0
    %745 = vmatpush1.msra.mxu0 %v511
    %746 = vmatprep.subr.mxu0 0.0
    %747 = vmatpush1.msra.mxu0 0.0
    %748 = vmatprep.subr.mxu0 0.0
    %749 = vmatpush1.msra.mxu0 0.0
    %750 = vmatprep.subr.mxu0 0.0
    %751 = vmatpush1.msra.mxu0 0.0
    %752 = vmatprep.subr.mxu0 0.0
    %753 = vmatpush1.msra.mxu0 0.0
    %754 = vmatprep.subr.mxu0 0.0
    %755 = vmatpush1.msra.mxu0 0.0
    %756 = vmatprep.subr.mxu0 0.0
    %757 = vmatpush1.msra.mxu0 0.0
    %758 = vmatprep.subr.mxu0 0.0
    %759 = vmatpush1.msra.mxu0 0.0
    %760 = vmatprep.subr.mxu0 0.0
    %761 = vmatpush1.msra.mxu0 0.0
    %762 = vmatprep.subr.mxu0 0.0
    %763 = vmatpush1.msra.mxu0 0.0
    %764 = vmatprep.subr.mxu0 0.0
    %765 = vmatpush1.msra.mxu0 0.0
    %766 = vmatprep.subr.mxu0 0.0
    %767 = vmatpush1.msra.mxu0 0.0
    %768 = vmatprep.subr.mxu0 0.0
    %769 = vmatpush1.msra.mxu0 0.0
    %770 = vmatprep.subr.mxu0 0.0
    %771 = vmatpush1.msra.mxu0 0.0
    %772 = vmatprep.subr.mxu0 0.0
    %773 = vmatpush1.msra.mxu0 0.0
    %774 = vmatprep.subr.mxu0 0.0
    %775 = vmatpush1.msra.mxu0 0.0
    %776 = vmatprep.subr.mxu0 0.0
    %777 = vmatpush1.msra.mxu0 0.0
    %778 = vmatprep.subr.mxu0 0.0
    %779 = vmatpush1.msra.mxu0 0.0
    %780 = vmatprep.subr.mxu0 0.0
    %781 = vmatpush1.msra.mxu0 0.0
    %782 = vmatprep.subr.mxu0 0.0
    %783 = vmatpush1.msra.mxu0 0.0
    %784 = vmatprep.subr.mxu0 0.0
    %785 = vmatpush1.msra.mxu0 0.0
    %786 = vmatprep.subr.mxu0 0.0
    %787 = vmatpush1.msra.mxu0 0.0
    %788 = vmatprep.subr.mxu0 0.0
    %789 = vmatpush1.msra.mxu0 0.0
    %790 = vmatprep.subr.mxu0 0.0
    %791 = vmatpush1.msra.mxu0 0.0
    %792 = vmatprep.subr.mxu0 0.0
    %793 = vmatpush1.msra.mxu0 0.0
    %794 = vmatprep.subr.mxu0 0.0
    %795 = vmatpush1.msra.mxu0 0.0
    %796 = vmatprep.subr.mxu0 0.0
    %797 = vmatpush1.msra.mxu0 0.0
    %798 = vmatprep.subr.mxu0 0.0
    %799 = vmatpush1.msra.mxu0 0.0
    %800 = vmatprep.subr.mxu0 0.0
    %801 = vmatpush1.msra.mxu0 0.0
    %802 = vmatprep.mubr.f32.mxu0 0.0
    %803 = vmatmul.mubr.f32.gmra.mrb[0].mxu0 %v665
    %v804 = vpop.f32.mrb[0].mxu0
    %v805 = vadd.f32 %v661, %v804
    %v806 = vpop.f32.mrb[0].mxu0
    %807 = vdwg.mxu0
    %s808 = scalar_lea.vmem [#allocation6], 144
    %v809 = vld [vmem:[%s808] ss:$8 sm:$0x7]
    %v811 = vlaneseq
    %v812 = vshrl.u32 %v811, 7
    %v813 = vsub.s32 0, %v812
    %v814 = vrot.slane %v809, %v813
    %v815 = vlaneseq
    %v816 = vshrl.u32 %v815, 7
    %v817 = vsub.s32 1, %v816
    %v818 = vrot.slane %v809, %v817
    %v819 = vlaneseq
    %v820 = vshrl.u32 %v819, 7
    %v821 = vsub.s32 2, %v820
    %v822 = vrot.slane %v809, %v821
    %v826 = vadd.f32 %v734, %v814
    %v827 = vadd.f32 %v736, %v818
    %v828 = vadd.f32 %v805, %v822
    %v829 = vadd.f32 %v826, %v277
    %v830 = vsub.f32 0.0, %v829
    %v831 = vmul.f32 %v830, 1.442695
    %v832 = vpow.pop %v831
    %v833 = vadd.f32 %v832, 1.0
    %v834 = vrcp.pop %v833
    %v835 = vmul.f32 1.0, %v834
    %v836 = vadd.f32 %v827, %v346
    %v837 = vsub.f32 0.0, %v836
    %v838 = vmul.f32 %v837, 1.442695
    %v839 = vpow.pop %v838
    %v840 = vadd.f32 %v839, 1.0
    %v841 = vrcp.pop %v840
    %v842 = vmul.f32 1.0, %v841
    %v843 = vmul.f32 %v835, %v348
    %v844 = vadd.f32 %v828, %v843
    %v845 = vtanh.pop %v844
    %v846 = vsub.f32 1.0, %v842
    %v847 = vmul.f32 %v846, %v845
    %v848 = vmul.f32 %v842, 0.0
    %v849 = vadd.f32 %v847, %v848
    %v850 = vld [vmem:[#allocation11 + $0x18] sm:$0xff]
    %v851 = vld [vmem:[#allocation11 + $0x20] sm:$0xff]
    %v852 = vld [vmem:[#allocation11 + $0x28] sm:$0xff]
    %v853 = vld [vmem:[#allocation11 + $0x30] sm:$0xff]
    %v854 = vld [vmem:[#allocation11 + $0x38] sm:$0x1]
    %v855 = vlaneseq
    %v856 = vshrl.u32 %v855, 7
    %v857 = vsub.s32 0, %v856
    %v858 = vrot.slane %v854, %v857
    %v860 = vsel %vm204, %v849, 0
    %862 = vmatprep.subr.mxu0 0.0
    %863 = vmatpush1.msra.mxu0 %v850
    %864 = vmatprep.subr.mxu0 0.0
    %865 = vmatpush1.msra.mxu0 %v851
    %866 = vmatprep.subr.mxu0 0.0
    %867 = vmatpush1.msra.mxu0 %v852
    %868 = vmatprep.subr.mxu0 0.0
    %869 = vmatpush1.msra.mxu0 %v853
    %870 = vmatprep.subr.mxu0 0.0
    %871 = vmatpush1.msra.mxu0 0.0
    %872 = vmatprep.subr.mxu0 0.0
    %873 = vmatpush1.msra.mxu0 0.0
    %874 = vmatprep.subr.mxu0 0.0
    %875 = vmatpush1.msra.mxu0 0.0
    %876 = vmatprep.subr.mxu0 0.0
    %877 = vmatpush1.msra.mxu0 0.0
    %878 = vmatprep.subr.mxu0 0.0
    %879 = vmatpush1.msra.mxu0 0.0
    %880 = vmatprep.subr.mxu0 0.0
    %881 = vmatpush1.msra.mxu0 0.0
    %882 = vmatprep.subr.mxu0 0.0
    %883 = vmatpush1.msra.mxu0 0.0
    %884 = vmatprep.subr.mxu0 0.0
    %885 = vmatpush1.msra.mxu0 0.0
    %886 = vmatprep.subr.mxu0 0.0
    %887 = vmatpush1.msra.mxu0 0.0
    %888 = vmatprep.subr.mxu0 0.0
    %889 = vmatpush1.msra.mxu0 0.0
    %890 = vmatprep.subr.mxu0 0.0
    %891 = vmatpush1.msra.mxu0 0.0
    %892 = vmatprep.subr.mxu0 0.0
    %893 = vmatpush1.msra.mxu0 0.0
    %894 = vmatprep.subr.mxu0 0.0
    %895 = vmatpush1.msra.mxu0 0.0
    %896 = vmatprep.subr.mxu0 0.0
    %897 = vmatpush1.msra.mxu0 0.0
    %898 = vmatprep.subr.mxu0 0.0
    %899 = vmatpush1.msra.mxu0 0.0
    %900 = vmatprep.subr.mxu0 0.0
    %901 = vmatpush1.msra.mxu0 0.0
    %902 = vmatprep.subr.mxu0 0.0
    %903 = vmatpush1.msra.mxu0 0.0
    %904 = vmatprep.subr.mxu0 0.0
    %905 = vmatpush1.msra.mxu0 0.0
    %906 = vmatprep.subr.mxu0 0.0
    %907 = vmatpush1.msra.mxu0 0.0
    %908 = vmatprep.subr.mxu0 0.0
    %909 = vmatpush1.msra.mxu0 0.0
    %910 = vmatprep.subr.mxu0 0.0
    %911 = vmatpush1.msra.mxu0 0.0
    %912 = vmatprep.subr.mxu0 0.0
    %913 = vmatpush1.msra.mxu0 0.0
    %914 = vmatprep.subr.mxu0 0.0
    %915 = vmatpush1.msra.mxu0 0.0
    %916 = vmatprep.subr.mxu0 0.0
    %917 = vmatpush1.msra.mxu0 0.0
    %918 = vmatprep.subr.mxu0 0.0
    %919 = vmatpush1.msra.mxu0 0.0
    %920 = vmatprep.subr.mxu0 0.0
    %921 = vmatpush1.msra.mxu0 0.0
    %922 = vmatprep.subr.mxu0 0.0
    %923 = vmatpush1.msra.mxu0 0.0
    %924 = vmatprep.subr.mxu0 0.0
    %925 = vmatpush1.msra.mxu0 0.0
    %926 = vmatprep.mubr.f32.mxu0 0.0
    %927 = vmatmul.mubr.f32.gmra.mrb[0].mxu0 %v860
    %v928 = vpop.f32.mrb[0].mxu0
    %v929 = vadd.f32 %v858, %v928
    %v930 = vpop.f32.mrb[0].mxu0
    %931 = vdwg.mxu0
    %s932 = scalar_lea.vmem [#allocation12], 2
    %933 = vst [vmem:[%s932] sm:$0x3] %v929
    %s934 = scalar_lea.vmem [#allocation2], 2
    %935 = vst.msk [vmem:[%s934] sm:$0x3] %vm77, %v849
    %vm936 = vcmask 1041408
    %v937 = vsel %vm936, %v929, -inf
    %938 = vmax.xlane.f32.xlu0 %v937
    %v939 = vpop.xlane.xlu0 %938
    %vm940 = vcmp.eq.f32.partialorder %v929, %v939
    %v941 = vsel %vm940, %v164, 128
    %v942 = vsel %vm936, %v941, 2147483647
    %v943 = vand.u32 %v942, 65535
    %v944 = vshra.s32 %v942, 16
    %v945 = vcvt.s32.f32 %v943
    %v946 = vcvt.s32.f32 %v944
    %947 = vmin.xlane.f32.xlu0 %v946
    %v948 = vpop.xlane.xlu0 %947
    %vm949 = vcmp.eq.f32.partialorder %v946, %v948
    %v950 = vsel %vm949, %v945, inf
    %951 = vmin.xlane.f32.xlu0 %v950
    %v952 = vpop.xlane.xlu0 %951
    %v953 = vcvt.f32.s32 %v952
    %v954 = vcvt.f32.s32 %v948
    %v955 = vshll.u32 %v954, 16
    %v956 = vadd.s32 %v955, %v953
    %v957 = vld [vmem:[#allocation9] sm:$0xff]
    %v958 = vld [vmem:[#allocation9 + $0x8] sm:$0xff]
    %v959 = vld [vmem:[#allocation9 + $0x10] sm:$0xff]
    %v960 = vld [vmem:[#allocation9 + $0x18] sm:$0xff]
    %v961 = vld [vmem:[#allocation9 + $0x20] sm:$0xff]
    %v962 = vld [vmem:[#allocation9 + $0x28] sm:$0xff]
    %v963 = vld [vmem:[#allocation9 + $0x30] sm:$0xff]
    %v964 = vld [vmem:[#allocation9 + $0x38] sm:$0xff]
    %v965 = vld [vmem:[#allocation9 + $0x40] sm:$0xff]
    %v966 = vld [vmem:[#allocation9 + $0x48] sm:$0xff]
    %v967 = vld [vmem:[#allocation9 + $0x50] sm:$0xff]
    %v968 = vld [vmem:[#allocation9 + $0x58] sm:$0xff]
    %v969 = vld [vmem:[#allocation9 + $0x60] sm:$0xff]
    %v970 = vld [vmem:[#allocation9 + $0x68] sm:$0xff]
    %v971 = vld [vmem:[#allocation9 + $0x70] sm:$0xff]
    %v972 = vld [vmem:[#allocation9 + $0x78] sm:$0xff]
    %v973 = vld [vmem:[%s181] ss:$8 sm:$0xf]
    %v975 = vlaneseq
    %v976 = vshrl.u32 %v975, 7
    %v977 = vsub.s32 0, %v976
    %v978 = vrot.slane %v973, %v977
    %v979 = vlaneseq
    %v980 = vshrl.u32 %v979, 7
    %v981 = vsub.s32 1, %v980
    %v982 = vrot.slane %v973, %v981
    %v983 = vlaneseq
    %v984 = vshrl.u32 %v983, 7
    %v985 = vsub.s32 2, %v984
    %v986 = vrot.slane %v973, %v985
    %v987 = vlaneseq
    %v988 = vshrl.u32 %v987, 7
    %v989 = vsub.s32 3, %v988
    %v990 = vrot.slane %v973, %v989
    %995 = vmatprep.subr.mxu0 %v958
    %996 = vmatpush1.msra.mxu0 %v957
    %997 = vmatprep.subr.mxu0 %v962
    %998 = vmatpush1.msra.mxu0 %v961
    %999 = vmatprep.subr.mxu0 %v966
    %1000 = vmatpush1.msra.mxu0 %v965
    %1001 = vmatprep.subr.mxu0 %v970
    %1002 = vmatpush1.msra.mxu0 %v969
    %1003 = vmatprep.subr.mxu0 0.0
    %1004 = vmatpush1.msra.mxu0 0.0
    %1005 = vmatprep.subr.mxu0 0.0
    %1006 = vmatpush1.msra.mxu0 0.0
    %1007 = vmatprep.subr.mxu0 0.0
    %1008 = vmatpush1.msra.mxu0 0.0
    %1009 = vmatprep.subr.mxu0 0.0
    %1010 = vmatpush1.msra.mxu0 0.0
    %1011 = vmatprep.subr.mxu0 0.0
    %1012 = vmatpush1.msra.mxu0 0.0
    %1013 = vmatprep.subr.mxu0 0.0
    %1014 = vmatpush1.msra.mxu0 0.0
    %1015 = vmatprep.subr.mxu0 0.0
    %1016 = vmatpush1.msra.mxu0 0.0
    %1017 = vmatprep.subr.mxu0 0.0
    %1018 = vmatpush1.msra.mxu0 0.0
    %1019 = vmatprep.subr.mxu0 0.0
    %1020 = vmatpush1.msra.mxu0 0.0
    %1021 = vmatprep.subr.mxu0 0.0
    %1022 = vmatpush1.msra.mxu0 0.0
    %1023 = vmatprep.subr.mxu0 0.0
    %1024 = vmatpush1.msra.mxu0 0.0
    %1025 = vmatprep.subr.mxu0 0.0
    %1026 = vmatpush1.msra.mxu0 0.0
    %1027 = vmatprep.subr.mxu0 0.0
    %1028 = vmatpush1.msra.mxu0 0.0
    %1029 = vmatprep.subr.mxu0 0.0
    %1030 = vmatpush1.msra.mxu0 0.0
    %1031 = vmatprep.subr.mxu0 0.0
    %1032 = vmatpush1.msra.mxu0 0.0
    %1033 = vmatprep.subr.mxu0 0.0
    %1034 = vmatpush1.msra.mxu0 0.0
    %1035 = vmatprep.subr.mxu0 0.0
    %1036 = vmatpush1.msra.mxu0 0.0
    %1037 = vmatprep.subr.mxu0 0.0
    %1038 = vmatpush1.msra.mxu0 0.0
    %1039 = vmatprep.subr.mxu0 0.0
    %1040 = vmatpush1.msra.mxu0 0.0
    %1041 = vmatprep.subr.mxu0 0.0
    %1042 = vmatpush1.msra.mxu0 0.0
    %1043 = vmatprep.subr.mxu0 0.0
    %1044 = vmatpush1.msra.mxu0 0.0
    %1045 = vmatprep.subr.mxu0 0.0
    %1046 = vmatpush1.msra.mxu0 0.0
    %1047 = vmatprep.subr.mxu0 0.0
    %1048 = vmatpush1.msra.mxu0 0.0
    %1049 = vmatprep.subr.mxu0 0.0
    %1050 = vmatpush1.msra.mxu0 0.0
    %1051 = vmatprep.subr.mxu0 0.0
    %1052 = vmatpush1.msra.mxu0 0.0
    %1053 = vmatprep.subr.mxu0 0.0
    %1054 = vmatpush1.msra.mxu0 0.0
    %1055 = vmatprep.subr.mxu0 0.0
    %1056 = vmatpush1.msra.mxu0 0.0
    %1057 = vmatprep.subr.mxu0 0.0
    %1058 = vmatpush1.msra.mxu0 0.0
    %1059 = vmatprep.mubr.f32.mxu0 0.0
    %1060 = vmatmul.mubr.f32.gmra.mrb[0].mxu0 %v860
    %v1061 = vpop.f32.mrb[0].mxu0
    %v1062 = vadd.f32 %v978, %v1061
    %v1063 = vpop.f32.mrb[0].mxu0
    %v1064 = vadd.f32 %v982, %v1063
    %1065 = vdwg.mxu0
    %1066 = vmatprep.subr.mxu0 %v960
    %1067 = vmatpush1.msra.mxu0 %v959
    %1068 = vmatprep.subr.mxu0 %v964
    %1069 = vmatpush1.msra.mxu0 %v963
    %1070 = vmatprep.subr.mxu0 %v968
    %1071 = vmatpush1.msra.mxu0 %v967
    %1072 = vmatprep.subr.mxu0 %v972
    %1073 = vmatpush1.msra.mxu0 %v971
    %1074 = vmatprep.subr.mxu0 0.0
    %1075 = vmatpush1.msra.mxu0 0.0
    %1076 = vmatprep.subr.mxu0 0.0
    %1077 = vmatpush1.msra.mxu0 0.0
    %1078 = vmatprep.subr.mxu0 0.0
    %1079 = vmatpush1.msra.mxu0 0.0
    %1080 = vmatprep.subr.mxu0 0.0
    %1081 = vmatpush1.msra.mxu0 0.0
    %1082 = vmatprep.subr.mxu0 0.0
    %1083 = vmatpush1.msra.mxu0 0.0
    %1084 = vmatprep.subr.mxu0 0.0
    %1085 = vmatpush1.msra.mxu0 0.0
    %1086 = vmatprep.subr.mxu0 0.0
    %1087 = vmatpush1.msra.mxu0 0.0
    %1088 = vmatprep.subr.mxu0 0.0
    %1089 = vmatpush1.msra.mxu0 0.0
    %1090 = vmatprep.subr.mxu0 0.0
    %1091 = vmatpush1.msra.mxu0 0.0
    %1092 = vmatprep.subr.mxu0 0.0
    %1093 = vmatpush1.msra.mxu0 0.0
    %1094 = vmatprep.subr.mxu0 0.0
    %1095 = vmatpush1.msra.mxu0 0.0
    %1096 = vmatprep.subr.mxu0 0.0
    %1097 = vmatpush1.msra.mxu0 0.0
    %1098 = vmatprep.subr.mxu0 0.0
    %1099 = vmatpush1.msra.mxu0 0.0
    %1100 = vmatprep.subr.mxu0 0.0
    %1101 = vmatpush1.msra.mxu0 0.0
    %1102 = vmatprep.subr.mxu0 0.0
    %1103 = vmatpush1.msra.mxu0 0.0
    %1104 = vmatprep.subr.mxu0 0.0
    %1105 = vmatpush1.msra.mxu0 0.0
    %1106 = vmatprep.subr.mxu0 0.0
    %1107 = vmatpush1.msra.mxu0 0.0
    %1108 = vmatprep.subr.mxu0 0.0
    %1109 = vmatpush1.msra.mxu0 0.0
    %1110 = vmatprep.subr.mxu0 0.0
    %1111 = vmatpush1.msra.mxu0 0.0
    %1112 = vmatprep.subr.mxu0 0.0
    %1113 = vmatpush1.msra.mxu0 0.0
    %1114 = vmatprep.subr.mxu0 0.0
    %1115 = vmatpush1.msra.mxu0 0.0
    %1116 = vmatprep.subr.mxu0 0.0
    %1117 = vmatpush1.msra.mxu0 0.0
    %1118 = vmatprep.subr.mxu0 0.0
    %1119 = vmatpush1.msra.mxu0 0.0
    %1120 = vmatprep.subr.mxu0 0.0
    %1121 = vmatpush1.msra.mxu0 0.0
    %1122 = vmatprep.subr.mxu0 0.0
    %1123 = vmatpush1.msra.mxu0 0.0
    %1124 = vmatprep.subr.mxu0 0.0
    %1125 = vmatpush1.msra.mxu0 0.0
    %1126 = vmatprep.subr.mxu0 0.0
    %1127 = vmatpush1.msra.mxu0 0.0
    %1128 = vmatprep.subr.mxu0 0.0
    %1129 = vmatpush1.msra.mxu0 0.0
    %1130 = vmatprep.mubr.f32.mxu0 0.0
    %1131 = vmatmul.mubr.f32.gmra.mrb[0].mxu0 %v860
    %v1132 = vpop.f32.mrb[0].mxu0
    %v1133 = vadd.f32 %v986, %v1132
    %v1134 = vpop.f32.mrb[0].mxu0
    %v1135 = vadd.f32 %v990, %v1134
    %1136 = vdwg.mxu0
    %v1139 = vunpack.c.l.s4 1966171168
    %v1140 = vunpack.c.0.s8 %v1139
    %v1141 = vlaneseq
    %v1142 = vshrl.u32 %v1141, 7
    %v1143 = vsub.s32 %v1140, %v1142
    %v1144 = vrot.slane %v1062, %v1143
    %v1145 = vcombine.high %v1144, %v1144
    %v1147 = vunpack.c.l.s4 1966171168
    %v1148 = vunpack.c.0.s8 %v1147
    %v1149 = vlaneseq
    %v1150 = vshrl.u32 %v1149, 7
    %v1151 = vsub.s32 %v1148, %v1150
    %v1152 = vrot.slane %v1144, %v1151
    %v1154 = vunpack.c.l.s4 1966171168
    %v1155 = vunpack.c.0.s8 %v1154
    %v1156 = vlaneseq
    %v1157 = vshrl.u32 %v1156, 7
    %v1158 = vsub.s32 %v1155, %v1157
    %v1159 = vrot.slane %v1145, %v1158
    %v1160 = vlaneseq
    %v1161 = vshrl.u32 %v1160, 7
    %v1162 = vsub.s32 0, %v1161
    %v1163 = vrot.slane %v1152, %v1162
    %v1164 = vlaneseq
    %v1165 = vshrl.u32 %v1164, 7
    %v1166 = vsub.s32 0, %v1165
    %v1167 = vrot.slane %v1159, %v1166
    %v1170 = vadd.f32 %v1163, %v157
    %v1171 = vadd.f32 %v1167, %v161
    %v1172 = vtanh.pop %v1170
    %v1173 = vtanh.pop %v1171
    %v1174 = vmul.f32 %v1172, %v390
    %v1175 = vmul.f32 %v1173, %v390
    %v1176 = vsel %vm393, %v1174, 0.0
    %1177 = vadd.xlane.f32.xlu0 %v1176
    %v1178 = vpop.xlane.xlu0 %1177
    %v1179 = vsel %vm393, %v1175, 0.0
    %1180 = vadd.xlane.f32.xlu0 %v1179
    %v1181 = vpop.xlane.xlu0 %1180
    %v1184 = vlaneseq
    %v1185 = vshrl.u32 %v1184, 7
    %v1186 = vsub.s32 %v164, %v1185
    %v1187 = vrot.slane %v1178, %v1186
    %v1188 = vlaneseq
    %v1189 = vshrl.u32 %v1188, 7
    %v1190 = vsub.s32 %v164, %v1189
    %v1191 = vrot.slane %v1181, %v1190
    %v1192 = vsel %vm410, %v1191, %v1187
    %v1194 = vsel %vm413, %v1192, -inf
    %1195 = vmax.xlane.f32.xlu0 %v1194
    %v1196 = vpop.xlane.xlu0 %1195
    %v1198 = vlaneseq
    %v1199 = vshrl.u32 %v1198, 7
    %v1200 = vsub.s32 0, %v1199
    %v1201 = vrot.slane %v1196, %v1200
    %v1202 = vlaneseq
    %v1203 = vshrl.u32 %v1202, 7
    %v1204 = vsub.s32 1, %v1203
    %v1205 = vrot.slane %v1196, %v1204
    %v1208 = vsub.f32 %v1178, %v1201
    %v1209 = vsub.f32 %v1181, %v1205
    %v1210 = vmul.f32 %v1208, 1.442695
    %v1211 = vpow.pop %v1210
    %v1212 = vmul.f32 %v1209, 1.442695
    %v1213 = vpow.pop %v1212
    %1216 = vset.pattern.permute.xlu0 0
    %1217 = vperm.xlu0 %1216, %v1211
    %v1218 = vpop.permute.xlu0 %1217
    %1219 = vset.pattern.permute.xlu0 0
    %1220 = vperm.xlu0 %1219, %v1213
    %v1221 = vpop.permute.xlu0 %1220
    %v1222 = vlaneseq
    %v1223 = vshrl.u32 %v1222, 7
    %v1224 = vsub.s32 %v164, %v1223
    %v1225 = vrot.slane %v1218, %v1224
    %v1226 = vlaneseq
    %v1227 = vshrl.u32 %v1226, 7
    %v1228 = vsub.s32 %v164, %v1227
    %v1229 = vrot.slane %v1221, %v1228
    %v1230 = vsel %vm410, %v1229, %v1225
    %v1232 = vsel %vm413, %v1230, 0.0
    %1233 = vadd.xlane.f32.xlu0 %v1232
    %v1234 = vpop.xlane.xlu0 %1233
    %v1236 = vlaneseq
    %v1237 = vshrl.u32 %v1236, 7
    %v1238 = vsub.s32 0, %v1237
    %v1239 = vrot.slane %v1234, %v1238
    %v1240 = vlaneseq
    %v1241 = vshrl.u32 %v1240, 7
    %v1242 = vsub.s32 1, %v1241
    %v1243 = vrot.slane %v1234, %v1242
    %v1246 = vrcp.pop %v1239
    %v1247 = vmul.f32 %v1211, %v1246
    %v1248 = vrcp.pop %v1243
    %v1249 = vmul.f32 %v1213, %v1248
    %1251 = vset.pattern.permute.xlu0 0
    %1252 = vperm.xlu0 %1251, %v1247
    %v1253 = vpop.permute.xlu0 %1252
    %1256 = vset.pattern.permute.xlu0 0
    %1257 = vperm.xlu0 %1256, %v1249
    %v1258 = vpop.permute.xlu0 %1257
    %v1260 = vmul.f32 %v1253, %v79
    %v1261 = vmul.f32 %v1258, %v80
    %v1262 = vsel %vm482, %v1260, 0.0
    %v1263 = vrot.slane %v1262, 4
    %v1264 = vadd.f32 %v1262, %v1263
    %v1265 = vrot.slane %v1264, 2
    %v1266 = vadd.f32 %v1264, %v1265
    %v1267 = vrot.slane %v1266, 1
    %v1268 = vadd.f32 %v1266, %v1267
    %v1269 = vsel %vm482, %v1261, 0.0
    %v1270 = vrot.slane %v1269, 4
    %v1271 = vadd.f32 %v1269, %v1270
    %v1272 = vrot.slane %v1271, 2
    %v1273 = vadd.f32 %v1271, %v1272
    %v1274 = vrot.slane %v1273, 1
    %v1275 = vadd.f32 %v1273, %v1274
    %vm1276 = vcmp.eq.s32.totalorder %v164, %v956
    %v1277 = vsel %vm1276, 1, 0
    %v1278 = vcvt.s32.f32 %v1277
    %v1279 = vld [vmem:[#allocation6] sm:$0xff]
    %v1280 = vld [vmem:[#allocation6 + $0x8] sm:$0xff]
    %v1281 = vld [vmem:[#allocation6 + $0x10] sm:$0xff]
    %v1282 = vld [vmem:[#allocation6 + $0x18] sm:$0xff]
    %v1283 = vld [vmem:[#allocation6 + $0x20] sm:$0xff]
    %v1284 = vld [vmem:[#allocation6 + $0x28] sm:$0xff]
    %v1285 = vld [vmem:[#allocation6 + $0x30] sm:$0xff]
    %v1286 = vld [vmem:[#allocation6 + $0x38] sm:$0xff]
    %v1287 = vld [vmem:[#allocation6 + $0x40] sm:$0xff]
    %v1288 = vld [vmem:[#allocation6 + $0x48] sm:$0xff]
    %v1289 = vld [vmem:[#allocation6 + $0x50] sm:$0xff]
    %v1290 = vld [vmem:[#allocation6 + $0x58] sm:$0xff]
    %v1291 = vld [vmem:[#allocation6 + $0x60] sm:$0xff]
    %v1292 = vld [vmem:[#allocation6 + $0x68] sm:$0xff]
    %v1293 = vld [vmem:[#allocation6 + $0x70] sm:$0xff]
    %v1294 = vld [vmem:[#allocation6 + $0x78] sm:$0xff]
    %v1295 = vld [vmem:[#allocation6 + $0x80] sm:$0xff]
    %v1296 = vld [vmem:[#allocation6 + $0x88] sm:$0xff]
    %v1299 = vsel %vm410, %v1275, %v1268
    %v1300 = vsel %vm87, %v1299, 0
    %1302 = vmatprep.subr.mxu0 %v1292
    %1303 = vmatpush1.msra.mxu0 %v1291
    %1304 = vmatprep.subr.mxu0 %v1295
    %1305 = vmatpush1.msra.mxu0 %v1294
    %1306 = vmatprep.subr.mxu0 0.0
    %1307 = vmatpush1.msra.mxu0 0.0
    %1308 = vmatprep.subr.mxu0 0.0
    %1309 = vmatpush1.msra.mxu0 0.0
    %1310 = vmatprep.subr.mxu0 0.0
    %1311 = vmatpush1.msra.mxu0 0.0
    %1312 = vmatprep.subr.mxu0 0.0
    %1313 = vmatpush1.msra.mxu0 0.0
    %1314 = vmatprep.subr.mxu0 0.0
    %1315 = vmatpush1.msra.mxu0 0.0
    %1316 = vmatprep.subr.mxu0 0.0
    %1317 = vmatpush1.msra.mxu0 0.0
    %1318 = vmatprep.subr.mxu0 0.0
    %1319 = vmatpush1.msra.mxu0 0.0
    %1320 = vmatprep.subr.mxu0 0.0
    %1321 = vmatpush1.msra.mxu0 0.0
    %1322 = vmatprep.subr.mxu0 0.0
    %1323 = vmatpush1.msra.mxu0 0.0
    %1324 = vmatprep.subr.mxu0 0.0
    %1325 = vmatpush1.msra.mxu0 0.0
    %1326 = vmatprep.subr.mxu0 0.0
    %1327 = vmatpush1.msra.mxu0 0.0
    %1328 = vmatprep.subr.mxu0 0.0
    %1329 = vmatpush1.msra.mxu0 0.0
    %1330 = vmatprep.subr.mxu0 0.0
    %1331 = vmatpush1.msra.mxu0 0.0
    %1332 = vmatprep.subr.mxu0 0.0
    %1333 = vmatpush1.msra.mxu0 0.0
    %1334 = vmatprep.subr.mxu0 0.0
    %1335 = vmatpush1.msra.mxu0 0.0
    %1336 = vmatprep.subr.mxu0 0.0
    %1337 = vmatpush1.msra.mxu0 0.0
    %1338 = vmatprep.subr.mxu0 0.0
    %1339 = vmatpush1.msra.mxu0 0.0
    %1340 = vmatprep.subr.mxu0 0.0
    %1341 = vmatpush1.msra.mxu0 0.0
    %1342 = vmatprep.subr.mxu0 0.0
    %1343 = vmatpush1.msra.mxu0 0.0
    %1344 = vmatprep.subr.mxu0 0.0
    %1345 = vmatpush1.msra.mxu0 0.0
    %1346 = vmatprep.subr.mxu0 0.0
    %1347 = vmatpush1.msra.mxu0 0.0
    %1348 = vmatprep.subr.mxu0 0.0
    %1349 = vmatpush1.msra.mxu0 0.0
    %1350 = vmatprep.subr.mxu0 0.0
    %1351 = vmatpush1.msra.mxu0 0.0
    %1352 = vmatprep.subr.mxu0 0.0
    %1353 = vmatpush1.msra.mxu0 0.0
    %1354 = vmatprep.subr.mxu0 0.0
    %1355 = vmatpush1.msra.mxu0 0.0
    %1356 = vmatprep.subr.mxu0 0.0
    %1357 = vmatpush1.msra.mxu0 0.0
    %1358 = vmatprep.subr.mxu0 0.0
    %1359 = vmatpush1.msra.mxu0 0.0
    %1360 = vmatprep.subr.mxu0 0.0
    %1361 = vmatpush1.msra.mxu0 0.0
    %1362 = vmatprep.subr.mxu0 0.0
    %1363 = vmatpush1.msra.mxu0 0.0
    %1364 = vmatprep.subr.mxu0 0.0
    %1365 = vmatpush1.msra.mxu0 0.0
    %1366 = vmatprep.mubr.f32.mxu0 0.0
    %1367 = vmatmul.mubr.f32.gmra.mrb[0].mxu0 %v1300
    %v1368 = vpop.f32.mrb[0].mxu0
    %v1369 = vadd.f32 0.0, %v1368
    %v1370 = vpop.f32.mrb[0].mxu0
    %v1371 = vadd.f32 0.0, %v1370
    %1372 = vdwg.mxu0
    %1373 = vmatprep.subr.mxu0 0.0
    %1374 = vmatpush1.msra.mxu0 %v1293
    %1375 = vmatprep.subr.mxu0 0.0
    %1376 = vmatpush1.msra.mxu0 %v1296
    %1377 = vmatprep.subr.mxu0 0.0
    %1378 = vmatpush1.msra.mxu0 0.0
    %1379 = vmatprep.subr.mxu0 0.0
    %1380 = vmatpush1.msra.mxu0 0.0
    %1381 = vmatprep.subr.mxu0 0.0
    %1382 = vmatpush1.msra.mxu0 0.0
    %1383 = vmatprep.subr.mxu0 0.0
    %1384 = vmatpush1.msra.mxu0 0.0
    %1385 = vmatprep.subr.mxu0 0.0
    %1386 = vmatpush1.msra.mxu0 0.0
    %1387 = vmatprep.subr.mxu0 0.0
    %1388 = vmatpush1.msra.mxu0 0.0
    %1389 = vmatprep.subr.mxu0 0.0
    %1390 = vmatpush1.msra.mxu0 0.0
    %1391 = vmatprep.subr.mxu0 0.0
    %1392 = vmatpush1.msra.mxu0 0.0
    %1393 = vmatprep.subr.mxu0 0.0
    %1394 = vmatpush1.msra.mxu0 0.0
    %1395 = vmatprep.subr.mxu0 0.0
    %1396 = vmatpush1.msra.mxu0 0.0
    %1397 = vmatprep.subr.mxu0 0.0
    %1398 = vmatpush1.msra.mxu0 0.0
    %1399 = vmatprep.subr.mxu0 0.0
    %1400 = vmatpush1.msra.mxu0 0.0
    %1401 = vmatprep.subr.mxu0 0.0
    %1402 = vmatpush1.msra.mxu0 0.0
    %1403 = vmatprep.subr.mxu0 0.0
    %1404 = vmatpush1.msra.mxu0 0.0
    %1405 = vmatprep.subr.mxu0 0.0
    %1406 = vmatpush1.msra.mxu0 0.0
    %1407 = vmatprep.subr.mxu0 0.0
    %1408 = vmatpush1.msra.mxu0 0.0
    %1409 = vmatprep.subr.mxu0 0.0
    %1410 = vmatpush1.msra.mxu0 0.0
    %1411 = vmatprep.subr.mxu0 0.0
    %1412 = vmatpush1.msra.mxu0 0.0
    %1413 = vmatprep.subr.mxu0 0.0
    %1414 = vmatpush1.msra.mxu0 0.0
    %1415 = vmatprep.subr.mxu0 0.0
    %1416 = vmatpush1.msra.mxu0 0.0
    %1417 = vmatprep.subr.mxu0 0.0
    %1418 = vmatpush1.msra.mxu0 0.0
    %1419 = vmatprep.subr.mxu0 0.0
    %1420 = vmatpush1.msra.mxu0 0.0
    %1421 = vmatprep.subr.mxu0 0.0
    %1422 = vmatpush1.msra.mxu0 0.0
    %1423 = vmatprep.subr.mxu0 0.0
    %1424 = vmatpush1.msra.mxu0 0.0
    %1425 = vmatprep.subr.mxu0 0.0
    %1426 = vmatpush1.msra.mxu0 0.0
    %1427 = vmatprep.subr.mxu0 0.0
    %1428 = vmatpush1.msra.mxu0 0.0
    %1429 = vmatprep.subr.mxu0 0.0
    %1430 = vmatpush1.msra.mxu0 0.0
    %1431 = vmatprep.subr.mxu0 0.0
    %1432 = vmatpush1.msra.mxu0 0.0
    %1433 = vmatprep.subr.mxu0 0.0
    %1434 = vmatpush1.msra.mxu0 0.0
    %1435 = vmatprep.subr.mxu0 0.0
    %1436 = vmatpush1.msra.mxu0 0.0
    %1437 = vmatprep.mubr.f32.mxu0 0.0
    %1438 = vmatmul.mubr.f32.gmra.mrb[0].mxu0 %v1300
    %v1439 = vpop.f32.mrb[0].mxu0
    %v1440 = vadd.f32 0.0, %v1439
    %v1441 = vpop.f32.mrb[0].mxu0
    %1442 = vdwg.mxu0
    %v1444 = vsel %vm204, %v1278, 0
    %1446 = vmatprep.subr.mxu0 %v1280
    %1447 = vmatpush1.msra.mxu0 %v1279
    %1448 = vmatprep.subr.mxu0 %v1283
    %1449 = vmatpush1.msra.mxu0 %v1282
    %1450 = vmatprep.subr.mxu0 %v1286
    %1451 = vmatpush1.msra.mxu0 %v1285
    %1452 = vmatprep.subr.mxu0 %v1289
    %1453 = vmatpush1.msra.mxu0 %v1288
    %1454 = vmatprep.subr.mxu0 0.0
    %1455 = vmatpush1.msra.mxu0 0.0
    %1456 = vmatprep.subr.mxu0 0.0
    %1457 = vmatpush1.msra.mxu0 0.0
    %1458 = vmatprep.subr.mxu0 0.0
    %1459 = vmatpush1.msra.mxu0 0.0
    %1460 = vmatprep.subr.mxu0 0.0
    %1461 = vmatpush1.msra.mxu0 0.0
    %1462 = vmatprep.subr.mxu0 0.0
    %1463 = vmatpush1.msra.mxu0 0.0
    %1464 = vmatprep.subr.mxu0 0.0
    %1465 = vmatpush1.msra.mxu0 0.0
    %1466 = vmatprep.subr.mxu0 0.0
    %1467 = vmatpush1.msra.mxu0 0.0
    %1468 = vmatprep.subr.mxu0 0.0
    %1469 = vmatpush1.msra.mxu0 0.0
    %1470 = vmatprep.subr.mxu0 0.0
    %1471 = vmatpush1.msra.mxu0 0.0
    %1472 = vmatprep.subr.mxu0 0.0
    %1473 = vmatpush1.msra.mxu0 0.0
    %1474 = vmatprep.subr.mxu0 0.0
    %1475 = vmatpush1.msra.mxu0 0.0
    %1476 = vmatprep.subr.mxu0 0.0
    %1477 = vmatpush1.msra.mxu0 0.0
    %1478 = vmatprep.subr.mxu0 0.0
    %1479 = vmatpush1.msra.mxu0 0.0
    %1480 = vmatprep.subr.mxu0 0.0
    %1481 = vmatpush1.msra.mxu0 0.0
    %1482 = vmatprep.subr.mxu0 0.0
    %1483 = vmatpush1.msra.mxu0 0.0
    %1484 = vmatprep.subr.mxu0 0.0
    %1485 = vmatpush1.msra.mxu0 0.0
    %1486 = vmatprep.subr.mxu0 0.0
    %1487 = vmatpush1.msra.mxu0 0.0
    %1488 = vmatprep.subr.mxu0 0.0
    %1489 = vmatpush1.msra.mxu0 0.0
    %1490 = vmatprep.subr.mxu0 0.0
    %1491 = vmatpush1.msra.mxu0 0.0
    %1492 = vmatprep.subr.mxu0 0.0
    %1493 = vmatpush1.msra.mxu0 0.0
    %1494 = vmatprep.subr.mxu0 0.0
    %1495 = vmatpush1.msra.mxu0 0.0
    %1496 = vmatprep.subr.mxu0 0.0
    %1497 = vmatpush1.msra.mxu0 0.0
    %1498 = vmatprep.subr.mxu0 0.0
    %1499 = vmatpush1.msra.mxu0 0.0
    %1500 = vmatprep.subr.mxu0 0.0
    %1501 = vmatpush1.msra.mxu0 0.0
    %1502 = vmatprep.subr.mxu0 0.0
    %1503 = vmatpush1.msra.mxu0 0.0
    %1504 = vmatprep.subr.mxu0 0.0
    %1505 = vmatpush1.msra.mxu0 0.0
    %1506 = vmatprep.subr.mxu0 0.0
    %1507 = vmatpush1.msra.mxu0 0.0
    %1508 = vmatprep.subr.mxu0 0.0
    %1509 = vmatpush1.msra.mxu0 0.0
    %1510 = vmatprep.mubr.f32.mxu0 0.0
    %1511 = vmatmul.mubr.f32.gmra.mrb[0].mxu0 %v1444
    %v1512 = vpop.f32.mrb[0].mxu0
    %v1513 = vadd.f32 %v1369, %v1512
    %v1514 = vpop.f32.mrb[0].mxu0
    %v1515 = vadd.f32 %v1371, %v1514
    %1516 = vdwg.mxu0
    %1517 = vmatprep.subr.mxu0 0.0
    %1518 = vmatpush1.msra.mxu0 %v1281
    %1519 = vmatprep.subr.mxu0 0.0
    %1520 = vmatpush1.msra.mxu0 %v1284
    %1521 = vmatprep.subr.mxu0 0.0
    %1522 = vmatpush1.msra.mxu0 %v1287
    %1523 = vmatprep.subr.mxu0 0.0
    %1524 = vmatpush1.msra.mxu0 %v1290
    %1525 = vmatprep.subr.mxu0 0.0
    %1526 = vmatpush1.msra.mxu0 0.0
    %1527 = vmatprep.subr.mxu0 0.0
    %1528 = vmatpush1.msra.mxu0 0.0
    %1529 = vmatprep.subr.mxu0 0.0
    %1530 = vmatpush1.msra.mxu0 0.0
    %1531 = vmatprep.subr.mxu0 0.0
    %1532 = vmatpush1.msra.mxu0 0.0
    %1533 = vmatprep.subr.mxu0 0.0
    %1534 = vmatpush1.msra.mxu0 0.0
    %1535 = vmatprep.subr.mxu0 0.0
    %1536 = vmatpush1.msra.mxu0 0.0
    %1537 = vmatprep.subr.mxu0 0.0
    %1538 = vmatpush1.msra.mxu0 0.0
    %1539 = vmatprep.subr.mxu0 0.0
    %1540 = vmatpush1.msra.mxu0 0.0
    %1541 = vmatprep.subr.mxu0 0.0
    %1542 = vmatpush1.msra.mxu0 0.0
    %1543 = vmatprep.subr.mxu0 0.0
    %1544 = vmatpush1.msra.mxu0 0.0
    %1545 = vmatprep.subr.mxu0 0.0
    %1546 = vmatpush1.msra.mxu0 0.0
    %1547 = vmatprep.subr.mxu0 0.0
    %1548 = vmatpush1.msra.mxu0 0.0
    %1549 = vmatprep.subr.mxu0 0.0
    %1550 = vmatpush1.msra.mxu0 0.0
    %1551 = vmatprep.subr.mxu0 0.0
    %1552 = vmatpush1.msra.mxu0 0.0
    %1553 = vmatprep.subr.mxu0 0.0
    %1554 = vmatpush1.msra.mxu0 0.0
    %1555 = vmatprep.subr.mxu0 0.0
    %1556 = vmatpush1.msra.mxu0 0.0
    %1557 = vmatprep.subr.mxu0 0.0
    %1558 = vmatpush1.msra.mxu0 0.0
    %1559 = vmatprep.subr.mxu0 0.0
    %1560 = vmatpush1.msra.mxu0 0.0
    %1561 = vmatprep.subr.mxu0 0.0
    %1562 = vmatpush1.msra.mxu0 0.0
    %1563 = vmatprep.subr.mxu0 0.0
    %1564 = vmatpush1.msra.mxu0 0.0
    %1565 = vmatprep.subr.mxu0 0.0
    %1566 = vmatpush1.msra.mxu0 0.0
    %1567 = vmatprep.subr.mxu0 0.0
    %1568 = vmatpush1.msra.mxu0 0.0
    %1569 = vmatprep.subr.mxu0 0.0
    %1570 = vmatpush1.msra.mxu0 0.0
    %1571 = vmatprep.subr.mxu0 0.0
    %1572 = vmatpush1.msra.mxu0 0.0
    %1573 = vmatprep.subr.mxu0 0.0
    %1574 = vmatpush1.msra.mxu0 0.0
    %1575 = vmatprep.subr.mxu0 0.0
    %1576 = vmatpush1.msra.mxu0 0.0
    %1577 = vmatprep.subr.mxu0 0.0
    %1578 = vmatpush1.msra.mxu0 0.0
    %1579 = vmatprep.subr.mxu0 0.0
    %1580 = vmatpush1.msra.mxu0 0.0
    %1581 = vmatprep.mubr.f32.mxu0 0.0
    %1582 = vmatmul.mubr.f32.gmra.mrb[0].mxu0 %v1444
    %v1583 = vpop.f32.mrb[0].mxu0
    %v1584 = vadd.f32 %v1440, %v1583
    %v1585 = vpop.f32.mrb[0].mxu0
    %1586 = vdwg.mxu0
    %v1587 = vld [vmem:[%s808] ss:$8 sm:$0x7]
    %v1589 = vlaneseq
    %v1590 = vshrl.u32 %v1589, 7
    %v1591 = vsub.s32 0, %v1590
    %v1592 = vrot.slane %v1587, %v1591
    %v1593 = vlaneseq
    %v1594 = vshrl.u32 %v1593, 7
    %v1595 = vsub.s32 1, %v1594
    %v1596 = vrot.slane %v1587, %v1595
    %v1597 = vlaneseq
    %v1598 = vshrl.u32 %v1597, 7
    %v1599 = vsub.s32 2, %v1598
    %v1600 = vrot.slane %v1587, %v1599
    %v1604 = vadd.f32 %v1513, %v1592
    %v1605 = vadd.f32 %v1515, %v1596
    %v1606 = vadd.f32 %v1584, %v1600
    %v1607 = vadd.f32 %v1604, %v1064
    %v1608 = vsub.f32 0.0, %v1607
    %v1609 = vmul.f32 %v1608, 1.442695
    %v1610 = vpow.pop %v1609
    %v1611 = vadd.f32 %v1610, 1.0
    %v1612 = vrcp.pop %v1611
    %v1613 = vmul.f32 1.0, %v1612
    %v1614 = vadd.f32 %v1605, %v1133
    %v1615 = vsub.f32 0.0, %v1614
    %v1616 = vmul.f32 %v1615, 1.442695
    %v1617 = vpow.pop %v1616
    %v1618 = vadd.f32 %v1617, 1.0
    %v1619 = vrcp.pop %v1618
    %v1620 = vmul.f32 1.0, %v1619
    %v1621 = vmul.f32 %v1613, %v1135
    %v1622 = vadd.f32 %v1606, %v1621
    %v1623 = vtanh.pop %v1622
    %v1624 = vsub.f32 1.0, %v1620
    %v1625 = vmul.f32 %v1624, %v1623
    %v1626 = vmul.f32 %v1620, %v849
    %v1627 = vadd.f32 %v1625, %v1626
    %v1628 = vld [vmem:[#allocation11 + $0x18] sm:$0xff]
    %v1629 = vld [vmem:[#allocation11 + $0x20] sm:$0xff]
    %v1630 = vld [vmem:[#allocation11 + $0x28] sm:$0xff]
    %v1631 = vld [vmem:[#allocation11 + $0x30] sm:$0xff]
    %v1632 = vld [vmem:[#allocation11 + $0x38] sm:$0x1]
    %v1633 = vlaneseq
    %v1634 = vshrl.u32 %v1633, 7
    %v1635 = vsub.s32 0, %v1634
    %v1636 = vrot.slane %v1632, %v1635
    %v1638 = vsel %vm204, %v1627, 0
    %1640 = vmatprep.subr.mxu0 0.0
    %1641 = vmatpush1.msra.mxu0 %v1628
    %1642 = vmatprep.subr.mxu0 0.0
    %1643 = vmatpush1.msra.mxu0 %v1629
    %1644 = vmatprep.subr.mxu0 0.0
    %1645 = vmatpush1.msra.mxu0 %v1630
    %1646 = vmatprep.subr.mxu0 0.0
    %1647 = vmatpush1.msra.mxu0 %v1631
    %1648 = vmatprep.subr.mxu0 0.0
    %1649 = vmatpush1.msra.mxu0 0.0
    %1650 = vmatprep.subr.mxu0 0.0
    %1651 = vmatpush1.msra.mxu0 0.0
    %1652 = vmatprep.subr.mxu0 0.0
    %1653 = vmatpush1.msra.mxu0 0.0
    %1654 = vmatprep.subr.mxu0 0.0
    %1655 = vmatpush1.msra.mxu0 0.0
    %1656 = vmatprep.subr.mxu0 0.0
    %1657 = vmatpush1.msra.mxu0 0.0
    %1658 = vmatprep.subr.mxu0 0.0
    %1659 = vmatpush1.msra.mxu0 0.0
    %1660 = vmatprep.subr.mxu0 0.0
    %1661 = vmatpush1.msra.mxu0 0.0
    %1662 = vmatprep.subr.mxu0 0.0
    %1663 = vmatpush1.msra.mxu0 0.0
    %1664 = vmatprep.subr.mxu0 0.0
    %1665 = vmatpush1.msra.mxu0 0.0
    %1666 = vmatprep.subr.mxu0 0.0
    %1667 = vmatpush1.msra.mxu0 0.0
    %1668 = vmatprep.subr.mxu0 0.0
    %1669 = vmatpush1.msra.mxu0 0.0
    %1670 = vmatprep.subr.mxu0 0.0
    %1671 = vmatpush1.msra.mxu0 0.0
    %1672 = vmatprep.subr.mxu0 0.0
    %1673 = vmatpush1.msra.mxu0 0.0
    %1674 = vmatprep.subr.mxu0 0.0
    %1675 = vmatpush1.msra.mxu0 0.0
    %1676 = vmatprep.subr.mxu0 0.0
    %1677 = vmatpush1.msra.mxu0 0.0
    %1678 = vmatprep.subr.mxu0 0.0
    %1679 = vmatpush1.msra.mxu0 0.0
    %1680 = vmatprep.subr.mxu0 0.0
    %1681 = vmatpush1.msra.mxu0 0.0
    %1682 = vmatprep.subr.mxu0 0.0
    %1683 = vmatpush1.msra.mxu0 0.0
    %1684 = vmatprep.subr.mxu0 0.0
    %1685 = vmatpush1.msra.mxu0 0.0
    %1686 = vmatprep.subr.mxu0 0.0
    %1687 = vmatpush1.msra.mxu0 0.0
    %1688 = vmatprep.subr.mxu0 0.0
    %1689 = vmatpush1.msra.mxu0 0.0
    %1690 = vmatprep.subr.mxu0 0.0
    %1691 = vmatpush1.msra.mxu0 0.0
    %1692 = vmatprep.subr.mxu0 0.0
    %1693 = vmatpush1.msra.mxu0 0.0
    %1694 = vmatprep.subr.mxu0 0.0
    %1695 = vmatpush1.msra.mxu0 0.0
    %1696 = vmatprep.subr.mxu0 0.0
    %1697 = vmatpush1.msra.mxu0 0.0
    %1698 = vmatprep.subr.mxu0 0.0
    %1699 = vmatpush1.msra.mxu0 0.0
    %1700 = vmatprep.subr.mxu0 0.0
    %1701 = vmatpush1.msra.mxu0 0.0
    %1702 = vmatprep.subr.mxu0 0.0
    %1703 = vmatpush1.msra.mxu0 0.0
    %1704 = vmatprep.mubr.f32.mxu0 0.0
    %1705 = vmatmul.mubr.f32.gmra.mrb[0].mxu0 %v1638
    %v1706 = vpop.f32.mrb[0].mxu0
    %v1707 = vadd.f32 %v1636, %v1706
    %v1708 = vpop.f32.mrb[0].mxu0
    %1709 = vdwg.mxu0
    %s1710 = scalar_lea.vmem [#allocation12], 4
    %1711 = vst [vmem:[%s1710] sm:$0x3] %v1707
    %s1712 = scalar_lea.vmem [#allocation2], 4
    %1713 = vst.msk [vmem:[%s1712] sm:$0x3] %vm77, %v1627
    %v1714 = vsel %vm936, %v1707, -inf
    %1715 = vmax.xlane.f32.xlu0 %v1714
    %v1716 = vpop.xlane.xlu0 %1715
    %vm1717 = vcmp.eq.f32.partialorder %v1707, %v1716
    %v1718 = vsel %vm1717, %v164, 128
    %v1719 = vsel %vm936, %v1718, 2147483647
    %v1720 = vand.u32 %v1719, 65535
    %v1721 = vshra.s32 %v1719, 16
    %v1722 = vcvt.s32.f32 %v1720
    %v1723 = vcvt.s32.f32 %v1721
    %1724 = vmin.xlane.f32.xlu0 %v1723
    %v1725 = vpop.xlane.xlu0 %1724
    %vm1726 = vcmp.eq.f32.partialorder %v1723, %v1725
    %v1727 = vsel %vm1726, %v1722, inf
    %1728 = vmin.xlane.f32.xlu0 %v1727
    %v1729 = vpop.xlane.xlu0 %1728
    %v1730 = vcvt.f32.s32 %v1729
    %v1731 = vcvt.f32.s32 %v1725
    %v1732 = vshll.u32 %v1731, 16
    %v1733 = vadd.s32 %v1732, %v1730
    %v1734 = vld [vmem:[#allocation9] sm:$0xff]
    %v1735 = vld [vmem:[#allocation9 + $0x8] sm:$0xff]
    %v1736 = vld [vmem:[#allocation9 + $0x10] sm:$0xff]
    %v1737 = vld [vmem:[#allocation9 + $0x18] sm:$0xff]
    %v1738 = vld [vmem:[#allocation9 + $0x20] sm:$0xff]
    %v1739 = vld [vmem:[#allocation9 + $0x28] sm:$0xff]
    %v1740 = vld [vmem:[#allocation9 + $0x30] sm:$0xff]
    %v1741 = vld [vmem:[#allocation9 + $0x38] sm:$0xff]
    %v1742 = vld [vmem:[#allocation9 + $0x40] sm:$0xff]
    %v1743 = vld [vmem:[#allocation9 + $0x48] sm:$0xff]
    %v1744 = vld [vmem:[#allocation9 + $0x50] sm:$0xff]
    %v1745 = vld [vmem:[#allocation9 + $0x58] sm:$0xff]
    %v1746 = vld [vmem:[#allocation9 + $0x60] sm:$0xff]
    %v1747 = vld [vmem:[#allocation9 + $0x68] sm:$0xff]
    %v1748 = vld [vmem:[#allocation9 + $0x70] sm:$0xff]
    %v1749 = vld [vmem:[#allocation9 + $0x78] sm:$0xff]
    %v1750 = vld [vmem:[%s181] ss:$8 sm:$0xf]
    %v1752 = vlaneseq
    %v1753 = vshrl.u32 %v1752, 7
    %v1754 = vsub.s32 0, %v1753
    %v1755 = vrot.slane %v1750, %v1754
    %v1756 = vlaneseq
    %v1757 = vshrl.u32 %v1756, 7
    %v1758 = vsub.s32 1, %v1757
    %v1759 = vrot.slane %v1750, %v1758
    %v1760 = vlaneseq
    %v1761 = vshrl.u32 %v1760, 7
    %v1762 = vsub.s32 2, %v1761
    %v1763 = vrot.slane %v1750, %v1762
    %v1764 = vlaneseq
    %v1765 = vshrl.u32 %v1764, 7
    %v1766 = vsub.s32 3, %v1765
    %v1767 = vrot.slane %v1750, %v1766
    %1772 = vmatprep.subr.mxu0 %v1735
    %1773 = vmatpush1.msra.mxu0 %v1734
    %1774 = vmatprep.subr.mxu0 %v1739
    %1775 = vmatpush1.msra.mxu0 %v1738
    %1776 = vmatprep.subr.mxu0 %v1743
    %1777 = vmatpush1.msra.mxu0 %v1742
    %1778 = vmatprep.subr.mxu0 %v1747
    %1779 = vmatpush1.msra.mxu0 %v1746
    %1780 = vmatprep.subr.mxu0 0.0
    %1781 = vmatpush1.msra.mxu0 0.0
    %1782 = vmatprep.subr.mxu0 0.0
    %1783 = vmatpush1.msra.mxu0 0.0
    %1784 = vmatprep.subr.mxu0 0.0
    %1785 = vmatpush1.msra.mxu0 0.0
    %1786 = vmatprep.subr.mxu0 0.0
    %1787 = vmatpush1.msra.mxu0 0.0
    %1788 = vmatprep.subr.mxu0 0.0
    %1789 = vmatpush1.msra.mxu0 0.0
    %1790 = vmatprep.subr.mxu0 0.0
    %1791 = vmatpush1.msra.mxu0 0.0
    %1792 = vmatprep.subr.mxu0 0.0
    %1793 = vmatpush1.msra.mxu0 0.0
    %1794 = vmatprep.subr.mxu0 0.0
    %1795 = vmatpush1.msra.mxu0 0.0
    %1796 = vmatprep.subr.mxu0 0.0
    %1797 = vmatpush1.msra.mxu0 0.0
    %1798 = vmatprep.subr.mxu0 0.0
    %1799 = vmatpush1.msra.mxu0 0.0
    %1800 = vmatprep.subr.mxu0 0.0
    %1801 = vmatpush1.msra.mxu0 0.0
    %1802 = vmatprep.subr.mxu0 0.0
    %1803 = vmatpush1.msra.mxu0 0.0
    %1804 = vmatprep.subr.mxu0 0.0
    %1805 = vmatpush1.msra.mxu0 0.0
    %1806 = vmatprep.subr.mxu0 0.0
    %1807 = vmatpush1.msra.mxu0 0.0
    %1808 = vmatprep.subr.mxu0 0.0
    %1809 = vmatpush1.msra.mxu0 0.0
    %1810 = vmatprep.subr.mxu0 0.0
    %1811 = vmatpush1.msra.mxu0 0.0
    %1812 = vmatprep.subr.mxu0 0.0
    %1813 = vmatpush1.msra.mxu0 0.0
    %1814 = vmatprep.subr.mxu0 0.0
    %1815 = vmatpush1.msra.mxu0 0.0
    %1816 = vmatprep.subr.mxu0 0.0
    %1817 = vmatpush1.msra.mxu0 0.0
    %1818 = vmatprep.subr.mxu0 0.0
    %1819 = vmatpush1.msra.mxu0 0.0
    %1820 = vmatprep.subr.mxu0 0.0
    %1821 = vmatpush1.msra.mxu0 0.0
    %1822 = vmatprep.subr.mxu0 0.0
    %1823 = vmatpush1.msra.mxu0 0.0
    %1824 = vmatprep.subr.mxu0 0.0
    %1825 = vmatpush1.msra.mxu0 0.0
    %1826 = vmatprep.subr.mxu0 0.0
    %1827 = vmatpush1.msra.mxu0 0.0
    %1828 = vmatprep.subr.mxu0 0.0
    %1829 = vmatpush1.msra.mxu0 0.0
    %1830 = vmatprep.subr.mxu0 0.0
    %1831 = vmatpush1.msra.mxu0 0.0
    %1832 = vmatprep.subr.mxu0 0.0
    %1833 = vmatpush1.msra.mxu0 0.0
    %1834 = vmatprep.subr.mxu0 0.0
    %1835 = vmatpush1.msra.mxu0 0.0
    %1836 = vmatprep.mubr.f32.mxu0 0.0
    %1837 = vmatmul.mubr.f32.gmra.mrb[0].mxu0 %v1638
    %v1838 = vpop.f32.mrb[0].mxu0
    %v1839 = vadd.f32 %v1755, %v1838
    %v1840 = vpop.f32.mrb[0].mxu0
    %v1841 = vadd.f32 %v1759, %v1840
    %1842 = vdwg.mxu0
    %1843 = vmatprep.subr.mxu0 %v1737
    %1844 = vmatpush1.msra.mxu0 %v1736
    %1845 = vmatprep.subr.mxu0 %v1741
    %1846 = vmatpush1.msra.mxu0 %v1740
    %1847 = vmatprep.subr.mxu0 %v1745
    %1848 = vmatpush1.msra.mxu0 %v1744
    %1849 = vmatprep.subr.mxu0 %v1749
    %1850 = vmatpush1.msra.mxu0 %v1748
    %1851 = vmatprep.subr.mxu0 0.0
    %1852 = vmatpush1.msra.mxu0 0.0
    %1853 = vmatprep.subr.mxu0 0.0
    %1854 = vmatpush1.msra.mxu0 0.0
    %1855 = vmatprep.subr.mxu0 0.0
    %1856 = vmatpush1.msra.mxu0 0.0
    %1857 = vmatprep.subr.mxu0 0.0
    %1858 = vmatpush1.msra.mxu0 0.0
    %1859 = vmatprep.subr.mxu0 0.0
    %1860 = vmatpush1.msra.mxu0 0.0
    %1861 = vmatprep.subr.mxu0 0.0
    %1862 = vmatpush1.msra.mxu0 0.0
    %1863 = vmatprep.subr.mxu0 0.0
    %1864 = vmatpush1.msra.mxu0 0.0
    %1865 = vmatprep.subr.mxu0 0.0
    %1866 = vmatpush1.msra.mxu0 0.0
    %1867 = vmatprep.subr.mxu0 0.0
    %1868 = vmatpush1.msra.mxu0 0.0
    %1869 = vmatprep.subr.mxu0 0.0
    %1870 = vmatpush1.msra.mxu0 0.0
    %1871 = vmatprep.subr.mxu0 0.0
    %1872 = vmatpush1.msra.mxu0 0.0
    %1873 = vmatprep.subr.mxu0 0.0
    %1874 = vmatpush1.msra.mxu0 0.0
    %1875 = vmatprep.subr.mxu0 0.0
    %1876 = vmatpush1.msra.mxu0 0.0
    %1877 = vmatprep.subr.mxu0 0.0
    %1878 = vmatpush1.msra.mxu0 0.0
    %1879 = vmatprep.subr.mxu0 0.0
    %1880 = vmatpush1.msra.mxu0 0.0
    %1881 = vmatprep.subr.mxu0 0.0
    %1882 = vmatpush1.msra.mxu0 0.0
    %1883 = vmatprep.subr.mxu0 0.0
    %1884 = vmatpush1.msra.mxu0 0.0
    %1885 = vmatprep.subr.mxu0 0.0
    %1886 = vmatpush1.msra.mxu0 0.0
    %1887 = vmatprep.subr.mxu0 0.0
    %1888 = vmatpush1.msra.mxu0 0.0
    %1889 = vmatprep.subr.mxu0 0.0
    %1890 = vmatpush1.msra.mxu0 0.0
    %1891 = vmatprep.subr.mxu0 0.0
    %1892 = vmatpush1.msra.mxu0 0.0
    %1893 = vmatprep.subr.mxu0 0.0
    %1894 = vmatpush1.msra.mxu0 0.0
    %1895 = vmatprep.subr.mxu0 0.0
    %1896 = vmatpush1.msra.mxu0 0.0
    %1897 = vmatprep.subr.mxu0 0.0
    %1898 = vmatpush1.msra.mxu0 0.0
    %1899 = vmatprep.subr.mxu0 0.0
    %1900 = vmatpush1.msra.mxu0 0.0
    %1901 = vmatprep.subr.mxu0 0.0
    %1902 = vmatpush1.msra.mxu0 0.0
    %1903 = vmatprep.subr.mxu0 0.0
    %1904 = vmatpush1.msra.mxu0 0.0
    %1905 = vmatprep.subr.mxu0 0.0
    %1906 = vmatpush1.msra.mxu0 0.0
    %1907 = vmatprep.mubr.f32.mxu0 0.0
    %1908 = vmatmul.mubr.f32.gmra.mrb[0].mxu0 %v1638
    %v1909 = vpop.f32.mrb[0].mxu0
    %v1910 = vadd.f32 %v1763, %v1909
    %v1911 = vpop.f32.mrb[0].mxu0
    %v1912 = vadd.f32 %v1767, %v1911
    %1913 = vdwg.mxu0
    %v1916 = vunpack.c.l.s4 1966171168
    %v1917 = vunpack.c.0.s8 %v1916
    %v1918 = vlaneseq
    %v1919 = vshrl.u32 %v1918, 7
    %v1920 = vsub.s32 %v1917, %v1919
    %v1921 = vrot.slane %v1839, %v1920
    %v1922 = vcombine.high %v1921, %v1921
    %v1924 = vunpack.c.l.s4 1966171168
    %v1925 = vunpack.c.0.s8 %v1924
    %v1926 = vlaneseq
    %v1927 = vshrl.u32 %v1926, 7
    %v1928 = vsub.s32 %v1925, %v1927
    %v1929 = vrot.slane %v1921, %v1928
    %v1931 = vunpack.c.l.s4 1966171168
    %v1932 = vunpack.c.0.s8 %v1931
    %v1933 = vlaneseq
    %v1934 = vshrl.u32 %v1933, 7
    %v1935 = vsub.s32 %v1932, %v1934
    %v1936 = vrot.slane %v1922, %v1935
    %v1937 = vlaneseq
    %v1938 = vshrl.u32 %v1937, 7
    %v1939 = vsub.s32 0, %v1938
    %v1940 = vrot.slane %v1929, %v1939
    %v1941 = vlaneseq
    %v1942 = vshrl.u32 %v1941, 7
    %v1943 = vsub.s32 0, %v1942
    %v1944 = vrot.slane %v1936, %v1943
    %v1947 = vadd.f32 %v1940, %v157
    %v1948 = vadd.f32 %v1944, %v161
    %v1949 = vtanh.pop %v1947
    %v1950 = vtanh.pop %v1948
    %v1951 = vmul.f32 %v1949, %v390
    %v1952 = vmul.f32 %v1950, %v390
    %v1953 = vsel %vm393, %v1951, 0.0
    %1954 = vadd.xlane.f32.xlu0 %v1953
    %v1955 = vpop.xlane.xlu0 %1954
    %v1956 = vsel %vm393, %v1952, 0.0
    %1957 = vadd.xlane.f32.xlu0 %v1956
    %v1958 = vpop.xlane.xlu0 %1957
    %v1961 = vlaneseq
    %v1962 = vshrl.u32 %v1961, 7
    %v1963 = vsub.s32 %v164, %v1962
    %v1964 = vrot.slane %v1955, %v1963
    %v1965 = vlaneseq
    %v1966 = vshrl.u32 %v1965, 7
    %v1967 = vsub.s32 %v164, %v1966
    %v1968 = vrot.slane %v1958, %v1967
    %v1969 = vsel %vm410, %v1968, %v1964
    %v1971 = vsel %vm413, %v1969, -inf
    %1972 = vmax.xlane.f32.xlu0 %v1971
    %v1973 = vpop.xlane.xlu0 %1972
    %v1975 = vlaneseq
    %v1976 = vshrl.u32 %v1975, 7
    %v1977 = vsub.s32 0, %v1976
    %v1978 = vrot.slane %v1973, %v1977
    %v1979 = vlaneseq
    %v1980 = vshrl.u32 %v1979, 7
    %v1981 = vsub.s32 1, %v1980
    %v1982 = vrot.slane %v1973, %v1981
    %v1985 = vsub.f32 %v1955, %v1978
    %v1986 = vsub.f32 %v1958, %v1982
    %v1987 = vmul.f32 %v1985, 1.442695
    %v1988 = vpow.pop %v1987
    %v1989 = vmul.f32 %v1986, 1.442695
    %v1990 = vpow.pop %v1989
    %1993 = vset.pattern.permute.xlu0 0
    %1994 = vperm.xlu0 %1993, %v1988
    %v1995 = vpop.permute.xlu0 %1994
    %1996 = vset.pattern.permute.xlu0 0
    %1997 = vperm.xlu0 %1996, %v1990
    %v1998 = vpop.permute.xlu0 %1997
    %v1999 = vlaneseq
    %v2000 = vshrl.u32 %v1999, 7
    %v2001 = vsub.s32 %v164, %v2000
    %v2002 = vrot.slane %v1995, %v2001
    %v2003 = vlaneseq
    %v2004 = vshrl.u32 %v2003, 7
    %v2005 = vsub.s32 %v164, %v2004
    %v2006 = vrot.slane %v1998, %v2005
    %v2007 = vsel %vm410, %v2006, %v2002
    %v2009 = vsel %vm413, %v2007, 0.0
    %2010 = vadd.xlane.f32.xlu0 %v2009
    %v2011 = vpop.xlane.xlu0 %2010
    %v2013 = vlaneseq
    %v2014 = vshrl.u32 %v2013, 7
    %v2015 = vsub.s32 0, %v2014
    %v2016 = vrot.slane %v2011, %v2015
    %v2017 = vlaneseq
    %v2018 = vshrl.u32 %v2017, 7
    %v2019 = vsub.s32 1, %v2018
    %v2020 = vrot.slane %v2011, %v2019
    %v2023 = vrcp.pop %v2016
    %v2024 = vmul.f32 %v1988, %v2023
    %v2025 = vrcp.pop %v2020
    %v2026 = vmul.f32 %v1990, %v2025
    %2028 = vset.pattern.permute.xlu0 0
    %2029 = vperm.xlu0 %2028, %v2024
    %v2030 = vpop.permute.xlu0 %2029
    %2033 = vset.pattern.permute.xlu0 0
    %2034 = vperm.xlu0 %2033, %v2026
    %v2035 = vpop.permute.xlu0 %2034
    %v2037 = vmul.f32 %v2030, %v79
    %v2038 = vmul.f32 %v2035, %v80
    %v2039 = vsel %vm482, %v2037, 0.0
    %v2040 = vrot.slane %v2039, 4
    %v2041 = vadd.f32 %v2039, %v2040
    %v2042 = vrot.slane %v2041, 2
    %v2043 = vadd.f32 %v2041, %v2042
    %v2044 = vrot.slane %v2043, 1
    %v2045 = vadd.f32 %v2043, %v2044
    %v2046 = vsel %vm482, %v2038, 0.0
    %v2047 = vrot.slane %v2046, 4
    %v2048 = vadd.f32 %v2046, %v2047
    %v2049 = vrot.slane %v2048, 2
    %v2050 = vadd.f32 %v2048, %v2049
    %v2051 = vrot.slane %v2050, 1
    %v2052 = vadd.f32 %v2050, %v2051
    %vm2053 = vcmp.eq.s32.totalorder %v164, %v1733
    %v2054 = vsel %vm2053, 1, 0
    %v2055 = vcvt.s32.f32 %v2054
    %v2056 = vld [vmem:[#allocation6] sm:$0xff]
    %v2057 = vld [vmem:[#allocation6 + $0x8] sm:$0xff]
    %v2058 = vld [vmem:[#allocation6 + $0x10] sm:$0xff]
    %v2059 = vld [vmem:[#allocation6 + $0x18] sm:$0xff]
    %v2060 = vld [vmem:[#allocation6 + $0x20] sm:$0xff]
    %v2061 = vld [vmem:[#allocation6 + $0x28] sm:$0xff]
    %v2062 = vld [vmem:[#allocation6 + $0x30] sm:$0xff]
    %v2063 = vld [vmem:[#allocation6 + $0x38] sm:$0xff]
    %v2064 = vld [vmem:[#allocation6 + $0x40] sm:$0xff]
    %v2065 = vld [vmem:[#allocation6 + $0x48] sm:$0xff]
    %v2066 = vld [vmem:[#allocation6 + $0x50] sm:$0xff]
    %v2067 = vld [vmem:[#allocation6 + $0x58] sm:$0xff]
    %v2068 = vld [vmem:[#allocation6 + $0x60] sm:$0xff]
    %v2069 = vld [vmem:[#allocation6 + $0x68] sm:$0xff]
    %v2070 = vld [vmem:[#allocation6 + $0x70] sm:$0xff]
    %v2071 = vld [vmem:[#allocation6 + $0x78] sm:$0xff]
    %v2072 = vld [vmem:[#allocation6 + $0x80] sm:$0xff]
    %v2073 = vld [vmem:[#allocation6 + $0x88] sm:$0xff]
    %v2076 = vsel %vm410, %v2052, %v2045
    %v2077 = vsel %vm87, %v2076, 0
    %2079 = vmatprep.subr.mxu0 %v2069
    %2080 = vmatpush1.msra.mxu0 %v2068
    %2081 = vmatprep.subr.mxu0 %v2072
    %2082 = vmatpush1.msra.mxu0 %v2071
    %2083 = vmatprep.subr.mxu0 0.0
    %2084 = vmatpush1.msra.mxu0 0.0
    %2085 = vmatprep.subr.mxu0 0.0
    %2086 = vmatpush1.msra.mxu0 0.0
    %2087 = vmatprep.subr.mxu0 0.0
    %2088 = vmatpush1.msra.mxu0 0.0
    %2089 = vmatprep.subr.mxu0 0.0
    %2090 = vmatpush1.msra.mxu0 0.0
    %2091 = vmatprep.subr.mxu0 0.0
    %2092 = vmatpush1.msra.mxu0 0.0
    %2093 = vmatprep.subr.mxu0 0.0
    %2094 = vmatpush1.msra.mxu0 0.0
    %2095 = vmatprep.subr.mxu0 0.0
    %2096 = vmatpush1.msra.mxu0 0.0
    %2097 = vmatprep.subr.mxu0 0.0
    %2098 = vmatpush1.msra.mxu0 0.0
    %2099 = vmatprep.subr.mxu0 0.0
    %2100 = vmatpush1.msra.mxu0 0.0
    %2101 = vmatprep.subr.mxu0 0.0
    %2102 = vmatpush1.msra.mxu0 0.0
    %2103 = vmatprep.subr.mxu0 0.0
    %2104 = vmatpush1.msra.mxu0 0.0
    %2105 = vmatprep.subr.mxu0 0.0
    %2106 = vmatpush1.msra.mxu0 0.0
    %2107 = vmatprep.subr.mxu0 0.0
    %2108 = vmatpush1.msra.mxu0 0.0
    %2109 = vmatprep.subr.mxu0 0.0
    %2110 = vmatpush1.msra.mxu0 0.0
    %2111 = vmatprep.subr.mxu0 0.0
    %2112 = vmatpush1.msra.mxu0 0.0
    %2113 = vmatprep.subr.mxu0 0.0
    %2114 = vmatpush1.msra.mxu0 0.0
    %2115 = vmatprep.subr.mxu0 0.0
    %2116 = vmatpush1.msra.mxu0 0.0
    %2117 = vmatprep.subr.mxu0 0.0
    %2118 = vmatpush1.msra.mxu0 0.0
    %2119 = vmatprep.subr.mxu0 0.0
    %2120 = vmatpush1.msra.mxu0 0.0
    %2121 = vmatprep.subr.mxu0 0.0
    %2122 = vmatpush1.msra.mxu0 0.0
    %2123 = vmatprep.subr.mxu0 0.0
    %2124 = vmatpush1.msra.mxu0 0.0
    %2125 = vmatprep.subr.mxu0 0.0
    %2126 = vmatpush1.msra.mxu0 0.0
    %2127 = vmatprep.subr.mxu0 0.0
    %2128 = vmatpush1.msra.mxu0 0.0
    %2129 = vmatprep.subr.mxu0 0.0
    %2130 = vmatpush1.msra.mxu0 0.0
    %2131 = vmatprep.subr.mxu0 0.0
    %2132 = vmatpush1.msra.mxu0 0.0
    %2133 = vmatprep.subr.mxu0 0.0
    %2134 = vmatpush1.msra.mxu0 0.0
    %2135 = vmatprep.subr.mxu0 0.0
    %2136 = vmatpush1.msra.mxu0 0.0
    %2137 = vmatprep.subr.mxu0 0.0
    %2138 = vmatpush1.msra.mxu0 0.0
    %2139 = vmatprep.subr.mxu0 0.0
    %2140 = vmatpush1.msra.mxu0 0.0
    %2141 = vmatprep.subr.mxu0 0.0
    %2142 = vmatpush1.msra.mxu0 0.0
    %2143 = vmatprep.mubr.f32.mxu0 0.0
    %2144 = vmatmul.mubr.f32.gmra.mrb[0].mxu0 %v2077
    %v2145 = vpop.f32.mrb[0].mxu0
    %v2146 = vadd.f32 0.0, %v2145
    %v2147 = vpop.f32.mrb[0].mxu0
    %v2148 = vadd.f32 0.0, %v2147
    %2149 = vdwg.mxu0
    %2150 = vmatprep.subr.mxu0 0.0
    %2151 = vmatpush1.msra.mxu0 %v2070
    %2152 = vmatprep.subr.mxu0 0.0
    %2153 = vmatpush1.msra.mxu0 %v2073
    %2154 = vmatprep.subr.mxu0 0.0
    %2155 = vmatpush1.msra.mxu0 0.0
    %2156 = vmatprep.subr.mxu0 0.0
    %2157 = vmatpush1.msra.mxu0 0.0
    %2158 = vmatprep.subr.mxu0 0.0
    %2159 = vmatpush1.msra.mxu0 0.0
    %2160 = vmatprep.subr.mxu0 0.0
    %2161 = vmatpush1.msra.mxu0 0.0
    %2162 = vmatprep.subr.mxu0 0.0
    %2163 = vmatpush1.msra.mxu0 0.0
    %2164 = vmatprep.subr.mxu0 0.0
    %2165 = vmatpush1.msra.mxu0 0.0
    %2166 = vmatprep.subr.mxu0 0.0
    %2167 = vmatpush1.msra.mxu0 0.0
    %2168 = vmatprep.subr.mxu0 0.0
    %2169 = vmatpush1.msra.mxu0 0.0
    %2170 = vmatprep.subr.mxu0 0.0
    %2171 = vmatpush1.msra.mxu0 0.0
    %2172 = vmatprep.subr.mxu0 0.0
    %2173 = vmatpush1.msra.mxu0 0.0
    %2174 = vmatprep.subr.mxu0 0.0
    %2175 = vmatpush1.msra.mxu0 0.0
    %2176 = vmatprep.subr.mxu0 0.0
    %2177 = vmatpush1.msra.mxu0 0.0
    %2178 = vmatprep.subr.mxu0 0.0
    %2179 = vmatpush1.msra.mxu0 0.0
    %2180 = vmatprep.subr.mxu0 0.0
    %2181 = vmatpush1.msra.mxu0 0.0
    %2182 = vmatprep.subr.mxu0 0.0
    %2183 = vmatpush1.msra.mxu0 0.0
    %2184 = vmatprep.subr.mxu0 0.0
    %2185 = vmatpush1.msra.mxu0 0.0
    %2186 = vmatprep.subr.mxu0 0.0
    %2187 = vmatpush1.msra.mxu0 0.0
    %2188 = vmatprep.subr.mxu0 0.0
    %2189 = vmatpush1.msra.mxu0 0.0
    %2190 = vmatprep.subr.mxu0 0.0
    %2191 = vmatpush1.msra.mxu0 0.0
    %2192 = vmatprep.subr.mxu0 0.0
    %2193 = vmatpush1.msra.mxu0 0.0
    %2194 = vmatprep.subr.mxu0 0.0
    %2195 = vmatpush1.msra.mxu0 0.0
    %2196 = vmatprep.subr.mxu0 0.0
    %2197 = vmatpush1.msra.mxu0 0.0
    %2198 = vmatprep.subr.mxu0 0.0
    %2199 = vmatpush1.msra.mxu0 0.0
    %2200 = vmatprep.subr.mxu0 0.0
    %2201 = vmatpush1.msra.mxu0 0.0
    %2202 = vmatprep.subr.mxu0 0.0
    %2203 = vmatpush1.msra.mxu0 0.0
    %2204 = vmatprep.subr.mxu0 0.0
    %2205 = vmatpush1.msra.mxu0 0.0
    %2206 = vmatprep.subr.mxu0 0.0
    %2207 = vmatpush1.msra.mxu0 0.0
    %2208 = vmatprep.subr.mxu0 0.0
    %2209 = vmatpush1.msra.mxu0 0.0
    %2210 = vmatprep.subr.mxu0 0.0
    %2211 = vmatpush1.msra.mxu0 0.0
    %2212 = vmatprep.subr.mxu0 0.0
    %2213 = vmatpush1.msra.mxu0 0.0
    %2214 = vmatprep.mubr.f32.mxu0 0.0
    %2215 = vmatmul.mubr.f32.gmra.mrb[0].mxu0 %v2077
    %v2216 = vpop.f32.mrb[0].mxu0
    %v2217 = vadd.f32 0.0, %v2216
    %v2218 = vpop.f32.mrb[0].mxu0
    %2219 = vdwg.mxu0
    %v2221 = vsel %vm204, %v2055, 0
    %2223 = vmatprep.subr.mxu0 %v2057
    %2224 = vmatpush1.msra.mxu0 %v2056
    %2225 = vmatprep.subr.mxu0 %v2060
    %2226 = vmatpush1.msra.mxu0 %v2059
    %2227 = vmatprep.subr.mxu0 %v2063
    %2228 = vmatpush1.msra.mxu0 %v2062
    %2229 = vmatprep.subr.mxu0 %v2066
    %2230 = vmatpush1.msra.mxu0 %v2065
    %2231 = vmatprep.subr.mxu0 0.0
    %2232 = vmatpush1.msra.mxu0 0.0
    %2233 = vmatprep.subr.mxu0 0.0
    %2234 = vmatpush1.msra.mxu0 0.0
    %2235 = vmatprep.subr.mxu0 0.0
    %2236 = vmatpush1.msra.mxu0 0.0
    %2237 = vmatprep.subr.mxu0 0.0
    %2238 = vmatpush1.msra.mxu0 0.0
    %2239 = vmatprep.subr.mxu0 0.0
    %2240 = vmatpush1.msra.mxu0 0.0
    %2241 = vmatprep.subr.mxu0 0.0
    %2242 = vmatpush1.msra.mxu0 0.0
    %2243 = vmatprep.subr.mxu0 0.0
    %2244 = vmatpush1.msra.mxu0 0.0
    %2245 = vmatprep.subr.mxu0 0.0
    %2246 = vmatpush1.msra.mxu0 0.0
    %2247 = vmatprep.subr.mxu0 0.0
    %2248 = vmatpush1.msra.mxu0 0.0
    %2249 = vmatprep.subr.mxu0 0.0
    %2250 = vmatpush1.msra.mxu0 0.0
    %2251 = vmatprep.subr.mxu0 0.0
    %2252 = vmatpush1.msra.mxu0 0.0
    %2253 = vmatprep.subr.mxu0 0.0
    %2254 = vmatpush1.msra.mxu0 0.0
    %2255 = vmatprep.subr.mxu0 0.0
    %2256 = vmatpush1.msra.mxu0 0.0
    %2257 = vmatprep.subr.mxu0 0.0
    %2258 = vmatpush1.msra.mxu0 0.0
    %2259 = vmatprep.subr.mxu0 0.0
    %2260 = vmatpush1.msra.mxu0 0.0
    %2261 = vmatprep.subr.mxu0 0.0
    %2262 = vmatpush1.msra.mxu0 0.0
    %2263 = vmatprep.subr.mxu0 0.0
    %2264 = vmatpush1.msra.mxu0 0.0
    %2265 = vmatprep.subr.mxu0 0.0
    %2266 = vmatpush1.msra.mxu0 0.0
    %2267 = vmatprep.subr.mxu0 0.0
    %2268 = vmatpush1.msra.mxu0 0.0
    %2269 = vmatprep.subr.mxu0 0.0
    %2270 = vmatpush1.msra.mxu0 0.0
    %2271 = vmatprep.subr.mxu0 0.0
    %2272 = vmatpush1.msra.mxu0 0.0
    %2273 = vmatprep.subr.mxu0 0.0
    %2274 = vmatpush1.msra.mxu0 0.0
    %2275 = vmatprep.subr.mxu0 0.0
    %2276 = vmatpush1.msra.mxu0 0.0
    %2277 = vmatprep.subr.mxu0 0.0
    %2278 = vmatpush1.msra.mxu0 0.0
    %2279 = vmatprep.subr.mxu0 0.0
    %2280 = vmatpush1.msra.mxu0 0.0
    %2281 = vmatprep.subr.mxu0 0.0
    %2282 = vmatpush1.msra.mxu0 0.0
    %2283 = vmatprep.subr.mxu0 0.0
    %2284 = vmatpush1.msra.mxu0 0.0
    %2285 = vmatprep.subr.mxu0 0.0
    %2286 = vmatpush1.msra.mxu0 0.0
    %2287 = vmatprep.mubr.f32.mxu0 0.0
    %2288 = vmatmul.mubr.f32.gmra.mrb[0].mxu0 %v2221
    %v2289 = vpop.f32.mrb[0].mxu0
    %v2290 = vadd.f32 %v2146, %v2289
    %v2291 = vpop.f32.mrb[0].mxu0
    %v2292 = vadd.f32 %v2148, %v2291
    %2293 = vdwg.mxu0
    %2294 = vmatprep.subr.mxu0 0.0
    %2295 = vmatpush1.msra.mxu0 %v2058
    %2296 = vmatprep.subr.mxu0 0.0
    %2297 = vmatpush1.msra.mxu0 %v2061
    %2298 = vmatprep.subr.mxu0 0.0
    %2299 = vmatpush1.msra.mxu0 %v2064
    %2300 = vmatprep.subr.mxu0 0.0
    %2301 = vmatpush1.msra.mxu0 %v2067
    %2302 = vmatprep.subr.mxu0 0.0
    %2303 = vmatpush1.msra.mxu0 0.0
    %2304 = vmatprep.subr.mxu0 0.0
    %2305 = vmatpush1.msra.mxu0 0.0
    %2306 = vmatprep.subr.mxu0 0.0
    %2307 = vmatpush1.msra.mxu0 0.0
    %2308 = vmatprep.subr.mxu0 0.0
    %2309 = vmatpush1.msra.mxu0 0.0
    %2310 = vmatprep.subr.mxu0 0.0
    %2311 = vmatpush1.msra.mxu0 0.0
    %2312 = vmatprep.subr.mxu0 0.0
    %2313 = vmatpush1.msra.mxu0 0.0
    %2314 = vmatprep.subr.mxu0 0.0
    %2315 = vmatpush1.msra.mxu0 0.0
    %2316 = vmatprep.subr.mxu0 0.0
    %2317 = vmatpush1.msra.mxu0 0.0
    %2318 = vmatprep.subr.mxu0 0.0
    %2319 = vmatpush1.msra.mxu0 0.0
    %2320 = vmatprep.subr.mxu0 0.0
    %2321 = vmatpush1.msra.mxu0 0.0
    %2322 = vmatprep.subr.mxu0 0.0
    %2323 = vmatpush1.msra.mxu0 0.0
    %2324 = vmatprep.subr.mxu0 0.0
    %2325 = vmatpush1.msra.mxu0 0.0
    %2326 = vmatprep.subr.mxu0 0.0
    %2327 = vmatpush1.msra.mxu0 0.0
    %2328 = vmatprep.subr.mxu0 0.0
    %2329 = vmatpush1.msra.mxu0 0.0
    %2330 = vmatprep.subr.mxu0 0.0
    %2331 = vmatpush1.msra.mxu0 0.0
    %2332 = vmatprep.subr.mxu0 0.0
    %2333 = vmatpush1.msra.mxu0 0.0
    %2334 = vmatprep.subr.mxu0 0.0
    %2335 = vmatpush1.msra.mxu0 0.0
    %2336 = vmatprep.subr.mxu0 0.0
    %2337 = vmatpush1.msra.mxu0 0.0
    %2338 = vmatprep.subr.mxu0 0.0
    %2339 = vmatpush1.msra.mxu0 0.0
    %2340 = vmatprep.subr.mxu0 0.0
    %2341 = vmatpush1.msra.mxu0 0.0
    %2342 = vmatprep.subr.mxu0 0.0
    %2343 = vmatpush1.msra.mxu0 0.0
    %2344 = vmatprep.subr.mxu0 0.0
    %2345 = vmatpush1.msra.mxu0 0.0
    %2346 = vmatprep.subr.mxu0 0.0
    %2347 = vmatpush1.msra.mxu0 0.0
    %2348 = vmatprep.subr.mxu0 0.0
    %2349 = vmatpush1.msra.mxu0 0.0
    %2350 = vmatprep.subr.mxu0 0.0
    %2351 = vmatpush1.msra.mxu0 0.0
    %2352 = vmatprep.subr.mxu0 0.0
    %2353 = vmatpush1.msra.mxu0 0.0
    %2354 = vmatprep.subr.mxu0 0.0
    %2355 = vmatpush1.msra.mxu0 0.0
    %2356 = vmatprep.subr.mxu0 0.0
    %2357 = vmatpush1.msra.mxu0 0.0
    %2358 = vmatprep.mubr.f32.mxu0 0.0
    %2359 = vmatmul.mubr.f32.gmra.mrb[0].mxu0 %v2221
    %v2360 = vpop.f32.mrb[0].mxu0
    %v2361 = vadd.f32 %v2217, %v2360
    %v2362 = vpop.f32.mrb[0].mxu0
    %2363 = vdwg.mxu0
    %v2364 = vld [vmem:[%s808] ss:$8 sm:$0x7]
    %v2366 = vlaneseq
    %v2367 = vshrl.u32 %v2366, 7
    %v2368 = vsub.s32 0, %v2367
    %v2369 = vrot.slane %v2364, %v2368
    %v2370 = vlaneseq
    %v2371 = vshrl.u32 %v2370, 7
    %v2372 = vsub.s32 1, %v2371
    %v2373 = vrot.slane %v2364, %v2372
    %v2374 = vlaneseq
    %v2375 = vshrl.u32 %v2374, 7
    %v2376 = vsub.s32 2, %v2375
    %v2377 = vrot.slane %v2364, %v2376
    %v2381 = vadd.f32 %v2290, %v2369
    %v2382 = vadd.f32 %v2292, %v2373
    %v2383 = vadd.f32 %v2361, %v2377
    %v2384 = vadd.f32 %v2381, %v1841
    %v2385 = vsub.f32 0.0, %v2384
    %v2386 = vmul.f32 %v2385, 1.442695
    %v2387 = vpow.pop %v2386
    %v2388 = vadd.f32 %v2387, 1.0
    %v2389 = vrcp.pop %v2388
    %v2390 = vmul.f32 1.0, %v2389
    %v2391 = vadd.f32 %v2382, %v1910
    %v2392 = vsub.f32 0.0, %v2391
    %v2393 = vmul.f32 %v2392, 1.442695
    %v2394 = vpow.pop %v2393
    %v2395 = vadd.f32 %v2394, 1.0
    %v2396 = vrcp.pop %v2395
    %v2397 = vmul.f32 1.0, %v2396
    %v2398 = vmul.f32 %v2390, %v1912
    %v2399 = vadd.f32 %v2383, %v2398
    %v2400 = vtanh.pop %v2399
    %v2401 = vsub.f32 1.0, %v2397
    %v2402 = vmul.f32 %v2401, %v2400
    %v2403 = vmul.f32 %v2397, %v1627
    %v2404 = vadd.f32 %v2402, %v2403
    %v2405 = vld [vmem:[#allocation11 + $0x18] sm:$0xff]
    %v2406 = vld [vmem:[#allocation11 + $0x20] sm:$0xff]
    %v2407 = vld [vmem:[#allocation11 + $0x28] sm:$0xff]
    %v2408 = vld [vmem:[#allocation11 + $0x30] sm:$0xff]
    %v2409 = vld [vmem:[#allocation11 + $0x38] sm:$0x1]
    %v2410 = vlaneseq
    %v2411 = vshrl.u32 %v2410, 7
    %v2412 = vsub.s32 0, %v2411
    %v2413 = vrot.slane %v2409, %v2412
    %v2415 = vsel %vm204, %v2404, 0
    %2417 = vmatprep.subr.mxu0 0.0
    %2418 = vmatpush1.msra.mxu0 %v2405
    %2419 = vmatprep.subr.mxu0 0.0
    %2420 = vmatpush1.msra.mxu0 %v2406
    %2421 = vmatprep.subr.mxu0 0.0
    %2422 = vmatpush1.msra.mxu0 %v2407
    %2423 = vmatprep.subr.mxu0 0.0
    %2424 = vmatpush1.msra.mxu0 %v2408
    %2425 = vmatprep.subr.mxu0 0.0
    %2426 = vmatpush1.msra.mxu0 0.0
    %2427 = vmatprep.subr.mxu0 0.0
    %2428 = vmatpush1.msra.mxu0 0.0
    %2429 = vmatprep.subr.mxu0 0.0
    %2430 = vmatpush1.msra.mxu0 0.0
    %2431 = vmatprep.subr.mxu0 0.0
    %2432 = vmatpush1.msra.mxu0 0.0
    %2433 = vmatprep.subr.mxu0 0.0
    %2434 = vmatpush1.msra.mxu0 0.0
    %2435 = vmatprep.subr.mxu0 0.0
    %2436 = vmatpush1.msra.mxu0 0.0
    %2437 = vmatprep.subr.mxu0 0.0
    %2438 = vmatpush1.msra.mxu0 0.0
    %2439 = vmatprep.subr.mxu0 0.0
    %2440 = vmatpush1.msra.mxu0 0.0
    %2441 = vmatprep.subr.mxu0 0.0
    %2442 = vmatpush1.msra.mxu0 0.0
    %2443 = vmatprep.subr.mxu0 0.0
    %2444 = vmatpush1.msra.mxu0 0.0
    %2445 = vmatprep.subr.mxu0 0.0
    %2446 = vmatpush1.msra.mxu0 0.0
    %2447 = vmatprep.subr.mxu0 0.0
    %2448 = vmatpush1.msra.mxu0 0.0
    %2449 = vmatprep.subr.mxu0 0.0
    %2450 = vmatpush1.msra.mxu0 0.0
    %2451 = vmatprep.subr.mxu0 0.0
    %2452 = vmatpush1.msra.mxu0 0.0
    %2453 = vmatprep.subr.mxu0 0.0
    %2454 = vmatpush1.msra.mxu0 0.0
    %2455 = vmatprep.subr.mxu0 0.0
    %2456 = vmatpush1.msra.mxu0 0.0
    %2457 = vmatprep.subr.mxu0 0.0
    %2458 = vmatpush1.msra.mxu0 0.0
    %2459 = vmatprep.subr.mxu0 0.0
    %2460 = vmatpush1.msra.mxu0 0.0
    %2461 = vmatprep.subr.mxu0 0.0
    %2462 = vmatpush1.msra.mxu0 0.0
    %2463 = vmatprep.subr.mxu0 0.0
    %2464 = vmatpush1.msra.mxu0 0.0
    %2465 = vmatprep.subr.mxu0 0.0
    %2466 = vmatpush1.msra.mxu0 0.0
    %2467 = vmatprep.subr.mxu0 0.0
    %2468 = vmatpush1.msra.mxu0 0.0
    %2469 = vmatprep.subr.mxu0 0.0
    %2470 = vmatpush1.msra.mxu0 0.0
    %2471 = vmatprep.subr.mxu0 0.0
    %2472 = vmatpush1.msra.mxu0 0.0
    %2473 = vmatprep.subr.mxu0 0.0
    %2474 = vmatpush1.msra.mxu0 0.0
    %2475 = vmatprep.subr.mxu0 0.0
    %2476 = vmatpush1.msra.mxu0 0.0
    %2477 = vmatprep.subr.mxu0 0.0
    %2478 = vmatpush1.msra.mxu0 0.0
    %2479 = vmatprep.subr.mxu0 0.0
    %2480 = vmatpush1.msra.mxu0 0.0
    %2481 = vmatprep.mubr.f32.mxu0 0.0
    %2482 = vmatmul.mubr.f32.gmra.mrb[0].mxu0 %v2415
    %v2483 = vpop.f32.mrb[0].mxu0
    %v2484 = vadd.f32 %v2413, %v2483
    %v2485 = vpop.f32.mrb[0].mxu0
    %2486 = vdwg.mxu0
    %s2487 = scalar_lea.vmem [#allocation12], 6
    %2488 = vst [vmem:[%s2487] sm:$0x3] %v2484
    %s2489 = scalar_lea.vmem [#allocation2], 6
    %2490 = vst.msk [vmem:[%s2489] sm:$0x3] %vm77, %v2404
    %v2491 = vsel %vm936, %v2484, -inf
    %2492 = vmax.xlane.f32.xlu0 %v2491
    %v2493 = vpop.xlane.xlu0 %2492
    %vm2494 = vcmp.eq.f32.partialorder %v2484, %v2493
    %v2495 = vsel %vm2494, %v164, 128
    %v2496 = vsel %vm936, %v2495, 2147483647
    %v2497 = vand.u32 %v2496, 65535
    %v2498 = vshra.s32 %v2496, 16
    %v2499 = vcvt.s32.f32 %v2497
    %v2500 = vcvt.s32.f32 %v2498
    %2501 = vmin.xlane.f32.xlu0 %v2500
    %v2502 = vpop.xlane.xlu0 %2501
    %vm2503 = vcmp.eq.f32.partialorder %v2500, %v2502
    %v2504 = vsel %vm2503, %v2499, inf
    %2505 = vmin.xlane.f32.xlu0 %v2504
    %v2506 = vpop.xlane.xlu0 %2505
    %v2507 = vcvt.f32.s32 %v2506
    %v2508 = vcvt.f32.s32 %v2502
    %v2509 = vshll.u32 %v2508, 16
    %v2510 = vadd.s32 %v2509, %v2507
    %v2511 = vld [vmem:[#allocation9] sm:$0xff]
    %v2512 = vld [vmem:[#allocation9 + $0x8] sm:$0xff]
    %v2513 = vld [vmem:[#allocation9 + $0x10] sm:$0xff]
    %v2514 = vld [vmem:[#allocation9 + $0x18] sm:$0xff]
    %v2515 = vld [vmem:[#allocation9 + $0x20] sm:$0xff]
    %v2516 = vld [vmem:[#allocation9 + $0x28] sm:$0xff]
    %v2517 = vld [vmem:[#allocation9 + $0x30] sm:$0xff]
    %v2518 = vld [vmem:[#allocation9 + $0x38] sm:$0xff]
    %v2519 = vld [vmem:[#allocation9 + $0x40] sm:$0xff]
    %v2520 = vld [vmem:[#allocation9 + $0x48] sm:$0xff]
    %v2521 = vld [vmem:[#allocation9 + $0x50] sm:$0xff]
    %v2522 = vld [vmem:[#allocation9 + $0x58] sm:$0xff]
    %v2523 = vld [vmem:[#allocation9 + $0x60] sm:$0xff]
    %v2524 = vld [vmem:[#allocation9 + $0x68] sm:$0xff]
    %v2525 = vld [vmem:[#allocation9 + $0x70] sm:$0xff]
    %v2526 = vld [vmem:[#allocation9 + $0x78] sm:$0xff]
    %v2527 = vld [vmem:[%s181] ss:$8 sm:$0xf]
    %v2529 = vlaneseq
    %v2530 = vshrl.u32 %v2529, 7
    %v2531 = vsub.s32 0, %v2530
    %v2532 = vrot.slane %v2527, %v2531
    %v2533 = vlaneseq
    %v2534 = vshrl.u32 %v2533, 7
    %v2535 = vsub.s32 1, %v2534
    %v2536 = vrot.slane %v2527, %v2535
    %v2537 = vlaneseq
    %v2538 = vshrl.u32 %v2537, 7
    %v2539 = vsub.s32 2, %v2538
    %v2540 = vrot.slane %v2527, %v2539
    %v2541 = vlaneseq
    %v2542 = vshrl.u32 %v2541, 7
    %v2543 = vsub.s32 3, %v2542
    %v2544 = vrot.slane %v2527, %v2543
    %2549 = vmatprep.subr.mxu0 %v2512
    %2550 = vmatpush1.msra.mxu0 %v2511
    %2551 = vmatprep.subr.mxu0 %v2516
    %2552 = vmatpush1.msra.mxu0 %v2515
    %2553 = vmatprep.subr.mxu0 %v2520
    %2554 = vmatpush1.msra.mxu0 %v2519
    %2555 = vmatprep.subr.mxu0 %v2524
    %2556 = vmatpush1.msra.mxu0 %v2523
    %2557 = vmatprep.subr.mxu0 0.0
    %2558 = vmatpush1.msra.mxu0 0.0
    %2559 = vmatprep.subr.mxu0 0.0
    %2560 = vmatpush1.msra.mxu0 0.0
    %2561 = vmatprep.subr.mxu0 0.0
    %2562 = vmatpush1.msra.mxu0 0.0
    %2563 = vmatprep.subr.mxu0 0.0
    %2564 = vmatpush1.msra.mxu0 0.0
    %2565 = vmatprep.subr.mxu0 0.0
    %2566 = vmatpush1.msra.mxu0 0.0
    %2567 = vmatprep.subr.mxu0 0.0
    %2568 = vmatpush1.msra.mxu0 0.0
    %2569 = vmatprep.subr.mxu0 0.0
    %2570 = vmatpush1.msra.mxu0 0.0
    %2571 = vmatprep.subr.mxu0 0.0
    %2572 = vmatpush1.msra.mxu0 0.0
    %2573 = vmatprep.subr.mxu0 0.0
    %2574 = vmatpush1.msra.mxu0 0.0
    %2575 = vmatprep.subr.mxu0 0.0
    %2576 = vmatpush1.msra.mxu0 0.0
    %2577 = vmatprep.subr.mxu0 0.0
    %2578 = vmatpush1.msra.mxu0 0.0
    %2579 = vmatprep.subr.mxu0 0.0
    %2580 = vmatpush1.msra.mxu0 0.0
    %2581 = vmatprep.subr.mxu0 0.0
    %2582 = vmatpush1.msra.mxu0 0.0
    %2583 = vmatprep.subr.mxu0 0.0
    %2584 = vmatpush1.msra.mxu0 0.0
    %2585 = vmatprep.subr.mxu0 0.0
    %2586 = vmatpush1.msra.mxu0 0.0
    %2587 = vmatprep.subr.mxu0 0.0
    %2588 = vmatpush1.msra.mxu0 0.0
    %2589 = vmatprep.subr.mxu0 0.0
    %2590 = vmatpush1.msra.mxu0 0.0
    %2591 = vmatprep.subr.mxu0 0.0
    %2592 = vmatpush1.msra.mxu0 0.0
    %2593 = vmatprep.subr.mxu0 0.0
    %2594 = vmatpush1.msra.mxu0 0.0
    %2595 = vmatprep.subr.mxu0 0.0
    %2596 = vmatpush1.msra.mxu0 0.0
    %2597 = vmatprep.subr.mxu0 0.0
    %2598 = vmatpush1.msra.mxu0 0.0
    %2599 = vmatprep.subr.mxu0 0.0
    %2600 = vmatpush1.msra.mxu0 0.0
    %2601 = vmatprep.subr.mxu0 0.0
    %2602 = vmatpush1.msra.mxu0 0.0
    %2603 = vmatprep.subr.mxu0 0.0
    %2604 = vmatpush1.msra.mxu0 0.0
    %2605 = vmatprep.subr.mxu0 0.0
    %2606 = vmatpush1.msra.mxu0 0.0
    %2607 = vmatprep.subr.mxu0 0.0
    %2608 = vmatpush1.msra.mxu0 0.0
    %2609 = vmatprep.subr.mxu0 0.0
    %2610 = vmatpush1.msra.mxu0 0.0
    %2611 = vmatprep.subr.mxu0 0.0
    %2612 = vmatpush1.msra.mxu0 0.0
    %2613 = vmatprep.mubr.f32.mxu0 0.0
    %2614 = vmatmul.mubr.f32.gmra.mrb[0].mxu0 %v2415
    %v2615 = vpop.f32.mrb[0].mxu0
    %v2616 = vadd.f32 %v2532, %v2615
    %v2617 = vpop.f32.mrb[0].mxu0
    %v2618 = vadd.f32 %v2536, %v2617
    %2619 = vdwg.mxu0
    %2620 = vmatprep.subr.mxu0 %v2514
    %2621 = vmatpush1.msra.mxu0 %v2513
    %2622 = vmatprep.subr.mxu0 %v2518
    %2623 = vmatpush1.msra.mxu0 %v2517
    %2624 = vmatprep.subr.mxu0 %v2522
    %2625 = vmatpush1.msra.mxu0 %v2521
    %2626 = vmatprep.subr.mxu0 %v2526
    %2627 = vmatpush1.msra.mxu0 %v2525
    %2628 = vmatprep.subr.mxu0 0.0
    %2629 = vmatpush1.msra.mxu0 0.0
    %2630 = vmatprep.subr.mxu0 0.0
    %2631 = vmatpush1.msra.mxu0 0.0
    %2632 = vmatprep.subr.mxu0 0.0
    %2633 = vmatpush1.msra.mxu0 0.0
    %2634 = vmatprep.subr.mxu0 0.0
    %2635 = vmatpush1.msra.mxu0 0.0
    %2636 = vmatprep.subr.mxu0 0.0
    %2637 = vmatpush1.msra.mxu0 0.0
    %2638 = vmatprep.subr.mxu0 0.0
    %2639 = vmatpush1.msra.mxu0 0.0
    %2640 = vmatprep.subr.mxu0 0.0
    %2641 = vmatpush1.msra.mxu0 0.0
    %2642 = vmatprep.subr.mxu0 0.0
    %2643 = vmatpush1.msra.mxu0 0.0
    %2644 = vmatprep.subr.mxu0 0.0
    %2645 = vmatpush1.msra.mxu0 0.0
    %2646 = vmatprep.subr.mxu0 0.0
    %2647 = vmatpush1.msra.mxu0 0.0
    %2648 = vmatprep.subr.mxu0 0.0
    %2649 = vmatpush1.msra.mxu0 0.0
    %2650 = vmatprep.subr.mxu0 0.0
    %2651 = vmatpush1.msra.mxu0 0.0
    %2652 = vmatprep.subr.mxu0 0.0
    %2653 = vmatpush1.msra.mxu0 0.0
    %2654 = vmatprep.subr.mxu0 0.0
    %2655 = vmatpush1.msra.mxu0 0.0
    %2656 = vmatprep.subr.mxu0 0.0
    %2657 = vmatpush1.msra.mxu0 0.0
    %2658 = vmatprep.subr.mxu0 0.0
    %2659 = vmatpush1.msra.mxu0 0.0
    %2660 = vmatprep.subr.mxu0 0.0
    %2661 = vmatpush1.msra.mxu0 0.0
    %2662 = vmatprep.subr.mxu0 0.0
    %2663 = vmatpush1.msra.mxu0 0.0
    %2664 = vmatprep.subr.mxu0 0.0
    %2665 = vmatpush1.msra.mxu0 0.0
    %2666 = vmatprep.subr.mxu0 0.0
    %2667 = vmatpush1.msra.mxu0 0.0
    %2668 = vmatprep.subr.mxu0 0.0
    %2669 = vmatpush1.msra.mxu0 0.0
    %2670 = vmatprep.subr.mxu0 0.0
    %2671 = vmatpush1.msra.mxu0 0.0
    %2672 = vmatprep.subr.mxu0 0.0
    %2673 = vmatpush1.msra.mxu0 0.0
    %2674 = vmatprep.subr.mxu0 0.0
    %2675 = vmatpush1.msra.mxu0 0.0
    %2676 = vmatprep.subr.mxu0 0.0
    %2677 = vmatpush1.msra.mxu0 0.0
    %2678 = vmatprep.subr.mxu0 0.0
    %2679 = vmatpush1.msra.mxu0 0.0
    %2680 = vmatprep.subr.mxu0 0.0
    %2681 = vmatpush1.msra.mxu0 0.0
    %2682 = vmatprep.subr.mxu0 0.0
    %2683 = vmatpush1.msra.mxu0 0.0
    %2684 = vmatprep.mubr.f32.mxu0 0.0
    %2685 = vmatmul.mubr.f32.gmra.mrb[0].mxu0 %v2415
    %v2686 = vpop.f32.mrb[0].mxu0
    %v2687 = vadd.f32 %v2540, %v2686
    %v2688 = vpop.f32.mrb[0].mxu0
    %v2689 = vadd.f32 %v2544, %v2688
    %2690 = vdwg.mxu0
    %v2693 = vunpack.c.l.s4 1966171168
    %v2694 = vunpack.c.0.s8 %v2693
    %v2695 = vlaneseq
    %v2696 = vshrl.u32 %v2695, 7
    %v2697 = vsub.s32 %v2694, %v2696
    %v2698 = vrot.slane %v2616, %v2697
    %v2699 = vcombine.high %v2698, %v2698
    %v2701 = vunpack.c.l.s4 1966171168
    %v2702 = vunpack.c.0.s8 %v2701
    %v2703 = vlaneseq
    %v2704 = vshrl.u32 %v2703, 7
    %v2705 = vsub.s32 %v2702, %v2704
    %v2706 = vrot.slane %v2698, %v2705
    %v2708 = vunpack.c.l.s4 1966171168
    %v2709 = vunpack.c.0.s8 %v2708
    %v2710 = vlaneseq
    %v2711 = vshrl.u32 %v2710, 7
    %v2712 = vsub.s32 %v2709, %v2711
    %v2713 = vrot.slane %v2699, %v2712
    %v2714 = vlaneseq
    %v2715 = vshrl.u32 %v2714, 7
    %v2716 = vsub.s32 0, %v2715
    %v2717 = vrot.slane %v2706, %v2716
    %v2718 = vlaneseq
    %v2719 = vshrl.u32 %v2718, 7
    %v2720 = vsub.s32 0, %v2719
    %v2721 = vrot.slane %v2713, %v2720
    %v2724 = vadd.f32 %v2717, %v157
    %v2725 = vadd.f32 %v2721, %v161
    %v2726 = vtanh.pop %v2724
    %v2727 = vtanh.pop %v2725
    %v2728 = vmul.f32 %v2726, %v390
    %v2729 = vmul.f32 %v2727, %v390
    %v2730 = vsel %vm393, %v2728, 0.0
    %2731 = vadd.xlane.f32.xlu0 %v2730
    %v2732 = vpop.xlane.xlu0 %2731
    %v2733 = vsel %vm393, %v2729, 0.0
    %2734 = vadd.xlane.f32.xlu0 %v2733
    %v2735 = vpop.xlane.xlu0 %2734
    %v2738 = vlaneseq
    %v2739 = vshrl.u32 %v2738, 7
    %v2740 = vsub.s32 %v164, %v2739
    %v2741 = vrot.slane %v2732, %v2740
    %v2742 = vlaneseq
    %v2743 = vshrl.u32 %v2742, 7
    %v2744 = vsub.s32 %v164, %v2743
    %v2745 = vrot.slane %v2735, %v2744
    %v2746 = vsel %vm410, %v2745, %v2741
    %v2748 = vsel %vm413, %v2746, -inf
    %2749 = vmax.xlane.f32.xlu0 %v2748
    %v2750 = vpop.xlane.xlu0 %2749
    %v2752 = vlaneseq
    %v2753 = vshrl.u32 %v2752, 7
    %v2754 = vsub.s32 0, %v2753
    %v2755 = vrot.slane %v2750, %v2754
    %v2756 = vlaneseq
    %v2757 = vshrl.u32 %v2756, 7
    %v2758 = vsub.s32 1, %v2757
    %v2759 = vrot.slane %v2750, %v2758
    %v2762 = vsub.f32 %v2732, %v2755
    %v2763 = vsub.f32 %v2735, %v2759
    %v2764 = vmul.f32 %v2762, 1.442695
    %v2765 = vpow.pop %v2764
    %v2766 = vmul.f32 %v2763, 1.442695
    %v2767 = vpow.pop %v2766
    %2770 = vset.pattern.permute.xlu0 0
    %2771 = vperm.xlu0 %2770, %v2765
    %v2772 = vpop.permute.xlu0 %2771
    %2773 = vset.pattern.permute.xlu0 0
    %2774 = vperm.xlu0 %2773, %v2767
    %v2775 = vpop.permute.xlu0 %2774
    %v2776 = vlaneseq
    %v2777 = vshrl.u32 %v2776, 7
    %v2778 = vsub.s32 %v164, %v2777
    %v2779 = vrot.slane %v2772, %v2778
    %v2780 = vlaneseq
    %v2781 = vshrl.u32 %v2780, 7
    %v2782 = vsub.s32 %v164, %v2781
    %v2783 = vrot.slane %v2775, %v2782
    %v2784 = vsel %vm410, %v2783, %v2779
    %v2786 = vsel %vm413, %v2784, 0.0
    %2787 = vadd.xlane.f32.xlu0 %v2786
    %v2788 = vpop.xlane.xlu0 %2787
    %v2790 = vlaneseq
    %v2791 = vshrl.u32 %v2790, 7
    %v2792 = vsub.s32 0, %v2791
    %v2793 = vrot.slane %v2788, %v2792
    %v2794 = vlaneseq
    %v2795 = vshrl.u32 %v2794, 7
    %v2796 = vsub.s32 1, %v2795
    %v2797 = vrot.slane %v2788, %v2796
    %v2800 = vrcp.pop %v2793
    %v2801 = vmul.f32 %v2765, %v2800
    %v2802 = vrcp.pop %v2797
    %v2803 = vmul.f32 %v2767, %v2802
    %2805 = vset.pattern.permute.xlu0 0
    %2806 = vperm.xlu0 %2805, %v2801
    %v2807 = vpop.permute.xlu0 %2806
    %2810 = vset.pattern.permute.xlu0 0
    %2811 = vperm.xlu0 %2810, %v2803
    %v2812 = vpop.permute.xlu0 %2811
    %v2814 = vmul.f32 %v2807, %v79
    %v2815 = vmul.f32 %v2812, %v80
    %v2816 = vsel %vm482, %v2814, 0.0
    %v2817 = vrot.slane %v2816, 4
    %v2818 = vadd.f32 %v2816, %v2817
    %v2819 = vrot.slane %v2818, 2
    %v2820 = vadd.f32 %v2818, %v2819
    %v2821 = vrot.slane %v2820, 1
    %v2822 = vadd.f32 %v2820, %v2821
    %v2823 = vsel %vm482, %v2815, 0.0
    %v2824 = vrot.slane %v2823, 4
    %v2825 = vadd.f32 %v2823, %v2824
    %v2826 = vrot.slane %v2825, 2
    %v2827 = vadd.f32 %v2825, %v2826
    %v2828 = vrot.slane %v2827, 1
    %v2829 = vadd.f32 %v2827, %v2828
    %vm2830 = vcmp.eq.s32.totalorder %v164, %v2510
    %v2831 = vsel %vm2830, 1, 0
    %v2832 = vcvt.s32.f32 %v2831
    %v2833 = vld [vmem:[#allocation6] sm:$0xff]
    %v2834 = vld [vmem:[#allocation6 + $0x8] sm:$0xff]
    %v2835 = vld [vmem:[#allocation6 + $0x10] sm:$0xff]
    %v2836 = vld [vmem:[#allocation6 + $0x18] sm:$0xff]
    %v2837 = vld [vmem:[#allocation6 + $0x20] sm:$0xff]
    %v2838 = vld [vmem:[#allocation6 + $0x28] sm:$0xff]
    %v2839 = vld [vmem:[#allocation6 + $0x30] sm:$0xff]
    %v2840 = vld [vmem:[#allocation6 + $0x38] sm:$0xff]
    %v2841 = vld [vmem:[#allocation6 + $0x40] sm:$0xff]
    %v2842 = vld [vmem:[#allocation6 + $0x48] sm:$0xff]
    %v2843 = vld [vmem:[#allocation6 + $0x50] sm:$0xff]
    %v2844 = vld [vmem:[#allocation6 + $0x58] sm:$0xff]
    %v2845 = vld [vmem:[#allocation6 + $0x60] sm:$0xff]
    %v2846 = vld [vmem:[#allocation6 + $0x68] sm:$0xff]
    %v2847 = vld [vmem:[#allocation6 + $0x70] sm:$0xff]
    %v2848 = vld [vmem:[#allocation6 + $0x78] sm:$0xff]
    %v2849 = vld [vmem:[#allocation6 + $0x80] sm:$0xff]
    %v2850 = vld [vmem:[#allocation6 + $0x88] sm:$0xff]
    %v2853 = vsel %vm410, %v2829, %v2822
    %v2854 = vsel %vm87, %v2853, 0
    %2856 = vmatprep.subr.mxu0 %v2846
    %2857 = vmatpush1.msra.mxu0 %v2845
    %2858 = vmatprep.subr.mxu0 %v2849
    %2859 = vmatpush1.msra.mxu0 %v2848
    %2860 = vmatprep.subr.mxu0 0.0
    %2861 = vmatpush1.msra.mxu0 0.0
    %2862 = vmatprep.subr.mxu0 0.0
    %2863 = vmatpush1.msra.mxu0 0.0
    %2864 = vmatprep.subr.mxu0 0.0
    %2865 = vmatpush1.msra.mxu0 0.0
    %2866 = vmatprep.subr.mxu0 0.0
    %2867 = vmatpush1.msra.mxu0 0.0
    %2868 = vmatprep.subr.mxu0 0.0
    %2869 = vmatpush1.msra.mxu0 0.0
    %2870 = vmatprep.subr.mxu0 0.0
    %2871 = vmatpush1.msra.mxu0 0.0
    %2872 = vmatprep.subr.mxu0 0.0
    %2873 = vmatpush1.msra.mxu0 0.0
    %2874 = vmatprep.subr.mxu0 0.0
    %2875 = vmatpush1.msra.mxu0 0.0
    %2876 = vmatprep.subr.mxu0 0.0
    %2877 = vmatpush1.msra.mxu0 0.0
    %2878 = vmatprep.subr.mxu0 0.0
    %2879 = vmatpush1.msra.mxu0 0.0
    %2880 = vmatprep.subr.mxu0 0.0
    %2881 = vmatpush1.msra.mxu0 0.0
    %2882 = vmatprep.subr.mxu0 0.0
    %2883 = vmatpush1.msra.mxu0 0.0
    %2884 = vmatprep.subr.mxu0 0.0
    %2885 = vmatpush1.msra.mxu0 0.0
    %2886 = vmatprep.subr.mxu0 0.0
    %2887 = vmatpush1.msra.mxu0 0.0
    %2888 = vmatprep.subr.mxu0 0.0
    %2889 = vmatpush1.msra.mxu0 0.0
    %2890 = vmatprep.subr.mxu0 0.0
    %2891 = vmatpush1.msra.mxu0 0.0
    %2892 = vmatprep.subr.mxu0 0.0
    %2893 = vmatpush1.msra.mxu0 0.0
    %2894 = vmatprep.subr.mxu0 0.0
    %2895 = vmatpush1.msra.mxu0 0.0
    %2896 = vmatprep.subr.mxu0 0.0
    %2897 = vmatpush1.msra.mxu0 0.0
    %2898 = vmatprep.subr.mxu0 0.0
    %2899 = vmatpush1.msra.mxu0 0.0
    %2900 = vmatprep.subr.mxu0 0.0
    %2901 = vmatpush1.msra.mxu0 0.0
    %2902 = vmatprep.subr.mxu0 0.0
    %2903 = vmatpush1.msra.mxu0 0.0
    %2904 = vmatprep.subr.mxu0 0.0
    %2905 = vmatpush1.msra.mxu0 0.0
    %2906 = vmatprep.subr.mxu0 0.0
    %2907 = vmatpush1.msra.mxu0 0.0
    %2908 = vmatprep.subr.mxu0 0.0
    %2909 = vmatpush1.msra.mxu0 0.0
    %2910 = vmatprep.subr.mxu0 0.0
    %2911 = vmatpush1.msra.mxu0 0.0
    %2912 = vmatprep.subr.mxu0 0.0
    %2913 = vmatpush1.msra.mxu0 0.0
    %2914 = vmatprep.subr.mxu0 0.0
    %2915 = vmatpush1.msra.mxu0 0.0
    %2916 = vmatprep.subr.mxu0 0.0
    %2917 = vmatpush1.msra.mxu0 0.0
    %2918 = vmatprep.subr.mxu0 0.0
    %2919 = vmatpush1.msra.mxu0 0.0
    %2920 = vmatprep.mubr.f32.mxu0 0.0
    %2921 = vmatmul.mubr.f32.gmra.mrb[0].mxu0 %v2854
    %v2922 = vpop.f32.mrb[0].mxu0
    %v2923 = vadd.f32 0.0, %v2922
    %v2924 = vpop.f32.mrb[0].mxu0
    %v2925 = vadd.f32 0.0, %v2924
    %2926 = vdwg.mxu0
    %2927 = vmatprep.subr.mxu0 0.0
    %2928 = vmatpush1.msra.mxu0 %v2847
    %2929 = vmatprep.subr.mxu0 0.0
    %2930 = vmatpush1.msra.mxu0 %v2850
    %2931 = vmatprep.subr.mxu0 0.0
    %2932 = vmatpush1.msra.mxu0 0.0
    %2933 = vmatprep.subr.mxu0 0.0
    %2934 = vmatpush1.msra.mxu0 0.0
    %2935 = vmatprep.subr.mxu0 0.0
    %2936 = vmatpush1.msra.mxu0 0.0
    %2937 = vmatprep.subr.mxu0 0.0
    %2938 = vmatpush1.msra.mxu0 0.0
    %2939 = vmatprep.subr.mxu0 0.0
    %2940 = vmatpush1.msra.mxu0 0.0
    %2941 = vmatprep.subr.mxu0 0.0
    %2942 = vmatpush1.msra.mxu0 0.0
    %2943 = vmatprep.subr.mxu0 0.0
    %2944 = vmatpush1.msra.mxu0 0.0
    %2945 = vmatprep.subr.mxu0 0.0
    %2946 = vmatpush1.msra.mxu0 0.0
    %2947 = vmatprep.subr.mxu0 0.0
    %2948 = vmatpush1.msra.mxu0 0.0
    %2949 = vmatprep.subr.mxu0 0.0
    %2950 = vmatpush1.msra.mxu0 0.0
    %2951 = vmatprep.subr.mxu0 0.0
    %2952 = vmatpush1.msra.mxu0 0.0
    %2953 = vmatprep.subr.mxu0 0.0
    %2954 = vmatpush1.msra.mxu0 0.0
    %2955 = vmatprep.subr.mxu0 0.0
    %2956 = vmatpush1.msra.mxu0 0.0
    %2957 = vmatprep.subr.mxu0 0.0
    %2958 = vmatpush1.msra.mxu0 0.0
    %2959 = vmatprep.subr.mxu0 0.0
    %2960 = vmatpush1.msra.mxu0 0.0
    %2961 = vmatprep.subr.mxu0 0.0
    %2962 = vmatpush1.msra.mxu0 0.0
    %2963 = vmatprep.subr.mxu0 0.0
    %2964 = vmatpush1.msra.mxu0 0.0
    %2965 = vmatprep.subr.mxu0 0.0
    %2966 = vmatpush1.msra.mxu0 0.0
    %2967 = vmatprep.subr.mxu0 0.0
    %2968 = vmatpush1.msra.mxu0 0.0
    %2969 = vmatprep.subr.mxu0 0.0
    %2970 = vmatpush1.msra.mxu0 0.0
    %2971 = vmatprep.subr.mxu0 0.0
    %2972 = vmatpush1.msra.mxu0 0.0
    %2973 = vmatprep.subr.mxu0 0.0
    %2974 = vmatpush1.msra.mxu0 0.0
    %2975 = vmatprep.subr.mxu0 0.0
    %2976 = vmatpush1.msra.mxu0 0.0
    %2977 = vmatprep.subr.mxu0 0.0
    %2978 = vmatpush1.msra.mxu0 0.0
    %2979 = vmatprep.subr.mxu0 0.0
    %2980 = vmatpush1.msra.mxu0 0.0
    %2981 = vmatprep.subr.mxu0 0.0
    %2982 = vmatpush1.msra.mxu0 0.0
    %2983 = vmatprep.subr.mxu0 0.0
    %2984 = vmatpush1.msra.mxu0 0.0
    %2985 = vmatprep.subr.mxu0 0.0
    %2986 = vmatpush1.msra.mxu0 0.0
    %2987 = vmatprep.subr.mxu0 0.0
    %2988 = vmatpush1.msra.mxu0 0.0
    %2989 = vmatprep.subr.mxu0 0.0
    %2990 = vmatpush1.msra.mxu0 0.0
    %2991 = vmatprep.mubr.f32.mxu0 0.0
    %2992 = vmatmul.mubr.f32.gmra.mrb[0].mxu0 %v2854
    %v2993 = vpop.f32.mrb[0].mxu0
    %v2994 = vadd.f32 0.0, %v2993
    %v2995 = vpop.f32.mrb[0].mxu0
    %2996 = vdwg.mxu0
    %v2998 = vsel %vm204, %v2832, 0
    %3000 = vmatprep.subr.mxu0 %v2834
    %3001 = vmatpush1.msra.mxu0 %v2833
    %3002 = vmatprep.subr.mxu0 %v2837
    %3003 = vmatpush1.msra.mxu0 %v2836
    %3004 = vmatprep.subr.mxu0 %v2840
    %3005 = vmatpush1.msra.mxu0 %v2839
    %3006 = vmatprep.subr.mxu0 %v2843
    %3007 = vmatpush1.msra.mxu0 %v2842
    %3008 = vmatprep.subr.mxu0 0.0
    %3009 = vmatpush1.msra.mxu0 0.0
    %3010 = vmatprep.subr.mxu0 0.0
    %3011 = vmatpush1.msra.mxu0 0.0
    %3012 = vmatprep.subr.mxu0 0.0
    %3013 = vmatpush1.msra.mxu0 0.0
    %3014 = vmatprep.subr.mxu0 0.0
    %3015 = vmatpush1.msra.mxu0 0.0
    %3016 = vmatprep.subr.mxu0 0.0
    %3017 = vmatpush1.msra.mxu0 0.0
    %3018 = vmatprep.subr.mxu0 0.0
    %3019 = vmatpush1.msra.mxu0 0.0
    %3020 = vmatprep.subr.mxu0 0.0
    %3021 = vmatpush1.msra.mxu0 0.0
    %3022 = vmatprep.subr.mxu0 0.0
    %3023 = vmatpush1.msra.mxu0 0.0
    %3024 = vmatprep.subr.mxu0 0.0
    %3025 = vmatpush1.msra.mxu0 0.0
    %3026 = vmatprep.subr.mxu0 0.0
    %3027 = vmatpush1.msra.mxu0 0.0
    %3028 = vmatprep.subr.mxu0 0.0
    %3029 = vmatpush1.msra.mxu0 0.0
    %3030 = vmatprep.subr.mxu0 0.0
    %3031 = vmatpush1.msra.mxu0 0.0
    %3032 = vmatprep.subr.mxu0 0.0
    %3033 = vmatpush1.msra.mxu0 0.0
    %3034 = vmatprep.subr.mxu0 0.0
    %3035 = vmatpush1.msra.mxu0 0.0
    %3036 = vmatprep.subr.mxu0 0.0
    %3037 = vmatpush1.msra.mxu0 0.0
    %3038 = vmatprep.subr.mxu0 0.0
    %3039 = vmatpush1.msra.mxu0 0.0
    %3040 = vmatprep.subr.mxu0 0.0
    %3041 = vmatpush1.msra.mxu0 0.0
    %3042 = vmatprep.subr.mxu0 0.0
    %3043 = vmatpush1.msra.mxu0 0.0
    %3044 = vmatprep.subr.mxu0 0.0
    %3045 = vmatpush1.msra.mxu0 0.0
    %3046 = vmatprep.subr.mxu0 0.0
    %3047 = vmatpush1.msra.mxu0 0.0
    %3048 = vmatprep.subr.mxu0 0.0
    %3049 = vmatpush1.msra.mxu0 0.0
    %3050 = vmatprep.subr.mxu0 0.0
    %3051 = vmatpush1.msra.mxu0 0.0
    %3052 = vmatprep.subr.mxu0 0.0
    %3053 = vmatpush1.msra.mxu0 0.0
    %3054 = vmatprep.subr.mxu0 0.0
    %3055 = vmatpush1.msra.mxu0 0.0
    %3056 = vmatprep.subr.mxu0 0.0
    %3057 = vmatpush1.msra.mxu0 0.0
    %3058 = vmatprep.subr.mxu0 0.0
    %3059 = vmatpush1.msra.mxu0 0.0
    %3060 = vmatprep.subr.mxu0 0.0
    %3061 = vmatpush1.msra.mxu0 0.0
    %3062 = vmatprep.subr.mxu0 0.0
    %3063 = vmatpush1.msra.mxu0 0.0
    %3064 = vmatprep.mubr.f32.mxu0 0.0
    %3065 = vmatmul.mubr.f32.gmra.mrb[0].mxu0 %v2998
    %v3066 = vpop.f32.mrb[0].mxu0
    %v3067 = vadd.f32 %v2923, %v3066
    %v3068 = vpop.f32.mrb[0].mxu0
    %v3069 = vadd.f32 %v2925, %v3068
    %3070 = vdwg.mxu0
    %3071 = vmatprep.subr.mxu0 0.0
    %3072 = vmatpush1.msra.mxu0 %v2835
    %3073 = vmatprep.subr.mxu0 0.0
    %3074 = vmatpush1.msra.mxu0 %v2838
    %3075 = vmatprep.subr.mxu0 0.0
    %3076 = vmatpush1.msra.mxu0 %v2841
    %3077 = vmatprep.subr.mxu0 0.0
    %3078 = vmatpush1.msra.mxu0 %v2844
    %3079 = vmatprep.subr.mxu0 0.0
    %3080 = vmatpush1.msra.mxu0 0.0
    %3081 = vmatprep.subr.mxu0 0.0
    %3082 = vmatpush1.msra.mxu0 0.0
    %3083 = vmatprep.subr.mxu0 0.0
    %3084 = vmatpush1.msra.mxu0 0.0
    %3085 = vmatprep.subr.mxu0 0.0
    %3086 = vmatpush1.msra.mxu0 0.0
    %3087 = vmatprep.subr.mxu0 0.0
    %3088 = vmatpush1.msra.mxu0 0.0
    %3089 = vmatprep.subr.mxu0 0.0
    %3090 = vmatpush1.msra.mxu0 0.0
    %3091 = vmatprep.subr.mxu0 0.0
    %3092 = vmatpush1.msra.mxu0 0.0
    %3093 = vmatprep.subr.mxu0 0.0
    %3094 = vmatpush1.msra.mxu0 0.0
    %3095 = vmatprep.subr.mxu0 0.0
    %3096 = vmatpush1.msra.mxu0 0.0
    %3097 = vmatprep.subr.mxu0 0.0
    %3098 = vmatpush1.msra.mxu0 0.0
    %3099 = vmatprep.subr.mxu0 0.0
    %3100 = vmatpush1.msra.mxu0 0.0
    %3101 = vmatprep.subr.mxu0 0.0
    %3102 = vmatpush1.msra.mxu0 0.0
    %3103 = vmatprep.subr.mxu0 0.0
    %3104 = vmatpush1.msra.mxu0 0.0
    %3105 = vmatprep.subr.mxu0 0.0
    %3106 = vmatpush1.msra.mxu0 0.0
    %3107 = vmatprep.subr.mxu0 0.0
    %3108 = vmatpush1.msra.mxu0 0.0
    %3109 = vmatprep.subr.mxu0 0.0
    %3110 = vmatpush1.msra.mxu0 0.0
    %3111 = vmatprep.subr.mxu0 0.0
    %3112 = vmatpush1.msra.mxu0 0.0
    %3113 = vmatprep.subr.mxu0 0.0
    %3114 = vmatpush1.msra.mxu0 0.0
    %3115 = vmatprep.subr.mxu0 0.0
    %3116 = vmatpush1.msra.mxu0 0.0
    %3117 = vmatprep.subr.mxu0 0.0
    %3118 = vmatpush1.msra.mxu0 0.0
    %3119 = vmatprep.subr.mxu0 0.0
    %3120 = vmatpush1.msra.mxu0 0.0
    %3121 = vmatprep.subr.mxu0 0.0
    %3122 = vmatpush1.msra.mxu0 0.0
    %3123 = vmatprep.subr.mxu0 0.0
    %3124 = vmatpush1.msra.mxu0 0.0
    %3125 = vmatprep.subr.mxu0 0.0
    %3126 = vmatpush1.msra.mxu0 0.0
    %3127 = vmatprep.subr.mxu0 0.0
    %3128 = vmatpush1.msra.mxu0 0.0
    %3129 = vmatprep.subr.mxu0 0.0
    %3130 = vmatpush1.msra.mxu0 0.0
    %3131 = vmatprep.subr.mxu0 0.0
    %3132 = vmatpush1.msra.mxu0 0.0
    %3133 = vmatprep.subr.mxu0 0.0
    %3134 = vmatpush1.msra.mxu0 0.0
    %3135 = vmatprep.mubr.f32.mxu0 0.0
    %3136 = vmatmul.mubr.f32.gmra.mrb[0].mxu0 %v2998
    %v3137 = vpop.f32.mrb[0].mxu0
    %v3138 = vadd.f32 %v2994, %v3137
    %v3139 = vpop.f32.mrb[0].mxu0
    %3140 = vdwg.mxu0
    %v3141 = vld [vmem:[%s808] ss:$8 sm:$0x7]
    %v3143 = vlaneseq
    %v3144 = vshrl.u32 %v3143, 7
    %v3145 = vsub.s32 0, %v3144
    %v3146 = vrot.slane %v3141, %v3145
    %v3147 = vlaneseq
    %v3148 = vshrl.u32 %v3147, 7
    %v3149 = vsub.s32 1, %v3148
    %v3150 = vrot.slane %v3141, %v3149
    %v3151 = vlaneseq
    %v3152 = vshrl.u32 %v3151, 7
    %v3153 = vsub.s32 2, %v3152
    %v3154 = vrot.slane %v3141, %v3153
    %v3158 = vadd.f32 %v3067, %v3146
    %v3159 = vadd.f32 %v3069, %v3150
    %v3160 = vadd.f32 %v3138, %v3154
    %v3161 = vadd.f32 %v3158, %v2618
    %v3162 = vsub.f32 0.0, %v3161
    %v3163 = vmul.f32 %v3162, 1.442695
    %v3164 = vpow.pop %v3163
    %v3165 = vadd.f32 %v3164, 1.0
    %v3166 = vrcp.pop %v3165
    %v3167 = vmul.f32 1.0, %v3166
    %v3168 = vadd.f32 %v3159, %v2687
    %v3169 = vsub.f32 0.0, %v3168
    %v3170 = vmul.f32 %v3169, 1.442695
    %v3171 = vpow.pop %v3170
    %v3172 = vadd.f32 %v3171, 1.0
    %v3173 = vrcp.pop %v3172
    %v3174 = vmul.f32 1.0, %v3173
    %v3175 = vmul.f32 %v3167, %v2689
    %v3176 = vadd.f32 %v3160, %v3175
    %v3177 = vtanh.pop %v3176
    %v3178 = vsub.f32 1.0, %v3174
    %v3179 = vmul.f32 %v3178, %v3177
    %v3180 = vmul.f32 %v3174, %v2404
    %v3181 = vadd.f32 %v3179, %v3180
    %v3182 = vld [vmem:[#allocation11 + $0x18] sm:$0xff]
    %v3183 = vld [vmem:[#allocation11 + $0x20] sm:$0xff]
    %v3184 = vld [vmem:[#allocation11 + $0x28] sm:$0xff]
    %v3185 = vld [vmem:[#allocation11 + $0x30] sm:$0xff]
    %v3186 = vld [vmem:[#allocation11 + $0x38] sm:$0x1]
    %v3187 = vlaneseq
    %v3188 = vshrl.u32 %v3187, 7
    %v3189 = vsub.s32 0, %v3188
    %v3190 = vrot.slane %v3186, %v3189
    %v3192 = vsel %vm204, %v3181, 0
    %3194 = vmatprep.subr.mxu0 0.0
    %3195 = vmatpush1.msra.mxu0 %v3182
    %3196 = vmatprep.subr.mxu0 0.0
    %3197 = vmatpush1.msra.mxu0 %v3183
    %3198 = vmatprep.subr.mxu0 0.0
    %3199 = vmatpush1.msra.mxu0 %v3184
    %3200 = vmatprep.subr.mxu0 0.0
    %3201 = vmatpush1.msra.mxu0 %v3185
    %3202 = vmatprep.subr.mxu0 0.0
    %3203 = vmatpush1.msra.mxu0 0.0
    %3204 = vmatprep.subr.mxu0 0.0
    %3205 = vmatpush1.msra.mxu0 0.0
    %3206 = vmatprep.subr.mxu0 0.0
    %3207 = vmatpush1.msra.mxu0 0.0
    %3208 = vmatprep.subr.mxu0 0.0
    %3209 = vmatpush1.msra.mxu0 0.0
    %3210 = vmatprep.subr.mxu0 0.0
    %3211 = vmatpush1.msra.mxu0 0.0
    %3212 = vmatprep.subr.mxu0 0.0
    %3213 = vmatpush1.msra.mxu0 0.0
    %3214 = vmatprep.subr.mxu0 0.0
    %3215 = vmatpush1.msra.mxu0 0.0
    %3216 = vmatprep.subr.mxu0 0.0
    %3217 = vmatpush1.msra.mxu0 0.0
    %3218 = vmatprep.subr.mxu0 0.0
    %3219 = vmatpush1.msra.mxu0 0.0
    %3220 = vmatprep.subr.mxu0 0.0
    %3221 = vmatpush1.msra.mxu0 0.0
    %3222 = vmatprep.subr.mxu0 0.0
    %3223 = vmatpush1.msra.mxu0 0.0
    %3224 = vmatprep.subr.mxu0 0.0
    %3225 = vmatpush1.msra.mxu0 0.0
    %3226 = vmatprep.subr.mxu0 0.0
    %3227 = vmatpush1.msra.mxu0 0.0
    %3228 = vmatprep.subr.mxu0 0.0
    %3229 = vmatpush1.msra.mxu0 0.0
    %3230 = vmatprep.subr.mxu0 0.0
    %3231 = vmatpush1.msra.mxu0 0.0
    %3232 = vmatprep.subr.mxu0 0.0
    %3233 = vmatpush1.msra.mxu0 0.0
    %3234 = vmatprep.subr.mxu0 0.0
    %3235 = vmatpush1.msra.mxu0 0.0
    %3236 = vmatprep.subr.mxu0 0.0
    %3237 = vmatpush1.msra.mxu0 0.0
    %3238 = vmatprep.subr.mxu0 0.0
    %3239 = vmatpush1.msra.mxu0 0.0
    %3240 = vmatprep.subr.mxu0 0.0
    %3241 = vmatpush1.msra.mxu0 0.0
    %3242 = vmatprep.subr.mxu0 0.0
    %3243 = vmatpush1.msra.mxu0 0.0
    %3244 = vmatprep.subr.mxu0 0.0
    %3245 = vmatpush1.msra.mxu0 0.0
    %3246 = vmatprep.subr.mxu0 0.0
    %3247 = vmatpush1.msra.mxu0 0.0
    %3248 = vmatprep.subr.mxu0 0.0
    %3249 = vmatpush1.msra.mxu0 0.0
    %3250 = vmatprep.subr.mxu0 0.0
    %3251 = vmatpush1.msra.mxu0 0.0
    %3252 = vmatprep.subr.mxu0 0.0
    %3253 = vmatpush1.msra.mxu0 0.0
    %3254 = vmatprep.subr.mxu0 0.0
    %3255 = vmatpush1.msra.mxu0 0.0
    %3256 = vmatprep.subr.mxu0 0.0
    %3257 = vmatpush1.msra.mxu0 0.0
    %3258 = vmatprep.mubr.f32.mxu0 0.0
    %3259 = vmatmul.mubr.f32.gmra.mrb[0].mxu0 %v3192
    %v3260 = vpop.f32.mrb[0].mxu0
    %v3261 = vadd.f32 %v3190, %v3260
    %v3262 = vpop.f32.mrb[0].mxu0
    %3263 = vdwg.mxu0
    %s3264 = scalar_lea.vmem [#allocation12], 8
    %3265 = vst [vmem:[%s3264] sm:$0x3] %v3261
    %s3266 = scalar_lea.vmem [#allocation2], 8
    %3267 = vst.msk [vmem:[%s3266] sm:$0x3] %vm77, %v3181
    %v3268 = vsel %vm936, %v3261, -inf
    %3269 = vmax.xlane.f32.xlu0 %v3268
    %v3270 = vpop.xlane.xlu0 %3269
    %vm3271 = vcmp.eq.f32.partialorder %v3261, %v3270
    %v3272 = vsel %vm3271, %v164, 128
    %v3273 = vsel %vm936, %v3272, 2147483647
    %v3274 = vand.u32 %v3273, 65535
    %v3275 = vshra.s32 %v3273, 16
    %v3276 = vcvt.s32.f32 %v3274
    %v3277 = vcvt.s32.f32 %v3275
    %3278 = vmin.xlane.f32.xlu0 %v3277
    %v3279 = vpop.xlane.xlu0 %3278
    %vm3280 = vcmp.eq.f32.partialorder %v3277, %v3279
    %v3281 = vsel %vm3280, %v3276, inf
    %3282 = vmin.xlane.f32.xlu0 %v3281
    %v3283 = vpop.xlane.xlu0 %3282
    %v3284 = vcvt.f32.s32 %v3283
    %v3285 = vcvt.f32.s32 %v3279
    %v3286 = vshll.u32 %v3285, 16
    %v3287 = vadd.s32 %v3286, %v3284
    %v3288 = vld [vmem:[#allocation9] sm:$0xff]
    %v3289 = vld [vmem:[#allocation9 + $0x8] sm:$0xff]
    %v3290 = vld [vmem:[#allocation9 + $0x10] sm:$0xff]
    %v3291 = vld [vmem:[#allocation9 + $0x18] sm:$0xff]
    %v3292 = vld [vmem:[#allocation9 + $0x20] sm:$0xff]
    %v3293 = vld [vmem:[#allocation9 + $0x28] sm:$0xff]
    %v3294 = vld [vmem:[#allocation9 + $0x30] sm:$0xff]
    %v3295 = vld [vmem:[#allocation9 + $0x38] sm:$0xff]
    %v3296 = vld [vmem:[#allocation9 + $0x40] sm:$0xff]
    %v3297 = vld [vmem:[#allocation9 + $0x48] sm:$0xff]
    %v3298 = vld [vmem:[#allocation9 + $0x50] sm:$0xff]
    %v3299 = vld [vmem:[#allocation9 + $0x58] sm:$0xff]
    %v3300 = vld [vmem:[#allocation9 + $0x60] sm:$0xff]
    %v3301 = vld [vmem:[#allocation9 + $0x68] sm:$0xff]
    %v3302 = vld [vmem:[#allocation9 + $0x70] sm:$0xff]
    %v3303 = vld [vmem:[#allocation9 + $0x78] sm:$0xff]
    %v3304 = vld [vmem:[%s181] ss:$8 sm:$0xf]
    %v3306 = vlaneseq
    %v3307 = vshrl.u32 %v3306, 7
    %v3308 = vsub.s32 0, %v3307
    %v3309 = vrot.slane %v3304, %v3308
    %v3310 = vlaneseq
    %v3311 = vshrl.u32 %v3310, 7
    %v3312 = vsub.s32 1, %v3311
    %v3313 = vrot.slane %v3304, %v3312
    %v3314 = vlaneseq
    %v3315 = vshrl.u32 %v3314, 7
    %v3316 = vsub.s32 2, %v3315
    %v3317 = vrot.slane %v3304, %v3316
    %v3318 = vlaneseq
    %v3319 = vshrl.u32 %v3318, 7
    %v3320 = vsub.s32 3, %v3319
    %v3321 = vrot.slane %v3304, %v3320
    %3326 = vmatprep.subr.mxu0 %v3289
    %3327 = vmatpush1.msra.mxu0 %v3288
    %3328 = vmatprep.subr.mxu0 %v3293
    %3329 = vmatpush1.msra.mxu0 %v3292
    %3330 = vmatprep.subr.mxu0 %v3297
    %3331 = vmatpush1.msra.mxu0 %v3296
    %3332 = vmatprep.subr.mxu0 %v3301
    %3333 = vmatpush1.msra.mxu0 %v3300
    %3334 = vmatprep.subr.mxu0 0.0
    %3335 = vmatpush1.msra.mxu0 0.0
    %3336 = vmatprep.subr.mxu0 0.0
    %3337 = vmatpush1.msra.mxu0 0.0
    %3338 = vmatprep.subr.mxu0 0.0
    %3339 = vmatpush1.msra.mxu0 0.0
    %3340 = vmatprep.subr.mxu0 0.0
    %3341 = vmatpush1.msra.mxu0 0.0
    %3342 = vmatprep.subr.mxu0 0.0
    %3343 = vmatpush1.msra.mxu0 0.0
    %3344 = vmatprep.subr.mxu0 0.0
    %3345 = vmatpush1.msra.mxu0 0.0
    %3346 = vmatprep.subr.mxu0 0.0
    %3347 = vmatpush1.msra.mxu0 0.0
    %3348 = vmatprep.subr.mxu0 0.0
    %3349 = vmatpush1.msra.mxu0 0.0
    %3350 = vmatprep.subr.mxu0 0.0
    %3351 = vmatpush1.msra.mxu0 0.0
    %3352 = vmatprep.subr.mxu0 0.0
    %3353 = vmatpush1.msra.mxu0 0.0
    %3354 = vmatprep.subr.mxu0 0.0
    %3355 = vmatpush1.msra.mxu0 0.0
    %3356 = vmatprep.subr.mxu0 0.0
    %3357 = vmatpush1.msra.mxu0 0.0
    %3358 = vmatprep.subr.mxu0 0.0
    %3359 = vmatpush1.msra.mxu0 0.0
    %3360 = vmatprep.subr.mxu0 0.0
    %3361 = vmatpush1.msra.mxu0 0.0
    %3362 = vmatprep.subr.mxu0 0.0
    %3363 = vmatpush1.msra.mxu0 0.0
    %3364 = vmatprep.subr.mxu0 0.0
    %3365 = vmatpush1.msra.mxu0 0.0
    %3366 = vmatprep.subr.mxu0 0.0
    %3367 = vmatpush1.msra.mxu0 0.0
    %3368 = vmatprep.subr.mxu0 0.0
    %3369 = vmatpush1.msra.mxu0 0.0
    %3370 = vmatprep.subr.mxu0 0.0
    %3371 = vmatpush1.msra.mxu0 0.0
    %3372 = vmatprep.subr.mxu0 0.0
    %3373 = vmatpush1.msra.mxu0 0.0
    %3374 = vmatprep.subr.mxu0 0.0
    %3375 = vmatpush1.msra.mxu0 0.0
    %3376 = vmatprep.subr.mxu0 0.0
    %3377 = vmatpush1.msra.mxu0 0.0
    %3378 = vmatprep.subr.mxu0 0.0
    %3379 = vmatpush1.msra.mxu0 0.0
    %3380 = vmatprep.subr.mxu0 0.0
    %3381 = vmatpush1.msra.mxu0 0.0
    %3382 = vmatprep.subr.mxu0 0.0
    %3383 = vmatpush1.msra.mxu0 0.0
    %3384 = vmatprep.subr.mxu0 0.0
    %3385 = vmatpush1.msra.mxu0 0.0
    %3386 = vmatprep.subr.mxu0 0.0
    %3387 = vmatpush1.msra.mxu0 0.0
    %3388 = vmatprep.subr.mxu0 0.0
    %3389 = vmatpush1.msra.mxu0 0.0
    %3390 = vmatprep.mubr.f32.mxu0 0.0
    %3391 = vmatmul.mubr.f32.gmra.mrb[0].mxu0 %v3192
    %v3392 = vpop.f32.mrb[0].mxu0
    %v3393 = vadd.f32 %v3309, %v3392
    %v3394 = vpop.f32.mrb[0].mxu0
    %v3395 = vadd.f32 %v3313, %v3394
    %3396 = vdwg.mxu0
    %3397 = vmatprep.subr.mxu0 %v3291
    %3398 = vmatpush1.msra.mxu0 %v3290
    %3399 = vmatprep.subr.mxu0 %v3295
    %3400 = vmatpush1.msra.mxu0 %v3294
    %3401 = vmatprep.subr.mxu0 %v3299
    %3402 = vmatpush1.msra.mxu0 %v3298
    %3403 = vmatprep.subr.mxu0 %v3303
    %3404 = vmatpush1.msra.mxu0 %v3302
    %3405 = vmatprep.subr.mxu0 0.0
    %3406 = vmatpush1.msra.mxu0 0.0
    %3407 = vmatprep.subr.mxu0 0.0
    %3408 = vmatpush1.msra.mxu0 0.0
    %3409 = vmatprep.subr.mxu0 0.0
    %3410 = vmatpush1.msra.mxu0 0.0
    %3411 = vmatprep.subr.mxu0 0.0
    %3412 = vmatpush1.msra.mxu0 0.0
    %3413 = vmatprep.subr.mxu0 0.0
    %3414 = vmatpush1.msra.mxu0 0.0
    %3415 = vmatprep.subr.mxu0 0.0
    %3416 = vmatpush1.msra.mxu0 0.0
    %3417 = vmatprep.subr.mxu0 0.0
    %3418 = vmatpush1.msra.mxu0 0.0
    %3419 = vmatprep.subr.mxu0 0.0
    %3420 = vmatpush1.msra.mxu0 0.0
    %3421 = vmatprep.subr.mxu0 0.0
    %3422 = vmatpush1.msra.mxu0 0.0
    %3423 = vmatprep.subr.mxu0 0.0
    %3424 = vmatpush1.msra.mxu0 0.0
    %3425 = vmatprep.subr.mxu0 0.0
    %3426 = vmatpush1.msra.mxu0 0.0
    %3427 = vmatprep.subr.mxu0 0.0
    %3428 = vmatpush1.msra.mxu0 0.0
    %3429 = vmatprep.subr.mxu0 0.0
    %3430 = vmatpush1.msra.mxu0 0.0
    %3431 = vmatprep.subr.mxu0 0.0
    %3432 = vmatpush1.msra.mxu0 0.0
    %3433 = vmatprep.subr.mxu0 0.0
    %3434 = vmatpush1.msra.mxu0 0.0
    %3435 = vmatprep.subr.mxu0 0.0
    %3436 = vmatpush1.msra.mxu0 0.0
    %3437 = vmatprep.subr.mxu0 0.0
    %3438 = vmatpush1.msra.mxu0 0.0
    %3439 = vmatprep.subr.mxu0 0.0
    %3440 = vmatpush1.msra.mxu0 0.0
    %3441 = vmatprep.subr.mxu0 0.0
    %3442 = vmatpush1.msra.mxu0 0.0
    %3443 = vmatprep.subr.mxu0 0.0
    %3444 = vmatpush1.msra.mxu0 0.0
    %3445 = vmatprep.subr.mxu0 0.0
    %3446 = vmatpush1.msra.mxu0 0.0
    %3447 = vmatprep.subr.mxu0 0.0
    %3448 = vmatpush1.msra.mxu0 0.0
    %3449 = vmatprep.subr.mxu0 0.0
    %3450 = vmatpush1.msra.mxu0 0.0
    %3451 = vmatprep.subr.mxu0 0.0
    %3452 = vmatpush1.msra.mxu0 0.0
    %3453 = vmatprep.subr.mxu0 0.0
    %3454 = vmatpush1.msra.mxu0 0.0
    %3455 = vmatprep.subr.mxu0 0.0
    %3456 = vmatpush1.msra.mxu0 0.0
    %3457 = vmatprep.subr.mxu0 0.0
    %3458 = vmatpush1.msra.mxu0 0.0
    %3459 = vmatprep.subr.mxu0 0.0
    %3460 = vmatpush1.msra.mxu0 0.0
    %3461 = vmatprep.mubr.f32.mxu0 0.0
    %3462 = vmatmul.mubr.f32.gmra.mrb[0].mxu0 %v3192
    %v3463 = vpop.f32.mrb[0].mxu0
    %v3464 = vadd.f32 %v3317, %v3463
    %v3465 = vpop.f32.mrb[0].mxu0
    %v3466 = vadd.f32 %v3321, %v3465
    %3467 = vdwg.mxu0
    %v3470 = vunpack.c.l.s4 1966171168
    %v3471 = vunpack.c.0.s8 %v3470
    %v3472 = vlaneseq
    %v3473 = vshrl.u32 %v3472, 7
    %v3474 = vsub.s32 %v3471, %v3473
    %v3475 = vrot.slane %v3393, %v3474
    %v3476 = vcombine.high %v3475, %v3475
    %v3478 = vunpack.c.l.s4 1966171168
    %v3479 = vunpack.c.0.s8 %v3478
    %v3480 = vlaneseq
    %v3481 = vshrl.u32 %v3480, 7
    %v3482 = vsub.s32 %v3479, %v3481
    %v3483 = vrot.slane %v3475, %v3482
    %v3485 = vunpack.c.l.s4 1966171168
    %v3486 = vunpack.c.0.s8 %v3485
    %v3487 = vlaneseq
    %v3488 = vshrl.u32 %v3487, 7
    %v3489 = vsub.s32 %v3486, %v3488
    %v3490 = vrot.slane %v3476, %v3489
    %v3491 = vlaneseq
    %v3492 = vshrl.u32 %v3491, 7
    %v3493 = vsub.s32 0, %v3492
    %v3494 = vrot.slane %v3483, %v3493
    %v3495 = vlaneseq
    %v3496 = vshrl.u32 %v3495, 7
    %v3497 = vsub.s32 0, %v3496
    %v3498 = vrot.slane %v3490, %v3497
    %v3501 = vadd.f32 %v3494, %v157
    %v3502 = vadd.f32 %v3498, %v161
    %v3503 = vtanh.pop %v3501
    %v3504 = vtanh.pop %v3502
    %v3505 = vmul.f32 %v3503, %v390
    %v3506 = vmul.f32 %v3504, %v390
    %v3507 = vsel %vm393, %v3505, 0.0
    %3508 = vadd.xlane.f32.xlu0 %v3507
    %v3509 = vpop.xlane.xlu0 %3508
    %v3510 = vsel %vm393, %v3506, 0.0
    %3511 = vadd.xlane.f32.xlu0 %v3510
    %v3512 = vpop.xlane.xlu0 %3511
    %v3515 = vlaneseq
    %v3516 = vshrl.u32 %v3515, 7
    %v3517 = vsub.s32 %v164, %v3516
    %v3518 = vrot.slane %v3509, %v3517
    %v3519 = vlaneseq
    %v3520 = vshrl.u32 %v3519, 7
    %v3521 = vsub.s32 %v164, %v3520
    %v3522 = vrot.slane %v3512, %v3521
    %v3523 = vsel %vm410, %v3522, %v3518
    %v3525 = vsel %vm413, %v3523, -inf
    %3526 = vmax.xlane.f32.xlu0 %v3525
    %v3527 = vpop.xlane.xlu0 %3526
    %v3529 = vlaneseq
    %v3530 = vshrl.u32 %v3529, 7
    %v3531 = vsub.s32 0, %v3530
    %v3532 = vrot.slane %v3527, %v3531
    %v3533 = vlaneseq
    %v3534 = vshrl.u32 %v3533, 7
    %v3535 = vsub.s32 1, %v3534
    %v3536 = vrot.slane %v3527, %v3535
    %v3539 = vsub.f32 %v3509, %v3532
    %v3540 = vsub.f32 %v3512, %v3536
    %v3541 = vmul.f32 %v3539, 1.442695
    %v3542 = vpow.pop %v3541
    %v3543 = vmul.f32 %v3540, 1.442695
    %v3544 = vpow.pop %v3543
    %3547 = vset.pattern.permute.xlu0 0
    %3548 = vperm.xlu0 %3547, %v3542
    %v3549 = vpop.permute.xlu0 %3548
    %3550 = vset.pattern.permute.xlu0 0
    %3551 = vperm.xlu0 %3550, %v3544
    %v3552 = vpop.permute.xlu0 %3551
    %v3553 = vlaneseq
    %v3554 = vshrl.u32 %v3553, 7
    %v3555 = vsub.s32 %v164, %v3554
    %v3556 = vrot.slane %v3549, %v3555
    %v3557 = vlaneseq
    %v3558 = vshrl.u32 %v3557, 7
    %v3559 = vsub.s32 %v164, %v3558
    %v3560 = vrot.slane %v3552, %v3559
    %v3561 = vsel %vm410, %v3560, %v3556
    %v3563 = vsel %vm413, %v3561, 0.0
    %3564 = vadd.xlane.f32.xlu0 %v3563
    %v3565 = vpop.xlane.xlu0 %3564
    %v3567 = vlaneseq
    %v3568 = vshrl.u32 %v3567, 7
    %v3569 = vsub.s32 0, %v3568
    %v3570 = vrot.slane %v3565, %v3569
    %v3571 = vlaneseq
    %v3572 = vshrl.u32 %v3571, 7
    %v3573 = vsub.s32 1, %v3572
    %v3574 = vrot.slane %v3565, %v3573
    %v3577 = vrcp.pop %v3570
    %v3578 = vmul.f32 %v3542, %v3577
    %v3579 = vrcp.pop %v3574
    %v3580 = vmul.f32 %v3544, %v3579
    %3582 = vset.pattern.permute.xlu0 0
    %3583 = vperm.xlu0 %3582, %v3578
    %v3584 = vpop.permute.xlu0 %3583
    %3587 = vset.pattern.permute.xlu0 0
    %3588 = vperm.xlu0 %3587, %v3580
    %v3589 = vpop.permute.xlu0 %3588
    %v3591 = vmul.f32 %v3584, %v79
    %v3592 = vmul.f32 %v3589, %v80
    %v3593 = vsel %vm482, %v3591, 0.0
    %v3594 = vrot.slane %v3593, 4
    %v3595 = vadd.f32 %v3593, %v3594
    %v3596 = vrot.slane %v3595, 2
    %v3597 = vadd.f32 %v3595, %v3596
    %v3598 = vrot.slane %v3597, 1
    %v3599 = vadd.f32 %v3597, %v3598
    %v3600 = vsel %vm482, %v3592, 0.0
    %v3601 = vrot.slane %v3600, 4
    %v3602 = vadd.f32 %v3600, %v3601
    %v3603 = vrot.slane %v3602, 2
    %v3604 = vadd.f32 %v3602, %v3603
    %v3605 = vrot.slane %v3604, 1
    %v3606 = vadd.f32 %v3604, %v3605
    %vm3607 = vcmp.eq.s32.totalorder %v164, %v3287
    %v3608 = vsel %vm3607, 1, 0
    %v3609 = vcvt.s32.f32 %v3608
    %v3610 = vld [vmem:[#allocation6] sm:$0xff]
    %v3611 = vld [vmem:[#allocation6 + $0x8] sm:$0xff]
    %v3612 = vld [vmem:[#allocation6 + $0x10] sm:$0xff]
    %v3613 = vld [vmem:[#allocation6 + $0x18] sm:$0xff]
    %v3614 = vld [vmem:[#allocation6 + $0x20] sm:$0xff]
    %v3615 = vld [vmem:[#allocation6 + $0x28] sm:$0xff]
    %v3616 = vld [vmem:[#allocation6 + $0x30] sm:$0xff]
    %v3617 = vld [vmem:[#allocation6 + $0x38] sm:$0xff]
    %v3618 = vld [vmem:[#allocation6 + $0x40] sm:$0xff]
    %v3619 = vld [vmem:[#allocation6 + $0x48] sm:$0xff]
    %v3620 = vld [vmem:[#allocation6 + $0x50] sm:$0xff]
    %v3621 = vld [vmem:[#allocation6 + $0x58] sm:$0xff]
    %v3622 = vld [vmem:[#allocation6 + $0x60] sm:$0xff]
    %v3623 = vld [vmem:[#allocation6 + $0x68] sm:$0xff]
    %v3624 = vld [vmem:[#allocation6 + $0x70] sm:$0xff]
    %v3625 = vld [vmem:[#allocation6 + $0x78] sm:$0xff]
    %v3626 = vld [vmem:[#allocation6 + $0x80] sm:$0xff]
    %v3627 = vld [vmem:[#allocation6 + $0x88] sm:$0xff]
    %v3630 = vsel %vm410, %v3606, %v3599
    %v3631 = vsel %vm87, %v3630, 0
    %3633 = vmatprep.subr.mxu0 %v3623
    %3634 = vmatpush1.msra.mxu0 %v3622
    %3635 = vmatprep.subr.mxu0 %v3626
    %3636 = vmatpush1.msra.mxu0 %v3625
    %3637 = vmatprep.subr.mxu0 0.0
    %3638 = vmatpush1.msra.mxu0 0.0
    %3639 = vmatprep.subr.mxu0 0.0
    %3640 = vmatpush1.msra.mxu0 0.0
    %3641 = vmatprep.subr.mxu0 0.0
    %3642 = vmatpush1.msra.mxu0 0.0
    %3643 = vmatprep.subr.mxu0 0.0
    %3644 = vmatpush1.msra.mxu0 0.0
    %3645 = vmatprep.subr.mxu0 0.0
    %3646 = vmatpush1.msra.mxu0 0.0
    %3647 = vmatprep.subr.mxu0 0.0
    %3648 = vmatpush1.msra.mxu0 0.0
    %3649 = vmatprep.subr.mxu0 0.0
    %3650 = vmatpush1.msra.mxu0 0.0
    %3651 = vmatprep.subr.mxu0 0.0
    %3652 = vmatpush1.msra.mxu0 0.0
    %3653 = vmatprep.subr.mxu0 0.0
    %3654 = vmatpush1.msra.mxu0 0.0
    %3655 = vmatprep.subr.mxu0 0.0
    %3656 = vmatpush1.msra.mxu0 0.0
    %3657 = vmatprep.subr.mxu0 0.0
    %3658 = vmatpush1.msra.mxu0 0.0
    %3659 = vmatprep.subr.mxu0 0.0
    %3660 = vmatpush1.msra.mxu0 0.0
    %3661 = vmatprep.subr.mxu0 0.0
    %3662 = vmatpush1.msra.mxu0 0.0
    %3663 = vmatprep.subr.mxu0 0.0
    %3664 = vmatpush1.msra.mxu0 0.0
    %3665 = vmatprep.subr.mxu0 0.0
    %3666 = vmatpush1.msra.mxu0 0.0
    %3667 = vmatprep.subr.mxu0 0.0
    %3668 = vmatpush1.msra.mxu0 0.0
    %3669 = vmatprep.subr.mxu0 0.0
    %3670 = vmatpush1.msra.mxu0 0.0
    %3671 = vmatprep.subr.mxu0 0.0
    %3672 = vmatpush1.msra.mxu0 0.0
    %3673 = vmatprep.subr.mxu0 0.0
    %3674 = vmatpush1.msra.mxu0 0.0
    %3675 = vmatprep.subr.mxu0 0.0
    %3676 = vmatpush1.msra.mxu0 0.0
    %3677 = vmatprep.subr.mxu0 0.0
    %3678 = vmatpush1.msra.mxu0 0.0
    %3679 = vmatprep.subr.mxu0 0.0
    %3680 = vmatpush1.msra.mxu0 0.0
    %3681 = vmatprep.subr.mxu0 0.0
    %3682 = vmatpush1.msra.mxu0 0.0
    %3683 = vmatprep.subr.mxu0 0.0
    %3684 = vmatpush1.msra.mxu0 0.0
    %3685 = vmatprep.subr.mxu0 0.0
    %3686 = vmatpush1.msra.mxu0 0.0
    %3687 = vmatprep.subr.mxu0 0.0
    %3688 = vmatpush1.msra.mxu0 0.0
    %3689 = vmatprep.subr.mxu0 0.0
    %3690 = vmatpush1.msra.mxu0 0.0
    %3691 = vmatprep.subr.mxu0 0.0
    %3692 = vmatpush1.msra.mxu0 0.0
    %3693 = vmatprep.subr.mxu0 0.0
    %3694 = vmatpush1.msra.mxu0 0.0
    %3695 = vmatprep.subr.mxu0 0.0
    %3696 = vmatpush1.msra.mxu0 0.0
    %3697 = vmatprep.mubr.f32.mxu0 0.0
    %3698 = vmatmul.mubr.f32.gmra.mrb[0].mxu0 %v3631
    %v3699 = vpop.f32.mrb[0].mxu0
    %v3700 = vadd.f32 0.0, %v3699
    %v3701 = vpop.f32.mrb[0].mxu0
    %v3702 = vadd.f32 0.0, %v3701
    %3703 = vdwg.mxu0
    %3704 = vmatprep.subr.mxu0 0.0
    %3705 = vmatpush1.msra.mxu0 %v3624
    %3706 = vmatprep.subr.mxu0 0.0
    %3707 = vmatpush1.msra.mxu0 %v3627
    %3708 = vmatprep.subr.mxu0 0.0
    %3709 = vmatpush1.msra.mxu0 0.0
    %3710 = vmatprep.subr.mxu0 0.0
    %3711 = vmatpush1.msra.mxu0 0.0
    %3712 = vmatprep.subr.mxu0 0.0
    %3713 = vmatpush1.msra.mxu0 0.0
    %3714 = vmatprep.subr.mxu0 0.0
    %3715 = vmatpush1.msra.mxu0 0.0
    %3716 = vmatprep.subr.mxu0 0.0
    %3717 = vmatpush1.msra.mxu0 0.0
    %3718 = vmatprep.subr.mxu0 0.0
    %3719 = vmatpush1.msra.mxu0 0.0
    %3720 = vmatprep.subr.mxu0 0.0
    %3721 = vmatpush1.msra.mxu0 0.0
    %3722 = vmatprep.subr.mxu0 0.0
    %3723 = vmatpush1.msra.mxu0 0.0
    %3724 = vmatprep.subr.mxu0 0.0
    %3725 = vmatpush1.msra.mxu0 0.0
    %3726 = vmatprep.subr.mxu0 0.0
    %3727 = vmatpush1.msra.mxu0 0.0
    %3728 = vmatprep.subr.mxu0 0.0
    %3729 = vmatpush1.msra.mxu0 0.0
    %3730 = vmatprep.subr.mxu0 0.0
    %3731 = vmatpush1.msra.mxu0 0.0
    %3732 = vmatprep.subr.mxu0 0.0
    %3733 = vmatpush1.msra.mxu0 0.0
    %3734 = vmatprep.subr.mxu0 0.0
    %3735 = vmatpush1.msra.mxu0 0.0
    %3736 = vmatprep.subr.mxu0 0.0
    %3737 = vmatpush1.msra.mxu0 0.0
    %3738 = vmatprep.subr.mxu0 0.0
    %3739 = vmatpush1.msra.mxu0 0.0
    %3740 = vmatprep.subr.mxu0 0.0
    %3741 = vmatpush1.msra.mxu0 0.0
    %3742 = vmatprep.subr.mxu0 0.0
    %3743 = vmatpush1.msra.mxu0 0.0
    %3744 = vmatprep.subr.mxu0 0.0
    %3745 = vmatpush1.msra.mxu0 0.0
    %3746 = vmatprep.subr.mxu0 0.0
    %3747 = vmatpush1.msra.mxu0 0.0
    %3748 = vmatprep.subr.mxu0 0.0
    %3749 = vmatpush1.msra.mxu0 0.0
    %3750 = vmatprep.subr.mxu0 0.0
    %3751 = vmatpush1.msra.mxu0 0.0
    %3752 = vmatprep.subr.mxu0 0.0
    %3753 = vmatpush1.msra.mxu0 0.0
    %3754 = vmatprep.subr.mxu0 0.0
    %3755 = vmatpush1.msra.mxu0 0.0
    %3756 = vmatprep.subr.mxu0 0.0
    %3757 = vmatpush1.msra.mxu0 0.0
    %3758 = vmatprep.subr.mxu0 0.0
    %3759 = vmatpush1.msra.mxu0 0.0
    %3760 = vmatprep.subr.mxu0 0.0
    %3761 = vmatpush1.msra.mxu0 0.0
    %3762 = vmatprep.subr.mxu0 0.0
    %3763 = vmatpush1.msra.mxu0 0.0
    %3764 = vmatprep.subr.mxu0 0.0
    %3765 = vmatpush1.msra.mxu0 0.0
    %3766 = vmatprep.subr.mxu0 0.0
    %3767 = vmatpush1.msra.mxu0 0.0
    %3768 = vmatprep.mubr.f32.mxu0 0.0
    %3769 = vmatmul.mubr.f32.gmra.mrb[0].mxu0 %v3631
    %v3770 = vpop.f32.mrb[0].mxu0
    %v3771 = vadd.f32 0.0, %v3770
    %v3772 = vpop.f32.mrb[0].mxu0
    %3773 = vdwg.mxu0
    %v3775 = vsel %vm204, %v3609, 0
    %3777 = vmatprep.subr.mxu0 %v3611
    %3778 = vmatpush1.msra.mxu0 %v3610
    %3779 = vmatprep.subr.mxu0 %v3614
    %3780 = vmatpush1.msra.mxu0 %v3613
    %3781 = vmatprep.subr.mxu0 %v3617
    %3782 = vmatpush1.msra.mxu0 %v3616
    %3783 = vmatprep.subr.mxu0 %v3620
    %3784 = vmatpush1.msra.mxu0 %v3619
    %3785 = vmatprep.subr.mxu0 0.0
    %3786 = vmatpush1.msra.mxu0 0.0
    %3787 = vmatprep.subr.mxu0 0.0
    %3788 = vmatpush1.msra.mxu0 0.0
    %3789 = vmatprep.subr.mxu0 0.0
    %3790 = vmatpush1.msra.mxu0 0.0
    %3791 = vmatprep.subr.mxu0 0.0
    %3792 = vmatpush1.msra.mxu0 0.0
    %3793 = vmatprep.subr.mxu0 0.0
    %3794 = vmatpush1.msra.mxu0 0.0
    %3795 = vmatprep.subr.mxu0 0.0
    %3796 = vmatpush1.msra.mxu0 0.0
    %3797 = vmatprep.subr.mxu0 0.0
    %3798 = vmatpush1.msra.mxu0 0.0
    %3799 = vmatprep.subr.mxu0 0.0
    %3800 = vmatpush1.msra.mxu0 0.0
    %3801 = vmatprep.subr.mxu0 0.0
    %3802 = vmatpush1.msra.mxu0 0.0
    %3803 = vmatprep.subr.mxu0 0.0
    %3804 = vmatpush1.msra.mxu0 0.0
    %3805 = vmatprep.subr.mxu0 0.0
    %3806 = vmatpush1.msra.mxu0 0.0
    %3807 = vmatprep.subr.mxu0 0.0
    %3808 = vmatpush1.msra.mxu0 0.0
    %3809 = vmatprep.subr.mxu0 0.0
    %3810 = vmatpush1.msra.mxu0 0.0
    %3811 = vmatprep.subr.mxu0 0.0
    %3812 = vmatpush1.msra.mxu0 0.0
    %3813 = vmatprep.subr.mxu0 0.0
    %3814 = vmatpush1.msra.mxu0 0.0
    %3815 = vmatprep.subr.mxu0 0.0
    %3816 = vmatpush1.msra.mxu0 0.0
    %3817 = vmatprep.subr.mxu0 0.0
    %3818 = vmatpush1.msra.mxu0 0.0
    %3819 = vmatprep.subr.mxu0 0.0
    %3820 = vmatpush1.msra.mxu0 0.0
    %3821 = vmatprep.subr.mxu0 0.0
    %3822 = vmatpush1.msra.mxu0 0.0
    %3823 = vmatprep.subr.mxu0 0.0
    %3824 = vmatpush1.msra.mxu0 0.0
    %3825 = vmatprep.subr.mxu0 0.0
    %3826 = vmatpush1.msra.mxu0 0.0
    %3827 = vmatprep.subr.mxu0 0.0
    %3828 = vmatpush1.msra.mxu0 0.0
    %3829 = vmatprep.subr.mxu0 0.0
    %3830 = vmatpush1.msra.mxu0 0.0
    %3831 = vmatprep.subr.mxu0 0.0
    %3832 = vmatpush1.msra.mxu0 0.0
    %3833 = vmatprep.subr.mxu0 0.0
    %3834 = vmatpush1.msra.mxu0 0.0
    %3835 = vmatprep.subr.mxu0 0.0
    %3836 = vmatpush1.msra.mxu0 0.0
    %3837 = vmatprep.subr.mxu0 0.0
    %3838 = vmatpush1.msra.mxu0 0.0
    %3839 = vmatprep.subr.mxu0 0.0
    %3840 = vmatpush1.msra.mxu0 0.0
    %3841 = vmatprep.mubr.f32.mxu0 0.0
    %3842 = vmatmul.mubr.f32.gmra.mrb[0].mxu0 %v3775
    %v3843 = vpop.f32.mrb[0].mxu0
    %v3844 = vadd.f32 %v3700, %v3843
    %v3845 = vpop.f32.mrb[0].mxu0
    %v3846 = vadd.f32 %v3702, %v3845
    %3847 = vdwg.mxu0
    %3848 = vmatprep.subr.mxu0 0.0
    %3849 = vmatpush1.msra.mxu0 %v3612
    %3850 = vmatprep.subr.mxu0 0.0
    %3851 = vmatpush1.msra.mxu0 %v3615
    %3852 = vmatprep.subr.mxu0 0.0
    %3853 = vmatpush1.msra.mxu0 %v3618
    %3854 = vmatprep.subr.mxu0 0.0
    %3855 = vmatpush1.msra.mxu0 %v3621
    %3856 = vmatprep.subr.mxu0 0.0
    %3857 = vmatpush1.msra.mxu0 0.0
    %3858 = vmatprep.subr.mxu0 0.0
    %3859 = vmatpush1.msra.mxu0 0.0
    %3860 = vmatprep.subr.mxu0 0.0
    %3861 = vmatpush1.msra.mxu0 0.0
    %3862 = vmatprep.subr.mxu0 0.0
    %3863 = vmatpush1.msra.mxu0 0.0
    %3864 = vmatprep.subr.mxu0 0.0
    %3865 = vmatpush1.msra.mxu0 0.0
    %3866 = vmatprep.subr.mxu0 0.0
    %3867 = vmatpush1.msra.mxu0 0.0
    %3868 = vmatprep.subr.mxu0 0.0
    %3869 = vmatpush1.msra.mxu0 0.0
    %3870 = vmatprep.subr.mxu0 0.0
    %3871 = vmatpush1.msra.mxu0 0.0
    %3872 = vmatprep.subr.mxu0 0.0
    %3873 = vmatpush1.msra.mxu0 0.0
    %3874 = vmatprep.subr.mxu0 0.0
    %3875 = vmatpush1.msra.mxu0 0.0
    %3876 = vmatprep.subr.mxu0 0.0
    %3877 = vmatpush1.msra.mxu0 0.0
    %3878 = vmatprep.subr.mxu0 0.0
    %3879 = vmatpush1.msra.mxu0 0.0
    %3880 = vmatprep.subr.mxu0 0.0
    %3881 = vmatpush1.msra.mxu0 0.0
    %3882 = vmatprep.subr.mxu0 0.0
    %3883 = vmatpush1.msra.mxu0 0.0
    %3884 = vmatprep.subr.mxu0 0.0
    %3885 = vmatpush1.msra.mxu0 0.0
    %3886 = vmatprep.subr.mxu0 0.0
    %3887 = vmatpush1.msra.mxu0 0.0
    %3888 = vmatprep.subr.mxu0 0.0
    %3889 = vmatpush1.msra.mxu0 0.0
    %3890 = vmatprep.subr.mxu0 0.0
    %3891 = vmatpush1.msra.mxu0 0.0
    %3892 = vmatprep.subr.mxu0 0.0
    %3893 = vmatpush1.msra.mxu0 0.0
    %3894 = vmatprep.subr.mxu0 0.0
    %3895 = vmatpush1.msra.mxu0 0.0
    %3896 = vmatprep.subr.mxu0 0.0
    %3897 = vmatpush1.msra.mxu0 0.0
    %3898 = vmatprep.subr.mxu0 0.0
    %3899 = vmatpush1.msra.mxu0 0.0
    %3900 = vmatprep.subr.mxu0 0.0
    %3901 = vmatpush1.msra.mxu0 0.0
    %3902 = vmatprep.subr.mxu0 0.0
    %3903 = vmatpush1.msra.mxu0 0.0
    %3904 = vmatprep.subr.mxu0 0.0
    %3905 = vmatpush1.msra.mxu0 0.0
    %3906 = vmatprep.subr.mxu0 0.0
    %3907 = vmatpush1.msra.mxu0 0.0
    %3908 = vmatprep.subr.mxu0 0.0
    %3909 = vmatpush1.msra.mxu0 0.0
    %3910 = vmatprep.subr.mxu0 0.0
    %3911 = vmatpush1.msra.mxu0 0.0
    %3912 = vmatprep.mubr.f32.mxu0 0.0
    %3913 = vmatmul.mubr.f32.gmra.mrb[0].mxu0 %v3775
    %v3914 = vpop.f32.mrb[0].mxu0
    %v3915 = vadd.f32 %v3771, %v3914
    %v3916 = vpop.f32.mrb[0].mxu0
    %3917 = vdwg.mxu0
    %v3918 = vld [vmem:[%s808] ss:$8 sm:$0x7]
    %v3920 = vlaneseq
    %v3921 = vshrl.u32 %v3920, 7
    %v3922 = vsub.s32 0, %v3921
    %v3923 = vrot.slane %v3918, %v3922
    %v3924 = vlaneseq
    %v3925 = vshrl.u32 %v3924, 7
    %v3926 = vsub.s32 1, %v3925
    %v3927 = vrot.slane %v3918, %v3926
    %v3928 = vlaneseq
    %v3929 = vshrl.u32 %v3928, 7
    %v3930 = vsub.s32 2, %v3929
    %v3931 = vrot.slane %v3918, %v3930
    %v3935 = vadd.f32 %v3844, %v3923
    %v3936 = vadd.f32 %v3846, %v3927
    %v3937 = vadd.f32 %v3915, %v3931
    %v3938 = vadd.f32 %v3935, %v3395
    %v3939 = vsub.f32 0.0, %v3938
    %v3940 = vmul.f32 %v3939, 1.442695
    %v3941 = vpow.pop %v3940
    %v3942 = vadd.f32 %v3941, 1.0
    %v3943 = vrcp.pop %v3942
    %v3944 = vmul.f32 1.0, %v3943
    %v3945 = vadd.f32 %v3936, %v3464
    %v3946 = vsub.f32 0.0, %v3945
    %v3947 = vmul.f32 %v3946, 1.442695
    %v3948 = vpow.pop %v3947
    %v3949 = vadd.f32 %v3948, 1.0
    %v3950 = vrcp.pop %v3949
    %v3951 = vmul.f32 1.0, %v3950
    %v3952 = vmul.f32 %v3944, %v3466
    %v3953 = vadd.f32 %v3937, %v3952
    %v3954 = vtanh.pop %v3953
    %v3955 = vsub.f32 1.0, %v3951
    %v3956 = vmul.f32 %v3955, %v3954
    %v3957 = vmul.f32 %v3951, %v3181
    %v3958 = vadd.f32 %v3956, %v3957
    %v3959 = vld [vmem:[#allocation11 + $0x18] sm:$0xff]
    %v3960 = vld [vmem:[#allocation11 + $0x20] sm:$0xff]
    %v3961 = vld [vmem:[#allocation11 + $0x28] sm:$0xff]
    %v3962 = vld [vmem:[#allocation11 + $0x30] sm:$0xff]
    %v3963 = vld [vmem:[#allocation11 + $0x38] sm:$0x1]
    %v3964 = vlaneseq
    %v3965 = vshrl.u32 %v3964, 7
    %v3966 = vsub.s32 0, %v3965
    %v3967 = vrot.slane %v3963, %v3966
    %v3969 = vsel %vm204, %v3958, 0
    %3971 = vmatprep.subr.mxu0 0.0
    %3972 = vmatpush1.msra.mxu0 %v3959
    %3973 = vmatprep.subr.mxu0 0.0
    %3974 = vmatpush1.msra.mxu0 %v3960
    %3975 = vmatprep.subr.mxu0 0.0
    %3976 = vmatpush1.msra.mxu0 %v3961
    %3977 = vmatprep.subr.mxu0 0.0
    %3978 = vmatpush1.msra.mxu0 %v3962
    %3979 = vmatprep.subr.mxu0 0.0
    %3980 = vmatpush1.msra.mxu0 0.0
    %3981 = vmatprep.subr.mxu0 0.0
    %3982 = vmatpush1.msra.mxu0 0.0
    %3983 = vmatprep.subr.mxu0 0.0
    %3984 = vmatpush1.msra.mxu0 0.0
    %3985 = vmatprep.subr.mxu0 0.0
    %3986 = vmatpush1.msra.mxu0 0.0
    %3987 = vmatprep.subr.mxu0 0.0
    %3988 = vmatpush1.msra.mxu0 0.0
    %3989 = vmatprep.subr.mxu0 0.0
    %3990 = vmatpush1.msra.mxu0 0.0
    %3991 = vmatprep.subr.mxu0 0.0
    %3992 = vmatpush1.msra.mxu0 0.0
    %3993 = vmatprep.subr.mxu0 0.0
    %3994 = vmatpush1.msra.mxu0 0.0
    %3995 = vmatprep.subr.mxu0 0.0
    %3996 = vmatpush1.msra.mxu0 0.0
    %3997 = vmatprep.subr.mxu0 0.0
    %3998 = vmatpush1.msra.mxu0 0.0
    %3999 = vmatprep.subr.mxu0 0.0
    %4000 = vmatpush1.msra.mxu0 0.0
    %4001 = vmatprep.subr.mxu0 0.0
    %4002 = vmatpush1.msra.mxu0 0.0
    %4003 = vmatprep.subr.mxu0 0.0
    %4004 = vmatpush1.msra.mxu0 0.0
    %4005 = vmatprep.subr.mxu0 0.0
    %4006 = vmatpush1.msra.mxu0 0.0
    %4007 = vmatprep.subr.mxu0 0.0
    %4008 = vmatpush1.msra.mxu0 0.0
    %4009 = vmatprep.subr.mxu0 0.0
    %4010 = vmatpush1.msra.mxu0 0.0
    %4011 = vmatprep.subr.mxu0 0.0
    %4012 = vmatpush1.msra.mxu0 0.0
    %4013 = vmatprep.subr.mxu0 0.0
    %4014 = vmatpush1.msra.mxu0 0.0
    %4015 = vmatprep.subr.mxu0 0.0
    %4016 = vmatpush1.msra.mxu0 0.0
    %4017 = vmatprep.subr.mxu0 0.0
    %4018 = vmatpush1.msra.mxu0 0.0
    %4019 = vmatprep.subr.mxu0 0.0
    %4020 = vmatpush1.msra.mxu0 0.0
    %4021 = vmatprep.subr.mxu0 0.0
    %4022 = vmatpush1.msra.mxu0 0.0
    %4023 = vmatprep.subr.mxu0 0.0
    %4024 = vmatpush1.msra.mxu0 0.0
    %4025 = vmatprep.subr.mxu0 0.0
    %4026 = vmatpush1.msra.mxu0 0.0
    %4027 = vmatprep.subr.mxu0 0.0
    %4028 = vmatpush1.msra.mxu0 0.0
    %4029 = vmatprep.subr.mxu0 0.0
    %4030 = vmatpush1.msra.mxu0 0.0
    %4031 = vmatprep.subr.mxu0 0.0
    %4032 = vmatpush1.msra.mxu0 0.0
    %4033 = vmatprep.subr.mxu0 0.0
    %4034 = vmatpush1.msra.mxu0 0.0
    %4035 = vmatprep.mubr.f32.mxu0 0.0
    %4036 = vmatmul.mubr.f32.gmra.mrb[0].mxu0 %v3969
    %v4037 = vpop.f32.mrb[0].mxu0
    %v4038 = vadd.f32 %v3967, %v4037
    %v4039 = vpop.f32.mrb[0].mxu0
    %4040 = vdwg.mxu0
    %s4041 = scalar_lea.vmem [#allocation12], 10
    %4042 = vst [vmem:[%s4041] sm:$0x3] %v4038
    %s4043 = scalar_lea.vmem [#allocation2], 10
    %4044 = vst.msk [vmem:[%s4043] sm:$0x3] %vm77, %v3958
    %v4045 = vsel %vm936, %v4038, -inf
    %4046 = vmax.xlane.f32.xlu0 %v4045
    %v4047 = vpop.xlane.xlu0 %4046
    %vm4048 = vcmp.eq.f32.partialorder %v4038, %v4047
    %v4049 = vsel %vm4048, %v164, 128
    %v4050 = vsel %vm936, %v4049, 2147483647
    %v4051 = vand.u32 %v4050, 65535
    %v4052 = vshra.s32 %v4050, 16
    %v4053 = vcvt.s32.f32 %v4051
    %v4054 = vcvt.s32.f32 %v4052
    %4055 = vmin.xlane.f32.xlu0 %v4054
    %v4056 = vpop.xlane.xlu0 %4055
    %vm4057 = vcmp.eq.f32.partialorder %v4054, %v4056
    %v4058 = vsel %vm4057, %v4053, inf
    %4059 = vmin.xlane.f32.xlu0 %v4058
    %v4060 = vpop.xlane.xlu0 %4059
    %v4061 = vcvt.f32.s32 %v4060
    %v4062 = vcvt.f32.s32 %v4056
    %v4063 = vshll.u32 %v4062, 16
    %v4064 = vadd.s32 %v4063, %v4061
    %v4065 = vld [vmem:[#allocation9] sm:$0xff]
    %v4066 = vld [vmem:[#allocation9 + $0x8] sm:$0xff]
    %v4067 = vld [vmem:[#allocation9 + $0x10] sm:$0xff]
    %v4068 = vld [vmem:[#allocation9 + $0x18] sm:$0xff]
    %v4069 = vld [vmem:[#allocation9 + $0x20] sm:$0xff]
    %v4070 = vld [vmem:[#allocation9 + $0x28] sm:$0xff]
    %v4071 = vld [vmem:[#allocation9 + $0x30] sm:$0xff]
    %v4072 = vld [vmem:[#allocation9 + $0x38] sm:$0xff]
    %v4073 = vld [vmem:[#allocation9 + $0x40] sm:$0xff]
    %v4074 = vld [vmem:[#allocation9 + $0x48] sm:$0xff]
    %v4075 = vld [vmem:[#allocation9 + $0x50] sm:$0xff]
    %v4076 = vld [vmem:[#allocation9 + $0x58] sm:$0xff]
    %v4077 = vld [vmem:[#allocation9 + $0x60] sm:$0xff]
    %v4078 = vld [vmem:[#allocation9 + $0x68] sm:$0xff]
    %v4079 = vld [vmem:[#allocation9 + $0x70] sm:$0xff]
    %v4080 = vld [vmem:[#allocation9 + $0x78] sm:$0xff]
    %v4081 = vld [vmem:[%s181] ss:$8 sm:$0xf]
    %v4083 = vlaneseq
    %v4084 = vshrl.u32 %v4083, 7
    %v4085 = vsub.s32 0, %v4084
    %v4086 = vrot.slane %v4081, %v4085
    %v4087 = vlaneseq
    %v4088 = vshrl.u32 %v4087, 7
    %v4089 = vsub.s32 1, %v4088
    %v4090 = vrot.slane %v4081, %v4089
    %v4091 = vlaneseq
    %v4092 = vshrl.u32 %v4091, 7
    %v4093 = vsub.s32 2, %v4092
    %v4094 = vrot.slane %v4081, %v4093
    %v4095 = vlaneseq
    %v4096 = vshrl.u32 %v4095, 7
    %v4097 = vsub.s32 3, %v4096
    %v4098 = vrot.slane %v4081, %v4097
    %4103 = vmatprep.subr.mxu0 %v4066
    %4104 = vmatpush1.msra.mxu0 %v4065
    %4105 = vmatprep.subr.mxu0 %v4070
    %4106 = vmatpush1.msra.mxu0 %v4069
    %4107 = vmatprep.subr.mxu0 %v4074
    %4108 = vmatpush1.msra.mxu0 %v4073
    %4109 = vmatprep.subr.mxu0 %v4078
    %4110 = vmatpush1.msra.mxu0 %v4077
    %4111 = vmatprep.subr.mxu0 0.0
    %4112 = vmatpush1.msra.mxu0 0.0
    %4113 = vmatprep.subr.mxu0 0.0
    %4114 = vmatpush1.msra.mxu0 0.0
    %4115 = vmatprep.subr.mxu0 0.0
    %4116 = vmatpush1.msra.mxu0 0.0
    %4117 = vmatprep.subr.mxu0 0.0
    %4118 = vmatpush1.msra.mxu0 0.0
    %4119 = vmatprep.subr.mxu0 0.0
    %4120 = vmatpush1.msra.mxu0 0.0
    %4121 = vmatprep.subr.mxu0 0.0
    %4122 = vmatpush1.msra.mxu0 0.0
    %4123 = vmatprep.subr.mxu0 0.0
    %4124 = vmatpush1.msra.mxu0 0.0
    %4125 = vmatprep.subr.mxu0 0.0
    %4126 = vmatpush1.msra.mxu0 0.0
    %4127 = vmatprep.subr.mxu0 0.0
    %4128 = vmatpush1.msra.mxu0 0.0
    %4129 = vmatprep.subr.mxu0 0.0
    %4130 = vmatpush1.msra.mxu0 0.0
    %4131 = vmatprep.subr.mxu0 0.0
    %4132 = vmatpush1.msra.mxu0 0.0
    %4133 = vmatprep.subr.mxu0 0.0
    %4134 = vmatpush1.msra.mxu0 0.0
    %4135 = vmatprep.subr.mxu0 0.0
    %4136 = vmatpush1.msra.mxu0 0.0
    %4137 = vmatprep.subr.mxu0 0.0
    %4138 = vmatpush1.msra.mxu0 0.0
    %4139 = vmatprep.subr.mxu0 0.0
    %4140 = vmatpush1.msra.mxu0 0.0
    %4141 = vmatprep.subr.mxu0 0.0
    %4142 = vmatpush1.msra.mxu0 0.0
    %4143 = vmatprep.subr.mxu0 0.0
    %4144 = vmatpush1.msra.mxu0 0.0
    %4145 = vmatprep.subr.mxu0 0.0
    %4146 = vmatpush1.msra.mxu0 0.0
    %4147 = vmatprep.subr.mxu0 0.0
    %4148 = vmatpush1.msra.mxu0 0.0
    %4149 = vmatprep.subr.mxu0 0.0
    %4150 = vmatpush1.msra.mxu0 0.0
    %4151 = vmatprep.subr.mxu0 0.0
    %4152 = vmatpush1.msra.mxu0 0.0
    %4153 = vmatprep.subr.mxu0 0.0
    %4154 = vmatpush1.msra.mxu0 0.0
    %4155 = vmatprep.subr.mxu0 0.0
    %4156 = vmatpush1.msra.mxu0 0.0
    %4157 = vmatprep.subr.mxu0 0.0
    %4158 = vmatpush1.msra.mxu0 0.0
    %4159 = vmatprep.subr.mxu0 0.0
    %4160 = vmatpush1.msra.mxu0 0.0
    %4161 = vmatprep.subr.mxu0 0.0
    %4162 = vmatpush1.msra.mxu0 0.0
    %4163 = vmatprep.subr.mxu0 0.0
    %4164 = vmatpush1.msra.mxu0 0.0
    %4165 = vmatprep.subr.mxu0 0.0
    %4166 = vmatpush1.msra.mxu0 0.0
    %4167 = vmatprep.mubr.f32.mxu0 0.0
    %4168 = vmatmul.mubr.f32.gmra.mrb[0].mxu0 %v3969
    %v4169 = vpop.f32.mrb[0].mxu0
    %v4170 = vadd.f32 %v4086, %v4169
    %v4171 = vpop.f32.mrb[0].mxu0
    %v4172 = vadd.f32 %v4090, %v4171
    %4173 = vdwg.mxu0
    %4174 = vmatprep.subr.mxu0 %v4068
    %4175 = vmatpush1.msra.mxu0 %v4067
    %4176 = vmatprep.subr.mxu0 %v4072
    %4177 = vmatpush1.msra.mxu0 %v4071
    %4178 = vmatprep.subr.mxu0 %v4076
    %4179 = vmatpush1.msra.mxu0 %v4075
    %4180 = vmatprep.subr.mxu0 %v4080
    %4181 = vmatpush1.msra.mxu0 %v4079
    %4182 = vmatprep.subr.mxu0 0.0
    %4183 = vmatpush1.msra.mxu0 0.0
    %4184 = vmatprep.subr.mxu0 0.0
    %4185 = vmatpush1.msra.mxu0 0.0
    %4186 = vmatprep.subr.mxu0 0.0
    %4187 = vmatpush1.msra.mxu0 0.0
    %4188 = vmatprep.subr.mxu0 0.0
    %4189 = vmatpush1.msra.mxu0 0.0
    %4190 = vmatprep.subr.mxu0 0.0
    %4191 = vmatpush1.msra.mxu0 0.0
    %4192 = vmatprep.subr.mxu0 0.0
    %4193 = vmatpush1.msra.mxu0 0.0
    %4194 = vmatprep.subr.mxu0 0.0
    %4195 = vmatpush1.msra.mxu0 0.0
    %4196 = vmatprep.subr.mxu0 0.0
    %4197 = vmatpush1.msra.mxu0 0.0
    %4198 = vmatprep.subr.mxu0 0.0
    %4199 = vmatpush1.msra.mxu0 0.0
    %4200 = vmatprep.subr.mxu0 0.0
    %4201 = vmatpush1.msra.mxu0 0.0
    %4202 = vmatprep.subr.mxu0 0.0
    %4203 = vmatpush1.msra.mxu0 0.0
    %4204 = vmatprep.subr.mxu0 0.0
    %4205 = vmatpush1.msra.mxu0 0.0
    %4206 = vmatprep.subr.mxu0 0.0
    %4207 = vmatpush1.msra.mxu0 0.0
    %4208 = vmatprep.subr.mxu0 0.0
    %4209 = vmatpush1.msra.mxu0 0.0
    %4210 = vmatprep.subr.mxu0 0.0
    %4211 = vmatpush1.msra.mxu0 0.0
    %4212 = vmatprep.subr.mxu0 0.0
    %4213 = vmatpush1.msra.mxu0 0.0
    %4214 = vmatprep.subr.mxu0 0.0
    %4215 = vmatpush1.msra.mxu0 0.0
    %4216 = vmatprep.subr.mxu0 0.0
    %4217 = vmatpush1.msra.mxu0 0.0
    %4218 = vmatprep.subr.mxu0 0.0
    %4219 = vmatpush1.msra.mxu0 0.0
    %4220 = vmatprep.subr.mxu0 0.0
    %4221 = vmatpush1.msra.mxu0 0.0
    %4222 = vmatprep.subr.mxu0 0.0
    %4223 = vmatpush1.msra.mxu0 0.0
    %4224 = vmatprep.subr.mxu0 0.0
    %4225 = vmatpush1.msra.mxu0 0.0
    %4226 = vmatprep.subr.mxu0 0.0
    %4227 = vmatpush1.msra.mxu0 0.0
    %4228 = vmatprep.subr.mxu0 0.0
    %4229 = vmatpush1.msra.mxu0 0.0
    %4230 = vmatprep.subr.mxu0 0.0
    %4231 = vmatpush1.msra.mxu0 0.0
    %4232 = vmatprep.subr.mxu0 0.0
    %4233 = vmatpush1.msra.mxu0 0.0
    %4234 = vmatprep.subr.mxu0 0.0
    %4235 = vmatpush1.msra.mxu0 0.0
    %4236 = vmatprep.subr.mxu0 0.0
    %4237 = vmatpush1.msra.mxu0 0.0
    %4238 = vmatprep.mubr.f32.mxu0 0.0
    %4239 = vmatmul.mubr.f32.gmra.mrb[0].mxu0 %v3969
    %v4240 = vpop.f32.mrb[0].mxu0
    %v4241 = vadd.f32 %v4094, %v4240
    %v4242 = vpop.f32.mrb[0].mxu0
    %v4243 = vadd.f32 %v4098, %v4242
    %4244 = vdwg.mxu0
    %v4247 = vunpack.c.l.s4 1966171168
    %v4248 = vunpack.c.0.s8 %v4247
    %v4249 = vlaneseq
    %v4250 = vshrl.u32 %v4249, 7
    %v4251 = vsub.s32 %v4248, %v4250
    %v4252 = vrot.slane %v4170, %v4251
    %v4253 = vcombine.high %v4252, %v4252
    %v4255 = vunpack.c.l.s4 1966171168
    %v4256 = vunpack.c.0.s8 %v4255
    %v4257 = vlaneseq
    %v4258 = vshrl.u32 %v4257, 7
    %v4259 = vsub.s32 %v4256, %v4258
    %v4260 = vrot.slane %v4252, %v4259
    %v4262 = vunpack.c.l.s4 1966171168
    %v4263 = vunpack.c.0.s8 %v4262
    %v4264 = vlaneseq
    %v4265 = vshrl.u32 %v4264, 7
    %v4266 = vsub.s32 %v4263, %v4265
    %v4267 = vrot.slane %v4253, %v4266
    %v4268 = vlaneseq
    %v4269 = vshrl.u32 %v4268, 7
    %v4270 = vsub.s32 0, %v4269
    %v4271 = vrot.slane %v4260, %v4270
    %v4272 = vlaneseq
    %v4273 = vshrl.u32 %v4272, 7
    %v4274 = vsub.s32 0, %v4273
    %v4275 = vrot.slane %v4267, %v4274
    %v4278 = vadd.f32 %v4271, %v157
    %v4279 = vadd.f32 %v4275, %v161
    %v4280 = vtanh.pop %v4278
    %v4281 = vtanh.pop %v4279
    %v4282 = vmul.f32 %v4280, %v390
    %v4283 = vmul.f32 %v4281, %v390
    %v4284 = vsel %vm393, %v4282, 0.0
    %4285 = vadd.xlane.f32.xlu0 %v4284
    %v4286 = vpop.xlane.xlu0 %4285
    %v4287 = vsel %vm393, %v4283, 0.0
    %4288 = vadd.xlane.f32.xlu0 %v4287
    %v4289 = vpop.xlane.xlu0 %4288
    %v4292 = vlaneseq
    %v4293 = vshrl.u32 %v4292, 7
    %v4294 = vsub.s32 %v164, %v4293
    %v4295 = vrot.slane %v4286, %v4294
    %v4296 = vlaneseq
    %v4297 = vshrl.u32 %v4296, 7
    %v4298 = vsub.s32 %v164, %v4297
    %v4299 = vrot.slane %v4289, %v4298
    %v4300 = vsel %vm410, %v4299, %v4295
    %v4302 = vsel %vm413, %v4300, -inf
    %4303 = vmax.xlane.f32.xlu0 %v4302
    %v4304 = vpop.xlane.xlu0 %4303
    %v4306 = vlaneseq
    %v4307 = vshrl.u32 %v4306, 7
    %v4308 = vsub.s32 0, %v4307
    %v4309 = vrot.slane %v4304, %v4308
    %v4310 = vlaneseq
    %v4311 = vshrl.u32 %v4310, 7
    %v4312 = vsub.s32 1, %v4311
    %v4313 = vrot.slane %v4304, %v4312
    %v4316 = vsub.f32 %v4286, %v4309
    %v4317 = vsub.f32 %v4289, %v4313
    %v4318 = vmul.f32 %v4316, 1.442695
    %v4319 = vpow.pop %v4318
    %v4320 = vmul.f32 %v4317, 1.442695
    %v4321 = vpow.pop %v4320
    %4324 = vset.pattern.permute.xlu0 0
    %4325 = vperm.xlu0 %4324, %v4319
    %v4326 = vpop.permute.xlu0 %4325
    %4327 = vset.pattern.permute.xlu0 0
    %4328 = vperm.xlu0 %4327, %v4321
    %v4329 = vpop.permute.xlu0 %4328
    %v4330 = vlaneseq
    %v4331 = vshrl.u32 %v4330, 7
    %v4332 = vsub.s32 %v164, %v4331
    %v4333 = vrot.slane %v4326, %v4332
    %v4334 = vlaneseq
    %v4335 = vshrl.u32 %v4334, 7
    %v4336 = vsub.s32 %v164, %v4335
    %v4337 = vrot.slane %v4329, %v4336
    %v4338 = vsel %vm410, %v4337, %v4333
    %v4340 = vsel %vm413, %v4338, 0.0
    %4341 = vadd.xlane.f32.xlu0 %v4340
    %v4342 = vpop.xlane.xlu0 %4341
    %v4344 = vlaneseq
    %v4345 = vshrl.u32 %v4344, 7
    %v4346 = vsub.s32 0, %v4345
    %v4347 = vrot.slane %v4342, %v4346
    %v4348 = vlaneseq
    %v4349 = vshrl.u32 %v4348, 7
    %v4350 = vsub.s32 1, %v4349
    %v4351 = vrot.slane %v4342, %v4350
    %v4354 = vrcp.pop %v4347
    %v4355 = vmul.f32 %v4319, %v4354
    %v4356 = vrcp.pop %v4351
    %v4357 = vmul.f32 %v4321, %v4356
    %4359 = vset.pattern.permute.xlu0 0
    %4360 = vperm.xlu0 %4359, %v4355
    %v4361 = vpop.permute.xlu0 %4360
    %4364 = vset.pattern.permute.xlu0 0
    %4365 = vperm.xlu0 %4364, %v4357
    %v4366 = vpop.permute.xlu0 %4365
    %v4368 = vmul.f32 %v4361, %v79
    %v4369 = vmul.f32 %v4366, %v80
    %v4370 = vsel %vm482, %v4368, 0.0
    %v4371 = vrot.slane %v4370, 4
    %v4372 = vadd.f32 %v4370, %v4371
    %v4373 = vrot.slane %v4372, 2
    %v4374 = vadd.f32 %v4372, %v4373
    %v4375 = vrot.slane %v4374, 1
    %v4376 = vadd.f32 %v4374, %v4375
    %v4377 = vsel %vm482, %v4369, 0.0
    %v4378 = vrot.slane %v4377, 4
    %v4379 = vadd.f32 %v4377, %v4378
    %v4380 = vrot.slane %v4379, 2
    %v4381 = vadd.f32 %v4379, %v4380
    %v4382 = vrot.slane %v4381, 1
    %v4383 = vadd.f32 %v4381, %v4382
    %vm4384 = vcmp.eq.s32.totalorder %v164, %v4064
    %v4385 = vsel %vm4384, 1, 0
    %v4386 = vcvt.s32.f32 %v4385
    %v4387 = vld [vmem:[#allocation6] sm:$0xff]
    %v4388 = vld [vmem:[#allocation6 + $0x8] sm:$0xff]
    %v4389 = vld [vmem:[#allocation6 + $0x10] sm:$0xff]
    %v4390 = vld [vmem:[#allocation6 + $0x18] sm:$0xff]
    %v4391 = vld [vmem:[#allocation6 + $0x20] sm:$0xff]
    %v4392 = vld [vmem:[#allocation6 + $0x28] sm:$0xff]
    %v4393 = vld [vmem:[#allocation6 + $0x30] sm:$0xff]
    %v4394 = vld [vmem:[#allocation6 + $0x38] sm:$0xff]
    %v4395 = vld [vmem:[#allocation6 + $0x40] sm:$0xff]
    %v4396 = vld [vmem:[#allocation6 + $0x48] sm:$0xff]
    %v4397 = vld [vmem:[#allocation6 + $0x50] sm:$0xff]
    %v4398 = vld [vmem:[#allocation6 + $0x58] sm:$0xff]
    %v4399 = vld [vmem:[#allocation6 + $0x60] sm:$0xff]
    %v4400 = vld [vmem:[#allocation6 + $0x68] sm:$0xff]
    %v4401 = vld [vmem:[#allocation6 + $0x70] sm:$0xff]
    %v4402 = vld [vmem:[#allocation6 + $0x78] sm:$0xff]
    %v4403 = vld [vmem:[#allocation6 + $0x80] sm:$0xff]
    %v4404 = vld [vmem:[#allocation6 + $0x88] sm:$0xff]
    %v4407 = vsel %vm410, %v4383, %v4376
    %v4408 = vsel %vm87, %v4407, 0
    %4410 = vmatprep.subr.mxu0 %v4400
    %4411 = vmatpush1.msra.mxu0 %v4399
    %4412 = vmatprep.subr.mxu0 %v4403
    %4413 = vmatpush1.msra.mxu0 %v4402
    %4414 = vmatprep.subr.mxu0 0.0
    %4415 = vmatpush1.msra.mxu0 0.0
    %4416 = vmatprep.subr.mxu0 0.0
    %4417 = vmatpush1.msra.mxu0 0.0
    %4418 = vmatprep.subr.mxu0 0.0
    %4419 = vmatpush1.msra.mxu0 0.0
    %4420 = vmatprep.subr.mxu0 0.0
    %4421 = vmatpush1.msra.mxu0 0.0
    %4422 = vmatprep.subr.mxu0 0.0
    %4423 = vmatpush1.msra.mxu0 0.0
    %4424 = vmatprep.subr.mxu0 0.0
    %4425 = vmatpush1.msra.mxu0 0.0
    %4426 = vmatprep.subr.mxu0 0.0
    %4427 = vmatpush1.msra.mxu0 0.0
    %4428 = vmatprep.subr.mxu0 0.0
    %4429 = vmatpush1.msra.mxu0 0.0
    %4430 = vmatprep.subr.mxu0 0.0
    %4431 = vmatpush1.msra.mxu0 0.0
    %4432 = vmatprep.subr.mxu0 0.0
    %4433 = vmatpush1.msra.mxu0 0.0
    %4434 = vmatprep.subr.mxu0 0.0
    %4435 = vmatpush1.msra.mxu0 0.0
    %4436 = vmatprep.subr.mxu0 0.0
    %4437 = vmatpush1.msra.mxu0 0.0
    %4438 = vmatprep.subr.mxu0 0.0
    %4439 = vmatpush1.msra.mxu0 0.0
    %4440 = vmatprep.subr.mxu0 0.0
    %4441 = vmatpush1.msra.mxu0 0.0
    %4442 = vmatprep.subr.mxu0 0.0
    %4443 = vmatpush1.msra.mxu0 0.0
    %4444 = vmatprep.subr.mxu0 0.0
    %4445 = vmatpush1.msra.mxu0 0.0
    %4446 = vmatprep.subr.mxu0 0.0
    %4447 = vmatpush1.msra.mxu0 0.0
    %4448 = vmatprep.subr.mxu0 0.0
    %4449 = vmatpush1.msra.mxu0 0.0
    %4450 = vmatprep.subr.mxu0 0.0
    %4451 = vmatpush1.msra.mxu0 0.0
    %4452 = vmatprep.subr.mxu0 0.0
    %4453 = vmatpush1.msra.mxu0 0.0
    %4454 = vmatprep.subr.mxu0 0.0
    %4455 = vmatpush1.msra.mxu0 0.0
    %4456 = vmatprep.subr.mxu0 0.0
    %4457 = vmatpush1.msra.mxu0 0.0
    %4458 = vmatprep.subr.mxu0 0.0
    %4459 = vmatpush1.msra.mxu0 0.0
    %4460 = vmatprep.subr.mxu0 0.0
    %4461 = vmatpush1.msra.mxu0 0.0
    %4462 = vmatprep.subr.mxu0 0.0
    %4463 = vmatpush1.msra.mxu0 0.0
    %4464 = vmatprep.subr.mxu0 0.0
    %4465 = vmatpush1.msra.mxu0 0.0
    %4466 = vmatprep.subr.mxu0 0.0
    %4467 = vmatpush1.msra.mxu0 0.0
    %4468 = vmatprep.subr.mxu0 0.0
    %4469 = vmatpush1.msra.mxu0 0.0
    %4470 = vmatprep.subr.mxu0 0.0
    %4471 = vmatpush1.msra.mxu0 0.0
    %4472 = vmatprep.subr.mxu0 0.0
    %4473 = vmatpush1.msra.mxu0 0.0
    %4474 = vmatprep.mubr.f32.mxu0 0.0
    %4475 = vmatmul.mubr.f32.gmra.mrb[0].mxu0 %v4408
    %v4476 = vpop.f32.mrb[0].mxu0
    %v4477 = vadd.f32 0.0, %v4476
    %v4478 = vpop.f32.mrb[0].mxu0
    %v4479 = vadd.f32 0.0, %v4478
    %4480 = vdwg.mxu0
    %4481 = vmatprep.subr.mxu0 0.0
    %4482 = vmatpush1.msra.mxu0 %v4401
    %4483 = vmatprep.subr.mxu0 0.0
    %4484 = vmatpush1.msra.mxu0 %v4404
    %4485 = vmatprep.subr.mxu0 0.0
    %4486 = vmatpush1.msra.mxu0 0.0
    %4487 = vmatprep.subr.mxu0 0.0
    %4488 = vmatpush1.msra.mxu0 0.0
    %4489 = vmatprep.subr.mxu0 0.0
    %4490 = vmatpush1.msra.mxu0 0.0
    %4491 = vmatprep.subr.mxu0 0.0
    %4492 = vmatpush1.msra.mxu0 0.0
    %4493 = vmatprep.subr.mxu0 0.0
    %4494 = vmatpush1.msra.mxu0 0.0
    %4495 = vmatprep.subr.mxu0 0.0
    %4496 = vmatpush1.msra.mxu0 0.0
    %4497 = vmatprep.subr.mxu0 0.0
    %4498 = vmatpush1.msra.mxu0 0.0
    %4499 = vmatprep.subr.mxu0 0.0
    %4500 = vmatpush1.msra.mxu0 0.0
    %4501 = vmatprep.subr.mxu0 0.0
    %4502 = vmatpush1.msra.mxu0 0.0
    %4503 = vmatprep.subr.mxu0 0.0
    %4504 = vmatpush1.msra.mxu0 0.0
    %4505 = vmatprep.subr.mxu0 0.0
    %4506 = vmatpush1.msra.mxu0 0.0
    %4507 = vmatprep.subr.mxu0 0.0
    %4508 = vmatpush1.msra.mxu0 0.0
    %4509 = vmatprep.subr.mxu0 0.0
    %4510 = vmatpush1.msra.mxu0 0.0
    %4511 = vmatprep.subr.mxu0 0.0
    %4512 = vmatpush1.msra.mxu0 0.0
    %4513 = vmatprep.subr.mxu0 0.0
    %4514 = vmatpush1.msra.mxu0 0.0
    %4515 = vmatprep.subr.mxu0 0.0
    %4516 = vmatpush1.msra.mxu0 0.0
    %4517 = vmatprep.subr.mxu0 0.0
    %4518 = vmatpush1.msra.mxu0 0.0
    %4519 = vmatprep.subr.mxu0 0.0
    %4520 = vmatpush1.msra.mxu0 0.0
    %4521 = vmatprep.subr.mxu0 0.0
    %4522 = vmatpush1.msra.mxu0 0.0
    %4523 = vmatprep.subr.mxu0 0.0
    %4524 = vmatpush1.msra.mxu0 0.0
    %4525 = vmatprep.subr.mxu0 0.0
    %4526 = vmatpush1.msra.mxu0 0.0
    %4527 = vmatprep.subr.mxu0 0.0
    %4528 = vmatpush1.msra.mxu0 0.0
    %4529 = vmatprep.subr.mxu0 0.0
    %4530 = vmatpush1.msra.mxu0 0.0
    %4531 = vmatprep.subr.mxu0 0.0
    %4532 = vmatpush1.msra.mxu0 0.0
    %4533 = vmatprep.subr.mxu0 0.0
    %4534 = vmatpush1.msra.mxu0 0.0
    %4535 = vmatprep.subr.mxu0 0.0
    %4536 = vmatpush1.msra.mxu0 0.0
    %4537 = vmatprep.subr.mxu0 0.0
    %4538 = vmatpush1.msra.mxu0 0.0
    %4539 = vmatprep.subr.mxu0 0.0
    %4540 = vmatpush1.msra.mxu0 0.0
    %4541 = vmatprep.subr.mxu0 0.0
    %4542 = vmatpush1.msra.mxu0 0.0
    %4543 = vmatprep.subr.mxu0 0.0
    %4544 = vmatpush1.msra.mxu0 0.0
    %4545 = vmatprep.mubr.f32.mxu0 0.0
    %4546 = vmatmul.mubr.f32.gmra.mrb[0].mxu0 %v4408
    %v4547 = vpop.f32.mrb[0].mxu0
    %v4548 = vadd.f32 0.0, %v4547
    %v4549 = vpop.f32.mrb[0].mxu0
    %4550 = vdwg.mxu0
    %v4552 = vsel %vm204, %v4386, 0
    %4554 = vmatprep.subr.mxu0 %v4388
    %4555 = vmatpush1.msra.mxu0 %v4387
    %4556 = vmatprep.subr.mxu0 %v4391
    %4557 = vmatpush1.msra.mxu0 %v4390
    %4558 = vmatprep.subr.mxu0 %v4394
    %4559 = vmatpush1.msra.mxu0 %v4393
    %4560 = vmatprep.subr.mxu0 %v4397
    %4561 = vmatpush1.msra.mxu0 %v4396
    %4562 = vmatprep.subr.mxu0 0.0
    %4563 = vmatpush1.msra.mxu0 0.0
    %4564 = vmatprep.subr.mxu0 0.0
    %4565 = vmatpush1.msra.mxu0 0.0
    %4566 = vmatprep.subr.mxu0 0.0
    %4567 = vmatpush1.msra.mxu0 0.0
    %4568 = vmatprep.subr.mxu0 0.0
    %4569 = vmatpush1.msra.mxu0 0.0
    %4570 = vmatprep.subr.mxu0 0.0
    %4571 = vmatpush1.msra.mxu0 0.0
    %4572 = vmatprep.subr.mxu0 0.0
    %4573 = vmatpush1.msra.mxu0 0.0
    %4574 = vmatprep.subr.mxu0 0.0
    %4575 = vmatpush1.msra.mxu0 0.0
    %4576 = vmatprep.subr.mxu0 0.0
    %4577 = vmatpush1.msra.mxu0 0.0
    %4578 = vmatprep.subr.mxu0 0.0
    %4579 = vmatpush1.msra.mxu0 0.0
    %4580 = vmatprep.subr.mxu0 0.0
    %4581 = vmatpush1.msra.mxu0 0.0
    %4582 = vmatprep.subr.mxu0 0.0
    %4583 = vmatpush1.msra.mxu0 0.0
    %4584 = vmatprep.subr.mxu0 0.0
    %4585 = vmatpush1.msra.mxu0 0.0
    %4586 = vmatprep.subr.mxu0 0.0
    %4587 = vmatpush1.msra.mxu0 0.0
    %4588 = vmatprep.subr.mxu0 0.0
    %4589 = vmatpush1.msra.mxu0 0.0
    %4590 = vmatprep.subr.mxu0 0.0
    %4591 = vmatpush1.msra.mxu0 0.0
    %4592 = vmatprep.subr.mxu0 0.0
    %4593 = vmatpush1.msra.mxu0 0.0
    %4594 = vmatprep.subr.mxu0 0.0
    %4595 = vmatpush1.msra.mxu0 0.0
    %4596 = vmatprep.subr.mxu0 0.0
    %4597 = vmatpush1.msra.mxu0 0.0
    %4598 = vmatprep.subr.mxu0 0.0
    %4599 = vmatpush1.msra.mxu0 0.0
    %4600 = vmatprep.subr.mxu0 0.0
    %4601 = vmatpush1.msra.mxu0 0.0
    %4602 = vmatprep.subr.mxu0 0.0
    %4603 = vmatpush1.msra.mxu0 0.0
    %4604 = vmatprep.subr.mxu0 0.0
    %4605 = vmatpush1.msra.mxu0 0.0
    %4606 = vmatprep.subr.mxu0 0.0
    %4607 = vmatpush1.msra.mxu0 0.0
    %4608 = vmatprep.subr.mxu0 0.0
    %4609 = vmatpush1.msra.mxu0 0.0
    %4610 = vmatprep.subr.mxu0 0.0
    %4611 = vmatpush1.msra.mxu0 0.0
    %4612 = vmatprep.subr.mxu0 0.0
    %4613 = vmatpush1.msra.mxu0 0.0
    %4614 = vmatprep.subr.mxu0 0.0
    %4615 = vmatpush1.msra.mxu0 0.0
    %4616 = vmatprep.subr.mxu0 0.0
    %4617 = vmatpush1.msra.mxu0 0.0
    %4618 = vmatprep.mubr.f32.mxu0 0.0
    %4619 = vmatmul.mubr.f32.gmra.mrb[0].mxu0 %v4552
    %v4620 = vpop.f32.mrb[0].mxu0
    %v4621 = vadd.f32 %v4477, %v4620
    %v4622 = vpop.f32.mrb[0].mxu0
    %v4623 = vadd.f32 %v4479, %v4622
    %4624 = vdwg.mxu0
    %4625 = vmatprep.subr.mxu0 0.0
    %4626 = vmatpush1.msra.mxu0 %v4389
    %4627 = vmatprep.subr.mxu0 0.0
    %4628 = vmatpush1.msra.mxu0 %v4392
    %4629 = vmatprep.subr.mxu0 0.0
    %4630 = vmatpush1.msra.mxu0 %v4395
    %4631 = vmatprep.subr.mxu0 0.0
    %4632 = vmatpush1.msra.mxu0 %v4398
    %4633 = vmatprep.subr.mxu0 0.0
    %4634 = vmatpush1.msra.mxu0 0.0
    %4635 = vmatprep.subr.mxu0 0.0
    %4636 = vmatpush1.msra.mxu0 0.0
    %4637 = vmatprep.subr.mxu0 0.0
    %4638 = vmatpush1.msra.mxu0 0.0
    %4639 = vmatprep.subr.mxu0 0.0
    %4640 = vmatpush1.msra.mxu0 0.0
    %4641 = vmatprep.subr.mxu0 0.0
    %4642 = vmatpush1.msra.mxu0 0.0
    %4643 = vmatprep.subr.mxu0 0.0
    %4644 = vmatpush1.msra.mxu0 0.0
    %4645 = vmatprep.subr.mxu0 0.0
    %4646 = vmatpush1.msra.mxu0 0.0
    %4647 = vmatprep.subr.mxu0 0.0
    %4648 = vmatpush1.msra.mxu0 0.0
    %4649 = vmatprep.subr.mxu0 0.0
    %4650 = vmatpush1.msra.mxu0 0.0
    %4651 = vmatprep.subr.mxu0 0.0
    %4652 = vmatpush1.msra.mxu0 0.0
    %4653 = vmatprep.subr.mxu0 0.0
    %4654 = vmatpush1.msra.mxu0 0.0
    %4655 = vmatprep.subr.mxu0 0.0
    %4656 = vmatpush1.msra.mxu0 0.0
    %4657 = vmatprep.subr.mxu0 0.0
    %4658 = vmatpush1.msra.mxu0 0.0
    %4659 = vmatprep.subr.mxu0 0.0
    %4660 = vmatpush1.msra.mxu0 0.0
    %4661 = vmatprep.subr.mxu0 0.0
    %4662 = vmatpush1.msra.mxu0 0.0
    %4663 = vmatprep.subr.mxu0 0.0
    %4664 = vmatpush1.msra.mxu0 0.0
    %4665 = vmatprep.subr.mxu0 0.0
    %4666 = vmatpush1.msra.mxu0 0.0
    %4667 = vmatprep.subr.mxu0 0.0
    %4668 = vmatpush1.msra.mxu0 0.0
    %4669 = vmatprep.subr.mxu0 0.0
    %4670 = vmatpush1.msra.mxu0 0.0
    %4671 = vmatprep.subr.mxu0 0.0
    %4672 = vmatpush1.msra.mxu0 0.0
    %4673 = vmatprep.subr.mxu0 0.0
    %4674 = vmatpush1.msra.mxu0 0.0
    %4675 = vmatprep.subr.mxu0 0.0
    %4676 = vmatpush1.msra.mxu0 0.0
    %4677 = vmatprep.subr.mxu0 0.0
    %4678 = vmatpush1.msra.mxu0 0.0
    %4679 = vmatprep.subr.mxu0 0.0
    %4680 = vmatpush1.msra.mxu0 0.0
    %4681 = vmatprep.subr.mxu0 0.0
    %4682 = vmatpush1.msra.mxu0 0.0
    %4683 = vmatprep.subr.mxu0 0.0
    %4684 = vmatpush1.msra.mxu0 0.0
    %4685 = vmatprep.subr.mxu0 0.0
    %4686 = vmatpush1.msra.mxu0 0.0
    %4687 = vmatprep.subr.mxu0 0.0
    %4688 = vmatpush1.msra.mxu0 0.0
    %4689 = vmatprep.mubr.f32.mxu0 0.0
    %4690 = vmatmul.mubr.f32.gmra.mrb[0].mxu0 %v4552
    %v4691 = vpop.f32.mrb[0].mxu0
    %v4692 = vadd.f32 %v4548, %v4691
    %v4693 = vpop.f32.mrb[0].mxu0
    %4694 = vdwg.mxu0
    %v4695 = vld [vmem:[%s808] ss:$8 sm:$0x7]
    %v4697 = vlaneseq
    %v4698 = vshrl.u32 %v4697, 7
    %v4699 = vsub.s32 0, %v4698
    %v4700 = vrot.slane %v4695, %v4699
    %v4701 = vlaneseq
    %v4702 = vshrl.u32 %v4701, 7
    %v4703 = vsub.s32 1, %v4702
    %v4704 = vrot.slane %v4695, %v4703
    %v4705 = vlaneseq
    %v4706 = vshrl.u32 %v4705, 7
    %v4707 = vsub.s32 2, %v4706
    %v4708 = vrot.slane %v4695, %v4707
    %v4712 = vadd.f32 %v4621, %v4700
    %v4713 = vadd.f32 %v4623, %v4704
    %v4714 = vadd.f32 %v4692, %v4708
    %v4715 = vadd.f32 %v4712, %v4172
    %v4716 = vsub.f32 0.0, %v4715
    %v4717 = vmul.f32 %v4716, 1.442695
    %v4718 = vpow.pop %v4717
    %v4719 = vadd.f32 %v4718, 1.0
    %v4720 = vrcp.pop %v4719
    %v4721 = vmul.f32 1.0, %v4720
    %v4722 = vadd.f32 %v4713, %v4241
    %v4723 = vsub.f32 0.0, %v4722
    %v4724 = vmul.f32 %v4723, 1.442695
    %v4725 = vpow.pop %v4724
    %v4726 = vadd.f32 %v4725, 1.0
    %v4727 = vrcp.pop %v4726
    %v4728 = vmul.f32 1.0, %v4727
    %v4729 = vmul.f32 %v4721, %v4243
    %v4730 = vadd.f32 %v4714, %v4729
    %v4731 = vtanh.pop %v4730
    %v4732 = vsub.f32 1.0, %v4728
    %v4733 = vmul.f32 %v4732, %v4731
    %v4734 = vmul.f32 %v4728, %v3958
    %v4735 = vadd.f32 %v4733, %v4734
    %v4736 = vld [vmem:[#allocation11 + $0x18] sm:$0xff]
    %v4737 = vld [vmem:[#allocation11 + $0x20] sm:$0xff]
    %v4738 = vld [vmem:[#allocation11 + $0x28] sm:$0xff]
    %v4739 = vld [vmem:[#allocation11 + $0x30] sm:$0xff]
    %v4740 = vld [vmem:[#allocation11 + $0x38] sm:$0x1]
    %v4741 = vlaneseq
    %v4742 = vshrl.u32 %v4741, 7
    %v4743 = vsub.s32 0, %v4742
    %v4744 = vrot.slane %v4740, %v4743
    %v4746 = vsel %vm204, %v4735, 0
    %4748 = vmatprep.subr.mxu0 0.0
    %4749 = vmatpush1.msra.mxu0 %v4736
    %4750 = vmatprep.subr.mxu0 0.0
    %4751 = vmatpush1.msra.mxu0 %v4737
    %4752 = vmatprep.subr.mxu0 0.0
    %4753 = vmatpush1.msra.mxu0 %v4738
    %4754 = vmatprep.subr.mxu0 0.0
    %4755 = vmatpush1.msra.mxu0 %v4739
    %4756 = vmatprep.subr.mxu0 0.0
    %4757 = vmatpush1.msra.mxu0 0.0
    %4758 = vmatprep.subr.mxu0 0.0
    %4759 = vmatpush1.msra.mxu0 0.0
    %4760 = vmatprep.subr.mxu0 0.0
    %4761 = vmatpush1.msra.mxu0 0.0
    %4762 = vmatprep.subr.mxu0 0.0
    %4763 = vmatpush1.msra.mxu0 0.0
    %4764 = vmatprep.subr.mxu0 0.0
    %4765 = vmatpush1.msra.mxu0 0.0
    %4766 = vmatprep.subr.mxu0 0.0
    %4767 = vmatpush1.msra.mxu0 0.0
    %4768 = vmatprep.subr.mxu0 0.0
    %4769 = vmatpush1.msra.mxu0 0.0
    %4770 = vmatprep.subr.mxu0 0.0
    %4771 = vmatpush1.msra.mxu0 0.0
    %4772 = vmatprep.subr.mxu0 0.0
    %4773 = vmatpush1.msra.mxu0 0.0
    %4774 = vmatprep.subr.mxu0 0.0
    %4775 = vmatpush1.msra.mxu0 0.0
    %4776 = vmatprep.subr.mxu0 0.0
    %4777 = vmatpush1.msra.mxu0 0.0
    %4778 = vmatprep.subr.mxu0 0.0
    %4779 = vmatpush1.msra.mxu0 0.0
    %4780 = vmatprep.subr.mxu0 0.0
    %4781 = vmatpush1.msra.mxu0 0.0
    %4782 = vmatprep.subr.mxu0 0.0
    %4783 = vmatpush1.msra.mxu0 0.0
    %4784 = vmatprep.subr.mxu0 0.0
    %4785 = vmatpush1.msra.mxu0 0.0
    %4786 = vmatprep.subr.mxu0 0.0
    %4787 = vmatpush1.msra.mxu0 0.0
    %4788 = vmatprep.subr.mxu0 0.0
    %4789 = vmatpush1.msra.mxu0 0.0
    %4790 = vmatprep.subr.mxu0 0.0
    %4791 = vmatpush1.msra.mxu0 0.0
    %4792 = vmatprep.subr.mxu0 0.0
    %4793 = vmatpush1.msra.mxu0 0.0
    %4794 = vmatprep.subr.mxu0 0.0
    %4795 = vmatpush1.msra.mxu0 0.0
    %4796 = vmatprep.subr.mxu0 0.0
    %4797 = vmatpush1.msra.mxu0 0.0
    %4798 = vmatprep.subr.mxu0 0.0
    %4799 = vmatpush1.msra.mxu0 0.0
    %4800 = vmatprep.subr.mxu0 0.0
    %4801 = vmatpush1.msra.mxu0 0.0
    %4802 = vmatprep.subr.mxu0 0.0
    %4803 = vmatpush1.msra.mxu0 0.0
    %4804 = vmatprep.subr.mxu0 0.0
    %4805 = vmatpush1.msra.mxu0 0.0
    %4806 = vmatprep.subr.mxu0 0.0
    %4807 = vmatpush1.msra.mxu0 0.0
    %4808 = vmatprep.subr.mxu0 0.0
    %4809 = vmatpush1.msra.mxu0 0.0
    %4810 = vmatprep.subr.mxu0 0.0
    %4811 = vmatpush1.msra.mxu0 0.0
    %4812 = vmatprep.mubr.f32.mxu0 0.0
    %4813 = vmatmul.mubr.f32.gmra.mrb[0].mxu0 %v4746
    %v4814 = vpop.f32.mrb[0].mxu0
    %v4815 = vadd.f32 %v4744, %v4814
    %v4816 = vpop.f32.mrb[0].mxu0
    %4817 = vdwg.mxu0
    %s4818 = scalar_lea.vmem [#allocation12], 12
    %4819 = vst [vmem:[%s4818] sm:$0x3] %v4815
    %s4820 = scalar_lea.vmem [#allocation2], 12
    %4821 = vst.msk [vmem:[%s4820] sm:$0x3] %vm77, %v4735
    %v4822 = vsel %vm936, %v4815, -inf
    %4823 = vmax.xlane.f32.xlu0 %v4822
    %v4824 = vpop.xlane.xlu0 %4823
    %vm4825 = vcmp.eq.f32.partialorder %v4815, %v4824
    %v4826 = vsel %vm4825, %v164, 128
    %v4827 = vsel %vm936, %v4826, 2147483647
    %v4828 = vand.u32 %v4827, 65535
    %v4829 = vshra.s32 %v4827, 16
    %v4830 = vcvt.s32.f32 %v4828
    %v4831 = vcvt.s32.f32 %v4829
    %4832 = vmin.xlane.f32.xlu0 %v4831
    %v4833 = vpop.xlane.xlu0 %4832
    %vm4834 = vcmp.eq.f32.partialorder %v4831, %v4833
    %v4835 = vsel %vm4834, %v4830, inf
    %4836 = vmin.xlane.f32.xlu0 %v4835
    %v4837 = vpop.xlane.xlu0 %4836
    %v4838 = vcvt.f32.s32 %v4837
    %v4839 = vcvt.f32.s32 %v4833
    %v4840 = vshll.u32 %v4839, 16
    %v4841 = vadd.s32 %v4840, %v4838
    %v4842 = vld [vmem:[#allocation9] sm:$0xff]
    %v4843 = vld [vmem:[#allocation9 + $0x8] sm:$0xff]
    %v4844 = vld [vmem:[#allocation9 + $0x10] sm:$0xff]
    %v4845 = vld [vmem:[#allocation9 + $0x18] sm:$0xff]
    %v4846 = vld [vmem:[#allocation9 + $0x20] sm:$0xff]
    %v4847 = vld [vmem:[#allocation9 + $0x28] sm:$0xff]
    %v4848 = vld [vmem:[#allocation9 + $0x30] sm:$0xff]
    %v4849 = vld [vmem:[#allocation9 + $0x38] sm:$0xff]
    %v4850 = vld [vmem:[#allocation9 + $0x40] sm:$0xff]
    %v4851 = vld [vmem:[#allocation9 + $0x48] sm:$0xff]
    %v4852 = vld [vmem:[#allocation9 + $0x50] sm:$0xff]
    %v4853 = vld [vmem:[#allocation9 + $0x58] sm:$0xff]
    %v4854 = vld [vmem:[#allocation9 + $0x60] sm:$0xff]
    %v4855 = vld [vmem:[#allocation9 + $0x68] sm:$0xff]
    %v4856 = vld [vmem:[#allocation9 + $0x70] sm:$0xff]
    %v4857 = vld [vmem:[#allocation9 + $0x78] sm:$0xff]
    %v4858 = vld [vmem:[%s181] ss:$8 sm:$0xf]
    %v4860 = vlaneseq
    %v4861 = vshrl.u32 %v4860, 7
    %v4862 = vsub.s32 0, %v4861
    %v4863 = vrot.slane %v4858, %v4862
    %v4864 = vlaneseq
    %v4865 = vshrl.u32 %v4864, 7
    %v4866 = vsub.s32 1, %v4865
    %v4867 = vrot.slane %v4858, %v4866
    %v4868 = vlaneseq
    %v4869 = vshrl.u32 %v4868, 7
    %v4870 = vsub.s32 2, %v4869
    %v4871 = vrot.slane %v4858, %v4870
    %v4872 = vlaneseq
    %v4873 = vshrl.u32 %v4872, 7
    %v4874 = vsub.s32 3, %v4873
    %v4875 = vrot.slane %v4858, %v4874
    %4880 = vmatprep.subr.mxu0 %v4843
    %4881 = vmatpush1.msra.mxu0 %v4842
    %4882 = vmatprep.subr.mxu0 %v4847
    %4883 = vmatpush1.msra.mxu0 %v4846
    %4884 = vmatprep.subr.mxu0 %v4851
    %4885 = vmatpush1.msra.mxu0 %v4850
    %4886 = vmatprep.subr.mxu0 %v4855
    %4887 = vmatpush1.msra.mxu0 %v4854
    %4888 = vmatprep.subr.mxu0 0.0
    %4889 = vmatpush1.msra.mxu0 0.0
    %4890 = vmatprep.subr.mxu0 0.0
    %4891 = vmatpush1.msra.mxu0 0.0
    %4892 = vmatprep.subr.mxu0 0.0
    %4893 = vmatpush1.msra.mxu0 0.0
    %4894 = vmatprep.subr.mxu0 0.0
    %4895 = vmatpush1.msra.mxu0 0.0
    %4896 = vmatprep.subr.mxu0 0.0
    %4897 = vmatpush1.msra.mxu0 0.0
    %4898 = vmatprep.subr.mxu0 0.0
    %4899 = vmatpush1.msra.mxu0 0.0
    %4900 = vmatprep.subr.mxu0 0.0
    %4901 = vmatpush1.msra.mxu0 0.0
    %4902 = vmatprep.subr.mxu0 0.0
    %4903 = vmatpush1.msra.mxu0 0.0
    %4904 = vmatprep.subr.mxu0 0.0
    %4905 = vmatpush1.msra.mxu0 0.0
    %4906 = vmatprep.subr.mxu0 0.0
    %4907 = vmatpush1.msra.mxu0 0.0
    %4908 = vmatprep.subr.mxu0 0.0
    %4909 = vmatpush1.msra.mxu0 0.0
    %4910 = vmatprep.subr.mxu0 0.0
    %4911 = vmatpush1.msra.mxu0 0.0
    %4912 = vmatprep.subr.mxu0 0.0
    %4913 = vmatpush1.msra.mxu0 0.0
    %4914 = vmatprep.subr.mxu0 0.0
    %4915 = vmatpush1.msra.mxu0 0.0
    %4916 = vmatprep.subr.mxu0 0.0
    %4917 = vmatpush1.msra.mxu0 0.0
    %4918 = vmatprep.subr.mxu0 0.0
    %4919 = vmatpush1.msra.mxu0 0.0
    %4920 = vmatprep.subr.mxu0 0.0
    %4921 = vmatpush1.msra.mxu0 0.0
    %4922 = vmatprep.subr.mxu0 0.0
    %4923 = vmatpush1.msra.mxu0 0.0
    %4924 = vmatprep.subr.mxu0 0.0
    %4925 = vmatpush1.msra.mxu0 0.0
    %4926 = vmatprep.subr.mxu0 0.0
    %4927 = vmatpush1.msra.mxu0 0.0
    %4928 = vmatprep.subr.mxu0 0.0
    %4929 = vmatpush1.msra.mxu0 0.0
    %4930 = vmatprep.subr.mxu0 0.0
    %4931 = vmatpush1.msra.mxu0 0.0
    %4932 = vmatprep.subr.mxu0 0.0
    %4933 = vmatpush1.msra.mxu0 0.0
    %4934 = vmatprep.subr.mxu0 0.0
    %4935 = vmatpush1.msra.mxu0 0.0
    %4936 = vmatprep.subr.mxu0 0.0
    %4937 = vmatpush1.msra.mxu0 0.0
    %4938 = vmatprep.subr.mxu0 0.0
    %4939 = vmatpush1.msra.mxu0 0.0
    %4940 = vmatprep.subr.mxu0 0.0
    %4941 = vmatpush1.msra.mxu0 0.0
    %4942 = vmatprep.subr.mxu0 0.0
    %4943 = vmatpush1.msra.mxu0 0.0
    %4944 = vmatprep.mubr.f32.mxu0 0.0
    %4945 = vmatmul.mubr.f32.gmra.mrb[0].mxu0 %v4746
    %v4946 = vpop.f32.mrb[0].mxu0
    %v4947 = vadd.f32 %v4863, %v4946
    %v4948 = vpop.f32.mrb[0].mxu0
    %v4949 = vadd.f32 %v4867, %v4948
    %4950 = vdwg.mxu0
    %4951 = vmatprep.subr.mxu0 %v4845
    %4952 = vmatpush1.msra.mxu0 %v4844
    %4953 = vmatprep.subr.mxu0 %v4849
    %4954 = vmatpush1.msra.mxu0 %v4848
    %4955 = vmatprep.subr.mxu0 %v4853
    %4956 = vmatpush1.msra.mxu0 %v4852
    %4957 = vmatprep.subr.mxu0 %v4857
    %4958 = vmatpush1.msra.mxu0 %v4856
    %4959 = vmatprep.subr.mxu0 0.0
    %4960 = vmatpush1.msra.mxu0 0.0
    %4961 = vmatprep.subr.mxu0 0.0
    %4962 = vmatpush1.msra.mxu0 0.0
    %4963 = vmatprep.subr.mxu0 0.0
    %4964 = vmatpush1.msra.mxu0 0.0
    %4965 = vmatprep.subr.mxu0 0.0
    %4966 = vmatpush1.msra.mxu0 0.0
    %4967 = vmatprep.subr.mxu0 0.0
    %4968 = vmatpush1.msra.mxu0 0.0
    %4969 = vmatprep.subr.mxu0 0.0
    %4970 = vmatpush1.msra.mxu0 0.0
    %4971 = vmatprep.subr.mxu0 0.0
    %4972 = vmatpush1.msra.mxu0 0.0
    %4973 = vmatprep.subr.mxu0 0.0
    %4974 = vmatpush1.msra.mxu0 0.0
    %4975 = vmatprep.subr.mxu0 0.0
    %4976 = vmatpush1.msra.mxu0 0.0
    %4977 = vmatprep.subr.mxu0 0.0
    %4978 = vmatpush1.msra.mxu0 0.0
    %4979 = vmatprep.subr.mxu0 0.0
    %4980 = vmatpush1.msra.mxu0 0.0
    %4981 = vmatprep.subr.mxu0 0.0
    %4982 = vmatpush1.msra.mxu0 0.0
    %4983 = vmatprep.subr.mxu0 0.0
    %4984 = vmatpush1.msra.mxu0 0.0
    %4985 = vmatprep.subr.mxu0 0.0
    %4986 = vmatpush1.msra.mxu0 0.0
    %4987 = vmatprep.subr.mxu0 0.0
    %4988 = vmatpush1.msra.mxu0 0.0
    %4989 = vmatprep.subr.mxu0 0.0
    %4990 = vmatpush1.msra.mxu0 0.0
    %4991 = vmatprep.subr.mxu0 0.0
    %4992 = vmatpush1.msra.mxu0 0.0
    %4993 = vmatprep.subr.mxu0 0.0
    %4994 = vmatpush1.msra.mxu0 0.0
    %4995 = vmatprep.subr.mxu0 0.0
    %4996 = vmatpush1.msra.mxu0 0.0
    %4997 = vmatprep.subr.mxu0 0.0
    %4998 = vmatpush1.msra.mxu0 0.0
    %4999 = vmatprep.subr.mxu0 0.0
    %5000 = vmatpush1.msra.mxu0 0.0
    %5001 = vmatprep.subr.mxu0 0.0
    %5002 = vmatpush1.msra.mxu0 0.0
    %5003 = vmatprep.subr.mxu0 0.0
    %5004 = vmatpush1.msra.mxu0 0.0
    %5005 = vmatprep.subr.mxu0 0.0
    %5006 = vmatpush1.msra.mxu0 0.0
    %5007 = vmatprep.subr.mxu0 0.0
    %5008 = vmatpush1.msra.mxu0 0.0
    %5009 = vmatprep.subr.mxu0 0.0
    %5010 = vmatpush1.msra.mxu0 0.0
    %5011 = vmatprep.subr.mxu0 0.0
    %5012 = vmatpush1.msra.mxu0 0.0
    %5013 = vmatprep.subr.mxu0 0.0
    %5014 = vmatpush1.msra.mxu0 0.0
    %5015 = vmatprep.mubr.f32.mxu0 0.0
    %5016 = vmatmul.mubr.f32.gmra.mrb[0].mxu0 %v4746
    %v5017 = vpop.f32.mrb[0].mxu0
    %v5018 = vadd.f32 %v4871, %v5017
    %v5019 = vpop.f32.mrb[0].mxu0
    %v5020 = vadd.f32 %v4875, %v5019
    %5021 = vdwg.mxu0
    %v5024 = vunpack.c.l.s4 1966171168
    %v5025 = vunpack.c.0.s8 %v5024
    %v5026 = vlaneseq
    %v5027 = vshrl.u32 %v5026, 7
    %v5028 = vsub.s32 %v5025, %v5027
    %v5029 = vrot.slane %v4947, %v5028
    %v5030 = vcombine.high %v5029, %v5029
    %v5032 = vunpack.c.l.s4 1966171168
    %v5033 = vunpack.c.0.s8 %v5032
    %v5034 = vlaneseq
    %v5035 = vshrl.u32 %v5034, 7
    %v5036 = vsub.s32 %v5033, %v5035
    %v5037 = vrot.slane %v5029, %v5036
    %v5039 = vunpack.c.l.s4 1966171168
    %v5040 = vunpack.c.0.s8 %v5039
    %v5041 = vlaneseq
    %v5042 = vshrl.u32 %v5041, 7
    %v5043 = vsub.s32 %v5040, %v5042
    %v5044 = vrot.slane %v5030, %v5043
    %v5045 = vlaneseq
    %v5046 = vshrl.u32 %v5045, 7
    %v5047 = vsub.s32 0, %v5046
    %v5048 = vrot.slane %v5037, %v5047
    %v5049 = vlaneseq
    %v5050 = vshrl.u32 %v5049, 7
    %v5051 = vsub.s32 0, %v5050
    %v5052 = vrot.slane %v5044, %v5051
    %v5055 = vadd.f32 %v5048, %v157
    %v5056 = vadd.f32 %v5052, %v161
    %v5057 = vtanh.pop %v5055
    %v5058 = vtanh.pop %v5056
    %v5059 = vmul.f32 %v5057, %v390
    %v5060 = vmul.f32 %v5058, %v390
    %v5061 = vsel %vm393, %v5059, 0.0
    %5062 = vadd.xlane.f32.xlu0 %v5061
    %v5063 = vpop.xlane.xlu0 %5062
    %v5064 = vsel %vm393, %v5060, 0.0
    %5065 = vadd.xlane.f32.xlu0 %v5064
    %v5066 = vpop.xlane.xlu0 %5065
    %v5069 = vlaneseq
    %v5070 = vshrl.u32 %v5069, 7
    %v5071 = vsub.s32 %v164, %v5070
    %v5072 = vrot.slane %v5063, %v5071
    %v5073 = vlaneseq
    %v5074 = vshrl.u32 %v5073, 7
    %v5075 = vsub.s32 %v164, %v5074
    %v5076 = vrot.slane %v5066, %v5075
    %v5077 = vsel %vm410, %v5076, %v5072
    %v5079 = vsel %vm413, %v5077, -inf
    %5080 = vmax.xlane.f32.xlu0 %v5079
    %v5081 = vpop.xlane.xlu0 %5080
    %v5083 = vlaneseq
    %v5084 = vshrl.u32 %v5083, 7
    %v5085 = vsub.s32 0, %v5084
    %v5086 = vrot.slane %v5081, %v5085
    %v5087 = vlaneseq
    %v5088 = vshrl.u32 %v5087, 7
    %v5089 = vsub.s32 1, %v5088
    %v5090 = vrot.slane %v5081, %v5089
    %v5093 = vsub.f32 %v5063, %v5086
    %v5094 = vsub.f32 %v5066, %v5090
    %v5095 = vmul.f32 %v5093, 1.442695
    %v5096 = vpow.pop %v5095
    %v5097 = vmul.f32 %v5094, 1.442695
    %v5098 = vpow.pop %v5097
    %5101 = vset.pattern.permute.xlu0 0
    %5102 = vperm.xlu0 %5101, %v5096
    %v5103 = vpop.permute.xlu0 %5102
    %5104 = vset.pattern.permute.xlu0 0
    %5105 = vperm.xlu0 %5104, %v5098
    %v5106 = vpop.permute.xlu0 %5105
    %v5107 = vlaneseq
    %v5108 = vshrl.u32 %v5107, 7
    %v5109 = vsub.s32 %v164, %v5108
    %v5110 = vrot.slane %v5103, %v5109
    %v5111 = vlaneseq
    %v5112 = vshrl.u32 %v5111, 7
    %v5113 = vsub.s32 %v164, %v5112
    %v5114 = vrot.slane %v5106, %v5113
    %v5115 = vsel %vm410, %v5114, %v5110
    %v5117 = vsel %vm413, %v5115, 0.0
    %5118 = vadd.xlane.f32.xlu0 %v5117
    %v5119 = vpop.xlane.xlu0 %5118
    %v5121 = vlaneseq
    %v5122 = vshrl.u32 %v5121, 7
    %v5123 = vsub.s32 0, %v5122
    %v5124 = vrot.slane %v5119, %v5123
    %v5125 = vlaneseq
    %v5126 = vshrl.u32 %v5125, 7
    %v5127 = vsub.s32 1, %v5126
    %v5128 = vrot.slane %v5119, %v5127
    %v5131 = vrcp.pop %v5124
    %v5132 = vmul.f32 %v5096, %v5131
    %v5133 = vrcp.pop %v5128
    %v5134 = vmul.f32 %v5098, %v5133
    %5136 = vset.pattern.permute.xlu0 0
    %5137 = vperm.xlu0 %5136, %v5132
    %v5138 = vpop.permute.xlu0 %5137
    %5141 = vset.pattern.permute.xlu0 0
    %5142 = vperm.xlu0 %5141, %v5134
    %v5143 = vpop.permute.xlu0 %5142
    %v5145 = vmul.f32 %v5138, %v79
    %v5146 = vmul.f32 %v5143, %v80
    %v5147 = vsel %vm482, %v5145, 0.0
    %v5148 = vrot.slane %v5147, 4
    %v5149 = vadd.f32 %v5147, %v5148
    %v5150 = vrot.slane %v5149, 2
    %v5151 = vadd.f32 %v5149, %v5150
    %v5152 = vrot.slane %v5151, 1
    %v5153 = vadd.f32 %v5151, %v5152
    %v5154 = vsel %vm482, %v5146, 0.0
    %v5155 = vrot.slane %v5154, 4
    %v5156 = vadd.f32 %v5154, %v5155
    %v5157 = vrot.slane %v5156, 2
    %v5158 = vadd.f32 %v5156, %v5157
    %v5159 = vrot.slane %v5158, 1
    %v5160 = vadd.f32 %v5158, %v5159
    %vm5161 = vcmp.eq.s32.totalorder %v164, %v4841
    %v5162 = vsel %vm5161, 1, 0
    %v5163 = vcvt.s32.f32 %v5162
    %v5164 = vld [vmem:[#allocation6] sm:$0xff]
    %v5165 = vld [vmem:[#allocation6 + $0x8] sm:$0xff]
    %v5166 = vld [vmem:[#allocation6 + $0x10] sm:$0xff]
    %v5167 = vld [vmem:[#allocation6 + $0x18] sm:$0xff]
    %v5168 = vld [vmem:[#allocation6 + $0x20] sm:$0xff]
    %v5169 = vld [vmem:[#allocation6 + $0x28] sm:$0xff]
    %v5170 = vld [vmem:[#allocation6 + $0x30] sm:$0xff]
    %v5171 = vld [vmem:[#allocation6 + $0x38] sm:$0xff]
    %v5172 = vld [vmem:[#allocation6 + $0x40] sm:$0xff]
    %v5173 = vld [vmem:[#allocation6 + $0x48] sm:$0xff]
    %v5174 = vld [vmem:[#allocation6 + $0x50] sm:$0xff]
    %v5175 = vld [vmem:[#allocation6 + $0x58] sm:$0xff]
    %v5176 = vld [vmem:[#allocation6 + $0x60] sm:$0xff]
    %v5177 = vld [vmem:[#allocation6 + $0x68] sm:$0xff]
    %v5178 = vld [vmem:[#allocation6 + $0x70] sm:$0xff]
    %v5179 = vld [vmem:[#allocation6 + $0x78] sm:$0xff]
    %v5180 = vld [vmem:[#allocation6 + $0x80] sm:$0xff]
    %v5181 = vld [vmem:[#allocation6 + $0x88] sm:$0xff]
    %v5184 = vsel %vm410, %v5160, %v5153
    %v5185 = vsel %vm87, %v5184, 0
    %5187 = vmatprep.subr.mxu0 %v5177
    %5188 = vmatpush1.msra.mxu0 %v5176
    %5189 = vmatprep.subr.mxu0 %v5180
    %5190 = vmatpush1.msra.mxu0 %v5179
    %5191 = vmatprep.subr.mxu0 0.0
    %5192 = vmatpush1.msra.mxu0 0.0
    %5193 = vmatprep.subr.mxu0 0.0
    %5194 = vmatpush1.msra.mxu0 0.0
    %5195 = vmatprep.subr.mxu0 0.0
    %5196 = vmatpush1.msra.mxu0 0.0
    %5197 = vmatprep.subr.mxu0 0.0
    %5198 = vmatpush1.msra.mxu0 0.0
    %5199 = vmatprep.subr.mxu0 0.0
    %5200 = vmatpush1.msra.mxu0 0.0
    %5201 = vmatprep.subr.mxu0 0.0
    %5202 = vmatpush1.msra.mxu0 0.0
    %5203 = vmatprep.subr.mxu0 0.0
    %5204 = vmatpush1.msra.mxu0 0.0
    %5205 = vmatprep.subr.mxu0 0.0
    %5206 = vmatpush1.msra.mxu0 0.0
    %5207 = vmatprep.subr.mxu0 0.0
    %5208 = vmatpush1.msra.mxu0 0.0
    %5209 = vmatprep.subr.mxu0 0.0
    %5210 = vmatpush1.msra.mxu0 0.0
    %5211 = vmatprep.subr.mxu0 0.0
    %5212 = vmatpush1.msra.mxu0 0.0
    %5213 = vmatprep.subr.mxu0 0.0
    %5214 = vmatpush1.msra.mxu0 0.0
    %5215 = vmatprep.subr.mxu0 0.0
    %5216 = vmatpush1.msra.mxu0 0.0
    %5217 = vmatprep.subr.mxu0 0.0
    %5218 = vmatpush1.msra.mxu0 0.0
    %5219 = vmatprep.subr.mxu0 0.0
    %5220 = vmatpush1.msra.mxu0 0.0
    %5221 = vmatprep.subr.mxu0 0.0
    %5222 = vmatpush1.msra.mxu0 0.0
    %5223 = vmatprep.subr.mxu0 0.0
    %5224 = vmatpush1.msra.mxu0 0.0
    %5225 = vmatprep.subr.mxu0 0.0
    %5226 = vmatpush1.msra.mxu0 0.0
    %5227 = vmatprep.subr.mxu0 0.0
    %5228 = vmatpush1.msra.mxu0 0.0
    %5229 = vmatprep.subr.mxu0 0.0
    %5230 = vmatpush1.msra.mxu0 0.0
    %5231 = vmatprep.subr.mxu0 0.0
    %5232 = vmatpush1.msra.mxu0 0.0
    %5233 = vmatprep.subr.mxu0 0.0
    %5234 = vmatpush1.msra.mxu0 0.0
    %5235 = vmatprep.subr.mxu0 0.0
    %5236 = vmatpush1.msra.mxu0 0.0
    %5237 = vmatprep.subr.mxu0 0.0
    %5238 = vmatpush1.msra.mxu0 0.0
    %5239 = vmatprep.subr.mxu0 0.0
    %5240 = vmatpush1.msra.mxu0 0.0
    %5241 = vmatprep.subr.mxu0 0.0
    %5242 = vmatpush1.msra.mxu0 0.0
    %5243 = vmatprep.subr.mxu0 0.0
    %5244 = vmatpush1.msra.mxu0 0.0
    %5245 = vmatprep.subr.mxu0 0.0
    %5246 = vmatpush1.msra.mxu0 0.0
    %5247 = vmatprep.subr.mxu0 0.0
    %5248 = vmatpush1.msra.mxu0 0.0
    %5249 = vmatprep.subr.mxu0 0.0
    %5250 = vmatpush1.msra.mxu0 0.0
    %5251 = vmatprep.mubr.f32.mxu0 0.0
    %5252 = vmatmul.mubr.f32.gmra.mrb[0].mxu0 %v5185
    %v5253 = vpop.f32.mrb[0].mxu0
    %v5254 = vadd.f32 0.0, %v5253
    %v5255 = vpop.f32.mrb[0].mxu0
    %v5256 = vadd.f32 0.0, %v5255
    %5257 = vdwg.mxu0
    %5258 = vmatprep.subr.mxu0 0.0
    %5259 = vmatpush1.msra.mxu0 %v5178
    %5260 = vmatprep.subr.mxu0 0.0
    %5261 = vmatpush1.msra.mxu0 %v5181
    %5262 = vmatprep.subr.mxu0 0.0
    %5263 = vmatpush1.msra.mxu0 0.0
    %5264 = vmatprep.subr.mxu0 0.0
    %5265 = vmatpush1.msra.mxu0 0.0
    %5266 = vmatprep.subr.mxu0 0.0
    %5267 = vmatpush1.msra.mxu0 0.0
    %5268 = vmatprep.subr.mxu0 0.0
    %5269 = vmatpush1.msra.mxu0 0.0
    %5270 = vmatprep.subr.mxu0 0.0
    %5271 = vmatpush1.msra.mxu0 0.0
    %5272 = vmatprep.subr.mxu0 0.0
    %5273 = vmatpush1.msra.mxu0 0.0
    %5274 = vmatprep.subr.mxu0 0.0
    %5275 = vmatpush1.msra.mxu0 0.0
    %5276 = vmatprep.subr.mxu0 0.0
    %5277 = vmatpush1.msra.mxu0 0.0
    %5278 = vmatprep.subr.mxu0 0.0
    %5279 = vmatpush1.msra.mxu0 0.0
    %5280 = vmatprep.subr.mxu0 0.0
    %5281 = vmatpush1.msra.mxu0 0.0
    %5282 = vmatprep.subr.mxu0 0.0
    %5283 = vmatpush1.msra.mxu0 0.0
    %5284 = vmatprep.subr.mxu0 0.0
    %5285 = vmatpush1.msra.mxu0 0.0
    %5286 = vmatprep.subr.mxu0 0.0
    %5287 = vmatpush1.msra.mxu0 0.0
    %5288 = vmatprep.subr.mxu0 0.0
    %5289 = vmatpush1.msra.mxu0 0.0
    %5290 = vmatprep.subr.mxu0 0.0
    %5291 = vmatpush1.msra.mxu0 0.0
    %5292 = vmatprep.subr.mxu0 0.0
    %5293 = vmatpush1.msra.mxu0 0.0
    %5294 = vmatprep.subr.mxu0 0.0
    %5295 = vmatpush1.msra.mxu0 0.0
    %5296 = vmatprep.subr.mxu0 0.0
    %5297 = vmatpush1.msra.mxu0 0.0
    %5298 = vmatprep.subr.mxu0 0.0
    %5299 = vmatpush1.msra.mxu0 0.0
    %5300 = vmatprep.subr.mxu0 0.0
    %5301 = vmatpush1.msra.mxu0 0.0
    %5302 = vmatprep.subr.mxu0 0.0
    %5303 = vmatpush1.msra.mxu0 0.0
    %5304 = vmatprep.subr.mxu0 0.0
    %5305 = vmatpush1.msra.mxu0 0.0
    %5306 = vmatprep.subr.mxu0 0.0
    %5307 = vmatpush1.msra.mxu0 0.0
    %5308 = vmatprep.subr.mxu0 0.0
    %5309 = vmatpush1.msra.mxu0 0.0
    %5310 = vmatprep.subr.mxu0 0.0
    %5311 = vmatpush1.msra.mxu0 0.0
    %5312 = vmatprep.subr.mxu0 0.0
    %5313 = vmatpush1.msra.mxu0 0.0
    %5314 = vmatprep.subr.mxu0 0.0
    %5315 = vmatpush1.msra.mxu0 0.0
    %5316 = vmatprep.subr.mxu0 0.0
    %5317 = vmatpush1.msra.mxu0 0.0
    %5318 = vmatprep.subr.mxu0 0.0
    %5319 = vmatpush1.msra.mxu0 0.0
    %5320 = vmatprep.subr.mxu0 0.0
    %5321 = vmatpush1.msra.mxu0 0.0
    %5322 = vmatprep.mubr.f32.mxu0 0.0
    %5323 = vmatmul.mubr.f32.gmra.mrb[0].mxu0 %v5185
    %v5324 = vpop.f32.mrb[0].mxu0
    %v5325 = vadd.f32 0.0, %v5324
    %v5326 = vpop.f32.mrb[0].mxu0
    %5327 = vdwg.mxu0
    %v5329 = vsel %vm204, %v5163, 0
    %5331 = vmatprep.subr.mxu0 %v5165
    %5332 = vmatpush1.msra.mxu0 %v5164
    %5333 = vmatprep.subr.mxu0 %v5168
    %5334 = vmatpush1.msra.mxu0 %v5167
    %5335 = vmatprep.subr.mxu0 %v5171
    %5336 = vmatpush1.msra.mxu0 %v5170
    %5337 = vmatprep.subr.mxu0 %v5174
    %5338 = vmatpush1.msra.mxu0 %v5173
    %5339 = vmatprep.subr.mxu0 0.0
    %5340 = vmatpush1.msra.mxu0 0.0
    %5341 = vmatprep.subr.mxu0 0.0
    %5342 = vmatpush1.msra.mxu0 0.0
    %5343 = vmatprep.subr.mxu0 0.0
    %5344 = vmatpush1.msra.mxu0 0.0
    %5345 = vmatprep.subr.mxu0 0.0
    %5346 = vmatpush1.msra.mxu0 0.0
    %5347 = vmatprep.subr.mxu0 0.0
    %5348 = vmatpush1.msra.mxu0 0.0
    %5349 = vmatprep.subr.mxu0 0.0
    %5350 = vmatpush1.msra.mxu0 0.0
    %5351 = vmatprep.subr.mxu0 0.0
    %5352 = vmatpush1.msra.mxu0 0.0
    %5353 = vmatprep.subr.mxu0 0.0
    %5354 = vmatpush1.msra.mxu0 0.0
    %5355 = vmatprep.subr.mxu0 0.0
    %5356 = vmatpush1.msra.mxu0 0.0
    %5357 = vmatprep.subr.mxu0 0.0
    %5358 = vmatpush1.msra.mxu0 0.0
    %5359 = vmatprep.subr.mxu0 0.0
    %5360 = vmatpush1.msra.mxu0 0.0
    %5361 = vmatprep.subr.mxu0 0.0
    %5362 = vmatpush1.msra.mxu0 0.0
    %5363 = vmatprep.subr.mxu0 0.0
    %5364 = vmatpush1.msra.mxu0 0.0
    %5365 = vmatprep.subr.mxu0 0.0
    %5366 = vmatpush1.msra.mxu0 0.0
    %5367 = vmatprep.subr.mxu0 0.0
    %5368 = vmatpush1.msra.mxu0 0.0
    %5369 = vmatprep.subr.mxu0 0.0
    %5370 = vmatpush1.msra.mxu0 0.0
    %5371 = vmatprep.subr.mxu0 0.0
    %5372 = vmatpush1.msra.mxu0 0.0
    %5373 = vmatprep.subr.mxu0 0.0
    %5374 = vmatpush1.msra.mxu0 0.0
    %5375 = vmatprep.subr.mxu0 0.0
    %5376 = vmatpush1.msra.mxu0 0.0
    %5377 = vmatprep.subr.mxu0 0.0
    %5378 = vmatpush1.msra.mxu0 0.0
    %5379 = vmatprep.subr.mxu0 0.0
    %5380 = vmatpush1.msra.mxu0 0.0
    %5381 = vmatprep.subr.mxu0 0.0
    %5382 = vmatpush1.msra.mxu0 0.0
    %5383 = vmatprep.subr.mxu0 0.0
    %5384 = vmatpush1.msra.mxu0 0.0
    %5385 = vmatprep.subr.mxu0 0.0
    %5386 = vmatpush1.msra.mxu0 0.0
    %5387 = vmatprep.subr.mxu0 0.0
    %5388 = vmatpush1.msra.mxu0 0.0
    %5389 = vmatprep.subr.mxu0 0.0
    %5390 = vmatpush1.msra.mxu0 0.0
    %5391 = vmatprep.subr.mxu0 0.0
    %5392 = vmatpush1.msra.mxu0 0.0
    %5393 = vmatprep.subr.mxu0 0.0
    %5394 = vmatpush1.msra.mxu0 0.0
    %5395 = vmatprep.mubr.f32.mxu0 0.0
    %5396 = vmatmul.mubr.f32.gmra.mrb[0].mxu0 %v5329
    %v5397 = vpop.f32.mrb[0].mxu0
    %v5398 = vadd.f32 %v5254, %v5397
    %v5399 = vpop.f32.mrb[0].mxu0
    %v5400 = vadd.f32 %v5256, %v5399
    %5401 = vdwg.mxu0
    %5402 = vmatprep.subr.mxu0 0.0
    %5403 = vmatpush1.msra.mxu0 %v5166
    %5404 = vmatprep.subr.mxu0 0.0
    %5405 = vmatpush1.msra.mxu0 %v5169
    %5406 = vmatprep.subr.mxu0 0.0
    %5407 = vmatpush1.msra.mxu0 %v5172
    %5408 = vmatprep.subr.mxu0 0.0
    %5409 = vmatpush1.msra.mxu0 %v5175
    %5410 = vmatprep.subr.mxu0 0.0
    %5411 = vmatpush1.msra.mxu0 0.0
    %5412 = vmatprep.subr.mxu0 0.0
    %5413 = vmatpush1.msra.mxu0 0.0
    %5414 = vmatprep.subr.mxu0 0.0
    %5415 = vmatpush1.msra.mxu0 0.0
    %5416 = vmatprep.subr.mxu0 0.0
    %5417 = vmatpush1.msra.mxu0 0.0
    %5418 = vmatprep.subr.mxu0 0.0
    %5419 = vmatpush1.msra.mxu0 0.0
    %5420 = vmatprep.subr.mxu0 0.0
    %5421 = vmatpush1.msra.mxu0 0.0
    %5422 = vmatprep.subr.mxu0 0.0
    %5423 = vmatpush1.msra.mxu0 0.0
    %5424 = vmatprep.subr.mxu0 0.0
    %5425 = vmatpush1.msra.mxu0 0.0
    %5426 = vmatprep.subr.mxu0 0.0
    %5427 = vmatpush1.msra.mxu0 0.0
    %5428 = vmatprep.subr.mxu0 0.0
    %5429 = vmatpush1.msra.mxu0 0.0
    %5430 = vmatprep.subr.mxu0 0.0
    %5431 = vmatpush1.msra.mxu0 0.0
    %5432 = vmatprep.subr.mxu0 0.0
    %5433 = vmatpush1.msra.mxu0 0.0
    %5434 = vmatprep.subr.mxu0 0.0
    %5435 = vmatpush1.msra.mxu0 0.0
    %5436 = vmatprep.subr.mxu0 0.0
    %5437 = vmatpush1.msra.mxu0 0.0
    %5438 = vmatprep.subr.mxu0 0.0
    %5439 = vmatpush1.msra.mxu0 0.0
    %5440 = vmatprep.subr.mxu0 0.0
    %5441 = vmatpush1.msra.mxu0 0.0
    %5442 = vmatprep.subr.mxu0 0.0
    %5443 = vmatpush1.msra.mxu0 0.0
    %5444 = vmatprep.subr.mxu0 0.0
    %5445 = vmatpush1.msra.mxu0 0.0
    %5446 = vmatprep.subr.mxu0 0.0
    %5447 = vmatpush1.msra.mxu0 0.0
    %5448 = vmatprep.subr.mxu0 0.0
    %5449 = vmatpush1.msra.mxu0 0.0
    %5450 = vmatprep.subr.mxu0 0.0
    %5451 = vmatpush1.msra.mxu0 0.0
    %5452 = vmatprep.subr.mxu0 0.0
    %5453 = vmatpush1.msra.mxu0 0.0
    %5454 = vmatprep.subr.mxu0 0.0
    %5455 = vmatpush1.msra.mxu0 0.0
    %5456 = vmatprep.subr.mxu0 0.0
    %5457 = vmatpush1.msra.mxu0 0.0
    %5458 = vmatprep.subr.mxu0 0.0
    %5459 = vmatpush1.msra.mxu0 0.0
    %5460 = vmatprep.subr.mxu0 0.0
    %5461 = vmatpush1.msra.mxu0 0.0
    %5462 = vmatprep.subr.mxu0 0.0
    %5463 = vmatpush1.msra.mxu0 0.0
    %5464 = vmatprep.subr.mxu0 0.0
    %5465 = vmatpush1.msra.mxu0 0.0
    %5466 = vmatprep.mubr.f32.mxu0 0.0
    %5467 = vmatmul.mubr.f32.gmra.mrb[0].mxu0 %v5329
    %v5468 = vpop.f32.mrb[0].mxu0
    %v5469 = vadd.f32 %v5325, %v5468
    %v5470 = vpop.f32.mrb[0].mxu0
    %5471 = vdwg.mxu0
    %v5472 = vld [vmem:[%s808] ss:$8 sm:$0x7]
    %v5474 = vlaneseq
    %v5475 = vshrl.u32 %v5474, 7
    %v5476 = vsub.s32 0, %v5475
    %v5477 = vrot.slane %v5472, %v5476
    %v5478 = vlaneseq
    %v5479 = vshrl.u32 %v5478, 7
    %v5480 = vsub.s32 1, %v5479
    %v5481 = vrot.slane %v5472, %v5480
    %v5482 = vlaneseq
    %v5483 = vshrl.u32 %v5482, 7
    %v5484 = vsub.s32 2, %v5483
    %v5485 = vrot.slane %v5472, %v5484
    %v5489 = vadd.f32 %v5398, %v5477
    %v5490 = vadd.f32 %v5400, %v5481
    %v5491 = vadd.f32 %v5469, %v5485
    %v5492 = vadd.f32 %v5489, %v4949
    %v5493 = vsub.f32 0.0, %v5492
    %v5494 = vmul.f32 %v5493, 1.442695
    %v5495 = vpow.pop %v5494
    %v5496 = vadd.f32 %v5495, 1.0
    %v5497 = vrcp.pop %v5496
    %v5498 = vmul.f32 1.0, %v5497
    %v5499 = vadd.f32 %v5490, %v5018
    %v5500 = vsub.f32 0.0, %v5499
    %v5501 = vmul.f32 %v5500, 1.442695
    %v5502 = vpow.pop %v5501
    %v5503 = vadd.f32 %v5502, 1.0
    %v5504 = vrcp.pop %v5503
    %v5505 = vmul.f32 1.0, %v5504
    %v5506 = vmul.f32 %v5498, %v5020
    %v5507 = vadd.f32 %v5491, %v5506
    %v5508 = vtanh.pop %v5507
    %v5509 = vsub.f32 1.0, %v5505
    %v5510 = vmul.f32 %v5509, %v5508
    %v5511 = vmul.f32 %v5505, %v4735
    %v5512 = vadd.f32 %v5510, %v5511
    %v5513 = vld [vmem:[#allocation11 + $0x18] sm:$0xff]
    %v5514 = vld [vmem:[#allocation11 + $0x20] sm:$0xff]
    %v5515 = vld [vmem:[#allocation11 + $0x28] sm:$0xff]
    %v5516 = vld [vmem:[#allocation11 + $0x30] sm:$0xff]
    %v5517 = vld [vmem:[#allocation11 + $0x38] sm:$0x1]
    %v5518 = vlaneseq
    %v5519 = vshrl.u32 %v5518, 7
    %v5520 = vsub.s32 0, %v5519
    %v5521 = vrot.slane %v5517, %v5520
    %v5523 = vsel %vm204, %v5512, 0
    %5525 = vmatprep.subr.mxu0 0.0
    %5526 = vmatpush1.msra.mxu0 %v5513
    %5527 = vmatprep.subr.mxu0 0.0
    %5528 = vmatpush1.msra.mxu0 %v5514
    %5529 = vmatprep.subr.mxu0 0.0
    %5530 = vmatpush1.msra.mxu0 %v5515
    %5531 = vmatprep.subr.mxu0 0.0
    %5532 = vmatpush1.msra.mxu0 %v5516
    %5533 = vmatprep.subr.mxu0 0.0
    %5534 = vmatpush1.msra.mxu0 0.0
    %5535 = vmatprep.subr.mxu0 0.0
    %5536 = vmatpush1.msra.mxu0 0.0
    %5537 = vmatprep.subr.mxu0 0.0
    %5538 = vmatpush1.msra.mxu0 0.0
    %5539 = vmatprep.subr.mxu0 0.0
    %5540 = vmatpush1.msra.mxu0 0.0
    %5541 = vmatprep.subr.mxu0 0.0
    %5542 = vmatpush1.msra.mxu0 0.0
    %5543 = vmatprep.subr.mxu0 0.0
    %5544 = vmatpush1.msra.mxu0 0.0
    %5545 = vmatprep.subr.mxu0 0.0
    %5546 = vmatpush1.msra.mxu0 0.0
    %5547 = vmatprep.subr.mxu0 0.0
    %5548 = vmatpush1.msra.mxu0 0.0
    %5549 = vmatprep.subr.mxu0 0.0
    %5550 = vmatpush1.msra.mxu0 0.0
    %5551 = vmatprep.subr.mxu0 0.0
    %5552 = vmatpush1.msra.mxu0 0.0
    %5553 = vmatprep.subr.mxu0 0.0
    %5554 = vmatpush1.msra.mxu0 0.0
    %5555 = vmatprep.subr.mxu0 0.0
    %5556 = vmatpush1.msra.mxu0 0.0
    %5557 = vmatprep.subr.mxu0 0.0
    %5558 = vmatpush1.msra.mxu0 0.0
    %5559 = vmatprep.subr.mxu0 0.0
    %5560 = vmatpush1.msra.mxu0 0.0
    %5561 = vmatprep.subr.mxu0 0.0
    %5562 = vmatpush1.msra.mxu0 0.0
    %5563 = vmatprep.subr.mxu0 0.0
    %5564 = vmatpush1.msra.mxu0 0.0
    %5565 = vmatprep.subr.mxu0 0.0
    %5566 = vmatpush1.msra.mxu0 0.0
    %5567 = vmatprep.subr.mxu0 0.0
    %5568 = vmatpush1.msra.mxu0 0.0
    %5569 = vmatprep.subr.mxu0 0.0
    %5570 = vmatpush1.msra.mxu0 0.0
    %5571 = vmatprep.subr.mxu0 0.0
    %5572 = vmatpush1.msra.mxu0 0.0
    %5573 = vmatprep.subr.mxu0 0.0
    %5574 = vmatpush1.msra.mxu0 0.0
    %5575 = vmatprep.subr.mxu0 0.0
    %5576 = vmatpush1.msra.mxu0 0.0
    %5577 = vmatprep.subr.mxu0 0.0
    %5578 = vmatpush1.msra.mxu0 0.0
    %5579 = vmatprep.subr.mxu0 0.0
    %5580 = vmatpush1.msra.mxu0 0.0
    %5581 = vmatprep.subr.mxu0 0.0
    %5582 = vmatpush1.msra.mxu0 0.0
    %5583 = vmatprep.subr.mxu0 0.0
    %5584 = vmatpush1.msra.mxu0 0.0
    %5585 = vmatprep.subr.mxu0 0.0
    %5586 = vmatpush1.msra.mxu0 0.0
    %5587 = vmatprep.subr.mxu0 0.0
    %5588 = vmatpush1.msra.mxu0 0.0
    %5589 = vmatprep.mubr.f32.mxu0 0.0
    %5590 = vmatmul.mubr.f32.gmra.mrb[0].mxu0 %v5523
    %v5591 = vpop.f32.mrb[0].mxu0
    %v5592 = vadd.f32 %v5521, %v5591
    %v5593 = vpop.f32.mrb[0].mxu0
    %5594 = vdwg.mxu0
    %s5595 = scalar_lea.vmem [#allocation12], 14
    %5596 = vst [vmem:[%s5595] sm:$0x3] %v5592
    %s5597 = scalar_lea.vmem [#allocation2], 14
    %5598 = vst.msk [vmem:[%s5597] sm:$0x3] %vm77, %v5512
    %v5599 = vld [vmem:[%s1] sm:$0x3]
    %v5600 = vld [vmem:[%s1 + $0x2] sm:$0x3]
    %v5601 = vld [vmem:[%s1 + $0x4] sm:$0x3]
    %v5602 = vld [vmem:[%s1 + $0x6] sm:$0x3]
    %v5603 = vld [vmem:[%s1 + $0x8] sm:$0x3]
    %v5604 = vld [vmem:[%s1 + $0xa] sm:$0x3]
    %v5605 = vld [vmem:[%s1 + $0xc] sm:$0x3]
    %v5606 = vld [vmem:[%s1 + $0xe] sm:$0x3]
    %vm5607 = vcmp.ne.s32.totalorder %v5599, 0
    %vm5608 = vcmp.ne.s32.totalorder %v5600, 0
    %vm5609 = vcmp.ne.s32.totalorder %v5601, 0
    %vm5610 = vcmp.ne.s32.totalorder %v5602, 0
    %vm5611 = vcmp.ne.s32.totalorder %v5603, 0
    %vm5612 = vcmp.ne.s32.totalorder %v5604, 0
    %vm5613 = vcmp.ne.s32.totalorder %v5605, 0
    %vm5614 = vcmp.ne.s32.totalorder %v5606, 0
    %v5615 = vsel %vm5607, 1, 0
    %v5616 = vsel %vm5608, 1, 0
    %v5617 = vsel %vm5609, 1, 0
    %v5618 = vsel %vm5610, 1, 0
    %v5619 = vsel %vm5611, 1, 0
    %v5620 = vsel %vm5612, 1, 0
    %v5621 = vsel %vm5613, 1, 0
    %v5622 = vsel %vm5614, 1, 0
    %v5623 = vcvt.s32.f32 %v5615
    %v5624 = vcvt.s32.f32 %v5616
    %v5625 = vcvt.s32.f32 %v5617
    %v5626 = vcvt.s32.f32 %v5618
    %v5627 = vcvt.s32.f32 %v5619
    %v5628 = vcvt.s32.f32 %v5620
    %v5629 = vcvt.s32.f32 %v5621
    %v5630 = vcvt.s32.f32 %v5622
    %v5631 = vld [vmem:[#allocation2] sm:$0x3]
    %v5632 = vld [vmem:[#allocation2 + $0x2] sm:$0x3]
    %v5633 = vld [vmem:[#allocation2 + $0x4] sm:$0x3]
    %v5634 = vld [vmem:[#allocation2 + $0x6] sm:$0x3]
    %v5635 = vld [vmem:[#allocation2 + $0x8] sm:$0x3]
    %v5636 = vld [vmem:[#allocation2 + $0xa] sm:$0x3]
    %v5637 = vld [vmem:[#allocation2 + $0xc] sm:$0x3]
    %v5638 = vld [vmem:[#allocation2 + $0xe] sm:$0x3]
    %5640 = vset.pattern.permute.xlu0 0
    %5641 = vperm.xlu0 %5640, %v5623
    %v5642 = vpop.permute.xlu0 %5641
    %5645 = vset.pattern.permute.xlu0 0
    %5646 = vperm.xlu0 %5645, %v5624
    %v5647 = vpop.permute.xlu0 %5646
    %5650 = vset.pattern.permute.xlu0 0
    %5651 = vperm.xlu0 %5650, %v5625
    %v5652 = vpop.permute.xlu0 %5651
    %5655 = vset.pattern.permute.xlu0 0
    %5656 = vperm.xlu0 %5655, %v5626
    %v5657 = vpop.permute.xlu0 %5656
    %5660 = vset.pattern.permute.xlu0 0
    %5661 = vperm.xlu0 %5660, %v5627
    %v5662 = vpop.permute.xlu0 %5661
    %5665 = vset.pattern.permute.xlu0 0
    %5666 = vperm.xlu0 %5665, %v5628
    %v5667 = vpop.permute.xlu0 %5666
    %5670 = vset.pattern.permute.xlu0 0
    %5671 = vperm.xlu0 %5670, %v5629
    %v5672 = vpop.permute.xlu0 %5671
    %5675 = vset.pattern.permute.xlu0 0
    %5676 = vperm.xlu0 %5675, %v5630
    %v5677 = vpop.permute.xlu0 %5676
    %v5679 = vmul.f32 %v5631, %v5642
    %v5680 = vmul.f32 %v5632, %v5647
    %v5681 = vmul.f32 %v5633, %v5652
    %v5682 = vmul.f32 %v5634, %v5657
    %v5683 = vmul.f32 %v5635, %v5662
    %v5684 = vmul.f32 %v5636, %v5667
    %v5685 = vmul.f32 %v5637, %v5672
    %v5686 = vmul.f32 %v5638, %v5677
    %v5687 = vsel %vm77, %v5679, 0.0
    %v5688 = vsel %vm77, %v5680, 0.0
    %v5689 = vadd.f32 %v5687, %v5688
    %v5690 = vsel %vm77, %v5681, 0.0
    %v5691 = vadd.f32 %v5689, %v5690
    %v5692 = vsel %vm77, %v5682, 0.0
    %v5693 = vadd.f32 %v5691, %v5692
    %v5694 = vsel %vm77, %v5683, 0.0
    %v5695 = vadd.f32 %v5693, %v5694
    %v5696 = vsel %vm77, %v5684, 0.0
    %v5697 = vadd.f32 %v5695, %v5696
    %v5698 = vsel %vm77, %v5685, 0.0
    %v5699 = vadd.f32 %v5697, %v5698
    %v5700 = vsel %vm77, %v5686, 0.0
    %v5701 = vadd.f32 %v5699, %v5700
    %vm5702 = vcmask 1024
    %v5703 = vsel %vm5702, %v5623, 0.0
    %v5704 = vsel %vm5702, %v5624, 0.0
    %v5705 = vadd.f32 %v5703, %v5704
    %v5706 = vsel %vm5702, %v5625, 0.0
    %v5707 = vadd.f32 %v5705, %v5706
    %v5708 = vsel %vm5702, %v5626, 0.0
    %v5709 = vadd.f32 %v5707, %v5708
    %v5710 = vsel %vm5702, %v5627, 0.0
    %v5711 = vadd.f32 %v5709, %v5710
    %v5712 = vsel %vm5702, %v5628, 0.0
    %v5713 = vadd.f32 %v5711, %v5712
    %v5714 = vsel %vm5702, %v5629, 0.0
    %v5715 = vadd.f32 %v5713, %v5714
    %v5716 = vsel %vm5702, %v5630, 0.0
    %v5717 = vadd.f32 %v5715, %v5716
    %v5718 = vmax.f32 %v5717, 1.0
    %5720 = vset.pattern.permute.xlu0 0
    %5721 = vperm.xlu0 %5720, %v5718
    %v5722 = vpop.permute.xlu0 %5721
    %v5724 = vrcp.pop %v5722
    %v5725 = vmul.f32 %v5701, %v5724
    %s5726 = smul.u32 8, 14
    %s5727 = smul.u32 %s5726, 3
    %s5728 = sshll.u32 %s5727, 4
    %5729 = dma.done [#allocation5], %s5728
    %s5730 = scalar_lea.vmem [#allocation4], 288
    %v5731 = vld [vmem:[%s5730] ss:$8 sm:$0x7]
    %s5732 = scalar_lea.vmem [#allocation4], 312
    %v5733 = vld [vmem:[%s5732] ss:$8 sm:$0x7]
    %v5734 = vld [vmem:[#allocation4 + $0x60] sm:$0xff]
    %v5735 = vld [vmem:[#allocation4 + $0x68] sm:$0xff]
    %v5736 = vld [vmem:[#allocation4 + $0x70] sm:$0xff]
    %v5737 = vld [vmem:[#allocation4 + $0x78] sm:$0xff]
    %v5738 = vld [vmem:[#allocation4 + $0x80] sm:$0xff]
    %v5739 = vld [vmem:[#allocation4 + $0x88] sm:$0xff]
    %v5740 = vld [vmem:[#allocation4 + $0x90] sm:$0xff]
    %v5741 = vld [vmem:[#allocation4 + $0x98] sm:$0xff]
    %v5742 = vld [vmem:[#allocation4 + $0xa0] sm:$0xff]
    %v5743 = vld [vmem:[#allocation4 + $0xa8] sm:$0xff]
    %v5744 = vld [vmem:[#allocation4 + $0xb0] sm:$0xff]
    %v5745 = vld [vmem:[#allocation4 + $0xb8] sm:$0xff]
    %v5747 = vlaneseq
    %v5748 = vshrl.u32 %v5747, 7
    %v5749 = vsub.s32 0, %v5748
    %v5750 = vrot.slane %v5731, %v5749
    %v5751 = vlaneseq
    %v5752 = vshrl.u32 %v5751, 7
    %v5753 = vsub.s32 1, %v5752
    %v5754 = vrot.slane %v5731, %v5753
    %v5755 = vlaneseq
    %v5756 = vshrl.u32 %v5755, 7
    %v5757 = vsub.s32 2, %v5756
    %v5758 = vrot.slane %v5731, %v5757
    %v5763 = vsel %vm204, %v5725, 0
    %5765 = vmatprep.subr.mxu0 %v5735
    %5766 = vmatpush1.msra.mxu0 %v5734
    %5767 = vmatprep.subr.mxu0 %v5738
    %5768 = vmatpush1.msra.mxu0 %v5737
    %5769 = vmatprep.subr.mxu0 %v5741
    %5770 = vmatpush1.msra.mxu0 %v5740
    %5771 = vmatprep.subr.mxu0 %v5744
    %5772 = vmatpush1.msra.mxu0 %v5743
    %5773 = vmatprep.subr.mxu0 0.0
    %5774 = vmatpush1.msra.mxu0 0.0
    %5775 = vmatprep.subr.mxu0 0.0
    %5776 = vmatpush1.msra.mxu0 0.0
    %5777 = vmatprep.subr.mxu0 0.0
    %5778 = vmatpush1.msra.mxu0 0.0
    %5779 = vmatprep.subr.mxu0 0.0
    %5780 = vmatpush1.msra.mxu0 0.0
    %5781 = vmatprep.subr.mxu0 0.0
    %5782 = vmatpush1.msra.mxu0 0.0
    %5783 = vmatprep.subr.mxu0 0.0
    %5784 = vmatpush1.msra.mxu0 0.0
    %5785 = vmatprep.subr.mxu0 0.0
    %5786 = vmatpush1.msra.mxu0 0.0
    %5787 = vmatprep.subr.mxu0 0.0
    %5788 = vmatpush1.msra.mxu0 0.0
    %5789 = vmatprep.subr.mxu0 0.0
    %5790 = vmatpush1.msra.mxu0 0.0
    %5791 = vmatprep.subr.mxu0 0.0
    %5792 = vmatpush1.msra.mxu0 0.0
    %5793 = vmatprep.subr.mxu0 0.0
    %5794 = vmatpush1.msra.mxu0 0.0
    %5795 = vmatprep.subr.mxu0 0.0
    %5796 = vmatpush1.msra.mxu0 0.0
    %5797 = vmatprep.subr.mxu0 0.0
    %5798 = vmatpush1.msra.mxu0 0.0
    %5799 = vmatprep.subr.mxu0 0.0
    %5800 = vmatpush1.msra.mxu0 0.0
    %5801 = vmatprep.subr.mxu0 0.0
    %5802 = vmatpush1.msra.mxu0 0.0
    %5803 = vmatprep.subr.mxu0 0.0
    %5804 = vmatpush1.msra.mxu0 0.0
    %5805 = vmatprep.subr.mxu0 0.0
    %5806 = vmatpush1.msra.mxu0 0.0
    %5807 = vmatprep.subr.mxu0 0.0
    %5808 = vmatpush1.msra.mxu0 0.0
    %5809 = vmatprep.subr.mxu0 0.0
    %5810 = vmatpush1.msra.mxu0 0.0
    %5811 = vmatprep.subr.mxu0 0.0
    %5812 = vmatpush1.msra.mxu0 0.0
    %5813 = vmatprep.subr.mxu0 0.0
    %5814 = vmatpush1.msra.mxu0 0.0
    %5815 = vmatprep.subr.mxu0 0.0
    %5816 = vmatpush1.msra.mxu0 0.0
    %5817 = vmatprep.subr.mxu0 0.0
    %5818 = vmatpush1.msra.mxu0 0.0
    %5819 = vmatprep.subr.mxu0 0.0
    %5820 = vmatpush1.msra.mxu0 0.0
    %5821 = vmatprep.subr.mxu0 0.0
    %5822 = vmatpush1.msra.mxu0 0.0
    %5823 = vmatprep.subr.mxu0 0.0
    %5824 = vmatpush1.msra.mxu0 0.0
    %5825 = vmatprep.subr.mxu0 0.0
    %5826 = vmatpush1.msra.mxu0 0.0
    %5827 = vmatprep.subr.mxu0 0.0
    %5828 = vmatpush1.msra.mxu0 0.0
    %5829 = vmatprep.mubr.f32.mxu0 0.0
    %5830 = vmatmul.mubr.f32.gmra.mrb[0].mxu0 %v5763
    %v5831 = vpop.f32.mrb[0].mxu0
    %v5832 = vadd.f32 %v5750, %v5831
    %v5833 = vpop.f32.mrb[0].mxu0
    %v5834 = vadd.f32 %v5754, %v5833
    %5835 = vdwg.mxu0
    %5836 = vmatprep.subr.mxu0 0.0
    %5837 = vmatpush1.msra.mxu0 %v5736
    %5838 = vmatprep.subr.mxu0 0.0
    %5839 = vmatpush1.msra.mxu0 %v5739
    %5840 = vmatprep.subr.mxu0 0.0
    %5841 = vmatpush1.msra.mxu0 %v5742
    %5842 = vmatprep.subr.mxu0 0.0
    %5843 = vmatpush1.msra.mxu0 %v5745
    %5844 = vmatprep.subr.mxu0 0.0
    %5845 = vmatpush1.msra.mxu0 0.0
    %5846 = vmatprep.subr.mxu0 0.0
    %5847 = vmatpush1.msra.mxu0 0.0
    %5848 = vmatprep.subr.mxu0 0.0
    %5849 = vmatpush1.msra.mxu0 0.0
    %5850 = vmatprep.subr.mxu0 0.0
    %5851 = vmatpush1.msra.mxu0 0.0
    %5852 = vmatprep.subr.mxu0 0.0
    %5853 = vmatpush1.msra.mxu0 0.0
    %5854 = vmatprep.subr.mxu0 0.0
    %5855 = vmatpush1.msra.mxu0 0.0
    %5856 = vmatprep.subr.mxu0 0.0
    %5857 = vmatpush1.msra.mxu0 0.0
    %5858 = vmatprep.subr.mxu0 0.0
    %5859 = vmatpush1.msra.mxu0 0.0
    %5860 = vmatprep.subr.mxu0 0.0
    %5861 = vmatpush1.msra.mxu0 0.0
    %5862 = vmatprep.subr.mxu0 0.0
    %5863 = vmatpush1.msra.mxu0 0.0
    %5864 = vmatprep.subr.mxu0 0.0
    %5865 = vmatpush1.msra.mxu0 0.0
    %5866 = vmatprep.subr.mxu0 0.0
    %5867 = vmatpush1.msra.mxu0 0.0
    %5868 = vmatprep.subr.mxu0 0.0
    %5869 = vmatpush1.msra.mxu0 0.0
    %5870 = vmatprep.subr.mxu0 0.0
    %5871 = vmatpush1.msra.mxu0 0.0
    %5872 = vmatprep.subr.mxu0 0.0
    %5873 = vmatpush1.msra.mxu0 0.0
    %5874 = vmatprep.subr.mxu0 0.0
    %5875 = vmatpush1.msra.mxu0 0.0
    %5876 = vmatprep.subr.mxu0 0.0
    %5877 = vmatpush1.msra.mxu0 0.0
    %5878 = vmatprep.subr.mxu0 0.0
    %5879 = vmatpush1.msra.mxu0 0.0
    %5880 = vmatprep.subr.mxu0 0.0
    %5881 = vmatpush1.msra.mxu0 0.0
    %5882 = vmatprep.subr.mxu0 0.0
    %5883 = vmatpush1.msra.mxu0 0.0
    %5884 = vmatprep.subr.mxu0 0.0
    %5885 = vmatpush1.msra.mxu0 0.0
    %5886 = vmatprep.subr.mxu0 0.0
    %5887 = vmatpush1.msra.mxu0 0.0
    %5888 = vmatprep.subr.mxu0 0.0
    %5889 = vmatpush1.msra.mxu0 0.0
    %5890 = vmatprep.subr.mxu0 0.0
    %5891 = vmatpush1.msra.mxu0 0.0
    %5892 = vmatprep.subr.mxu0 0.0
    %5893 = vmatpush1.msra.mxu0 0.0
    %5894 = vmatprep.subr.mxu0 0.0
    %5895 = vmatpush1.msra.mxu0 0.0
    %5896 = vmatprep.subr.mxu0 0.0
    %5897 = vmatpush1.msra.mxu0 0.0
    %5898 = vmatprep.subr.mxu0 0.0
    %5899 = vmatpush1.msra.mxu0 0.0
    %5900 = vmatprep.mubr.f32.mxu0 0.0
    %5901 = vmatmul.mubr.f32.gmra.mrb[0].mxu0 %v5763
    %v5902 = vpop.f32.mrb[0].mxu0
    %v5903 = vadd.f32 %v5758, %v5902
    %v5904 = vpop.f32.mrb[0].mxu0
    %5905 = vdwg.mxu0
    %v5906 = vld [vmem:[#allocation4] sm:$0xff]
    %v5907 = vld [vmem:[#allocation4 + $0x8] sm:$0xff]
    %v5908 = vld [vmem:[#allocation4 + $0x10] sm:$0xff]
    %v5909 = vld [vmem:[#allocation4 + $0x18] sm:$0xff]
    %v5910 = vld [vmem:[#allocation4 + $0x20] sm:$0xff]
    %v5911 = vld [vmem:[#allocation4 + $0x28] sm:$0xff]
    %v5912 = vld [vmem:[#allocation4 + $0x30] sm:$0xff]
    %v5913 = vld [vmem:[#allocation4 + $0x38] sm:$0xff]
    %v5914 = vld [vmem:[#allocation4 + $0x40] sm:$0xff]
    %v5915 = vld [vmem:[#allocation4 + $0x48] sm:$0xff]
    %v5916 = vld [vmem:[#allocation4 + $0x50] sm:$0xff]
    %v5917 = vld [vmem:[#allocation4 + $0x58] sm:$0xff]
    %v5926 = vcombine.low %v5679, %v5680
    %v5927 = vcombine.low %v5681, %v5682
    %v5929 = vunpack.c.l.s4 1983009808
    %v5930 = vunpack.c.0.s8 %v5929
    %v5931 = vlaneseq
    %v5932 = vshrl.u32 %v5931, 7
    %v5933 = vsub.s32 %v5930, %v5932
    %v5934 = vrot.slane %v5926, %v5933
    %v5936 = vunpack.c.l.s4 1983009808
    %v5937 = vunpack.c.0.s8 %v5936
    %v5938 = vlaneseq
    %v5939 = vshrl.u32 %v5938, 7
    %v5940 = vsub.s32 %v5937, %v5939
    %v5941 = vrot.slane %v5927, %v5940
    %v5942 = vcombine.low %v5934, %v5941
    %v5943 = vcombine.low %v5683, %v5684
    %v5944 = vcombine.low %v5685, %v5686
    %v5946 = vunpack.c.l.s4 1983009808
    %v5947 = vunpack.c.0.s8 %v5946
    %v5948 = vlaneseq
    %v5949 = vshrl.u32 %v5948, 7
    %v5950 = vsub.s32 %v5947, %v5949
    %v5951 = vrot.slane %v5943, %v5950
    %v5953 = vunpack.c.l.s4 1983009808
    %v5954 = vunpack.c.0.s8 %v5953
    %v5955 = vlaneseq
    %v5956 = vshrl.u32 %v5955, 7
    %v5957 = vsub.s32 %v5954, %v5956
    %v5958 = vrot.slane %v5944, %v5957
    %v5959 = vcombine.low %v5951, %v5958
    %v5960 = vsel %vm204, %v5942, 0
    %v5962 = vsel %vm204, %v5959, 0
    %5964 = vmatprep.subr.mxu0 %v5907
    %5965 = vmatpush1.msra.mxu0 %v5906
    %5966 = vmatprep.subr.mxu0 %v5910
    %5967 = vmatpush1.msra.mxu0 %v5909
    %5968 = vmatprep.subr.mxu0 %v5913
    %5969 = vmatpush1.msra.mxu0 %v5912
    %5970 = vmatprep.subr.mxu0 %v5916
    %5971 = vmatpush1.msra.mxu0 %v5915
    %5972 = vmatprep.subr.mxu0 0.0
    %5973 = vmatpush1.msra.mxu0 0.0
    %5974 = vmatprep.subr.mxu0 0.0
    %5975 = vmatpush1.msra.mxu0 0.0
    %5976 = vmatprep.subr.mxu0 0.0
    %5977 = vmatpush1.msra.mxu0 0.0
    %5978 = vmatprep.subr.mxu0 0.0
    %5979 = vmatpush1.msra.mxu0 0.0
    %5980 = vmatprep.subr.mxu0 0.0
    %5981 = vmatpush1.msra.mxu0 0.0
    %5982 = vmatprep.subr.mxu0 0.0
    %5983 = vmatpush1.msra.mxu0 0.0
    %5984 = vmatprep.subr.mxu0 0.0
    %5985 = vmatpush1.msra.mxu0 0.0
    %5986 = vmatprep.subr.mxu0 0.0
    %5987 = vmatpush1.msra.mxu0 0.0
    %5988 = vmatprep.subr.mxu0 0.0
    %5989 = vmatpush1.msra.mxu0 0.0
    %5990 = vmatprep.subr.mxu0 0.0
    %5991 = vmatpush1.msra.mxu0 0.0
    %5992 = vmatprep.subr.mxu0 0.0
    %5993 = vmatpush1.msra.mxu0 0.0
    %5994 = vmatprep.subr.mxu0 0.0
    %5995 = vmatpush1.msra.mxu0 0.0
    %5996 = vmatprep.subr.mxu0 0.0
    %5997 = vmatpush1.msra.mxu0 0.0
    %5998 = vmatprep.subr.mxu0 0.0
    %5999 = vmatpush1.msra.mxu0 0.0
    %6000 = vmatprep.subr.mxu0 0.0
    %6001 = vmatpush1.msra.mxu0 0.0
    %6002 = vmatprep.subr.mxu0 0.0
    %6003 = vmatpush1.msra.mxu0 0.0
    %6004 = vmatprep.subr.mxu0 0.0
    %6005 = vmatpush1.msra.mxu0 0.0
    %6006 = vmatprep.subr.mxu0 0.0
    %6007 = vmatpush1.msra.mxu0 0.0
    %6008 = vmatprep.subr.mxu0 0.0
    %6009 = vmatpush1.msra.mxu0 0.0
    %6010 = vmatprep.subr.mxu0 0.0
    %6011 = vmatpush1.msra.mxu0 0.0
    %6012 = vmatprep.subr.mxu0 0.0
    %6013 = vmatpush1.msra.mxu0 0.0
    %6014 = vmatprep.subr.mxu0 0.0
    %6015 = vmatpush1.msra.mxu0 0.0
    %6016 = vmatprep.subr.mxu0 0.0
    %6017 = vmatpush1.msra.mxu0 0.0
    %6018 = vmatprep.subr.mxu0 0.0
    %6019 = vmatpush1.msra.mxu0 0.0
    %6020 = vmatprep.subr.mxu0 0.0
    %6021 = vmatpush1.msra.mxu0 0.0
    %6022 = vmatprep.subr.mxu0 0.0
    %6023 = vmatpush1.msra.mxu0 0.0
    %6024 = vmatprep.subr.mxu0 0.0
    %6025 = vmatpush1.msra.mxu0 0.0
    %6026 = vmatprep.subr.mxu0 0.0
    %6027 = vmatpush1.msra.mxu0 0.0
    %6028 = vmatprep.mubr.f32.mxu0 0.0
    %6029 = vmatmul.mubr.f32.gmra.mrb[0].mxu0 %v5960
    %v6030 = vpop.f32.mrb[0].mxu0
    %v6031 = vadd.f32 0.0, %v6030
    %v6032 = vpop.f32.mrb[0].mxu0
    %v6033 = vadd.f32 0.0, %v6032
    %6034 = vmatprep.mubr.f32.mxu0 0.0
    %6035 = vmatmul.mubr.f32.gmra.mrb[0].mxu0 %v5962
    %v6036 = vpop.f32.mrb[0].mxu0
    %v6037 = vadd.f32 0.0, %v6036
    %v6038 = vpop.f32.mrb[0].mxu0
    %v6039 = vadd.f32 0.0, %v6038
    %6040 = vdwg.mxu0
    %6041 = vmatprep.subr.mxu0 0.0
    %6042 = vmatpush1.msra.mxu0 %v5908
    %6043 = vmatprep.subr.mxu0 0.0
    %6044 = vmatpush1.msra.mxu0 %v5911
    %6045 = vmatprep.subr.mxu0 0.0
    %6046 = vmatpush1.msra.mxu0 %v5914
    %6047 = vmatprep.subr.mxu0 0.0
    %6048 = vmatpush1.msra.mxu0 %v5917
    %6049 = vmatprep.subr.mxu0 0.0
    %6050 = vmatpush1.msra.mxu0 0.0
    %6051 = vmatprep.subr.mxu0 0.0
    %6052 = vmatpush1.msra.mxu0 0.0
    %6053 = vmatprep.subr.mxu0 0.0
    %6054 = vmatpush1.msra.mxu0 0.0
    %6055 = vmatprep.subr.mxu0 0.0
    %6056 = vmatpush1.msra.mxu0 0.0
    %6057 = vmatprep.subr.mxu0 0.0
    %6058 = vmatpush1.msra.mxu0 0.0
    %6059 = vmatprep.subr.mxu0 0.0
    %6060 = vmatpush1.msra.mxu0 0.0
    %6061 = vmatprep.subr.mxu0 0.0
    %6062 = vmatpush1.msra.mxu0 0.0
    %6063 = vmatprep.subr.mxu0 0.0
    %6064 = vmatpush1.msra.mxu0 0.0
    %6065 = vmatprep.subr.mxu0 0.0
    %6066 = vmatpush1.msra.mxu0 0.0
    %6067 = vmatprep.subr.mxu0 0.0
    %6068 = vmatpush1.msra.mxu0 0.0
    %6069 = vmatprep.subr.mxu0 0.0
    %6070 = vmatpush1.msra.mxu0 0.0
    %6071 = vmatprep.subr.mxu0 0.0
    %6072 = vmatpush1.msra.mxu0 0.0
    %6073 = vmatprep.subr.mxu0 0.0
    %6074 = vmatpush1.msra.mxu0 0.0
    %6075 = vmatprep.subr.mxu0 0.0
    %6076 = vmatpush1.msra.mxu0 0.0
    %6077 = vmatprep.subr.mxu0 0.0
    %6078 = vmatpush1.msra.mxu0 0.0
    %6079 = vmatprep.subr.mxu0 0.0
    %6080 = vmatpush1.msra.mxu0 0.0
    %6081 = vmatprep.subr.mxu0 0.0
    %6082 = vmatpush1.msra.mxu0 0.0
    %6083 = vmatprep.subr.mxu0 0.0
    %6084 = vmatpush1.msra.mxu0 0.0
    %6085 = vmatprep.subr.mxu0 0.0
    %6086 = vmatpush1.msra.mxu0 0.0
    %6087 = vmatprep.subr.mxu0 0.0
    %6088 = vmatpush1.msra.mxu0 0.0
    %6089 = vmatprep.subr.mxu0 0.0
    %6090 = vmatpush1.msra.mxu0 0.0
    %6091 = vmatprep.subr.mxu0 0.0
    %6092 = vmatpush1.msra.mxu0 0.0
    %6093 = vmatprep.subr.mxu0 0.0
    %6094 = vmatpush1.msra.mxu0 0.0
    %6095 = vmatprep.subr.mxu0 0.0
    %6096 = vmatpush1.msra.mxu0 0.0
    %6097 = vmatprep.subr.mxu0 0.0
    %6098 = vmatpush1.msra.mxu0 0.0
    %6099 = vmatprep.subr.mxu0 0.0
    %6100 = vmatpush1.msra.mxu0 0.0
    %6101 = vmatprep.subr.mxu0 0.0
    %6102 = vmatpush1.msra.mxu0 0.0
    %6103 = vmatprep.subr.mxu0 0.0
    %6104 = vmatpush1.msra.mxu0 0.0
    %6105 = vmatprep.mubr.f32.mxu0 0.0
    %6106 = vmatmul.mubr.f32.gmra.mrb[0].mxu0 %v5960
    %v6107 = vpop.f32.mrb[0].mxu0
    %v6108 = vadd.f32 0.0, %v6107
    %v6109 = vpop.f32.mrb[0].mxu0
    %6110 = vmatprep.mubr.f32.mxu0 0.0
    %6111 = vmatmul.mubr.f32.gmra.mrb[0].mxu0 %v5962
    %v6112 = vpop.f32.mrb[0].mxu0
    %v6113 = vadd.f32 0.0, %v6112
    %v6114 = vpop.f32.mrb[0].mxu0
    %6115 = vdwg.mxu0
    %v6122 = vcombine.low %v6031, %v6033
    %v6123 = vcombine.high %v6031, %v6033
    %v6124 = vcombine.high %v6108, %v6108
    %v6126 = vunpack.c.l.s4 1983009808
    %v6127 = vunpack.c.0.s8 %v6126
    %v6128 = vlaneseq
    %v6129 = vshrl.u32 %v6128, 7
    %v6130 = vsub.s32 %v6127, %v6129
    %v6131 = vrot.slane %v6122, %v6130
    %v6133 = vunpack.c.l.s4 1983009808
    %v6134 = vunpack.c.0.s8 %v6133
    %v6135 = vlaneseq
    %v6136 = vshrl.u32 %v6135, 7
    %v6137 = vsub.s32 %v6134, %v6136
    %v6138 = vrot.slane %v6123, %v6137
    %v6140 = vunpack.c.l.s4 1983009808
    %v6141 = vunpack.c.0.s8 %v6140
    %v6142 = vlaneseq
    %v6143 = vshrl.u32 %v6142, 7
    %v6144 = vsub.s32 %v6141, %v6143
    %v6145 = vrot.slane %v6108, %v6144
    %v6147 = vunpack.c.l.s4 1983009808
    %v6148 = vunpack.c.0.s8 %v6147
    %v6149 = vlaneseq
    %v6150 = vshrl.u32 %v6149, 7
    %v6151 = vsub.s32 %v6148, %v6150
    %v6152 = vrot.slane %v6124, %v6151
    %v6153 = vcombine.low %v6131, %v6145
    %v6154 = vcombine.high %v6131, %v6145
    %v6155 = vcombine.low %v6138, %v6152
    %v6156 = vcombine.high %v6138, %v6152
    %v6157 = vcombine.low %v6037, %v6039
    %v6158 = vcombine.high %v6037, %v6039
    %v6159 = vcombine.high %v6113, %v6113
    %v6161 = vunpack.c.l.s4 1983009808
    %v6162 = vunpack.c.0.s8 %v6161
    %v6163 = vlaneseq
    %v6164 = vshrl.u32 %v6163, 7
    %v6165 = vsub.s32 %v6162, %v6164
    %v6166 = vrot.slane %v6157, %v6165
    %v6168 = vunpack.c.l.s4 1983009808
    %v6169 = vunpack.c.0.s8 %v6168
    %v6170 = vlaneseq
    %v6171 = vshrl.u32 %v6170, 7
    %v6172 = vsub.s32 %v6169, %v6171
    %v6173 = vrot.slane %v6158, %v6172
    %v6175 = vunpack.c.l.s4 1983009808
    %v6176 = vunpack.c.0.s8 %v6175
    %v6177 = vlaneseq
    %v6178 = vshrl.u32 %v6177, 7
    %v6179 = vsub.s32 %v6176, %v6178
    %v6180 = vrot.slane %v6113, %v6179
    %v6182 = vunpack.c.l.s4 1983009808
    %v6183 = vunpack.c.0.s8 %v6182
    %v6184 = vlaneseq
    %v6185 = vshrl.u32 %v6184, 7
    %v6186 = vsub.s32 %v6183, %v6185
    %v6187 = vrot.slane %v6159, %v6186
    %v6188 = vcombine.low %v6166, %v6180
    %v6189 = vcombine.high %v6166, %v6180
    %v6190 = vcombine.low %v6173, %v6187
    %v6191 = vcombine.high %v6173, %v6187
    %v6203 = vcombine.low %v5832, %v5834
    %v6205 = vunpack.c.l.s4 1983009808
    %v6206 = vunpack.c.0.s8 %v6205
    %v6207 = vlaneseq
    %v6208 = vshrl.u32 %v6207, 7
    %v6209 = vsub.s32 %v6206, %v6208
    %v6210 = vrot.slane %v6203, %v6209
    %v6212 = vunpack.c.l.s4 1983009808
    %v6213 = vunpack.c.0.s8 %v6212
    %v6214 = vlaneseq
    %v6215 = vshrl.u32 %v6214, 7
    %v6216 = vsub.s32 %v6213, %v6215
    %v6217 = vrot.slane %v5903, %v6216
    %v6218 = vcombine.low %v6210, %v6217
    %v6220 = vadd.f32 %v6153, %v6218
    %v6221 = vadd.f32 %v6154, %v6218
    %v6222 = vadd.f32 %v6155, %v6218
    %v6223 = vadd.f32 %v6156, %v6218
    %v6224 = vadd.f32 %v6188, %v6218
    %v6225 = vadd.f32 %v6189, %v6218
    %v6226 = vadd.f32 %v6190, %v6218
    %v6227 = vadd.f32 %v6191, %v6218
    %6228 = vst [vmem:[#allocation3] sm:$0x3f] %v6220
    %6229 = vst [vmem:[#allocation3 + $0x6] sm:$0x3f] %v6221
    %6230 = vst [vmem:[#allocation3 + $0xc] sm:$0x3f] %v6222
    %6231 = vst [vmem:[#allocation3 + $0x12] sm:$0x3f] %v6223
    %6232 = vst [vmem:[#allocation3 + $0x18] sm:$0x3f] %v6224
    %6233 = vst [vmem:[#allocation3 + $0x1e] sm:$0x3f] %v6225
    %6234 = vst [vmem:[#allocation3 + $0x24] sm:$0x3f] %v6226
    %6235 = vst [vmem:[#allocation3 + $0x2a] sm:$0x3f] %v6227
    %v6236 = vld [vmem:[#allocation3] sm:$0x3f]
    %v6237 = vld [vmem:[#allocation4 + $0xc0] sm:$0xff]
    %v6238 = vld [vmem:[#allocation4 + $0xc8] sm:$0xff]
    %v6239 = vld [vmem:[#allocation4 + $0xd0] sm:$0xff]
    %v6240 = vld [vmem:[#allocation4 + $0xd8] sm:$0xff]
    %v6241 = vld [vmem:[#allocation4 + $0xe0] sm:$0xff]
    %v6242 = vld [vmem:[#allocation4 + $0xe8] sm:$0xff]
    %v6243 = vld [vmem:[#allocation4 + $0xf0] sm:$0xff]
    %v6244 = vld [vmem:[#allocation4 + $0xf8] sm:$0xff]
    %v6245 = vld [vmem:[#allocation4 + $0x100] sm:$0xff]
    %v6246 = vld [vmem:[#allocation4 + $0x108] sm:$0xff]
    %v6247 = vld [vmem:[#allocation4 + $0x110] sm:$0xff]
    %v6248 = vld [vmem:[#allocation4 + $0x118] sm:$0xff]
    %v6250 = vlaneseq
    %v6251 = vshrl.u32 %v6250, 7
    %v6252 = vsub.s32 0, %v6251
    %v6253 = vrot.slane %v5733, %v6252
    %v6254 = vlaneseq
    %v6255 = vshrl.u32 %v6254, 7
    %v6256 = vsub.s32 1, %v6255
    %v6257 = vrot.slane %v5733, %v6256
    %v6258 = vlaneseq
    %v6259 = vshrl.u32 %v6258, 7
    %v6260 = vsub.s32 2, %v6259
    %v6261 = vrot.slane %v5733, %v6260
    %6265 = vmatprep.subr.mxu0 %v6238
    %6266 = vmatpush1.msra.mxu0 %v6237
    %6267 = vmatprep.subr.mxu0 %v6241
    %6268 = vmatpush1.msra.mxu0 %v6240
    %6269 = vmatprep.subr.mxu0 %v6244
    %6270 = vmatpush1.msra.mxu0 %v6243
    %6271 = vmatprep.subr.mxu0 %v6247
    %6272 = vmatpush1.msra.mxu0 %v6246
    %6273 = vmatprep.subr.mxu0 0.0
    %6274 = vmatpush1.msra.mxu0 0.0
    %6275 = vmatprep.subr.mxu0 0.0
    %6276 = vmatpush1.msra.mxu0 0.0
    %6277 = vmatprep.subr.mxu0 0.0
    %6278 = vmatpush1.msra.mxu0 0.0
    %6279 = vmatprep.subr.mxu0 0.0
    %6280 = vmatpush1.msra.mxu0 0.0
    %6281 = vmatprep.subr.mxu0 0.0
    %6282 = vmatpush1.msra.mxu0 0.0
    %6283 = vmatprep.subr.mxu0 0.0
    %6284 = vmatpush1.msra.mxu0 0.0
    %6285 = vmatprep.subr.mxu0 0.0
    %6286 = vmatpush1.msra.mxu0 0.0
    %6287 = vmatprep.subr.mxu0 0.0
    %6288 = vmatpush1.msra.mxu0 0.0
    %6289 = vmatprep.subr.mxu0 0.0
    %6290 = vmatpush1.msra.mxu0 0.0
    %6291 = vmatprep.subr.mxu0 0.0
    %6292 = vmatpush1.msra.mxu0 0.0
    %6293 = vmatprep.subr.mxu0 0.0
    %6294 = vmatpush1.msra.mxu0 0.0
    %6295 = vmatprep.subr.mxu0 0.0
    %6296 = vmatpush1.msra.mxu0 0.0
    %6297 = vmatprep.subr.mxu0 0.0
    %6298 = vmatpush1.msra.mxu0 0.0
    %6299 = vmatprep.subr.mxu0 0.0
    %6300 = vmatpush1.msra.mxu0 0.0
    %6301 = vmatprep.subr.mxu0 0.0
    %6302 = vmatpush1.msra.mxu0 0.0
    %6303 = vmatprep.subr.mxu0 0.0
    %6304 = vmatpush1.msra.mxu0 0.0
    %6305 = vmatprep.subr.mxu0 0.0
    %6306 = vmatpush1.msra.mxu0 0.0
    %6307 = vmatprep.subr.mxu0 0.0
    %6308 = vmatpush1.msra.mxu0 0.0
    %6309 = vmatprep.subr.mxu0 0.0
    %6310 = vmatpush1.msra.mxu0 0.0
    %6311 = vmatprep.subr.mxu0 0.0
    %6312 = vmatpush1.msra.mxu0 0.0
    %6313 = vmatprep.subr.mxu0 0.0
    %6314 = vmatpush1.msra.mxu0 0.0
    %6315 = vmatprep.subr.mxu0 0.0
    %6316 = vmatpush1.msra.mxu0 0.0
    %6317 = vmatprep.subr.mxu0 0.0
    %6318 = vmatpush1.msra.mxu0 0.0
    %6319 = vmatprep.subr.mxu0 0.0
    %6320 = vmatpush1.msra.mxu0 0.0
    %6321 = vmatprep.subr.mxu0 0.0
    %6322 = vmatpush1.msra.mxu0 0.0
    %6323 = vmatprep.subr.mxu0 0.0
    %6324 = vmatpush1.msra.mxu0 0.0
    %6325 = vmatprep.subr.mxu0 0.0
    %6326 = vmatpush1.msra.mxu0 0.0
    %6327 = vmatprep.subr.mxu0 0.0
    %6328 = vmatpush1.msra.mxu0 0.0
    %6329 = vmatprep.mubr.f32.mxu0 0.0
    %6330 = vmatmul.mubr.f32.gmra.mrb[0].mxu0 %v206
    %v6331 = vpop.f32.mrb[0].mxu0
    %v6332 = vadd.f32 %v6253, %v6331
    %v6333 = vpop.f32.mrb[0].mxu0
    %v6334 = vadd.f32 %v6257, %v6333
    %6335 = vdwg.mxu0
    %6336 = vmatprep.subr.mxu0 0.0
    %6337 = vmatpush1.msra.mxu0 %v6239
    %6338 = vmatprep.subr.mxu0 0.0
    %6339 = vmatpush1.msra.mxu0 %v6242
    %6340 = vmatprep.subr.mxu0 0.0
    %6341 = vmatpush1.msra.mxu0 %v6245
    %6342 = vmatprep.subr.mxu0 0.0
    %6343 = vmatpush1.msra.mxu0 %v6248
    %6344 = vmatprep.subr.mxu0 0.0
    %6345 = vmatpush1.msra.mxu0 0.0
    %6346 = vmatprep.subr.mxu0 0.0
    %6347 = vmatpush1.msra.mxu0 0.0
    %6348 = vmatprep.subr.mxu0 0.0
    %6349 = vmatpush1.msra.mxu0 0.0
    %6350 = vmatprep.subr.mxu0 0.0
    %6351 = vmatpush1.msra.mxu0 0.0
    %6352 = vmatprep.subr.mxu0 0.0
    %6353 = vmatpush1.msra.mxu0 0.0
    %6354 = vmatprep.subr.mxu0 0.0
    %6355 = vmatpush1.msra.mxu0 0.0
    %6356 = vmatprep.subr.mxu0 0.0
    %6357 = vmatpush1.msra.mxu0 0.0
    %6358 = vmatprep.subr.mxu0 0.0
    %6359 = vmatpush1.msra.mxu0 0.0
    %6360 = vmatprep.subr.mxu0 0.0
    %6361 = vmatpush1.msra.mxu0 0.0
    %6362 = vmatprep.subr.mxu0 0.0
    %6363 = vmatpush1.msra.mxu0 0.0
    %6364 = vmatprep.subr.mxu0 0.0
    %6365 = vmatpush1.msra.mxu0 0.0
    %6366 = vmatprep.subr.mxu0 0.0
    %6367 = vmatpush1.msra.mxu0 0.0
    %6368 = vmatprep.subr.mxu0 0.0
    %6369 = vmatpush1.msra.mxu0 0.0
    %6370 = vmatprep.subr.mxu0 0.0
    %6371 = vmatpush1.msra.mxu0 0.0
    %6372 = vmatprep.subr.mxu0 0.0
    %6373 = vmatpush1.msra.mxu0 0.0
    %6374 = vmatprep.subr.mxu0 0.0
    %6375 = vmatpush1.msra.mxu0 0.0
    %6376 = vmatprep.subr.mxu0 0.0
    %6377 = vmatpush1.msra.mxu0 0.0
    %6378 = vmatprep.subr.mxu0 0.0
    %6379 = vmatpush1.msra.mxu0 0.0
    %6380 = vmatprep.subr.mxu0 0.0
    %6381 = vmatpush1.msra.mxu0 0.0
    %6382 = vmatprep.subr.mxu0 0.0
    %6383 = vmatpush1.msra.mxu0 0.0
    %6384 = vmatprep.subr.mxu0 0.0
    %6385 = vmatpush1.msra.mxu0 0.0
    %6386 = vmatprep.subr.mxu0 0.0
    %6387 = vmatpush1.msra.mxu0 0.0
    %6388 = vmatprep.subr.mxu0 0.0
    %6389 = vmatpush1.msra.mxu0 0.0
    %6390 = vmatprep.subr.mxu0 0.0
    %6391 = vmatpush1.msra.mxu0 0.0
    %6392 = vmatprep.subr.mxu0 0.0
    %6393 = vmatpush1.msra.mxu0 0.0
    %6394 = vmatprep.subr.mxu0 0.0
    %6395 = vmatpush1.msra.mxu0 0.0
    %6396 = vmatprep.subr.mxu0 0.0
    %6397 = vmatpush1.msra.mxu0 0.0
    %6398 = vmatprep.subr.mxu0 0.0
    %6399 = vmatpush1.msra.mxu0 0.0
    %6400 = vmatprep.mubr.f32.mxu0 0.0
    %6401 = vmatmul.mubr.f32.gmra.mrb[0].mxu0 %v206
    %v6402 = vpop.f32.mrb[0].mxu0
    %v6403 = vadd.f32 %v6261, %v6402
    %v6404 = vpop.f32.mrb[0].mxu0
    %6405 = vdwg.mxu0
    %v6406 = vadd.f32 %v6236, %v6332
    %v6407 = vsub.f32 0.0, %v6406
    %v6408 = vmul.f32 %v6407, 1.442695
    %v6409 = vpow.pop %v6408
    %v6410 = vadd.f32 %v6409, 1.0
    %v6411 = vrcp.pop %v6410
    %v6412 = vmul.f32 1.0, %v6411
    %v6414 = vrot.slane %v6236, 2
    %v6416 = vadd.f32 %v6414, %v6334
    %v6417 = vsub.f32 0.0, %v6416
    %v6418 = vmul.f32 %v6417, 1.442695
    %v6419 = vpow.pop %v6418
    %v6420 = vadd.f32 %v6419, 1.0
    %v6421 = vrcp.pop %v6420
    %v6422 = vmul.f32 1.0, %v6421
    %v6423 = vmul.f32 %v6412, %v6403
    %v6424 = vrot.slane %v6236, 4
    %v6426 = vadd.f32 %v6424, %v6423
    %v6427 = vtanh.pop %v6426
    %v6428 = vsub.f32 1.0, %v6422
    %v6429 = vmul.f32 %v6428, %v6427
    %v6430 = vmul.f32 %v6422, 0.0
    %v6431 = vadd.f32 %v6429, %v6430
    %6432 = vst.msk [vmem:[%s7] sm:$0x3] %vm77, %v6431
    %s6433 = scalar_lea.vmem [#allocation3], 6
    %v6434 = vld [vmem:[%s6433] sm:$0x3f]
    %v6435 = vld [vmem:[#allocation4 + $0xc0] sm:$0xff]
    %v6436 = vld [vmem:[#allocation4 + $0xc8] sm:$0xff]
    %v6437 = vld [vmem:[#allocation4 + $0xd0] sm:$0xff]
    %v6438 = vld [vmem:[#allocation4 + $0xd8] sm:$0xff]
    %v6439 = vld [vmem:[#allocation4 + $0xe0] sm:$0xff]
    %v6440 = vld [vmem:[#allocation4 + $0xe8] sm:$0xff]
    %v6441 = vld [vmem:[#allocation4 + $0xf0] sm:$0xff]
    %v6442 = vld [vmem:[#allocation4 + $0xf8] sm:$0xff]
    %v6443 = vld [vmem:[#allocation4 + $0x100] sm:$0xff]
    %v6444 = vld [vmem:[#allocation4 + $0x108] sm:$0xff]
    %v6445 = vld [vmem:[#allocation4 + $0x110] sm:$0xff]
    %v6446 = vld [vmem:[#allocation4 + $0x118] sm:$0xff]
    %v6448 = vsel %vm204, %v6431, 0
    %6450 = vmatprep.subr.mxu0 %v6436
    %6451 = vmatpush1.msra.mxu0 %v6435
    %6452 = vmatprep.subr.mxu0 %v6439
    %6453 = vmatpush1.msra.mxu0 %v6438
    %6454 = vmatprep.subr.mxu0 %v6442
    %6455 = vmatpush1.msra.mxu0 %v6441
    %6456 = vmatprep.subr.mxu0 %v6445
    %6457 = vmatpush1.msra.mxu0 %v6444
    %6458 = vmatprep.subr.mxu0 0.0
    %6459 = vmatpush1.msra.mxu0 0.0
    %6460 = vmatprep.subr.mxu0 0.0
    %6461 = vmatpush1.msra.mxu0 0.0
    %6462 = vmatprep.subr.mxu0 0.0
    %6463 = vmatpush1.msra.mxu0 0.0
    %6464 = vmatprep.subr.mxu0 0.0
    %6465 = vmatpush1.msra.mxu0 0.0
    %6466 = vmatprep.subr.mxu0 0.0
    %6467 = vmatpush1.msra.mxu0 0.0
    %6468 = vmatprep.subr.mxu0 0.0
    %6469 = vmatpush1.msra.mxu0 0.0
    %6470 = vmatprep.subr.mxu0 0.0
    %6471 = vmatpush1.msra.mxu0 0.0
    %6472 = vmatprep.subr.mxu0 0.0
    %6473 = vmatpush1.msra.mxu0 0.0
    %6474 = vmatprep.subr.mxu0 0.0
    %6475 = vmatpush1.msra.mxu0 0.0
    %6476 = vmatprep.subr.mxu0 0.0
    %6477 = vmatpush1.msra.mxu0 0.0
    %6478 = vmatprep.subr.mxu0 0.0
    %6479 = vmatpush1.msra.mxu0 0.0
    %6480 = vmatprep.subr.mxu0 0.0
    %6481 = vmatpush1.msra.mxu0 0.0
    %6482 = vmatprep.subr.mxu0 0.0
    %6483 = vmatpush1.msra.mxu0 0.0
    %6484 = vmatprep.subr.mxu0 0.0
    %6485 = vmatpush1.msra.mxu0 0.0
    %6486 = vmatprep.subr.mxu0 0.0
    %6487 = vmatpush1.msra.mxu0 0.0
    %6488 = vmatprep.subr.mxu0 0.0
    %6489 = vmatpush1.msra.mxu0 0.0
    %6490 = vmatprep.subr.mxu0 0.0
    %6491 = vmatpush1.msra.mxu0 0.0
    %6492 = vmatprep.subr.mxu0 0.0
    %6493 = vmatpush1.msra.mxu0 0.0
    %6494 = vmatprep.subr.mxu0 0.0
    %6495 = vmatpush1.msra.mxu0 0.0
    %6496 = vmatprep.subr.mxu0 0.0
    %6497 = vmatpush1.msra.mxu0 0.0
    %6498 = vmatprep.subr.mxu0 0.0
    %6499 = vmatpush1.msra.mxu0 0.0
    %6500 = vmatprep.subr.mxu0 0.0
    %6501 = vmatpush1.msra.mxu0 0.0
    %6502 = vmatprep.subr.mxu0 0.0
    %6503 = vmatpush1.msra.mxu0 0.0
    %6504 = vmatprep.subr.mxu0 0.0
    %6505 = vmatpush1.msra.mxu0 0.0
    %6506 = vmatprep.subr.mxu0 0.0
    %6507 = vmatpush1.msra.mxu0 0.0
    %6508 = vmatprep.subr.mxu0 0.0
    %6509 = vmatpush1.msra.mxu0 0.0
    %6510 = vmatprep.subr.mxu0 0.0
    %6511 = vmatpush1.msra.mxu0 0.0
    %6512 = vmatprep.subr.mxu0 0.0
    %6513 = vmatpush1.msra.mxu0 0.0
    %6514 = vmatprep.mubr.f32.mxu0 0.0
    %6515 = vmatmul.mubr.f32.gmra.mrb[0].mxu0 %v6448
    %v6516 = vpop.f32.mrb[0].mxu0
    %v6517 = vadd.f32 %v6253, %v6516
    %v6518 = vpop.f32.mrb[0].mxu0
    %v6519 = vadd.f32 %v6257, %v6518
    %6520 = vdwg.mxu0
    %6521 = vmatprep.subr.mxu0 0.0
    %6522 = vmatpush1.msra.mxu0 %v6437
    %6523 = vmatprep.subr.mxu0 0.0
    %6524 = vmatpush1.msra.mxu0 %v6440
    %6525 = vmatprep.subr.mxu0 0.0
    %6526 = vmatpush1.msra.mxu0 %v6443
    %6527 = vmatprep.subr.mxu0 0.0
    %6528 = vmatpush1.msra.mxu0 %v6446
    %6529 = vmatprep.subr.mxu0 0.0
    %6530 = vmatpush1.msra.mxu0 0.0
    %6531 = vmatprep.subr.mxu0 0.0
    %6532 = vmatpush1.msra.mxu0 0.0
    %6533 = vmatprep.subr.mxu0 0.0
    %6534 = vmatpush1.msra.mxu0 0.0
    %6535 = vmatprep.subr.mxu0 0.0
    %6536 = vmatpush1.msra.mxu0 0.0
    %6537 = vmatprep.subr.mxu0 0.0
    %6538 = vmatpush1.msra.mxu0 0.0
    %6539 = vmatprep.subr.mxu0 0.0
    %6540 = vmatpush1.msra.mxu0 0.0
    %6541 = vmatprep.subr.mxu0 0.0
    %6542 = vmatpush1.msra.mxu0 0.0
    %6543 = vmatprep.subr.mxu0 0.0
    %6544 = vmatpush1.msra.mxu0 0.0
    %6545 = vmatprep.subr.mxu0 0.0
    %6546 = vmatpush1.msra.mxu0 0.0
    %6547 = vmatprep.subr.mxu0 0.0
    %6548 = vmatpush1.msra.mxu0 0.0
    %6549 = vmatprep.subr.mxu0 0.0
    %6550 = vmatpush1.msra.mxu0 0.0
    %6551 = vmatprep.subr.mxu0 0.0
    %6552 = vmatpush1.msra.mxu0 0.0
    %6553 = vmatprep.subr.mxu0 0.0
    %6554 = vmatpush1.msra.mxu0 0.0
    %6555 = vmatprep.subr.mxu0 0.0
    %6556 = vmatpush1.msra.mxu0 0.0
    %6557 = vmatprep.subr.mxu0 0.0
    %6558 = vmatpush1.msra.mxu0 0.0
    %6559 = vmatprep.subr.mxu0 0.0
    %6560 = vmatpush1.msra.mxu0 0.0
    %6561 = vmatprep.subr.mxu0 0.0
    %6562 = vmatpush1.msra.mxu0 0.0
    %6563 = vmatprep.subr.mxu0 0.0
    %6564 = vmatpush1.msra.mxu0 0.0
    %6565 = vmatprep.subr.mxu0 0.0
    %6566 = vmatpush1.msra.mxu0 0.0
    %6567 = vmatprep.subr.mxu0 0.0
    %6568 = vmatpush1.msra.mxu0 0.0
    %6569 = vmatprep.subr.mxu0 0.0
    %6570 = vmatpush1.msra.mxu0 0.0
    %6571 = vmatprep.subr.mxu0 0.0
    %6572 = vmatpush1.msra.mxu0 0.0
    %6573 = vmatprep.subr.mxu0 0.0
    %6574 = vmatpush1.msra.mxu0 0.0
    %6575 = vmatprep.subr.mxu0 0.0
    %6576 = vmatpush1.msra.mxu0 0.0
    %6577 = vmatprep.subr.mxu0 0.0
    %6578 = vmatpush1.msra.mxu0 0.0
    %6579 = vmatprep.subr.mxu0 0.0
    %6580 = vmatpush1.msra.mxu0 0.0
    %6581 = vmatprep.subr.mxu0 0.0
    %6582 = vmatpush1.msra.mxu0 0.0
    %6583 = vmatprep.subr.mxu0 0.0
    %6584 = vmatpush1.msra.mxu0 0.0
    %6585 = vmatprep.mubr.f32.mxu0 0.0
    %6586 = vmatmul.mubr.f32.gmra.mrb[0].mxu0 %v6448
    %v6587 = vpop.f32.mrb[0].mxu0
    %v6588 = vadd.f32 %v6261, %v6587
    %v6589 = vpop.f32.mrb[0].mxu0
    %6590 = vdwg.mxu0
    %v6591 = vadd.f32 %v6434, %v6517
    %v6592 = vsub.f32 0.0, %v6591
    %v6593 = vmul.f32 %v6592, 1.442695
    %v6594 = vpow.pop %v6593
    %v6595 = vadd.f32 %v6594, 1.0
    %v6596 = vrcp.pop %v6595
    %v6597 = vmul.f32 1.0, %v6596
    %v6599 = vrot.slane %v6434, 2
    %v6601 = vadd.f32 %v6599, %v6519
    %v6602 = vsub.f32 0.0, %v6601
    %v6603 = vmul.f32 %v6602, 1.442695
    %v6604 = vpow.pop %v6603
    %v6605 = vadd.f32 %v6604, 1.0
    %v6606 = vrcp.pop %v6605
    %v6607 = vmul.f32 1.0, %v6606
    %v6608 = vmul.f32 %v6597, %v6588
    %v6609 = vrot.slane %v6434, 4
    %v6611 = vadd.f32 %v6609, %v6608
    %v6612 = vtanh.pop %v6611
    %v6613 = vsub.f32 1.0, %v6607
    %v6614 = vmul.f32 %v6613, %v6612
    %v6615 = vmul.f32 %v6607, %v6431
    %v6616 = vadd.f32 %v6614, %v6615
    %s6617 = scalar_lea.vmem %s7, 2
    %6618 = vst.msk [vmem:[%s6617] sm:$0x3] %vm77, %v6616
    %s6619 = scalar_lea.vmem [#allocation3], 12
    %v6620 = vld [vmem:[%s6619] sm:$0x3f]
    %v6621 = vld [vmem:[#allocation4 + $0xc0] sm:$0xff]
    %v6622 = vld [vmem:[#allocation4 + $0xc8] sm:$0xff]
    %v6623 = vld [vmem:[#allocation4 + $0xd0] sm:$0xff]
    %v6624 = vld [vmem:[#allocation4 + $0xd8] sm:$0xff]
    %v6625 = vld [vmem:[#allocation4 + $0xe0] sm:$0xff]
    %v6626 = vld [vmem:[#allocation4 + $0xe8] sm:$0xff]
    %v6627 = vld [vmem:[#allocation4 + $0xf0] sm:$0xff]
    %v6628 = vld [vmem:[#allocation4 + $0xf8] sm:$0xff]
    %v6629 = vld [vmem:[#allocation4 + $0x100] sm:$0xff]
    %v6630 = vld [vmem:[#allocation4 + $0x108] sm:$0xff]
    %v6631 = vld [vmem:[#allocation4 + $0x110] sm:$0xff]
    %v6632 = vld [vmem:[#allocation4 + $0x118] sm:$0xff]
    %v6634 = vsel %vm204, %v6616, 0
    %6636 = vmatprep.subr.mxu0 %v6622
    %6637 = vmatpush1.msra.mxu0 %v6621
    %6638 = vmatprep.subr.mxu0 %v6625
    %6639 = vmatpush1.msra.mxu0 %v6624
    %6640 = vmatprep.subr.mxu0 %v6628
    %6641 = vmatpush1.msra.mxu0 %v6627
    %6642 = vmatprep.subr.mxu0 %v6631
    %6643 = vmatpush1.msra.mxu0 %v6630
    %6644 = vmatprep.subr.mxu0 0.0
    %6645 = vmatpush1.msra.mxu0 0.0
    %6646 = vmatprep.subr.mxu0 0.0
    %6647 = vmatpush1.msra.mxu0 0.0
    %6648 = vmatprep.subr.mxu0 0.0
    %6649 = vmatpush1.msra.mxu0 0.0
    %6650 = vmatprep.subr.mxu0 0.0
    %6651 = vmatpush1.msra.mxu0 0.0
    %6652 = vmatprep.subr.mxu0 0.0
    %6653 = vmatpush1.msra.mxu0 0.0
    %6654 = vmatprep.subr.mxu0 0.0
    %6655 = vmatpush1.msra.mxu0 0.0
    %6656 = vmatprep.subr.mxu0 0.0
    %6657 = vmatpush1.msra.mxu0 0.0
    %6658 = vmatprep.subr.mxu0 0.0
    %6659 = vmatpush1.msra.mxu0 0.0
    %6660 = vmatprep.subr.mxu0 0.0
    %6661 = vmatpush1.msra.mxu0 0.0
    %6662 = vmatprep.subr.mxu0 0.0
    %6663 = vmatpush1.msra.mxu0 0.0
    %6664 = vmatprep.subr.mxu0 0.0
    %6665 = vmatpush1.msra.mxu0 0.0
    %6666 = vmatprep.subr.mxu0 0.0
    %6667 = vmatpush1.msra.mxu0 0.0
    %6668 = vmatprep.subr.mxu0 0.0
    %6669 = vmatpush1.msra.mxu0 0.0
    %6670 = vmatprep.subr.mxu0 0.0
    %6671 = vmatpush1.msra.mxu0 0.0
    %6672 = vmatprep.subr.mxu0 0.0
    %6673 = vmatpush1.msra.mxu0 0.0
    %6674 = vmatprep.subr.mxu0 0.0
    %6675 = vmatpush1.msra.mxu0 0.0
    %6676 = vmatprep.subr.mxu0 0.0
    %6677 = vmatpush1.msra.mxu0 0.0
    %6678 = vmatprep.subr.mxu0 0.0
    %6679 = vmatpush1.msra.mxu0 0.0
    %6680 = vmatprep.subr.mxu0 0.0
    %6681 = vmatpush1.msra.mxu0 0.0
    %6682 = vmatprep.subr.mxu0 0.0
    %6683 = vmatpush1.msra.mxu0 0.0
    %6684 = vmatprep.subr.mxu0 0.0
    %6685 = vmatpush1.msra.mxu0 0.0
    %6686 = vmatprep.subr.mxu0 0.0
    %6687 = vmatpush1.msra.mxu0 0.0
    %6688 = vmatprep.subr.mxu0 0.0
    %6689 = vmatpush1.msra.mxu0 0.0
    %6690 = vmatprep.subr.mxu0 0.0
    %6691 = vmatpush1.msra.mxu0 0.0
    %6692 = vmatprep.subr.mxu0 0.0
    %6693 = vmatpush1.msra.mxu0 0.0
    %6694 = vmatprep.subr.mxu0 0.0
    %6695 = vmatpush1.msra.mxu0 0.0
    %6696 = vmatprep.subr.mxu0 0.0
    %6697 = vmatpush1.msra.mxu0 0.0
    %6698 = vmatprep.subr.mxu0 0.0
    %6699 = vmatpush1.msra.mxu0 0.0
    %6700 = vmatprep.mubr.f32.mxu0 0.0
    %6701 = vmatmul.mubr.f32.gmra.mrb[0].mxu0 %v6634
    %v6702 = vpop.f32.mrb[0].mxu0
    %v6703 = vadd.f32 %v6253, %v6702
    %v6704 = vpop.f32.mrb[0].mxu0
    %v6705 = vadd.f32 %v6257, %v6704
    %6706 = vdwg.mxu0
    %6707 = vmatprep.subr.mxu0 0.0
    %6708 = vmatpush1.msra.mxu0 %v6623
    %6709 = vmatprep.subr.mxu0 0.0
    %6710 = vmatpush1.msra.mxu0 %v6626
    %6711 = vmatprep.subr.mxu0 0.0
    %6712 = vmatpush1.msra.mxu0 %v6629
    %6713 = vmatprep.subr.mxu0 0.0
    %6714 = vmatpush1.msra.mxu0 %v6632
    %6715 = vmatprep.subr.mxu0 0.0
    %6716 = vmatpush1.msra.mxu0 0.0
    %6717 = vmatprep.subr.mxu0 0.0
    %6718 = vmatpush1.msra.mxu0 0.0
    %6719 = vmatprep.subr.mxu0 0.0
    %6720 = vmatpush1.msra.mxu0 0.0
    %6721 = vmatprep.subr.mxu0 0.0
    %6722 = vmatpush1.msra.mxu0 0.0
    %6723 = vmatprep.subr.mxu0 0.0
    %6724 = vmatpush1.msra.mxu0 0.0
    %6725 = vmatprep.subr.mxu0 0.0
    %6726 = vmatpush1.msra.mxu0 0.0
    %6727 = vmatprep.subr.mxu0 0.0
    %6728 = vmatpush1.msra.mxu0 0.0
    %6729 = vmatprep.subr.mxu0 0.0
    %6730 = vmatpush1.msra.mxu0 0.0
    %6731 = vmatprep.subr.mxu0 0.0
    %6732 = vmatpush1.msra.mxu0 0.0
    %6733 = vmatprep.subr.mxu0 0.0
    %6734 = vmatpush1.msra.mxu0 0.0
    %6735 = vmatprep.subr.mxu0 0.0
    %6736 = vmatpush1.msra.mxu0 0.0
    %6737 = vmatprep.subr.mxu0 0.0
    %6738 = vmatpush1.msra.mxu0 0.0
    %6739 = vmatprep.subr.mxu0 0.0
    %6740 = vmatpush1.msra.mxu0 0.0
    %6741 = vmatprep.subr.mxu0 0.0
    %6742 = vmatpush1.msra.mxu0 0.0
    %6743 = vmatprep.subr.mxu0 0.0
    %6744 = vmatpush1.msra.mxu0 0.0
    %6745 = vmatprep.subr.mxu0 0.0
    %6746 = vmatpush1.msra.mxu0 0.0
    %6747 = vmatprep.subr.mxu0 0.0
    %6748 = vmatpush1.msra.mxu0 0.0
    %6749 = vmatprep.subr.mxu0 0.0
    %6750 = vmatpush1.msra.mxu0 0.0
    %6751 = vmatprep.subr.mxu0 0.0
    %6752 = vmatpush1.msra.mxu0 0.0
    %6753 = vmatprep.subr.mxu0 0.0
    %6754 = vmatpush1.msra.mxu0 0.0
    %6755 = vmatprep.subr.mxu0 0.0
    %6756 = vmatpush1.msra.mxu0 0.0
    %6757 = vmatprep.subr.mxu0 0.0
    %6758 = vmatpush1.msra.mxu0 0.0
    %6759 = vmatprep.subr.mxu0 0.0
    %6760 = vmatpush1.msra.mxu0 0.0
    %6761 = vmatprep.subr.mxu0 0.0
    %6762 = vmatpush1.msra.mxu0 0.0
    %6763 = vmatprep.subr.mxu0 0.0
    %6764 = vmatpush1.msra.mxu0 0.0
    %6765 = vmatprep.subr.mxu0 0.0
    %6766 = vmatpush1.msra.mxu0 0.0
    %6767 = vmatprep.subr.mxu0 0.0
    %6768 = vmatpush1.msra.mxu0 0.0
    %6769 = vmatprep.subr.mxu0 0.0
    %6770 = vmatpush1.msra.mxu0 0.0
    %6771 = vmatprep.mubr.f32.mxu0 0.0
    %6772 = vmatmul.mubr.f32.gmra.mrb[0].mxu0 %v6634
    %v6773 = vpop.f32.mrb[0].mxu0
    %v6774 = vadd.f32 %v6261, %v6773
    %v6775 = vpop.f32.mrb[0].mxu0
    %6776 = vdwg.mxu0
    %v6777 = vadd.f32 %v6620, %v6703
    %v6778 = vsub.f32 0.0, %v6777
    %v6779 = vmul.f32 %v6778, 1.442695
    %v6780 = vpow.pop %v6779
    %v6781 = vadd.f32 %v6780, 1.0
    %v6782 = vrcp.pop %v6781
    %v6783 = vmul.f32 1.0, %v6782
    %v6785 = vrot.slane %v6620, 2
    %v6787 = vadd.f32 %v6785, %v6705
    %v6788 = vsub.f32 0.0, %v6787
    %v6789 = vmul.f32 %v6788, 1.442695
    %v6790 = vpow.pop %v6789
    %v6791 = vadd.f32 %v6790, 1.0
    %v6792 = vrcp.pop %v6791
    %v6793 = vmul.f32 1.0, %v6792
    %v6794 = vmul.f32 %v6783, %v6774
    %v6795 = vrot.slane %v6620, 4
    %v6797 = vadd.f32 %v6795, %v6794
    %v6798 = vtanh.pop %v6797
    %v6799 = vsub.f32 1.0, %v6793
    %v6800 = vmul.f32 %v6799, %v6798
    %v6801 = vmul.f32 %v6793, %v6616
    %v6802 = vadd.f32 %v6800, %v6801
    %s6803 = scalar_lea.vmem %s7, 4
    %6804 = vst.msk [vmem:[%s6803] sm:$0x3] %vm77, %v6802
    %s6805 = scalar_lea.vmem [#allocation3], 18
    %v6806 = vld [vmem:[%s6805] sm:$0x3f]
    %v6807 = vld [vmem:[#allocation4 + $0xc0] sm:$0xff]
    %v6808 = vld [vmem:[#allocation4 + $0xc8] sm:$0xff]
    %v6809 = vld [vmem:[#allocation4 + $0xd0] sm:$0xff]
    %v6810 = vld [vmem:[#allocation4 + $0xd8] sm:$0xff]
    %v6811 = vld [vmem:[#allocation4 + $0xe0] sm:$0xff]
    %v6812 = vld [vmem:[#allocation4 + $0xe8] sm:$0xff]
    %v6813 = vld [vmem:[#allocation4 + $0xf0] sm:$0xff]
    %v6814 = vld [vmem:[#allocation4 + $0xf8] sm:$0xff]
    %v6815 = vld [vmem:[#allocation4 + $0x100] sm:$0xff]
    %v6816 = vld [vmem:[#allocation4 + $0x108] sm:$0xff]
    %v6817 = vld [vmem:[#allocation4 + $0x110] sm:$0xff]
    %v6818 = vld [vmem:[#allocation4 + $0x118] sm:$0xff]
    %v6820 = vsel %vm204, %v6802, 0
    %6822 = vmatprep.subr.mxu0 %v6808
    %6823 = vmatpush1.msra.mxu0 %v6807
    %6824 = vmatprep.subr.mxu0 %v6811
    %6825 = vmatpush1.msra.mxu0 %v6810
    %6826 = vmatprep.subr.mxu0 %v6814
    %6827 = vmatpush1.msra.mxu0 %v6813
    %6828 = vmatprep.subr.mxu0 %v6817
    %6829 = vmatpush1.msra.mxu0 %v6816
    %6830 = vmatprep.subr.mxu0 0.0
    %6831 = vmatpush1.msra.mxu0 0.0
    %6832 = vmatprep.subr.mxu0 0.0
    %6833 = vmatpush1.msra.mxu0 0.0
    %6834 = vmatprep.subr.mxu0 0.0
    %6835 = vmatpush1.msra.mxu0 0.0
    %6836 = vmatprep.subr.mxu0 0.0
    %6837 = vmatpush1.msra.mxu0 0.0
    %6838 = vmatprep.subr.mxu0 0.0
    %6839 = vmatpush1.msra.mxu0 0.0
    %6840 = vmatprep.subr.mxu0 0.0
    %6841 = vmatpush1.msra.mxu0 0.0
    %6842 = vmatprep.subr.mxu0 0.0
    %6843 = vmatpush1.msra.mxu0 0.0
    %6844 = vmatprep.subr.mxu0 0.0
    %6845 = vmatpush1.msra.mxu0 0.0
    %6846 = vmatprep.subr.mxu0 0.0
    %6847 = vmatpush1.msra.mxu0 0.0
    %6848 = vmatprep.subr.mxu0 0.0
    %6849 = vmatpush1.msra.mxu0 0.0
    %6850 = vmatprep.subr.mxu0 0.0
    %6851 = vmatpush1.msra.mxu0 0.0
    %6852 = vmatprep.subr.mxu0 0.0
    %6853 = vmatpush1.msra.mxu0 0.0
    %6854 = vmatprep.subr.mxu0 0.0
    %6855 = vmatpush1.msra.mxu0 0.0
    %6856 = vmatprep.subr.mxu0 0.0
    %6857 = vmatpush1.msra.mxu0 0.0
    %6858 = vmatprep.subr.mxu0 0.0
    %6859 = vmatpush1.msra.mxu0 0.0
    %6860 = vmatprep.subr.mxu0 0.0
    %6861 = vmatpush1.msra.mxu0 0.0
    %6862 = vmatprep.subr.mxu0 0.0
    %6863 = vmatpush1.msra.mxu0 0.0
    %6864 = vmatprep.subr.mxu0 0.0
    %6865 = vmatpush1.msra.mxu0 0.0
    %6866 = vmatprep.subr.mxu0 0.0
    %6867 = vmatpush1.msra.mxu0 0.0
    %6868 = vmatprep.subr.mxu0 0.0
    %6869 = vmatpush1.msra.mxu0 0.0
    %6870 = vmatprep.subr.mxu0 0.0
    %6871 = vmatpush1.msra.mxu0 0.0
    %6872 = vmatprep.subr.mxu0 0.0
    %6873 = vmatpush1.msra.mxu0 0.0
    %6874 = vmatprep.subr.mxu0 0.0
    %6875 = vmatpush1.msra.mxu0 0.0
    %6876 = vmatprep.subr.mxu0 0.0
    %6877 = vmatpush1.msra.mxu0 0.0
    %6878 = vmatprep.subr.mxu0 0.0
    %6879 = vmatpush1.msra.mxu0 0.0
    %6880 = vmatprep.subr.mxu0 0.0
    %6881 = vmatpush1.msra.mxu0 0.0
    %6882 = vmatprep.subr.mxu0 0.0
    %6883 = vmatpush1.msra.mxu0 0.0
    %6884 = vmatprep.subr.mxu0 0.0
    %6885 = vmatpush1.msra.mxu0 0.0
    %6886 = vmatprep.mubr.f32.mxu0 0.0
    %6887 = vmatmul.mubr.f32.gmra.mrb[0].mxu0 %v6820
    %v6888 = vpop.f32.mrb[0].mxu0
    %v6889 = vadd.f32 %v6253, %v6888
    %v6890 = vpop.f32.mrb[0].mxu0
    %v6891 = vadd.f32 %v6257, %v6890
    %6892 = vdwg.mxu0
    %6893 = vmatprep.subr.mxu0 0.0
    %6894 = vmatpush1.msra.mxu0 %v6809
    %6895 = vmatprep.subr.mxu0 0.0
    %6896 = vmatpush1.msra.mxu0 %v6812
    %6897 = vmatprep.subr.mxu0 0.0
    %6898 = vmatpush1.msra.mxu0 %v6815
    %6899 = vmatprep.subr.mxu0 0.0
    %6900 = vmatpush1.msra.mxu0 %v6818
    %6901 = vmatprep.subr.mxu0 0.0
    %6902 = vmatpush1.msra.mxu0 0.0
    %6903 = vmatprep.subr.mxu0 0.0
    %6904 = vmatpush1.msra.mxu0 0.0
    %6905 = vmatprep.subr.mxu0 0.0
    %6906 = vmatpush1.msra.mxu0 0.0
    %6907 = vmatprep.subr.mxu0 0.0
    %6908 = vmatpush1.msra.mxu0 0.0
    %6909 = vmatprep.subr.mxu0 0.0
    %6910 = vmatpush1.msra.mxu0 0.0
    %6911 = vmatprep.subr.mxu0 0.0
    %6912 = vmatpush1.msra.mxu0 0.0
    %6913 = vmatprep.subr.mxu0 0.0
    %6914 = vmatpush1.msra.mxu0 0.0
    %6915 = vmatprep.subr.mxu0 0.0
    %6916 = vmatpush1.msra.mxu0 0.0
    %6917 = vmatprep.subr.mxu0 0.0
    %6918 = vmatpush1.msra.mxu0 0.0
    %6919 = vmatprep.subr.mxu0 0.0
    %6920 = vmatpush1.msra.mxu0 0.0
    %6921 = vmatprep.subr.mxu0 0.0
    %6922 = vmatpush1.msra.mxu0 0.0
    %6923 = vmatprep.subr.mxu0 0.0
    %6924 = vmatpush1.msra.mxu0 0.0
    %6925 = vmatprep.subr.mxu0 0.0
    %6926 = vmatpush1.msra.mxu0 0.0
    %6927 = vmatprep.subr.mxu0 0.0
    %6928 = vmatpush1.msra.mxu0 0.0
    %6929 = vmatprep.subr.mxu0 0.0
    %6930 = vmatpush1.msra.mxu0 0.0
    %6931 = vmatprep.subr.mxu0 0.0
    %6932 = vmatpush1.msra.mxu0 0.0
    %6933 = vmatprep.subr.mxu0 0.0
    %6934 = vmatpush1.msra.mxu0 0.0
    %6935 = vmatprep.subr.mxu0 0.0
    %6936 = vmatpush1.msra.mxu0 0.0
    %6937 = vmatprep.subr.mxu0 0.0
    %6938 = vmatpush1.msra.mxu0 0.0
    %6939 = vmatprep.subr.mxu0 0.0
    %6940 = vmatpush1.msra.mxu0 0.0
    %6941 = vmatprep.subr.mxu0 0.0
    %6942 = vmatpush1.msra.mxu0 0.0
    %6943 = vmatprep.subr.mxu0 0.0
    %6944 = vmatpush1.msra.mxu0 0.0
    %6945 = vmatprep.subr.mxu0 0.0
    %6946 = vmatpush1.msra.mxu0 0.0
    %6947 = vmatprep.subr.mxu0 0.0
    %6948 = vmatpush1.msra.mxu0 0.0
    %6949 = vmatprep.subr.mxu0 0.0
    %6950 = vmatpush1.msra.mxu0 0.0
    %6951 = vmatprep.subr.mxu0 0.0
    %6952 = vmatpush1.msra.mxu0 0.0
    %6953 = vmatprep.subr.mxu0 0.0
    %6954 = vmatpush1.msra.mxu0 0.0
    %6955 = vmatprep.subr.mxu0 0.0
    %6956 = vmatpush1.msra.mxu0 0.0
    %6957 = vmatprep.mubr.f32.mxu0 0.0
    %6958 = vmatmul.mubr.f32.gmra.mrb[0].mxu0 %v6820
    %v6959 = vpop.f32.mrb[0].mxu0
    %v6960 = vadd.f32 %v6261, %v6959
    %v6961 = vpop.f32.mrb[0].mxu0
    %6962 = vdwg.mxu0
    %v6963 = vadd.f32 %v6806, %v6889
    %v6964 = vsub.f32 0.0, %v6963
    %v6965 = vmul.f32 %v6964, 1.442695
    %v6966 = vpow.pop %v6965
    %v6967 = vadd.f32 %v6966, 1.0
    %v6968 = vrcp.pop %v6967
    %v6969 = vmul.f32 1.0, %v6968
    %v6971 = vrot.slane %v6806, 2
    %v6973 = vadd.f32 %v6971, %v6891
    %v6974 = vsub.f32 0.0, %v6973
    %v6975 = vmul.f32 %v6974, 1.442695
    %v6976 = vpow.pop %v6975
    %v6977 = vadd.f32 %v6976, 1.0
    %v6978 = vrcp.pop %v6977
    %v6979 = vmul.f32 1.0, %v6978
    %v6980 = vmul.f32 %v6969, %v6960
    %v6981 = vrot.slane %v6806, 4
    %v6983 = vadd.f32 %v6981, %v6980
    %v6984 = vtanh.pop %v6983
    %v6985 = vsub.f32 1.0, %v6979
    %v6986 = vmul.f32 %v6985, %v6984
    %v6987 = vmul.f32 %v6979, %v6802
    %v6988 = vadd.f32 %v6986, %v6987
    %s6989 = scalar_lea.vmem %s7, 6
    %6990 = vst.msk [vmem:[%s6989] sm:$0x3] %vm77, %v6988
    %s6991 = scalar_lea.vmem [#allocation3], 24
    %v6992 = vld [vmem:[%s6991] sm:$0x3f]
    %v6993 = vld [vmem:[#allocation4 + $0xc0] sm:$0xff]
    %v6994 = vld [vmem:[#allocation4 + $0xc8] sm:$0xff]
    %v6995 = vld [vmem:[#allocation4 + $0xd0] sm:$0xff]
    %v6996 = vld [vmem:[#allocation4 + $0xd8] sm:$0xff]
    %v6997 = vld [vmem:[#allocation4 + $0xe0] sm:$0xff]
    %v6998 = vld [vmem:[#allocation4 + $0xe8] sm:$0xff]
    %v6999 = vld [vmem:[#allocation4 + $0xf0] sm:$0xff]
    %v7000 = vld [vmem:[#allocation4 + $0xf8] sm:$0xff]
    %v7001 = vld [vmem:[#allocation4 + $0x100] sm:$0xff]
    %v7002 = vld [vmem:[#allocation4 + $0x108] sm:$0xff]
    %v7003 = vld [vmem:[#allocation4 + $0x110] sm:$0xff]
    %v7004 = vld [vmem:[#allocation4 + $0x118] sm:$0xff]
    %v7006 = vsel %vm204, %v6988, 0
    %7008 = vmatprep.subr.mxu0 %v6994
    %7009 = vmatpush1.msra.mxu0 %v6993
    %7010 = vmatprep.subr.mxu0 %v6997
    %7011 = vmatpush1.msra.mxu0 %v6996
    %7012 = vmatprep.subr.mxu0 %v7000
    %7013 = vmatpush1.msra.mxu0 %v6999
    %7014 = vmatprep.subr.mxu0 %v7003
    %7015 = vmatpush1.msra.mxu0 %v7002
    %7016 = vmatprep.subr.mxu0 0.0
    %7017 = vmatpush1.msra.mxu0 0.0
    %7018 = vmatprep.subr.mxu0 0.0
    %7019 = vmatpush1.msra.mxu0 0.0
    %7020 = vmatprep.subr.mxu0 0.0
    %7021 = vmatpush1.msra.mxu0 0.0
    %7022 = vmatprep.subr.mxu0 0.0
    %7023 = vmatpush1.msra.mxu0 0.0
    %7024 = vmatprep.subr.mxu0 0.0
    %7025 = vmatpush1.msra.mxu0 0.0
    %7026 = vmatprep.subr.mxu0 0.0
    %7027 = vmatpush1.msra.mxu0 0.0
    %7028 = vmatprep.subr.mxu0 0.0
    %7029 = vmatpush1.msra.mxu0 0.0
    %7030 = vmatprep.subr.mxu0 0.0
    %7031 = vmatpush1.msra.mxu0 0.0
    %7032 = vmatprep.subr.mxu0 0.0
    %7033 = vmatpush1.msra.mxu0 0.0
    %7034 = vmatprep.subr.mxu0 0.0
    %7035 = vmatpush1.msra.mxu0 0.0
    %7036 = vmatprep.subr.mxu0 0.0
    %7037 = vmatpush1.msra.mxu0 0.0
    %7038 = vmatprep.subr.mxu0 0.0
    %7039 = vmatpush1.msra.mxu0 0.0
    %7040 = vmatprep.subr.mxu0 0.0
    %7041 = vmatpush1.msra.mxu0 0.0
    %7042 = vmatprep.subr.mxu0 0.0
    %7043 = vmatpush1.msra.mxu0 0.0
    %7044 = vmatprep.subr.mxu0 0.0
    %7045 = vmatpush1.msra.mxu0 0.0
    %7046 = vmatprep.subr.mxu0 0.0
    %7047 = vmatpush1.msra.mxu0 0.0
    %7048 = vmatprep.subr.mxu0 0.0
    %7049 = vmatpush1.msra.mxu0 0.0
    %7050 = vmatprep.subr.mxu0 0.0
    %7051 = vmatpush1.msra.mxu0 0.0
    %7052 = vmatprep.subr.mxu0 0.0
    %7053 = vmatpush1.msra.mxu0 0.0
    %7054 = vmatprep.subr.mxu0 0.0
    %7055 = vmatpush1.msra.mxu0 0.0
    %7056 = vmatprep.subr.mxu0 0.0
    %7057 = vmatpush1.msra.mxu0 0.0
    %7058 = vmatprep.subr.mxu0 0.0
    %7059 = vmatpush1.msra.mxu0 0.0
    %7060 = vmatprep.subr.mxu0 0.0
    %7061 = vmatpush1.msra.mxu0 0.0
    %7062 = vmatprep.subr.mxu0 0.0
    %7063 = vmatpush1.msra.mxu0 0.0
    %7064 = vmatprep.subr.mxu0 0.0
    %7065 = vmatpush1.msra.mxu0 0.0
    %7066 = vmatprep.subr.mxu0 0.0
    %7067 = vmatpush1.msra.mxu0 0.0
    %7068 = vmatprep.subr.mxu0 0.0
    %7069 = vmatpush1.msra.mxu0 0.0
    %7070 = vmatprep.subr.mxu0 0.0
    %7071 = vmatpush1.msra.mxu0 0.0
    %7072 = vmatprep.mubr.f32.mxu0 0.0
    %7073 = vmatmul.mubr.f32.gmra.mrb[0].mxu0 %v7006
    %v7074 = vpop.f32.mrb[0].mxu0
    %v7075 = vadd.f32 %v6253, %v7074
    %v7076 = vpop.f32.mrb[0].mxu0
    %v7077 = vadd.f32 %v6257, %v7076
    %7078 = vdwg.mxu0
    %7079 = vmatprep.subr.mxu0 0.0
    %7080 = vmatpush1.msra.mxu0 %v6995
    %7081 = vmatprep.subr.mxu0 0.0
    %7082 = vmatpush1.msra.mxu0 %v6998
    %7083 = vmatprep.subr.mxu0 0.0
    %7084 = vmatpush1.msra.mxu0 %v7001
    %7085 = vmatprep.subr.mxu0 0.0
    %7086 = vmatpush1.msra.mxu0 %v7004
    %7087 = vmatprep.subr.mxu0 0.0
    %7088 = vmatpush1.msra.mxu0 0.0
    %7089 = vmatprep.subr.mxu0 0.0
    %7090 = vmatpush1.msra.mxu0 0.0
    %7091 = vmatprep.subr.mxu0 0.0
    %7092 = vmatpush1.msra.mxu0 0.0
    %7093 = vmatprep.subr.mxu0 0.0
    %7094 = vmatpush1.msra.mxu0 0.0
    %7095 = vmatprep.subr.mxu0 0.0
    %7096 = vmatpush1.msra.mxu0 0.0
    %7097 = vmatprep.subr.mxu0 0.0
    %7098 = vmatpush1.msra.mxu0 0.0
    %7099 = vmatprep.subr.mxu0 0.0
    %7100 = vmatpush1.msra.mxu0 0.0
    %7101 = vmatprep.subr.mxu0 0.0
    %7102 = vmatpush1.msra.mxu0 0.0
    %7103 = vmatprep.subr.mxu0 0.0
    %7104 = vmatpush1.msra.mxu0 0.0
    %7105 = vmatprep.subr.mxu0 0.0
    %7106 = vmatpush1.msra.mxu0 0.0
    %7107 = vmatprep.subr.mxu0 0.0
    %7108 = vmatpush1.msra.mxu0 0.0
    %7109 = vmatprep.subr.mxu0 0.0
    %7110 = vmatpush1.msra.mxu0 0.0
    %7111 = vmatprep.subr.mxu0 0.0
    %7112 = vmatpush1.msra.mxu0 0.0
    %7113 = vmatprep.subr.mxu0 0.0
    %7114 = vmatpush1.msra.mxu0 0.0
    %7115 = vmatprep.subr.mxu0 0.0
    %7116 = vmatpush1.msra.mxu0 0.0
    %7117 = vmatprep.subr.mxu0 0.0
    %7118 = vmatpush1.msra.mxu0 0.0
    %7119 = vmatprep.subr.mxu0 0.0
    %7120 = vmatpush1.msra.mxu0 0.0
    %7121 = vmatprep.subr.mxu0 0.0
    %7122 = vmatpush1.msra.mxu0 0.0
    %7123 = vmatprep.subr.mxu0 0.0
    %7124 = vmatpush1.msra.mxu0 0.0
    %7125 = vmatprep.subr.mxu0 0.0
    %7126 = vmatpush1.msra.mxu0 0.0
    %7127 = vmatprep.subr.mxu0 0.0
    %7128 = vmatpush1.msra.mxu0 0.0
    %7129 = vmatprep.subr.mxu0 0.0
    %7130 = vmatpush1.msra.mxu0 0.0
    %7131 = vmatprep.subr.mxu0 0.0
    %7132 = vmatpush1.msra.mxu0 0.0
    %7133 = vmatprep.subr.mxu0 0.0
    %7134 = vmatpush1.msra.mxu0 0.0
    %7135 = vmatprep.subr.mxu0 0.0
    %7136 = vmatpush1.msra.mxu0 0.0
    %7137 = vmatprep.subr.mxu0 0.0
    %7138 = vmatpush1.msra.mxu0 0.0
    %7139 = vmatprep.subr.mxu0 0.0
    %7140 = vmatpush1.msra.mxu0 0.0
    %7141 = vmatprep.subr.mxu0 0.0
    %7142 = vmatpush1.msra.mxu0 0.0
    %7143 = vmatprep.mubr.f32.mxu0 0.0
    %7144 = vmatmul.mubr.f32.gmra.mrb[0].mxu0 %v7006
    %v7145 = vpop.f32.mrb[0].mxu0
    %v7146 = vadd.f32 %v6261, %v7145
    %v7147 = vpop.f32.mrb[0].mxu0
    %7148 = vdwg.mxu0
    %v7149 = vadd.f32 %v6992, %v7075
    %v7150 = vsub.f32 0.0, %v7149
    %v7151 = vmul.f32 %v7150, 1.442695
    %v7152 = vpow.pop %v7151
    %v7153 = vadd.f32 %v7152, 1.0
    %v7154 = vrcp.pop %v7153
    %v7155 = vmul.f32 1.0, %v7154
    %v7157 = vrot.slane %v6992, 2
    %v7159 = vadd.f32 %v7157, %v7077
    %v7160 = vsub.f32 0.0, %v7159
    %v7161 = vmul.f32 %v7160, 1.442695
    %v7162 = vpow.pop %v7161
    %v7163 = vadd.f32 %v7162, 1.0
    %v7164 = vrcp.pop %v7163
    %v7165 = vmul.f32 1.0, %v7164
    %v7166 = vmul.f32 %v7155, %v7146
    %v7167 = vrot.slane %v6992, 4
    %v7169 = vadd.f32 %v7167, %v7166
    %v7170 = vtanh.pop %v7169
    %v7171 = vsub.f32 1.0, %v7165
    %v7172 = vmul.f32 %v7171, %v7170
    %v7173 = vmul.f32 %v7165, %v6988
    %v7174 = vadd.f32 %v7172, %v7173
    %s7175 = scalar_lea.vmem %s7, 8
    %7176 = vst.msk [vmem:[%s7175] sm:$0x3] %vm77, %v7174
    %s7177 = scalar_lea.vmem [#allocation3], 30
    %v7178 = vld [vmem:[%s7177] sm:$0x3f]
    %v7179 = vld [vmem:[#allocation4 + $0xc0] sm:$0xff]
    %v7180 = vld [vmem:[#allocation4 + $0xc8] sm:$0xff]
    %v7181 = vld [vmem:[#allocation4 + $0xd0] sm:$0xff]
    %v7182 = vld [vmem:[#allocation4 + $0xd8] sm:$0xff]
    %v7183 = vld [vmem:[#allocation4 + $0xe0] sm:$0xff]
    %v7184 = vld [vmem:[#allocation4 + $0xe8] sm:$0xff]
    %v7185 = vld [vmem:[#allocation4 + $0xf0] sm:$0xff]
    %v7186 = vld [vmem:[#allocation4 + $0xf8] sm:$0xff]
    %v7187 = vld [vmem:[#allocation4 + $0x100] sm:$0xff]
    %v7188 = vld [vmem:[#allocation4 + $0x108] sm:$0xff]
    %v7189 = vld [vmem:[#allocation4 + $0x110] sm:$0xff]
    %v7190 = vld [vmem:[#allocation4 + $0x118] sm:$0xff]
    %v7192 = vsel %vm204, %v7174, 0
    %7194 = vmatprep.subr.mxu0 %v7180
    %7195 = vmatpush1.msra.mxu0 %v7179
    %7196 = vmatprep.subr.mxu0 %v7183
    %7197 = vmatpush1.msra.mxu0 %v7182
    %7198 = vmatprep.subr.mxu0 %v7186
    %7199 = vmatpush1.msra.mxu0 %v7185
    %7200 = vmatprep.subr.mxu0 %v7189
    %7201 = vmatpush1.msra.mxu0 %v7188
    %7202 = vmatprep.subr.mxu0 0.0
    %7203 = vmatpush1.msra.mxu0 0.0
    %7204 = vmatprep.subr.mxu0 0.0
    %7205 = vmatpush1.msra.mxu0 0.0
    %7206 = vmatprep.subr.mxu0 0.0
    %7207 = vmatpush1.msra.mxu0 0.0
    %7208 = vmatprep.subr.mxu0 0.0
    %7209 = vmatpush1.msra.mxu0 0.0
    %7210 = vmatprep.subr.mxu0 0.0
    %7211 = vmatpush1.msra.mxu0 0.0
    %7212 = vmatprep.subr.mxu0 0.0
    %7213 = vmatpush1.msra.mxu0 0.0
    %7214 = vmatprep.subr.mxu0 0.0
    %7215 = vmatpush1.msra.mxu0 0.0
    %7216 = vmatprep.subr.mxu0 0.0
    %7217 = vmatpush1.msra.mxu0 0.0
    %7218 = vmatprep.subr.mxu0 0.0
    %7219 = vmatpush1.msra.mxu0 0.0
    %7220 = vmatprep.subr.mxu0 0.0
    %7221 = vmatpush1.msra.mxu0 0.0
    %7222 = vmatprep.subr.mxu0 0.0
    %7223 = vmatpush1.msra.mxu0 0.0
    %7224 = vmatprep.subr.mxu0 0.0
    %7225 = vmatpush1.msra.mxu0 0.0
    %7226 = vmatprep.subr.mxu0 0.0
    %7227 = vmatpush1.msra.mxu0 0.0
    %7228 = vmatprep.subr.mxu0 0.0
    %7229 = vmatpush1.msra.mxu0 0.0
    %7230 = vmatprep.subr.mxu0 0.0
    %7231 = vmatpush1.msra.mxu0 0.0
    %7232 = vmatprep.subr.mxu0 0.0
    %7233 = vmatpush1.msra.mxu0 0.0
    %7234 = vmatprep.subr.mxu0 0.0
    %7235 = vmatpush1.msra.mxu0 0.0
    %7236 = vmatprep.subr.mxu0 0.0
    %7237 = vmatpush1.msra.mxu0 0.0
    %7238 = vmatprep.subr.mxu0 0.0
    %7239 = vmatpush1.msra.mxu0 0.0
    %7240 = vmatprep.subr.mxu0 0.0
    %7241 = vmatpush1.msra.mxu0 0.0
    %7242 = vmatprep.subr.mxu0 0.0
    %7243 = vmatpush1.msra.mxu0 0.0
    %7244 = vmatprep.subr.mxu0 0.0
    %7245 = vmatpush1.msra.mxu0 0.0
    %7246 = vmatprep.subr.mxu0 0.0
    %7247 = vmatpush1.msra.mxu0 0.0
    %7248 = vmatprep.subr.mxu0 0.0
    %7249 = vmatpush1.msra.mxu0 0.0
    %7250 = vmatprep.subr.mxu0 0.0
    %7251 = vmatpush1.msra.mxu0 0.0
    %7252 = vmatprep.subr.mxu0 0.0
    %7253 = vmatpush1.msra.mxu0 0.0
    %7254 = vmatprep.subr.mxu0 0.0
    %7255 = vmatpush1.msra.mxu0 0.0
    %7256 = vmatprep.subr.mxu0 0.0
    %7257 = vmatpush1.msra.mxu0 0.0
    %7258 = vmatprep.mubr.f32.mxu0 0.0
    %7259 = vmatmul.mubr.f32.gmra.mrb[0].mxu0 %v7192
    %v7260 = vpop.f32.mrb[0].mxu0
    %v7261 = vadd.f32 %v6253, %v7260
    %v7262 = vpop.f32.mrb[0].mxu0
    %v7263 = vadd.f32 %v6257, %v7262
    %7264 = vdwg.mxu0
    %7265 = vmatprep.subr.mxu0 0.0
    %7266 = vmatpush1.msra.mxu0 %v7181
    %7267 = vmatprep.subr.mxu0 0.0
    %7268 = vmatpush1.msra.mxu0 %v7184
    %7269 = vmatprep.subr.mxu0 0.0
    %7270 = vmatpush1.msra.mxu0 %v7187
    %7271 = vmatprep.subr.mxu0 0.0
    %7272 = vmatpush1.msra.mxu0 %v7190
    %7273 = vmatprep.subr.mxu0 0.0
    %7274 = vmatpush1.msra.mxu0 0.0
    %7275 = vmatprep.subr.mxu0 0.0
    %7276 = vmatpush1.msra.mxu0 0.0
    %7277 = vmatprep.subr.mxu0 0.0
    %7278 = vmatpush1.msra.mxu0 0.0
    %7279 = vmatprep.subr.mxu0 0.0
    %7280 = vmatpush1.msra.mxu0 0.0
    %7281 = vmatprep.subr.mxu0 0.0
    %7282 = vmatpush1.msra.mxu0 0.0
    %7283 = vmatprep.subr.mxu0 0.0
    %7284 = vmatpush1.msra.mxu0 0.0
    %7285 = vmatprep.subr.mxu0 0.0
    %7286 = vmatpush1.msra.mxu0 0.0
    %7287 = vmatprep.subr.mxu0 0.0
    %7288 = vmatpush1.msra.mxu0 0.0
    %7289 = vmatprep.subr.mxu0 0.0
    %7290 = vmatpush1.msra.mxu0 0.0
    %7291 = vmatprep.subr.mxu0 0.0
    %7292 = vmatpush1.msra.mxu0 0.0
    %7293 = vmatprep.subr.mxu0 0.0
    %7294 = vmatpush1.msra.mxu0 0.0
    %7295 = vmatprep.subr.mxu0 0.0
    %7296 = vmatpush1.msra.mxu0 0.0
    %7297 = vmatprep.subr.mxu0 0.0
    %7298 = vmatpush1.msra.mxu0 0.0
    %7299 = vmatprep.subr.mxu0 0.0
    %7300 = vmatpush1.msra.mxu0 0.0
    %7301 = vmatprep.subr.mxu0 0.0
    %7302 = vmatpush1.msra.mxu0 0.0
    %7303 = vmatprep.subr.mxu0 0.0
    %7304 = vmatpush1.msra.mxu0 0.0
    %7305 = vmatprep.subr.mxu0 0.0
    %7306 = vmatpush1.msra.mxu0 0.0
    %7307 = vmatprep.subr.mxu0 0.0
    %7308 = vmatpush1.msra.mxu0 0.0
    %7309 = vmatprep.subr.mxu0 0.0
    %7310 = vmatpush1.msra.mxu0 0.0
    %7311 = vmatprep.subr.mxu0 0.0
    %7312 = vmatpush1.msra.mxu0 0.0
    %7313 = vmatprep.subr.mxu0 0.0
    %7314 = vmatpush1.msra.mxu0 0.0
    %7315 = vmatprep.subr.mxu0 0.0
    %7316 = vmatpush1.msra.mxu0 0.0
    %7317 = vmatprep.subr.mxu0 0.0
    %7318 = vmatpush1.msra.mxu0 0.0
    %7319 = vmatprep.subr.mxu0 0.0
    %7320 = vmatpush1.msra.mxu0 0.0
    %7321 = vmatprep.subr.mxu0 0.0
    %7322 = vmatpush1.msra.mxu0 0.0
    %7323 = vmatprep.subr.mxu0 0.0
    %7324 = vmatpush1.msra.mxu0 0.0
    %7325 = vmatprep.subr.mxu0 0.0
    %7326 = vmatpush1.msra.mxu0 0.0
    %7327 = vmatprep.subr.mxu0 0.0
    %7328 = vmatpush1.msra.mxu0 0.0
    %7329 = vmatprep.mubr.f32.mxu0 0.0
    %7330 = vmatmul.mubr.f32.gmra.mrb[0].mxu0 %v7192
    %v7331 = vpop.f32.mrb[0].mxu0
    %v7332 = vadd.f32 %v6261, %v7331
    %v7333 = vpop.f32.mrb[0].mxu0
    %7334 = vdwg.mxu0
    %v7335 = vadd.f32 %v7178, %v7261
    %v7336 = vsub.f32 0.0, %v7335
    %v7337 = vmul.f32 %v7336, 1.442695
    %v7338 = vpow.pop %v7337
    %v7339 = vadd.f32 %v7338, 1.0
    %v7340 = vrcp.pop %v7339
    %v7341 = vmul.f32 1.0, %v7340
    %v7343 = vrot.slane %v7178, 2
    %v7345 = vadd.f32 %v7343, %v7263
    %v7346 = vsub.f32 0.0, %v7345
    %v7347 = vmul.f32 %v7346, 1.442695
    %v7348 = vpow.pop %v7347
    %v7349 = vadd.f32 %v7348, 1.0
    %v7350 = vrcp.pop %v7349
    %v7351 = vmul.f32 1.0, %v7350
    %v7352 = vmul.f32 %v7341, %v7332
    %v7353 = vrot.slane %v7178, 4
    %v7355 = vadd.f32 %v7353, %v7352
    %v7356 = vtanh.pop %v7355
    %v7357 = vsub.f32 1.0, %v7351
    %v7358 = vmul.f32 %v7357, %v7356
    %v7359 = vmul.f32 %v7351, %v7174
    %v7360 = vadd.f32 %v7358, %v7359
    %s7361 = scalar_lea.vmem %s7, 10
    %7362 = vst.msk [vmem:[%s7361] sm:$0x3] %vm77, %v7360
    %s7363 = scalar_lea.vmem [#allocation3], 36
    %v7364 = vld [vmem:[%s7363] sm:$0x3f]
    %v7365 = vld [vmem:[#allocation4 + $0xc0] sm:$0xff]
    %v7366 = vld [vmem:[#allocation4 + $0xc8] sm:$0xff]
    %v7367 = vld [vmem:[#allocation4 + $0xd0] sm:$0xff]
    %v7368 = vld [vmem:[#allocation4 + $0xd8] sm:$0xff]
    %v7369 = vld [vmem:[#allocation4 + $0xe0] sm:$0xff]
    %v7370 = vld [vmem:[#allocation4 + $0xe8] sm:$0xff]
    %v7371 = vld [vmem:[#allocation4 + $0xf0] sm:$0xff]
    %v7372 = vld [vmem:[#allocation4 + $0xf8] sm:$0xff]
    %v7373 = vld [vmem:[#allocation4 + $0x100] sm:$0xff]
    %v7374 = vld [vmem:[#allocation4 + $0x108] sm:$0xff]
    %v7375 = vld [vmem:[#allocation4 + $0x110] sm:$0xff]
    %v7376 = vld [vmem:[#allocation4 + $0x118] sm:$0xff]
    %v7378 = vsel %vm204, %v7360, 0
    %7380 = vmatprep.subr.mxu0 %v7366
    %7381 = vmatpush1.msra.mxu0 %v7365
    %7382 = vmatprep.subr.mxu0 %v7369
    %7383 = vmatpush1.msra.mxu0 %v7368
    %7384 = vmatprep.subr.mxu0 %v7372
    %7385 = vmatpush1.msra.mxu0 %v7371
    %7386 = vmatprep.subr.mxu0 %v7375
    %7387 = vmatpush1.msra.mxu0 %v7374
    %7388 = vmatprep.subr.mxu0 0.0
    %7389 = vmatpush1.msra.mxu0 0.0
    %7390 = vmatprep.subr.mxu0 0.0
    %7391 = vmatpush1.msra.mxu0 0.0
    %7392 = vmatprep.subr.mxu0 0.0
    %7393 = vmatpush1.msra.mxu0 0.0
    %7394 = vmatprep.subr.mxu0 0.0
    %7395 = vmatpush1.msra.mxu0 0.0
    %7396 = vmatprep.subr.mxu0 0.0
    %7397 = vmatpush1.msra.mxu0 0.0
    %7398 = vmatprep.subr.mxu0 0.0
    %7399 = vmatpush1.msra.mxu0 0.0
    %7400 = vmatprep.subr.mxu0 0.0
    %7401 = vmatpush1.msra.mxu0 0.0
    %7402 = vmatprep.subr.mxu0 0.0
    %7403 = vmatpush1.msra.mxu0 0.0
    %7404 = vmatprep.subr.mxu0 0.0
    %7405 = vmatpush1.msra.mxu0 0.0
    %7406 = vmatprep.subr.mxu0 0.0
    %7407 = vmatpush1.msra.mxu0 0.0
    %7408 = vmatprep.subr.mxu0 0.0
    %7409 = vmatpush1.msra.mxu0 0.0
    %7410 = vmatprep.subr.mxu0 0.0
    %7411 = vmatpush1.msra.mxu0 0.0
    %7412 = vmatprep.subr.mxu0 0.0
    %7413 = vmatpush1.msra.mxu0 0.0
    %7414 = vmatprep.subr.mxu0 0.0
    %7415 = vmatpush1.msra.mxu0 0.0
    %7416 = vmatprep.subr.mxu0 0.0
    %7417 = vmatpush1.msra.mxu0 0.0
    %7418 = vmatprep.subr.mxu0 0.0
    %7419 = vmatpush1.msra.mxu0 0.0
    %7420 = vmatprep.subr.mxu0 0.0
    %7421 = vmatpush1.msra.mxu0 0.0
    %7422 = vmatprep.subr.mxu0 0.0
    %7423 = vmatpush1.msra.mxu0 0.0
    %7424 = vmatprep.subr.mxu0 0.0
    %7425 = vmatpush1.msra.mxu0 0.0
    %7426 = vmatprep.subr.mxu0 0.0
    %7427 = vmatpush1.msra.mxu0 0.0
    %7428 = vmatprep.subr.mxu0 0.0
    %7429 = vmatpush1.msra.mxu0 0.0
    %7430 = vmatprep.subr.mxu0 0.0
    %7431 = vmatpush1.msra.mxu0 0.0
    %7432 = vmatprep.subr.mxu0 0.0
    %7433 = vmatpush1.msra.mxu0 0.0
    %7434 = vmatprep.subr.mxu0 0.0
    %7435 = vmatpush1.msra.mxu0 0.0
    %7436 = vmatprep.subr.mxu0 0.0
    %7437 = vmatpush1.msra.mxu0 0.0
    %7438 = vmatprep.subr.mxu0 0.0
    %7439 = vmatpush1.msra.mxu0 0.0
    %7440 = vmatprep.subr.mxu0 0.0
    %7441 = vmatpush1.msra.mxu0 0.0
    %7442 = vmatprep.subr.mxu0 0.0
    %7443 = vmatpush1.msra.mxu0 0.0
    %7444 = vmatprep.mubr.f32.mxu0 0.0
    %7445 = vmatmul.mubr.f32.gmra.mrb[0].mxu0 %v7378
    %v7446 = vpop.f32.mrb[0].mxu0
    %v7447 = vadd.f32 %v6253, %v7446
    %v7448 = vpop.f32.mrb[0].mxu0
    %v7449 = vadd.f32 %v6257, %v7448
    %7450 = vdwg.mxu0
    %7451 = vmatprep.subr.mxu0 0.0
    %7452 = vmatpush1.msra.mxu0 %v7367
    %7453 = vmatprep.subr.mxu0 0.0
    %7454 = vmatpush1.msra.mxu0 %v7370
    %7455 = vmatprep.subr.mxu0 0.0
    %7456 = vmatpush1.msra.mxu0 %v7373
    %7457 = vmatprep.subr.mxu0 0.0
    %7458 = vmatpush1.msra.mxu0 %v7376
    %7459 = vmatprep.subr.mxu0 0.0
    %7460 = vmatpush1.msra.mxu0 0.0
    %7461 = vmatprep.subr.mxu0 0.0
    %7462 = vmatpush1.msra.mxu0 0.0
    %7463 = vmatprep.subr.mxu0 0.0
    %7464 = vmatpush1.msra.mxu0 0.0
    %7465 = vmatprep.subr.mxu0 0.0
    %7466 = vmatpush1.msra.mxu0 0.0
    %7467 = vmatprep.subr.mxu0 0.0
    %7468 = vmatpush1.msra.mxu0 0.0
    %7469 = vmatprep.subr.mxu0 0.0
    %7470 = vmatpush1.msra.mxu0 0.0
    %7471 = vmatprep.subr.mxu0 0.0
    %7472 = vmatpush1.msra.mxu0 0.0
    %7473 = vmatprep.subr.mxu0 0.0
    %7474 = vmatpush1.msra.mxu0 0.0
    %7475 = vmatprep.subr.mxu0 0.0
    %7476 = vmatpush1.msra.mxu0 0.0
    %7477 = vmatprep.subr.mxu0 0.0
    %7478 = vmatpush1.msra.mxu0 0.0
    %7479 = vmatprep.subr.mxu0 0.0
    %7480 = vmatpush1.msra.mxu0 0.0
    %7481 = vmatprep.subr.mxu0 0.0
    %7482 = vmatpush1.msra.mxu0 0.0
    %7483 = vmatprep.subr.mxu0 0.0
    %7484 = vmatpush1.msra.mxu0 0.0
    %7485 = vmatprep.subr.mxu0 0.0
    %7486 = vmatpush1.msra.mxu0 0.0
    %7487 = vmatprep.subr.mxu0 0.0
    %7488 = vmatpush1.msra.mxu0 0.0
    %7489 = vmatprep.subr.mxu0 0.0
    %7490 = vmatpush1.msra.mxu0 0.0
    %7491 = vmatprep.subr.mxu0 0.0
    %7492 = vmatpush1.msra.mxu0 0.0
    %7493 = vmatprep.subr.mxu0 0.0
    %7494 = vmatpush1.msra.mxu0 0.0
    %7495 = vmatprep.subr.mxu0 0.0
    %7496 = vmatpush1.msra.mxu0 0.0
    %7497 = vmatprep.subr.mxu0 0.0
    %7498 = vmatpush1.msra.mxu0 0.0
    %7499 = vmatprep.subr.mxu0 0.0
    %7500 = vmatpush1.msra.mxu0 0.0
    %7501 = vmatprep.subr.mxu0 0.0
    %7502 = vmatpush1.msra.mxu0 0.0
    %7503 = vmatprep.subr.mxu0 0.0
    %7504 = vmatpush1.msra.mxu0 0.0
    %7505 = vmatprep.subr.mxu0 0.0
    %7506 = vmatpush1.msra.mxu0 0.0
    %7507 = vmatprep.subr.mxu0 0.0
    %7508 = vmatpush1.msra.mxu0 0.0
    %7509 = vmatprep.subr.mxu0 0.0
    %7510 = vmatpush1.msra.mxu0 0.0
    %7511 = vmatprep.subr.mxu0 0.0
    %7512 = vmatpush1.msra.mxu0 0.0
    %7513 = vmatprep.subr.mxu0 0.0
    %7514 = vmatpush1.msra.mxu0 0.0
    %7515 = vmatprep.mubr.f32.mxu0 0.0
    %7516 = vmatmul.mubr.f32.gmra.mrb[0].mxu0 %v7378
    %v7517 = vpop.f32.mrb[0].mxu0
    %v7518 = vadd.f32 %v6261, %v7517
    %v7519 = vpop.f32.mrb[0].mxu0
    %7520 = vdwg.mxu0
    %v7521 = vadd.f32 %v7364, %v7447
    %v7522 = vsub.f32 0.0, %v7521
    %v7523 = vmul.f32 %v7522, 1.442695
    %v7524 = vpow.pop %v7523
    %v7525 = vadd.f32 %v7524, 1.0
    %v7526 = vrcp.pop %v7525
    %v7527 = vmul.f32 1.0, %v7526
    %v7529 = vrot.slane %v7364, 2
    %v7531 = vadd.f32 %v7529, %v7449
    %v7532 = vsub.f32 0.0, %v7531
    %v7533 = vmul.f32 %v7532, 1.442695
    %v7534 = vpow.pop %v7533
    %v7535 = vadd.f32 %v7534, 1.0
    %v7536 = vrcp.pop %v7535
    %v7537 = vmul.f32 1.0, %v7536
    %v7538 = vmul.f32 %v7527, %v7518
    %v7539 = vrot.slane %v7364, 4
    %v7541 = vadd.f32 %v7539, %v7538
    %v7542 = vtanh.pop %v7541
    %v7543 = vsub.f32 1.0, %v7537
    %v7544 = vmul.f32 %v7543, %v7542
    %v7545 = vmul.f32 %v7537, %v7360
    %v7546 = vadd.f32 %v7544, %v7545
    %s7547 = scalar_lea.vmem %s7, 12
    %7548 = vst.msk [vmem:[%s7547] sm:$0x3] %vm77, %v7546
    %s7549 = scalar_lea.vmem [#allocation3], 42
    %v7550 = vld [vmem:[%s7549] sm:$0x3f]
    %v7551 = vld [vmem:[#allocation4 + $0xc0] sm:$0xff]
    %v7552 = vld [vmem:[#allocation4 + $0xc8] sm:$0xff]
    %v7553 = vld [vmem:[#allocation4 + $0xd0] sm:$0xff]
    %v7554 = vld [vmem:[#allocation4 + $0xd8] sm:$0xff]
    %v7555 = vld [vmem:[#allocation4 + $0xe0] sm:$0xff]
    %v7556 = vld [vmem:[#allocation4 + $0xe8] sm:$0xff]
    %v7557 = vld [vmem:[#allocation4 + $0xf0] sm:$0xff]
    %v7558 = vld [vmem:[#allocation4 + $0xf8] sm:$0xff]
    %v7559 = vld [vmem:[#allocation4 + $0x100] sm:$0xff]
    %v7560 = vld [vmem:[#allocation4 + $0x108] sm:$0xff]
    %v7561 = vld [vmem:[#allocation4 + $0x110] sm:$0xff]
    %v7562 = vld [vmem:[#allocation4 + $0x118] sm:$0xff]
    %v7564 = vsel %vm204, %v7546, 0
    %7566 = vmatprep.subr.mxu0 %v7552
    %7567 = vmatpush1.msra.mxu0 %v7551
    %7568 = vmatprep.subr.mxu0 %v7555
    %7569 = vmatpush1.msra.mxu0 %v7554
    %7570 = vmatprep.subr.mxu0 %v7558
    %7571 = vmatpush1.msra.mxu0 %v7557
    %7572 = vmatprep.subr.mxu0 %v7561
    %7573 = vmatpush1.msra.mxu0 %v7560
    %7574 = vmatprep.subr.mxu0 0.0
    %7575 = vmatpush1.msra.mxu0 0.0
    %7576 = vmatprep.subr.mxu0 0.0
    %7577 = vmatpush1.msra.mxu0 0.0
    %7578 = vmatprep.subr.mxu0 0.0
    %7579 = vmatpush1.msra.mxu0 0.0
    %7580 = vmatprep.subr.mxu0 0.0
    %7581 = vmatpush1.msra.mxu0 0.0
    %7582 = vmatprep.subr.mxu0 0.0
    %7583 = vmatpush1.msra.mxu0 0.0
    %7584 = vmatprep.subr.mxu0 0.0
    %7585 = vmatpush1.msra.mxu0 0.0
    %7586 = vmatprep.subr.mxu0 0.0
    %7587 = vmatpush1.msra.mxu0 0.0
    %7588 = vmatprep.subr.mxu0 0.0
    %7589 = vmatpush1.msra.mxu0 0.0
    %7590 = vmatprep.subr.mxu0 0.0
    %7591 = vmatpush1.msra.mxu0 0.0
    %7592 = vmatprep.subr.mxu0 0.0
    %7593 = vmatpush1.msra.mxu0 0.0
    %7594 = vmatprep.subr.mxu0 0.0
    %7595 = vmatpush1.msra.mxu0 0.0
    %7596 = vmatprep.subr.mxu0 0.0
    %7597 = vmatpush1.msra.mxu0 0.0
    %7598 = vmatprep.subr.mxu0 0.0
    %7599 = vmatpush1.msra.mxu0 0.0
    %7600 = vmatprep.subr.mxu0 0.0
    %7601 = vmatpush1.msra.mxu0 0.0
    %7602 = vmatprep.subr.mxu0 0.0
    %7603 = vmatpush1.msra.mxu0 0.0
    %7604 = vmatprep.subr.mxu0 0.0
    %7605 = vmatpush1.msra.mxu0 0.0
    %7606 = vmatprep.subr.mxu0 0.0
    %7607 = vmatpush1.msra.mxu0 0.0
    %7608 = vmatprep.subr.mxu0 0.0
    %7609 = vmatpush1.msra.mxu0 0.0
    %7610 = vmatprep.subr.mxu0 0.0
    %7611 = vmatpush1.msra.mxu0 0.0
    %7612 = vmatprep.subr.mxu0 0.0
    %7613 = vmatpush1.msra.mxu0 0.0
    %7614 = vmatprep.subr.mxu0 0.0
    %7615 = vmatpush1.msra.mxu0 0.0
    %7616 = vmatprep.subr.mxu0 0.0
    %7617 = vmatpush1.msra.mxu0 0.0
    %7618 = vmatprep.subr.mxu0 0.0
    %7619 = vmatpush1.msra.mxu0 0.0
    %7620 = vmatprep.subr.mxu0 0.0
    %7621 = vmatpush1.msra.mxu0 0.0
    %7622 = vmatprep.subr.mxu0 0.0
    %7623 = vmatpush1.msra.mxu0 0.0
    %7624 = vmatprep.subr.mxu0 0.0
    %7625 = vmatpush1.msra.mxu0 0.0
    %7626 = vmatprep.subr.mxu0 0.0
    %7627 = vmatpush1.msra.mxu0 0.0
    %7628 = vmatprep.subr.mxu0 0.0
    %7629 = vmatpush1.msra.mxu0 0.0
    %7630 = vmatprep.mubr.f32.mxu0 0.0
    %7631 = vmatmul.mubr.f32.gmra.mrb[0].mxu0 %v7564
    %v7632 = vpop.f32.mrb[0].mxu0
    %v7633 = vadd.f32 %v6253, %v7632
    %v7634 = vpop.f32.mrb[0].mxu0
    %v7635 = vadd.f32 %v6257, %v7634
    %7636 = vdwg.mxu0
    %7637 = vmatprep.subr.mxu0 0.0
    %7638 = vmatpush1.msra.mxu0 %v7553
    %7639 = vmatprep.subr.mxu0 0.0
    %7640 = vmatpush1.msra.mxu0 %v7556
    %7641 = vmatprep.subr.mxu0 0.0
    %7642 = vmatpush1.msra.mxu0 %v7559
    %7643 = vmatprep.subr.mxu0 0.0
    %7644 = vmatpush1.msra.mxu0 %v7562
    %7645 = vmatprep.subr.mxu0 0.0
    %7646 = vmatpush1.msra.mxu0 0.0
    %7647 = vmatprep.subr.mxu0 0.0
    %7648 = vmatpush1.msra.mxu0 0.0
    %7649 = vmatprep.subr.mxu0 0.0
    %7650 = vmatpush1.msra.mxu0 0.0
    %7651 = vmatprep.subr.mxu0 0.0
    %7652 = vmatpush1.msra.mxu0 0.0
    %7653 = vmatprep.subr.mxu0 0.0
    %7654 = vmatpush1.msra.mxu0 0.0
    %7655 = vmatprep.subr.mxu0 0.0
    %7656 = vmatpush1.msra.mxu0 0.0
    %7657 = vmatprep.subr.mxu0 0.0
    %7658 = vmatpush1.msra.mxu0 0.0
    %7659 = vmatprep.subr.mxu0 0.0
    %7660 = vmatpush1.msra.mxu0 0.0
    %7661 = vmatprep.subr.mxu0 0.0
    %7662 = vmatpush1.msra.mxu0 0.0
    %7663 = vmatprep.subr.mxu0 0.0
    %7664 = vmatpush1.msra.mxu0 0.0
    %7665 = vmatprep.subr.mxu0 0.0
    %7666 = vmatpush1.msra.mxu0 0.0
    %7667 = vmatprep.subr.mxu0 0.0
    %7668 = vmatpush1.msra.mxu0 0.0
    %7669 = vmatprep.subr.mxu0 0.0
    %7670 = vmatpush1.msra.mxu0 0.0
    %7671 = vmatprep.subr.mxu0 0.0
    %7672 = vmatpush1.msra.mxu0 0.0
    %7673 = vmatprep.subr.mxu0 0.0
    %7674 = vmatpush1.msra.mxu0 0.0
    %7675 = vmatprep.subr.mxu0 0.0
    %7676 = vmatpush1.msra.mxu0 0.0
    %7677 = vmatprep.subr.mxu0 0.0
    %7678 = vmatpush1.msra.mxu0 0.0
    %7679 = vmatprep.subr.mxu0 0.0
    %7680 = vmatpush1.msra.mxu0 0.0
    %7681 = vmatprep.subr.mxu0 0.0
    %7682 = vmatpush1.msra.mxu0 0.0
    %7683 = vmatprep.subr.mxu0 0.0
    %7684 = vmatpush1.msra.mxu0 0.0
    %7685 = vmatprep.subr.mxu0 0.0
    %7686 = vmatpush1.msra.mxu0 0.0
    %7687 = vmatprep.subr.mxu0 0.0
    %7688 = vmatpush1.msra.mxu0 0.0
    %7689 = vmatprep.subr.mxu0 0.0
    %7690 = vmatpush1.msra.mxu0 0.0
    %7691 = vmatprep.subr.mxu0 0.0
    %7692 = vmatpush1.msra.mxu0 0.0
    %7693 = vmatprep.subr.mxu0 0.0
    %7694 = vmatpush1.msra.mxu0 0.0
    %7695 = vmatprep.subr.mxu0 0.0
    %7696 = vmatpush1.msra.mxu0 0.0
    %7697 = vmatprep.subr.mxu0 0.0
    %7698 = vmatpush1.msra.mxu0 0.0
    %7699 = vmatprep.subr.mxu0 0.0
    %7700 = vmatpush1.msra.mxu0 0.0
    %7701 = vmatprep.mubr.f32.mxu0 0.0
    %7702 = vmatmul.mubr.f32.gmra.mrb[0].mxu0 %v7564
    %v7703 = vpop.f32.mrb[0].mxu0
    %v7704 = vadd.f32 %v6261, %v7703
    %v7705 = vpop.f32.mrb[0].mxu0
    %7706 = vdwg.mxu0
    %v7707 = vadd.f32 %v7550, %v7633
    %v7708 = vsub.f32 0.0, %v7707
    %v7709 = vmul.f32 %v7708, 1.442695
    %v7710 = vpow.pop %v7709
    %v7711 = vadd.f32 %v7710, 1.0
    %v7712 = vrcp.pop %v7711
    %v7713 = vmul.f32 1.0, %v7712
    %v7715 = vrot.slane %v7550, 2
    %v7717 = vadd.f32 %v7715, %v7635
    %v7718 = vsub.f32 0.0, %v7717
    %v7719 = vmul.f32 %v7718, 1.442695
    %v7720 = vpow.pop %v7719
    %v7721 = vadd.f32 %v7720, 1.0
    %v7722 = vrcp.pop %v7721
    %v7723 = vmul.f32 1.0, %v7722
    %v7724 = vmul.f32 %v7713, %v7704
    %v7725 = vrot.slane %v7550, 4
    %v7727 = vadd.f32 %v7725, %v7724
    %v7728 = vtanh.pop %v7727
    %v7729 = vsub.f32 1.0, %v7723
    %v7730 = vmul.f32 %v7729, %v7728
    %v7731 = vmul.f32 %v7723, %v7546
    %v7732 = vadd.f32 %v7730, %v7731
    %s7733 = scalar_lea.vmem %s7, 14
    %7734 = vst.msk [vmem:[%s7733] sm:$0x3] %vm77, %v7732
    // Predicated region
    $region38: #{_forward_impl.1} parent=1 // pred_check
      _
    $region39: #{_forward_impl.1} parent=1 // pred_check_branch
      %7736 = sbr.rel (0) target = $region41
    $region40: #{_forward_impl.1} parent=1 // pred_region
      %s7738 = ssub.s32 256, 256
      %7739 = vsyncadd [#allocation8], %s7738
      %s7740 = sshll.u32 [#allocation12], 4
      %s7741 = int_to_ptr.vmem [resolvable:$true] %s7740
      %7746 = dma.vmem_to_hbm [thread:$0]  %s7741, 256, %s6, [#allocation8], 32, 32, 2
    $region41: #{_forward_impl.1} parent=1 // pred_fallthru
      _
    // Predicated region
    $region42: #{_forward_impl.1} parent=1 // pred_check
      _
    $region43: #{_forward_impl.1} parent=1 // pred_check_branch
      %7748 = sbr.rel (0) target = $region45
    $region44: #{_forward_impl.1} parent=1 // pred_region
      _
    $region45: #{_forward_impl.1} parent=1 // pred_fallthru
      _
    // Predicated region
    $region46: #{_forward_impl.1} parent=1 // pred_check
      _
    $region47: #{_forward_impl.1} parent=1 // pred_check_branch
      %7750 = sbr.rel (0) target = $region49
    $region48: #{_forward_impl.1} parent=1 // pred_region
      %7751 = dma.done [#allocation8], 256
    $region49: #{_forward_impl.1} parent=1 // pred_fallthru
      _
    // Predicated region
    $region50: #{_forward_impl.1} parent=1 // pred_check
      _
    $region51: #{_forward_impl.1} parent=1 // pred_check_branch
      %7753 = sbr.rel (0) target = $region53
    $region52: #{_forward_impl.1} parent=1 // pred_region
      _
    $region53: #{_forward_impl.1} parent=1 // pred_fallthru
      _
    %7754 = vsyncpa [#allocation7], 1
    %7755 = vsyncpa [#allocation10], 1
    %7756 = vsyncpa [#allocation8], 1
  %7757 = vsyncmov [#allocation5]
  %s7758 = vpop.sfrf %7757
  %p7759 = scmp.eq.s32.totalorder %s7758, 0
  %p7760 = pneg %p7759
  %7762 = shalt.err (%p7760)

</llo_original>
